<compile_context>
chip_gen: v5e
topology: v5e:2x2
jax: 0.10.0
libtpu: 0.0.40
codegen_flags: <defaults>
</compile_context>

<pallas_src>
import functools

import jax
import jax.numpy as jnp
from jax.experimental import pallas as pl
from jax.experimental.pallas import tpu as pltpu


LEAKY_SLOPE = 0.1   # nn.LeakyReLU(negative_slope=0.1) in the reference module
BN_EPS = 1e-5


def _leaky(x, slope=LEAKY_SLOPE):
    return jnp.where(x >= 0, x, slope * x)


# ------------------------------ Pallas kernel --------------------------------

def _conv_layer_kernel(*refs, Ci_list, norm_flags, K, Co, T, use_bias,
                       out_act, compute_stats, slope):
    """Fused per-layer kernel, one grid step per batch element.

    refs (in order):
      x_j            : (1, Ci_j, T) f32     for each input j
      scale_j,shift_j: (Ci_j, 1)  f32       for each input with norm_flags[j]
      w              : (Co, K*sum(Ci)) bf16
      bias           : (Co, 1) f32          if use_bias
      y (out)        : (1, Co, T) f32       raw conv output (pre-BN)
      stats (out)    : (1, Co, 2) f32       [sum, sum_sq] per channel, if requested
    """
    refs = list(refs)
    n_in = len(Ci_list)
    x_refs = [refs.pop(0) for _ in range(n_in)]
    ss_refs = []
    for flag in norm_flags:
        ss_refs.append((refs.pop(0), refs.pop(0)) if flag else None)
    w_ref = refs.pop(0)
    b_ref = refs.pop(0) if use_bias else None
    y_ref = refs.pop(0)
    stats_ref = refs.pop(0) if compute_stats else None

    pad = (K - 1) // 2
    xs = []
    for j in range(n_in):
        xj = x_refs[j][0]                         # (Ci_j, T) f32
        if norm_flags[j]:
            s = ss_refs[j][0][...]                # (Ci_j, 1)
            t = ss_refs[j][1][...]
            # deferred BatchNorm affine + LeakyReLU of the producer layer
            xj = _leaky(xj * s + t, slope)
        if pad:
            z = jnp.zeros((Ci_list[j], pad), jnp.float32)
            xj = jnp.concatenate([z, xj, z], axis=1)   # in-kernel zero padding
        xs.append(xj)

    # im2col: row order (tap k, input j, channel c) matches the flattened
    # PyTorch weight layout (Co, Ci, K) -> transpose -> (Co, K*Ci).
    pieces = []
    for k in range(K):
        for j in range(n_in):
            pieces.append(xs[j][:, k:k + T])
    col = pieces[0] if len(pieces) == 1 else jnp.concatenate(pieces, axis=0)
    col = col.astype(jnp.bfloat16)                # (K*sum(Ci), T)

    # single large-contraction bf16 MXU matmul, f32 accumulate
    acc = jnp.dot(w_ref[...], col, preferred_element_type=jnp.float32)  # (Co, T)
    if use_bias:
        acc = acc + b_ref[...]
    if out_act == "tanh":
        acc = jnp.tanh(acc)

    y_ref[0] = acc
    if compute_stats:
        s1 = jnp.sum(acc, axis=1, keepdims=True)
        s2 = jnp.sum(acc * acc, axis=1, keepdims=True)
        stats_ref[0] = jnp.concatenate([s1, s2], axis=1)


def conv_layer(inputs, norm_params, w_flat, bias, *, K, use_bias, out_act,
               compute_stats):
    """inputs: list of (B, Ci_j, T) f32 tensors (raw conv outputs or data).
    norm_params[j]: None, or (scale, shift) each (Ci_j,) — the deferred BN
    affine + LeakyReLU of input j's producer layer, applied in-kernel.
    w_flat: (Co, K * sum(Ci_j)) bf16. Returns (raw_conv, stats_or_None)."""
    B, _, T = inputs[0].shape
    Ci_list = tuple(int(x.shape[1]) for x in inputs)
    Co = int(w_flat.shape[0])

    args, in_specs = [], []
    for x, ci in zip(inputs, Ci_list):
        args.append(x)
        in_specs.append(pl.BlockSpec((1, ci, T), lambda b: (b, 0, 0)))
    for p in norm_params:
        if p is not None:
            for v in p:
                v = v.reshape(-1, 1).astype(jnp.float32)
                args.append(v)
                in_specs.append(pl.BlockSpec(v.shape, lambda b: (0, 0)))
    args.append(w_flat)
    in_specs.append(pl.BlockSpec(w_flat.shape, lambda b: (0, 0)))
    if use_bias:
        bv = bias.reshape(-1, 1).astype(jnp.float32)
        args.append(bv)
        in_specs.append(pl.BlockSpec(bv.shape, lambda b: (0, 0)))

    out_shape = [jax.ShapeDtypeStruct((B, Co, T), jnp.float32)]
    out_specs = [pl.BlockSpec((1, Co, T), lambda b: (b, 0, 0))]
    if compute_stats:
        out_shape.append(jax.ShapeDtypeStruct((B, Co, 2), jnp.float32))
        out_specs.append(pl.BlockSpec((1, Co, 2), lambda b: (b, 0, 0)))

    kern = functools.partial(
        _conv_layer_kernel, Ci_list=Ci_list,
        norm_flags=tuple(p is not None for p in norm_params),
        K=K, Co=Co, T=T, use_bias=use_bias, out_act=out_act,
        compute_stats=compute_stats, slope=LEAKY_SLOPE)

    outs = pl.pallas_call(
        kern,
        grid=(B,),
        in_specs=in_specs,
        out_specs=out_specs,
        out_shape=out_shape,
        compiler_params=pltpu.CompilerParams(
            dimension_semantics=("parallel",),
            vmem_limit_bytes=32 * 1024 * 1024),
    )(*args)
    return outs[0], (outs[1] if compute_stats else None)


# -------------------------------- JAX glue -----------------------------------

def bn_affine(stats, gamma, beta, count, eps=BN_EPS):
    """Training-mode BatchNorm1d affine from per-batch [sum, sum_sq] stats."""
    total = jnp.sum(stats, axis=0)                    # (Co, 2)
    mean = total[:, 0] / count
    var = jnp.maximum(total[:, 1] / count - mean * mean, 0.0)  # biased variance
    scale = gamma * jax.lax.rsqrt(var + eps)
    shift = beta - mean * scale
    return scale, shift


def apply_bn_act(raw, ss):
    scale, shift = ss
    return _leaky(raw * scale[None, :, None] + shift[None, :, None])


def upsample_linear_2x(x):
    """F.interpolate(scale_factor=2, mode='linear', align_corners=True) as a
    matmul with a constant (L, 2L) interpolation matrix (no gathers)."""
    B, C, L = x.shape
    Lo = 2 * L
    if L == 1:
        return jnp.repeat(x, 2, axis=2)
    pos = jnp.arange(Lo, dtype=jnp.float32) * (L - 1) / (Lo - 1)
    i0 = jnp.clip(jnp.floor(pos).astype(jnp.int32), 0, L - 2)
    frac = pos - i0.astype(jnp.float32)
    rows = jnp.arange(L, dtype=jnp.int32)[:, None]
    m = ((rows == i0[None, :]).astype(jnp.float32) * (1.0 - frac)[None, :]
         + (rows == (i0 + 1)[None, :]).astype(jnp.float32) * frac[None, :])
    return jnp.einsum('bcl,lo->bco', x, m)


# ------------------------------ parameters -----------------------------------

def _flatten_weight(w):
    """(Co, Ci, K) PyTorch layout -> (Co, K*Ci) bf16 matching the im2col rows."""
    co, ci, k = w.shape
    return jnp.transpose(w, (0, 2, 1)).reshape(co, k * ci).astype(jnp.bfloat16)


def init_conv(key, ci, co, k):
    kw, kb = jax.random.split(key)
    bound = 1.0 / float(ci * k) ** 0.5
    w = jax.random.uniform(kw, (co, ci, k), jnp.float32, -bound, bound)
    b = jax.random.uniform(kb, (co,), jnp.float32, -bound, bound)
    return w, b


def init_params(key, n_layers, channels_interval):
    enc_in = [1] + [i * channels_interval for i in range(1, n_layers)]
    enc_out = [i * channels_interval for i in range(1, n_layers + 1)]
    dec_in = ([(2 * i + 1) * channels_interval for i in range(1, n_layers)]
              + [2 * n_layers * channels_interval])[::-1]
    dec_out = enc_out[::-1]
    bn_ch = n_layers * channels_interval

    keys = jax.random.split(key, 2 * n_layers + 2)
    params = {"enc": [], "dec": []}
    for i in range(n_layers):
        w, _ = init_conv(keys[i], enc_in[i], enc_out[i], 15)
        params["enc"].append({           # conv bias dropped: cancelled by BN
            "w": _flatten_weight(w),
            "g": jnp.ones((enc_out[i],), jnp.float32),
            "be": jnp.zeros((enc_out[i],), jnp.float32)})
    w, _ = init_conv(keys[n_layers], bn_ch, bn_ch, 15)
    params["bottle"] = {"w": _flatten_weight(w),
                        "g": jnp.ones((bn_ch,), jnp.float32),
                        "be": jnp.zeros((bn_ch,), jnp.float32)}
    for i in range(n_layers):
        w, _ = init_conv(keys[n_layers + 1 + i], dec_in[i], dec_out[i], 5)
        params["dec"].append({
            "w": _flatten_weight(w),
            "g": jnp.ones((dec_out[i],), jnp.float32),
            "be": jnp.zeros((dec_out[i],), jnp.float32)})
    w, b = init_conv(keys[-1], 1 + channels_interval, 1, 1)
    params["out"] = {"w": _flatten_weight(w), "b": b}
    return params


# ------------------------------ forward pass ---------------------------------

def model_forward(params, x_nct, n_layers):
    """x_nct: (B, 1, T) in PyTorch NCL layout; returns (B, 1, T)."""
    x = x_nct.astype(jnp.float32)
    B, _, T = x.shape
    tmp_raw, tmp_ss = [], []
    cur, cur_ss = x, None
    t_len = T

    # encoder: Conv1d(k=15, p=7) + BN + LeakyReLU(0.1) (BN applied lazily), ::2
    for i in range(n_layers):
        p = params["enc"][i]
        raw, stats = conv_layer([cur], [cur_ss], p["w"], None, K=15,
                                use_bias=False, out_act=None, compute_stats=True)
        ss = bn_affine(stats, p["g"], p["be"], count=B * t_len)
        tmp_raw.append(raw)
        tmp_ss.append(ss)
        cur = raw[:, :, ::2]
        cur_ss = ss
        t_len //= 2

    # bottleneck
    p = params["bottle"]
    raw, stats = conv_layer([cur], [cur_ss], p["w"], None, K=15,
                            use_bias=False, out_act=None, compute_stats=True)
    ss = bn_affine(stats, p["g"], p["be"], count=B * t_len)

    # decoder: 2x linear upsample (const-matrix matmul), fused skip concat,
    # Conv1d(k=5, p=2) + lazy BN + LeakyReLU
    up = apply_bn_act(raw, ss)
    for i in range(n_layers):
        up2 = upsample_linear_2x(up)
        t_len *= 2
        j = n_layers - 1 - i
        p = params["dec"][i]
        raw, stats = conv_layer([up2, tmp_raw[j]], [None, tmp_ss[j]], p["w"],
                                None, K=5, use_bias=False, out_act=None,
                                compute_stats=True)
        ss = bn_affine(stats, p["g"], p["be"], count=B * t_len)
        if i < n_layers - 1:
            up = apply_bn_act(raw, ss)

    # output head: fused concat with the network input, Conv1d(k=1)+bias+Tanh
    p = params["out"]
    y, _ = conv_layer([raw, x], [ss, None], p["w"], p["b"], K=1,
                      use_bias=True, out_act="tanh", compute_stats=False)
    return y


# ---------------------------------- main --------------------------------------

if __name__ == "__main__":
    # Small config consistent with the module's constructor args:
    # Model(n_layers=4, channels_interval=8), input (B, 1, T), T % 2**n == 0.
    n_layers = 4
    channels_interval = 8
    B, T = 2, 128

    key = jax.random.PRNGKey(0)
    kp, kx = jax.random.split(key)
    params = init_params(kp, n_layers, channels_interval)
    x = jax.random.normal(kx, (B, 1, T), jnp.float32)

    fwd = jax.jit(functools.partial(model_forward, n_layers=n_layers))
    y = jax.block_until_ready(fwd(params, x))

    assert y.shape == (B, 1, T), y.shape
    assert bool(jnp.all(jnp.isfinite(y)))
    assert bool(jnp.all(jnp.abs(y) <= 1.0))   # tanh output range
    print("KERNEL_OK")
</pallas_src>

<mosaic_0001>
module attributes {stable_mosaic.version = 11 : i64} {
  func.func @_conv_layer_kernel(%arg0: i32, %arg1: memref<1x1x128xf32, #tpu.memory_space<vmem>>, %arg2: memref<8x15xbf16, #tpu.memory_space<vmem>>, %arg3: memref<1x8x128xf32, #tpu.memory_space<vmem>>, %arg4: memref<1x8x2xf32, #tpu.memory_space<vmem>>) attributes {dimension_semantics = [#tpu.dimension_semantics<parallel>], iteration_bounds = array<i64: 2>, scalar_prefetch = 0 : i64, scratch_operands = 0 : i64, tpu.core_type = #tpu.core_type<tc>, window_params = [{transform_indices = @transform_0, window_bounds = array<i64: 1, 1, 128>}, {pipeline_mode = #tpu.pipeline_mode<synchronous>, transform_indices = @transform_1, window_bounds = array<i64: 8, 15>}, {transform_indices = @transform_2, window_bounds = array<i64: 1, 8, 128>}, {transform_indices = @transform_3, window_bounds = array<i64: 1, 8, 2>}]} {
    %c0 = arith.constant 0 : index
    %c0_0 = arith.constant 0 : index
    %c0_1 = arith.constant 0 : index
    %0 = vector.load %arg1[%c0, %c0_0, %c0_1] : memref<1x1x128xf32, #tpu.memory_space<vmem>>, vector<1x1x128xf32>
    %1 = vector.shape_cast %0 : vector<1x1x128xf32> to vector<1x128xf32>
    %cst = arith.constant 0.000000e+00 : f32
    %2 = vector.broadcast %cst : f32 to vector<1x7xf32>
    %3 = tpu.concatenate %2, %1, %2 in 1 : vector<1x7xf32>, vector<1x128xf32>, vector<1x7xf32> -> vector<1x142xf32>
    %4 = vector.extract_strided_slice %3 {offsets = [0, 0], sizes = [1, 128], strides = [1, 1]} : vector<1x142xf32> to vector<1x128xf32>
    %5 = vector.extract_strided_slice %3 {offsets = [0, 1], sizes = [1, 128], strides = [1, 1]} : vector<1x142xf32> to vector<1x128xf32>
    %6 = vector.extract_strided_slice %3 {offsets = [0, 2], sizes = [1, 128], strides = [1, 1]} : vector<1x142xf32> to vector<1x128xf32>
    %7 = vector.extract_strided_slice %3 {offsets = [0, 3], sizes = [1, 128], strides = [1, 1]} : vector<1x142xf32> to vector<1x128xf32>
    %8 = vector.extract_strided_slice %3 {offsets = [0, 4], sizes = [1, 128], strides = [1, 1]} : vector<1x142xf32> to vector<1x128xf32>
    %9 = vector.extract_strided_slice %3 {offsets = [0, 5], sizes = [1, 128], strides = [1, 1]} : vector<1x142xf32> to vector<1x128xf32>
    %10 = vector.extract_strided_slice %3 {offsets = [0, 6], sizes = [1, 128], strides = [1, 1]} : vector<1x142xf32> to vector<1x128xf32>
    %11 = vector.extract_strided_slice %3 {offsets = [0, 7], sizes = [1, 128], strides = [1, 1]} : vector<1x142xf32> to vector<1x128xf32>
    %12 = vector.extract_strided_slice %3 {offsets = [0, 8], sizes = [1, 128], strides = [1, 1]} : vector<1x142xf32> to vector<1x128xf32>
    %13 = vector.extract_strided_slice %3 {offsets = [0, 9], sizes = [1, 128], strides = [1, 1]} : vector<1x142xf32> to vector<1x128xf32>
    %14 = vector.extract_strided_slice %3 {offsets = [0, 10], sizes = [1, 128], strides = [1, 1]} : vector<1x142xf32> to vector<1x128xf32>
    %15 = vector.extract_strided_slice %3 {offsets = [0, 11], sizes = [1, 128], strides = [1, 1]} : vector<1x142xf32> to vector<1x128xf32>
    %16 = vector.extract_strided_slice %3 {offsets = [0, 12], sizes = [1, 128], strides = [1, 1]} : vector<1x142xf32> to vector<1x128xf32>
    %17 = vector.extract_strided_slice %3 {offsets = [0, 13], sizes = [1, 128], strides = [1, 1]} : vector<1x142xf32> to vector<1x128xf32>
    %18 = vector.extract_strided_slice %3 {offsets = [0, 14], sizes = [1, 128], strides = [1, 1]} : vector<1x142xf32> to vector<1x128xf32>
    %19 = tpu.concatenate %4, %5, %6, %7, %8, %9, %10, %11, %12, %13, %14, %15, %16, %17, %18 in 0 : vector<1x128xf32>, vector<1x128xf32>, vector<1x128xf32>, vector<1x128xf32>, vector<1x128xf32>, vector<1x128xf32>, vector<1x128xf32>, vector<1x128xf32>, vector<1x128xf32>, vector<1x128xf32>, vector<1x128xf32>, vector<1x128xf32>, vector<1x128xf32>, vector<1x128xf32>, vector<1x128xf32> -> vector<15x128xf32>
    %20 = arith.truncf %19 : vector<15x128xf32> to vector<15x128xbf16>
    %c0_2 = arith.constant 0 : index
    %c0_3 = arith.constant 0 : index
    %21 = vector.load %arg2[%c0_2, %c0_3] : memref<8x15xbf16, #tpu.memory_space<vmem>>, vector<8x15xbf16>
    %cst_4 = arith.constant dense<0.000000e+00> : vector<8x128xf32>
    %22 = tpu.matmul %21, %20, %cst_4 {dimension_numbers = #tpu.dot_dimension_numbers<[1], [0], [0], [1], [0, 0, 1, 1], [], []>} : vector<8x15xbf16>, vector<15x128xbf16>, vector<8x128xf32> -> vector<8x128xf32>
    %c0_5 = arith.constant 0 : index
    %c0_6 = arith.constant 0 : index
    %c0_7 = arith.constant 0 : index
    %23 = vector.load %arg3[%c0_5, %c0_6, %c0_7] : memref<1x8x128xf32, #tpu.memory_space<vmem>>, vector<1x8x128xf32>
    %24 = vector.shape_cast %23 : vector<1x8x128xf32> to vector<8x128xf32>
    %25 = vector.shape_cast %22 : vector<8x128xf32> to vector<1x8x128xf32>
    tpu.vector_store %arg3[%c0_5, %c0_6, %c0_7], %25 {strides = array<i32>} : memref<1x8x128xf32, #tpu.memory_space<vmem>>, vector<1x8x128xf32>,
    %cst_8 = arith.constant dense<0.000000e+00> : vector<8xf32>
    %26 = vector.multi_reduction <add>, %22, %cst_8 [1] : vector<8x128xf32> to vector<8xf32>
    %27 = vector.shape_cast %26 : vector<8xf32> to vector<8x1xf32>
    %28 = arith.mulf %22, %22 : vector<8x128xf32>
    %cst_9 = arith.constant dense<0.000000e+00> : vector<8xf32>
    %29 = vector.multi_reduction <add>, %28, %cst_9 [1] : vector<8x128xf32> to vector<8xf32>
    %30 = vector.shape_cast %29 : vector<8xf32> to vector<8x1xf32>
    %31 = tpu.concatenate %27, %30 in 1 : vector<8x1xf32>, vector<8x1xf32> -> vector<8x2xf32>
    %c0_10 = arith.constant 0 : index
    %c0_11 = arith.constant 0 : index
    %c0_12 = arith.constant 0 : index
    %32 = vector.load %arg4[%c0_10, %c0_11, %c0_12] : memref<1x8x2xf32, #tpu.memory_space<vmem>>, vector<1x8x2xf32>
    %33 = vector.shape_cast %32 : vector<1x8x2xf32> to vector<8x2xf32>
    %34 = vector.shape_cast %31 : vector<8x2xf32> to vector<1x8x2xf32>
    tpu.vector_store %arg4[%c0_10, %c0_11, %c0_12], %34 {strides = array<i32>} : memref<1x8x2xf32, #tpu.memory_space<vmem>>, vector<1x8x2xf32>,
    return
  }
  func.func @transform_0(%arg0: i32) -> (i32, i32, i32) {
    %c0_i32 = arith.constant 0 : i32
    %c0_i32_0 = arith.constant 0 : i32
    %c0_i32_1 = arith.constant 0 : i32
    return %arg0, %c0_i32, %c0_i32_0 : i32, i32, i32
  }
  func.func @transform_1(%arg0: i32) -> (i32, i32) {
    %c0_i32 = arith.constant 0 : i32
    %c0_i32_0 = arith.constant 0 : i32
    %c0_i32_1 = arith.constant 0 : i32
    return %c0_i32, %c0_i32_0 : i32, i32
  }
  func.func @transform_2(%arg0: i32) -> (i32, i32, i32) {
    %c0_i32 = arith.constant 0 : i32
    %c0_i32_0 = arith.constant 0 : i32
    %c0_i32_1 = arith.constant 0 : i32
    return %arg0, %c0_i32, %c0_i32_0 : i32, i32, i32
  }
  func.func @transform_3(%arg0: i32) -> (i32, i32, i32) {
    %c0_i32 = arith.constant 0 : i32
    %c0_i32_0 = arith.constant 0 : i32
    %c0_i32_1 = arith.constant 0 : i32
    return %arg0, %c0_i32, %c0_i32_0 : i32, i32, i32
  }
}

module attributes {stable_mosaic.version = 11 : i64} {
  func.func @_conv_layer_kernel(%arg0: i32, %arg1: memref<1x8x64xf32, #tpu.memory_space<vmem>>, %arg2: memref<8x1xf32, #tpu.memory_space<vmem>>, %arg3: memref<8x1xf32, #tpu.memory_space<vmem>>, %arg4: memref<16x120xbf16, #tpu.memory_space<vmem>>, %arg5: memref<1x16x64xf32, #tpu.memory_space<vmem>>, %arg6: memref<1x16x2xf32, #tpu.memory_space<vmem>>) attributes {dimension_semantics = [#tpu.dimension_semantics<parallel>], iteration_bounds = array<i64: 2>, scalar_prefetch = 0 : i64, scratch_operands = 0 : i64, tpu.core_type = #tpu.core_type<tc>, window_params = [{transform_indices = @transform_0, window_bounds = array<i64: 1, 8, 64>}, {pipeline_mode = #tpu.pipeline_mode<synchronous>, transform_indices = @transform_1, window_bounds = array<i64: 8, 1>}, {pipeline_mode = #tpu.pipeline_mode<synchronous>, transform_indices = @transform_2, window_bounds = array<i64: 8, 1>}, {pipeline_mode = #tpu.pipeline_mode<synchronous>, transform_indices = @transform_3, window_bounds = array<i64: 16, 120>}, {transform_indices = @transform_4, window_bounds = array<i64: 1, 16, 64>}, {transform_indices = @transform_5, window_bounds = array<i64: 1, 16, 2>}]} {
    %c0 = arith.constant 0 : index
    %c0_0 = arith.constant 0 : index
    %c0_1 = arith.constant 0 : index
    %0 = vector.load %arg1[%c0, %c0_0, %c0_1] : memref<1x8x64xf32, #tpu.memory_space<vmem>>, vector<1x8x64xf32>
    %1 = vector.shape_cast %0 : vector<1x8x64xf32> to vector<8x64xf32>
    %c0_2 = arith.constant 0 : index
    %c0_3 = arith.constant 0 : index
    %2 = vector.load %arg2[%c0_2, %c0_3] : memref<8x1xf32, #tpu.memory_space<vmem>>, vector<8x1xf32>
    %c0_4 = arith.constant 0 : index
    %c0_5 = arith.constant 0 : index
    %3 = vector.load %arg3[%c0_4, %c0_5] : memref<8x1xf32, #tpu.memory_space<vmem>>, vector<8x1xf32>
    %4 = vector.broadcast %2 : vector<8x1xf32> to vector<8x64xf32>
    %5 = arith.mulf %1, %4 : vector<8x64xf32>
    %6 = vector.broadcast %3 : vector<8x1xf32> to vector<8x64xf32>
    %7 = arith.addf %5, %6 : vector<8x64xf32>
    %cst = arith.constant 0.000000e+00 : f32
    %8 = vector.broadcast %cst : f32 to vector<8x64xf32>
    %9 = arith.cmpf oge, %7, %8 : vector<8x64xf32>
    %cst_6 = arith.constant 1.000000e-01 : f32
    %10 = vector.broadcast %cst_6 : f32 to vector<8x64xf32>
    %11 = arith.mulf %10, %7 : vector<8x64xf32>
    %12 = arith.select %9, %7, %11 : vector<8x64xi1>, vector<8x64xf32>
    %cst_7 = arith.constant 0.000000e+00 : f32
    %13 = vector.broadcast %cst_7 : f32 to vector<8x7xf32>
    %14 = tpu.concatenate %13, %12, %13 in 1 : vector<8x7xf32>, vector<8x64xf32>, vector<8x7xf32> -> vector<8x78xf32>
    %15 = vector.extract_strided_slice %14 {offsets = [0, 0], sizes = [8, 64], strides = [1, 1]} : vector<8x78xf32> to vector<8x64xf32>
    %16 = vector.extract_strided_slice %14 {offsets = [0, 1], sizes = [8, 64], strides = [1, 1]} : vector<8x78xf32> to vector<8x64xf32>
    %17 = vector.extract_strided_slice %14 {offsets = [0, 2], sizes = [8, 64], strides = [1, 1]} : vector<8x78xf32> to vector<8x64xf32>
    %18 = vector.extract_strided_slice %14 {offsets = [0, 3], sizes = [8, 64], strides = [1, 1]} : vector<8x78xf32> to vector<8x64xf32>
    %19 = vector.extract_strided_slice %14 {offsets = [0, 4], sizes = [8, 64], strides = [1, 1]} : vector<8x78xf32> to vector<8x64xf32>
    %20 = vector.extract_strided_slice %14 {offsets = [0, 5], sizes = [8, 64], strides = [1, 1]} : vector<8x78xf32> to vector<8x64xf32>
    %21 = vector.extract_strided_slice %14 {offsets = [0, 6], sizes = [8, 64], strides = [1, 1]} : vector<8x78xf32> to vector<8x64xf32>
    %22 = vector.extract_strided_slice %14 {offsets = [0, 7], sizes = [8, 64], strides = [1, 1]} : vector<8x78xf32> to vector<8x64xf32>
    %23 = vector.extract_strided_slice %14 {offsets = [0, 8], sizes = [8, 64], strides = [1, 1]} : vector<8x78xf32> to vector<8x64xf32>
    %24 = vector.extract_strided_slice %14 {offsets = [0, 9], sizes = [8, 64], strides = [1, 1]} : vector<8x78xf32> to vector<8x64xf32>
    %25 = vector.extract_strided_slice %14 {offsets = [0, 10], sizes = [8, 64], strides = [1, 1]} : vector<8x78xf32> to vector<8x64xf32>
    %26 = vector.extract_strided_slice %14 {offsets = [0, 11], sizes = [8, 64], strides = [1, 1]} : vector<8x78xf32> to vector<8x64xf32>
    %27 = vector.extract_strided_slice %14 {offsets = [0, 12], sizes = [8, 64], strides = [1, 1]} : vector<8x78xf32> to vector<8x64xf32>
    %28 = vector.extract_strided_slice %14 {offsets = [0, 13], sizes = [8, 64], strides = [1, 1]} : vector<8x78xf32> to vector<8x64xf32>
    %29 = vector.extract_strided_slice %14 {offsets = [0, 14], sizes = [8, 64], strides = [1, 1]} : vector<8x78xf32> to vector<8x64xf32>
    %30 = tpu.concatenate %15, %16, %17, %18, %19, %20, %21, %22, %23, %24, %25, %26, %27, %28, %29 in 0 : vector<8x64xf32>, vector<8x64xf32>, vector<8x64xf32>, vector<8x64xf32>, vector<8x64xf32>, vector<8x64xf32>, vector<8x64xf32>, vector<8x64xf32>, vector<8x64xf32>, vector<8x64xf32>, vector<8x64xf32>, vector<8x64xf32>, vector<8x64xf32>, vector<8x64xf32>, vector<8x64xf32> -> vector<120x64xf32>
    %31 = arith.truncf %30 : vector<120x64xf32> to vector<120x64xbf16>
    %c0_8 = arith.constant 0 : index
    %c0_9 = arith.constant 0 : index
    %32 = vector.load %arg4[%c0_8, %c0_9] : memref<16x120xbf16, #tpu.memory_space<vmem>>, vector<16x120xbf16>
    %cst_10 = arith.constant dense<0.000000e+00> : vector<16x64xf32>
    %33 = tpu.matmul %32, %31, %cst_10 {dimension_numbers = #tpu.dot_dimension_numbers<[1], [0], [0], [1], [0, 0, 1, 1], [], []>} : vector<16x120xbf16>, vector<120x64xbf16>, vector<16x64xf32> -> vector<16x64xf32>
    %c0_11 = arith.constant 0 : index
    %c0_12 = arith.constant 0 : index
    %c0_13 = arith.constant 0 : index
    %34 = vector.load %arg5[%c0_11, %c0_12, %c0_13] : memref<1x16x64xf32, #tpu.memory_space<vmem>>, vector<1x16x64xf32>
    %35 = vector.shape_cast %34 : vector<1x16x64xf32> to vector<16x64xf32>
    %36 = vector.shape_cast %33 : vector<16x64xf32> to vector<1x16x64xf32>
    tpu.vector_store %arg5[%c0_11, %c0_12, %c0_13], %36 {strides = array<i32>} : memref<1x16x64xf32, #tpu.memory_space<vmem>>, vector<1x16x64xf32>,
    %cst_14 = arith.constant dense<0.000000e+00> : vector<16xf32>
    %37 = vector.multi_reduction <add>, %33, %cst_14 [1] : vector<16x64xf32> to vector<16xf32>
    %38 = vector.shape_cast %37 : vector<16xf32> to vector<16x1xf32>
    %39 = arith.mulf %33, %33 : vector<16x64xf32>
    %cst_15 = arith.constant dense<0.000000e+00> : vector<16xf32>
    %40 = vector.multi_reduction <add>, %39, %cst_15 [1] : vector<16x64xf32> to vector<16xf32>
    %41 = vector.shape_cast %40 : vector<16xf32> to vector<16x1xf32>
    %42 = tpu.concatenate %38, %41 in 1 : vector<16x1xf32>, vector<16x1xf32> -> vector<16x2xf32>
    %c0_16 = arith.constant 0 : index
    %c0_17 = arith.constant 0 : index
    %c0_18 = arith.constant 0 : index
    %43 = vector.load %arg6[%c0_16, %c0_17, %c0_18] : memref<1x16x2xf32, #tpu.memory_space<vmem>>, vector<1x16x2xf32>
    %44 = vector.shape_cast %43 : vector<1x16x2xf32> to vector<16x2xf32>
    %45 = vector.shape_cast %42 : vector<16x2xf32> to vector<1x16x2xf32>
    tpu.vector_store %arg6[%c0_16, %c0_17, %c0_18], %45 {strides = array<i32>} : memref<1x16x2xf32, #tpu.memory_space<vmem>>, vector<1x16x2xf32>,
    return
  }
  func.func @transform_0(%arg0: i32) -> (i32, i32, i32) {
    %c0_i32 = arith.constant 0 : i32
    %c0_i32_0 = arith.constant 0 : i32
    %c0_i32_1 = arith.constant 0 : i32
    return %arg0, %c0_i32, %c0_i32_0 : i32, i32, i32
  }
  func.func @transform_1(%arg0: i32) -> (i32, i32) {
    %c0_i32 = arith.constant 0 : i32
    %c0_i32_0 = arith.constant 0 : i32
    %c0_i32_1 = arith.constant 0 : i32
    return %c0_i32, %c0_i32_0 : i32, i32
  }
  func.func @transform_2(%arg0: i32) -> (i32, i32) {
    %c0_i32 = arith.constant 0 : i32
    %c0_i32_0 = arith.constant 0 : i32
    %c0_i32_1 = arith.constant 0 : i32
    return %c0_i32, %c0_i32_0 : i32, i32
  }
  func.func @transform_3(%arg0: i32) -> (i32, i32) {
    %c0_i32 = arith.constant 0 : i32
    %c0_i32_0 = arith.constant 0 : i32
    %c0_i32_1 = arith.constant 0 : i32
    return %c0_i32, %c0_i32_0 : i32, i32
  }
  func.func @transform_4(%arg0: i32) -> (i32, i32, i32) {
    %c0_i32 = arith.constant 0 : i32
    %c0_i32_0 = arith.constant 0 : i32
    %c0_i32_1 = arith.constant 0 : i32
    return %arg0, %c0_i32, %c0_i32_0 : i32, i32, i32
  }
  func.func @transform_5(%arg0: i32) -> (i32, i32, i32) {
    %c0_i32 = arith.constant 0 : i32
    %c0_i32_0 = arith.constant 0 : i32
    %c0_i32_1 = arith.constant 0 : i32
    return %arg0, %c0_i32, %c0_i32_0 : i32, i32, i32
  }
}

module attributes {stable_mosaic.version = 11 : i64} {
  func.func @_conv_layer_kernel(%arg0: i32, %arg1: memref<1x16x32xf32, #tpu.memory_space<vmem>>, %arg2: memref<16x1xf32, #tpu.memory_space<vmem>>, %arg3: memref<16x1xf32, #tpu.memory_space<vmem>>, %arg4: memref<24x240xbf16, #tpu.memory_space<vmem>>, %arg5: memref<1x24x32xf32, #tpu.memory_space<vmem>>, %arg6: memref<1x24x2xf32, #tpu.memory_space<vmem>>) attributes {dimension_semantics = [#tpu.dimension_semantics<parallel>], iteration_bounds = array<i64: 2>, scalar_prefetch = 0 : i64, scratch_operands = 0 : i64, tpu.core_type = #tpu.core_type<tc>, window_params = [{transform_indices = @transform_0, window_bounds = array<i64: 1, 16, 32>}, {pipeline_mode = #tpu.pipeline_mode<synchronous>, transform_indices = @transform_1, window_bounds = array<i64: 16, 1>}, {pipeline_mode = #tpu.pipeline_mode<synchronous>, transform_indices = @transform_2, window_bounds = array<i64: 16, 1>}, {pipeline_mode = #tpu.pipeline_mode<synchronous>, transform_indices = @transform_3, window_bounds = array<i64: 24, 240>}, {transform_indices = @transform_4, window_bounds = array<i64: 1, 24, 32>}, {transform_indices = @transform_5, window_bounds = array<i64: 1, 24, 2>}]} {
    %c0 = arith.constant 0 : index
    %c0_0 = arith.constant 0 : index
    %c0_1 = arith.constant 0 : index
    %0 = vector.load %arg1[%c0, %c0_0, %c0_1] : memref<1x16x32xf32, #tpu.memory_space<vmem>>, vector<1x16x32xf32>
    %1 = vector.shape_cast %0 : vector<1x16x32xf32> to vector<16x32xf32>
    %c0_2 = arith.constant 0 : index
    %c0_3 = arith.constant 0 : index
    %2 = vector.load %arg2[%c0_2, %c0_3] : memref<16x1xf32, #tpu.memory_space<vmem>>, vector<16x1xf32>
    %c0_4 = arith.constant 0 : index
    %c0_5 = arith.constant 0 : index
    %3 = vector.load %arg3[%c0_4, %c0_5] : memref<16x1xf32, #tpu.memory_space<vmem>>, vector<16x1xf32>
    %4 = vector.broadcast %2 : vector<16x1xf32> to vector<16x32xf32>
    %5 = arith.mulf %1, %4 : vector<16x32xf32>
    %6 = vector.broadcast %3 : vector<16x1xf32> to vector<16x32xf32>
    %7 = arith.addf %5, %6 : vector<16x32xf32>
    %cst = arith.constant 0.000000e+00 : f32
    %8 = vector.broadcast %cst : f32 to vector<16x32xf32>
    %9 = arith.cmpf oge, %7, %8 : vector<16x32xf32>
    %cst_6 = arith.constant 1.000000e-01 : f32
    %10 = vector.broadcast %cst_6 : f32 to vector<16x32xf32>
    %11 = arith.mulf %10, %7 : vector<16x32xf32>
    %12 = arith.select %9, %7, %11 : vector<16x32xi1>, vector<16x32xf32>
    %cst_7 = arith.constant 0.000000e+00 : f32
    %13 = vector.broadcast %cst_7 : f32 to vector<16x7xf32>
    %14 = tpu.concatenate %13, %12, %13 in 1 : vector<16x7xf32>, vector<16x32xf32>, vector<16x7xf32> -> vector<16x46xf32>
    %15 = vector.extract_strided_slice %14 {offsets = [0, 0], sizes = [16, 32], strides = [1, 1]} : vector<16x46xf32> to vector<16x32xf32>
    %16 = vector.extract_strided_slice %14 {offsets = [0, 1], sizes = [16, 32], strides = [1, 1]} : vector<16x46xf32> to vector<16x32xf32>
    %17 = vector.extract_strided_slice %14 {offsets = [0, 2], sizes = [16, 32], strides = [1, 1]} : vector<16x46xf32> to vector<16x32xf32>
    %18 = vector.extract_strided_slice %14 {offsets = [0, 3], sizes = [16, 32], strides = [1, 1]} : vector<16x46xf32> to vector<16x32xf32>
    %19 = vector.extract_strided_slice %14 {offsets = [0, 4], sizes = [16, 32], strides = [1, 1]} : vector<16x46xf32> to vector<16x32xf32>
    %20 = vector.extract_strided_slice %14 {offsets = [0, 5], sizes = [16, 32], strides = [1, 1]} : vector<16x46xf32> to vector<16x32xf32>
    %21 = vector.extract_strided_slice %14 {offsets = [0, 6], sizes = [16, 32], strides = [1, 1]} : vector<16x46xf32> to vector<16x32xf32>
    %22 = vector.extract_strided_slice %14 {offsets = [0, 7], sizes = [16, 32], strides = [1, 1]} : vector<16x46xf32> to vector<16x32xf32>
    %23 = vector.extract_strided_slice %14 {offsets = [0, 8], sizes = [16, 32], strides = [1, 1]} : vector<16x46xf32> to vector<16x32xf32>
    %24 = vector.extract_strided_slice %14 {offsets = [0, 9], sizes = [16, 32], strides = [1, 1]} : vector<16x46xf32> to vector<16x32xf32>
    %25 = vector.extract_strided_slice %14 {offsets = [0, 10], sizes = [16, 32], strides = [1, 1]} : vector<16x46xf32> to vector<16x32xf32>
    %26 = vector.extract_strided_slice %14 {offsets = [0, 11], sizes = [16, 32], strides = [1, 1]} : vector<16x46xf32> to vector<16x32xf32>
    %27 = vector.extract_strided_slice %14 {offsets = [0, 12], sizes = [16, 32], strides = [1, 1]} : vector<16x46xf32> to vector<16x32xf32>
    %28 = vector.extract_strided_slice %14 {offsets = [0, 13], sizes = [16, 32], strides = [1, 1]} : vector<16x46xf32> to vector<16x32xf32>
    %29 = vector.extract_strided_slice %14 {offsets = [0, 14], sizes = [16, 32], strides = [1, 1]} : vector<16x46xf32> to vector<16x32xf32>
    %30 = tpu.concatenate %15, %16, %17, %18, %19, %20, %21, %22, %23, %24, %25, %26, %27, %28, %29 in 0 : vector<16x32xf32>, vector<16x32xf32>, vector<16x32xf32>, vector<16x32xf32>, vector<16x32xf32>, vector<16x32xf32>, vector<16x32xf32>, vector<16x32xf32>, vector<16x32xf32>, vector<16x32xf32>, vector<16x32xf32>, vector<16x32xf32>, vector<16x32xf32>, vector<16x32xf32>, vector<16x32xf32> -> vector<240x32xf32>
    %31 = arith.truncf %30 : vector<240x32xf32> to vector<240x32xbf16>
    %c0_8 = arith.constant 0 : index
    %c0_9 = arith.constant 0 : index
    %32 = vector.load %arg4[%c0_8, %c0_9] : memref<24x240xbf16, #tpu.memory_space<vmem>>, vector<24x240xbf16>
    %cst_10 = arith.constant dense<0.000000e+00> : vector<24x32xf32>
    %33 = tpu.matmul %32, %31, %cst_10 {dimension_numbers = #tpu.dot_dimension_numbers<[1], [0], [0], [1], [0, 0, 1, 1], [], []>} : vector<24x240xbf16>, vector<240x32xbf16>, vector<24x32xf32> -> vector<24x32xf32>
    %c0_11 = arith.constant 0 : index
    %c0_12 = arith.constant 0 : index
    %c0_13 = arith.constant 0 : index
    %34 = vector.load %arg5[%c0_11, %c0_12, %c0_13] : memref<1x24x32xf32, #tpu.memory_space<vmem>>, vector<1x24x32xf32>
    %35 = vector.shape_cast %34 : vector<1x24x32xf32> to vector<24x32xf32>
    %36 = vector.shape_cast %33 : vector<24x32xf32> to vector<1x24x32xf32>
    tpu.vector_store %arg5[%c0_11, %c0_12, %c0_13], %36 {strides = array<i32>} : memref<1x24x32xf32, #tpu.memory_space<vmem>>, vector<1x24x32xf32>,
    %cst_14 = arith.constant dense<0.000000e+00> : vector<24xf32>
    %37 = vector.multi_reduction <add>, %33, %cst_14 [1] : vector<24x32xf32> to vector<24xf32>
    %38 = vector.shape_cast %37 : vector<24xf32> to vector<24x1xf32>
    %39 = arith.mulf %33, %33 : vector<24x32xf32>
    %cst_15 = arith.constant dense<0.000000e+00> : vector<24xf32>
    %40 = vector.multi_reduction <add>, %39, %cst_15 [1] : vector<24x32xf32> to vector<24xf32>
    %41 = vector.shape_cast %40 : vector<24xf32> to vector<24x1xf32>
    %42 = tpu.concatenate %38, %41 in 1 : vector<24x1xf32>, vector<24x1xf32> -> vector<24x2xf32>
    %c0_16 = arith.constant 0 : index
    %c0_17 = arith.constant 0 : index
    %c0_18 = arith.constant 0 : index
    %43 = vector.load %arg6[%c0_16, %c0_17, %c0_18] : memref<1x24x2xf32, #tpu.memory_space<vmem>>, vector<1x24x2xf32>
    %44 = vector.shape_cast %43 : vector<1x24x2xf32> to vector<24x2xf32>
    %45 = vector.shape_cast %42 : vector<24x2xf32> to vector<1x24x2xf32>
    tpu.vector_store %arg6[%c0_16, %c0_17, %c0_18], %45 {strides = array<i32>} : memref<1x24x2xf32, #tpu.memory_space<vmem>>, vector<1x24x2xf32>,
    return
  }
  func.func @transform_0(%arg0: i32) -> (i32, i32, i32) {
    %c0_i32 = arith.constant 0 : i32
    %c0_i32_0 = arith.constant 0 : i32
    %c0_i32_1 = arith.constant 0 : i32
    return %arg0, %c0_i32, %c0_i32_0 : i32, i32, i32
  }
  func.func @transform_1(%arg0: i32) -> (i32, i32) {
    %c0_i32 = arith.constant 0 : i32
    %c0_i32_0 = arith.constant 0 : i32
    %c0_i32_1 = arith.constant 0 : i32
    return %c0_i32, %c0_i32_0 : i32, i32
  }
  func.func @transform_2(%arg0: i32) -> (i32, i32) {
    %c0_i32 = arith.constant 0 : i32
    %c0_i32_0 = arith.constant 0 : i32
    %c0_i32_1 = arith.constant 0 : i32
    return %c0_i32, %c0_i32_0 : i32, i32
  }
  func.func @transform_3(%arg0: i32) -> (i32, i32) {
    %c0_i32 = arith.constant 0 : i32
    %c0_i32_0 = arith.constant 0 : i32
    %c0_i32_1 = arith.constant 0 : i32
    return %c0_i32, %c0_i32_0 : i32, i32
  }
  func.func @transform_4(%arg0: i32) -> (i32, i32, i32) {
    %c0_i32 = arith.constant 0 : i32
    %c0_i32_0 = arith.constant 0 : i32
    %c0_i32_1 = arith.constant 0 : i32
    return %arg0, %c0_i32, %c0_i32_0 : i32, i32, i32
  }
  func.func @transform_5(%arg0: i32) -> (i32, i32, i32) {
    %c0_i32 = arith.constant 0 : i32
    %c0_i32_0 = arith.constant 0 : i32
    %c0_i32_1 = arith.constant 0 : i32
    return %arg0, %c0_i32, %c0_i32_0 : i32, i32, i32
  }
}

module attributes {stable_mosaic.version = 11 : i64} {
  func.func @_conv_layer_kernel(%arg0: i32, %arg1: memref<1x32x8xf32, #tpu.memory_space<vmem>>, %arg2: memref<32x1xf32, #tpu.memory_space<vmem>>, %arg3: memref<32x1xf32, #tpu.memory_space<vmem>>, %arg4: memref<32x480xbf16, #tpu.memory_space<vmem>>, %arg5: memref<1x32x8xf32, #tpu.memory_space<vmem>>, %arg6: memref<1x32x2xf32, #tpu.memory_space<vmem>>) attributes {dimension_semantics = [#tpu.dimension_semantics<parallel>], iteration_bounds = array<i64: 2>, scalar_prefetch = 0 : i64, scratch_operands = 0 : i64, tpu.core_type = #tpu.core_type<tc>, window_params = [{transform_indices = @transform_0, window_bounds = array<i64: 1, 32, 8>}, {pipeline_mode = #tpu.pipeline_mode<synchronous>, transform_indices = @transform_1, window_bounds = array<i64: 32, 1>}, {pipeline_mode = #tpu.pipeline_mode<synchronous>, transform_indices = @transform_2, window_bounds = array<i64: 32, 1>}, {pipeline_mode = #tpu.pipeline_mode<synchronous>, transform_indices = @transform_3, window_bounds = array<i64: 32, 480>}, {transform_indices = @transform_4, window_bounds = array<i64: 1, 32, 8>}, {transform_indices = @transform_5, window_bounds = array<i64: 1, 32, 2>}]} {
    %c0 = arith.constant 0 : index
    %c0_0 = arith.constant 0 : index
    %c0_1 = arith.constant 0 : index
    %0 = vector.load %arg1[%c0, %c0_0, %c0_1] : memref<1x32x8xf32, #tpu.memory_space<vmem>>, vector<1x32x8xf32>
    %1 = vector.shape_cast %0 : vector<1x32x8xf32> to vector<32x8xf32>
    %c0_2 = arith.constant 0 : index
    %c0_3 = arith.constant 0 : index
    %2 = vector.load %arg2[%c0_2, %c0_3] : memref<32x1xf32, #tpu.memory_space<vmem>>, vector<32x1xf32>
    %c0_4 = arith.constant 0 : index
    %c0_5 = arith.constant 0 : index
    %3 = vector.load %arg3[%c0_4, %c0_5] : memref<32x1xf32, #tpu.memory_space<vmem>>, vector<32x1xf32>
    %4 = vector.broadcast %2 : vector<32x1xf32> to vector<32x8xf32>
    %5 = arith.mulf %1, %4 : vector<32x8xf32>
    %6 = vector.broadcast %3 : vector<32x1xf32> to vector<32x8xf32>
    %7 = arith.addf %5, %6 : vector<32x8xf32>
    %cst = arith.constant 0.000000e+00 : f32
    %8 = vector.broadcast %cst : f32 to vector<32x8xf32>
    %9 = arith.cmpf oge, %7, %8 : vector<32x8xf32>
    %cst_6 = arith.constant 1.000000e-01 : f32
    %10 = vector.broadcast %cst_6 : f32 to vector<32x8xf32>
    %11 = arith.mulf %10, %7 : vector<32x8xf32>
    %12 = arith.select %9, %7, %11 : vector<32x8xi1>, vector<32x8xf32>
    %cst_7 = arith.constant 0.000000e+00 : f32
    %13 = vector.broadcast %cst_7 : f32 to vector<32x7xf32>
    %14 = tpu.concatenate %13, %12, %13 in 1 : vector<32x7xf32>, vector<32x8xf32>, vector<32x7xf32> -> vector<32x22xf32>
    %15 = vector.extract_strided_slice %14 {offsets = [0, 0], sizes = [32, 8], strides = [1, 1]} : vector<32x22xf32> to vector<32x8xf32>
    %16 = vector.extract_strided_slice %14 {offsets = [0, 1], sizes = [32, 8], strides = [1, 1]} : vector<32x22xf32> to vector<32x8xf32>
    %17 = vector.extract_strided_slice %14 {offsets = [0, 2], sizes = [32, 8], strides = [1, 1]} : vector<32x22xf32> to vector<32x8xf32>
    %18 = vector.extract_strided_slice %14 {offsets = [0, 3], sizes = [32, 8], strides = [1, 1]} : vector<32x22xf32> to vector<32x8xf32>
    %19 = vector.extract_strided_slice %14 {offsets = [0, 4], sizes = [32, 8], strides = [1, 1]} : vector<32x22xf32> to vector<32x8xf32>
    %20 = vector.extract_strided_slice %14 {offsets = [0, 5], sizes = [32, 8], strides = [1, 1]} : vector<32x22xf32> to vector<32x8xf32>
    %21 = vector.extract_strided_slice %14 {offsets = [0, 6], sizes = [32, 8], strides = [1, 1]} : vector<32x22xf32> to vector<32x8xf32>
    %22 = vector.extract_strided_slice %14 {offsets = [0, 7], sizes = [32, 8], strides = [1, 1]} : vector<32x22xf32> to vector<32x8xf32>
    %23 = vector.extract_strided_slice %14 {offsets = [0, 8], sizes = [32, 8], strides = [1, 1]} : vector<32x22xf32> to vector<32x8xf32>
    %24 = vector.extract_strided_slice %14 {offsets = [0, 9], sizes = [32, 8], strides = [1, 1]} : vector<32x22xf32> to vector<32x8xf32>
    %25 = vector.extract_strided_slice %14 {offsets = [0, 10], sizes = [32, 8], strides = [1, 1]} : vector<32x22xf32> to vector<32x8xf32>
    %26 = vector.extract_strided_slice %14 {offsets = [0, 11], sizes = [32, 8], strides = [1, 1]} : vector<32x22xf32> to vector<32x8xf32>
    %27 = vector.extract_strided_slice %14 {offsets = [0, 12], sizes = [32, 8], strides = [1, 1]} : vector<32x22xf32> to vector<32x8xf32>
    %28 = vector.extract_strided_slice %14 {offsets = [0, 13], sizes = [32, 8], strides = [1, 1]} : vector<32x22xf32> to vector<32x8xf32>
    %29 = vector.extract_strided_slice %14 {offsets = [0, 14], sizes = [32, 8], strides = [1, 1]} : vector<32x22xf32> to vector<32x8xf32>
    %30 = tpu.concatenate %15, %16, %17, %18, %19, %20, %21, %22, %23, %24, %25, %26, %27, %28, %29 in 0 : vector<32x8xf32>, vector<32x8xf32>, vector<32x8xf32>, vector<32x8xf32>, vector<32x8xf32>, vector<32x8xf32>, vector<32x8xf32>, vector<32x8xf32>, vector<32x8xf32>, vector<32x8xf32>, vector<32x8xf32>, vector<32x8xf32>, vector<32x8xf32>, vector<32x8xf32>, vector<32x8xf32> -> vector<480x8xf32>
    %31 = arith.truncf %30 : vector<480x8xf32> to vector<480x8xbf16>
    %c0_8 = arith.constant 0 : index
    %c0_9 = arith.constant 0 : index
    %32 = vector.load %arg4[%c0_8, %c0_9] : memref<32x480xbf16, #tpu.memory_space<vmem>>, vector<32x480xbf16>
    %cst_10 = arith.constant dense<0.000000e+00> : vector<32x8xf32>
    %33 = tpu.matmul %32, %31, %cst_10 {dimension_numbers = #tpu.dot_dimension_numbers<[1], [0], [0], [1], [0, 0, 1, 1], [], []>} : vector<32x480xbf16>, vector<480x8xbf16>, vector<32x8xf32> -> vector<32x8xf32>
    %c0_11 = arith.constant 0 : index
    %c0_12 = arith.constant 0 : index
    %c0_13 = arith.constant 0 : index
    %34 = vector.load %arg5[%c0_11, %c0_12, %c0_13] : memref<1x32x8xf32, #tpu.memory_space<vmem>>, vector<1x32x8xf32>
    %35 = vector.shape_cast %34 : vector<1x32x8xf32> to vector<32x8xf32>
    %36 = vector.shape_cast %33 : vector<32x8xf32> to vector<1x32x8xf32>
    tpu.vector_store %arg5[%c0_11, %c0_12, %c0_13], %36 {strides = array<i32>} : memref<1x32x8xf32, #tpu.memory_space<vmem>>, vector<1x32x8xf32>,
    %cst_14 = arith.constant dense<0.000000e+00> : vector<32xf32>
    %37 = vector.multi_reduction <add>, %33, %cst_14 [1] : vector<32x8xf32> to vector<32xf32>
    %38 = vector.shape_cast %37 : vector<32xf32> to vector<32x1xf32>
    %39 = arith.mulf %33, %33 : vector<32x8xf32>
    %cst_15 = arith.constant dense<0.000000e+00> : vector<32xf32>
    %40 = vector.multi_reduction <add>, %39, %cst_15 [1] : vector<32x8xf32> to vector<32xf32>
    %41 = vector.shape_cast %40 : vector<32xf32> to vector<32x1xf32>
    %42 = tpu.concatenate %38, %41 in 1 : vector<32x1xf32>, vector<32x1xf32> -> vector<32x2xf32>
    %c0_16 = arith.constant 0 : index
    %c0_17 = arith.constant 0 : index
    %c0_18 = arith.constant 0 : index
    %43 = vector.load %arg6[%c0_16, %c0_17, %c0_18] : memref<1x32x2xf32, #tpu.memory_space<vmem>>, vector<1x32x2xf32>
    %44 = vector.shape_cast %43 : vector<1x32x2xf32> to vector<32x2xf32>
    %45 = vector.shape_cast %42 : vector<32x2xf32> to vector<1x32x2xf32>
    tpu.vector_store %arg6[%c0_16, %c0_17, %c0_18], %45 {strides = array<i32>} : memref<1x32x2xf32, #tpu.memory_space<vmem>>, vector<1x32x2xf32>,
    return
  }
  func.func @transform_0(%arg0: i32) -> (i32, i32, i32) {
    %c0_i32 = arith.constant 0 : i32
    %c0_i32_0 = arith.constant 0 : i32
    %c0_i32_1 = arith.constant 0 : i32
    return %arg0, %c0_i32, %c0_i32_0 : i32, i32, i32
  }
  func.func @transform_1(%arg0: i32) -> (i32, i32) {
    %c0_i32 = arith.constant 0 : i32
    %c0_i32_0 = arith.constant 0 : i32
    %c0_i32_1 = arith.constant 0 : i32
    return %c0_i32, %c0_i32_0 : i32, i32
  }
  func.func @transform_2(%arg0: i32) -> (i32, i32) {
    %c0_i32 = arith.constant 0 : i32
    %c0_i32_0 = arith.constant 0 : i32
    %c0_i32_1 = arith.constant 0 : i32
    return %c0_i32, %c0_i32_0 : i32, i32
  }
  func.func @transform_3(%arg0: i32) -> (i32, i32) {
    %c0_i32 = arith.constant 0 : i32
    %c0_i32_0 = arith.constant 0 : i32
    %c0_i32_1 = arith.constant 0 : i32
    return %c0_i32, %c0_i32_0 : i32, i32
  }
  func.func @transform_4(%arg0: i32) -> (i32, i32, i32) {
    %c0_i32 = arith.constant 0 : i32
    %c0_i32_0 = arith.constant 0 : i32
    %c0_i32_1 = arith.constant 0 : i32
    return %arg0, %c0_i32, %c0_i32_0 : i32, i32, i32
  }
  func.func @transform_5(%arg0: i32) -> (i32, i32, i32) {
    %c0_i32 = arith.constant 0 : i32
    %c0_i32_0 = arith.constant 0 : i32
    %c0_i32_1 = arith.constant 0 : i32
    return %arg0, %c0_i32, %c0_i32_0 : i32, i32, i32
  }
}

module attributes {stable_mosaic.version = 11 : i64} {
  func.func @_conv_layer_kernel(%arg0: i32, %arg1: memref<1x24x16xf32, #tpu.memory_space<vmem>>, %arg2: memref<24x1xf32, #tpu.memory_space<vmem>>, %arg3: memref<24x1xf32, #tpu.memory_space<vmem>>, %arg4: memref<32x360xbf16, #tpu.memory_space<vmem>>, %arg5: memref<1x32x16xf32, #tpu.memory_space<vmem>>, %arg6: memref<1x32x2xf32, #tpu.memory_space<vmem>>) attributes {dimension_semantics = [#tpu.dimension_semantics<parallel>], iteration_bounds = array<i64: 2>, scalar_prefetch = 0 : i64, scratch_operands = 0 : i64, tpu.core_type = #tpu.core_type<tc>, window_params = [{transform_indices = @transform_0, window_bounds = array<i64: 1, 24, 16>}, {pipeline_mode = #tpu.pipeline_mode<synchronous>, transform_indices = @transform_1, window_bounds = array<i64: 24, 1>}, {pipeline_mode = #tpu.pipeline_mode<synchronous>, transform_indices = @transform_2, window_bounds = array<i64: 24, 1>}, {pipeline_mode = #tpu.pipeline_mode<synchronous>, transform_indices = @transform_3, window_bounds = array<i64: 32, 360>}, {transform_indices = @transform_4, window_bounds = array<i64: 1, 32, 16>}, {transform_indices = @transform_5, window_bounds = array<i64: 1, 32, 2>}]} {
    %c0 = arith.constant 0 : index
    %c0_0 = arith.constant 0 : index
    %c0_1 = arith.constant 0 : index
    %0 = vector.load %arg1[%c0, %c0_0, %c0_1] : memref<1x24x16xf32, #tpu.memory_space<vmem>>, vector<1x24x16xf32>
    %1 = vector.shape_cast %0 : vector<1x24x16xf32> to vector<24x16xf32>
    %c0_2 = arith.constant 0 : index
    %c0_3 = arith.constant 0 : index
    %2 = vector.load %arg2[%c0_2, %c0_3] : memref<24x1xf32, #tpu.memory_space<vmem>>, vector<24x1xf32>
    %c0_4 = arith.constant 0 : index
    %c0_5 = arith.constant 0 : index
    %3 = vector.load %arg3[%c0_4, %c0_5] : memref<24x1xf32, #tpu.memory_space<vmem>>, vector<24x1xf32>
    %4 = vector.broadcast %2 : vector<24x1xf32> to vector<24x16xf32>
    %5 = arith.mulf %1, %4 : vector<24x16xf32>
    %6 = vector.broadcast %3 : vector<24x1xf32> to vector<24x16xf32>
    %7 = arith.addf %5, %6 : vector<24x16xf32>
    %cst = arith.constant 0.000000e+00 : f32
    %8 = vector.broadcast %cst : f32 to vector<24x16xf32>
    %9 = arith.cmpf oge, %7, %8 : vector<24x16xf32>
    %cst_6 = arith.constant 1.000000e-01 : f32
    %10 = vector.broadcast %cst_6 : f32 to vector<24x16xf32>
    %11 = arith.mulf %10, %7 : vector<24x16xf32>
    %12 = arith.select %9, %7, %11 : vector<24x16xi1>, vector<24x16xf32>
    %cst_7 = arith.constant 0.000000e+00 : f32
    %13 = vector.broadcast %cst_7 : f32 to vector<24x7xf32>
    %14 = tpu.concatenate %13, %12, %13 in 1 : vector<24x7xf32>, vector<24x16xf32>, vector<24x7xf32> -> vector<24x30xf32>
    %15 = vector.extract_strided_slice %14 {offsets = [0, 0], sizes = [24, 16], strides = [1, 1]} : vector<24x30xf32> to vector<24x16xf32>
    %16 = vector.extract_strided_slice %14 {offsets = [0, 1], sizes = [24, 16], strides = [1, 1]} : vector<24x30xf32> to vector<24x16xf32>
    %17 = vector.extract_strided_slice %14 {offsets = [0, 2], sizes = [24, 16], strides = [1, 1]} : vector<24x30xf32> to vector<24x16xf32>
    %18 = vector.extract_strided_slice %14 {offsets = [0, 3], sizes = [24, 16], strides = [1, 1]} : vector<24x30xf32> to vector<24x16xf32>
    %19 = vector.extract_strided_slice %14 {offsets = [0, 4], sizes = [24, 16], strides = [1, 1]} : vector<24x30xf32> to vector<24x16xf32>
    %20 = vector.extract_strided_slice %14 {offsets = [0, 5], sizes = [24, 16], strides = [1, 1]} : vector<24x30xf32> to vector<24x16xf32>
    %21 = vector.extract_strided_slice %14 {offsets = [0, 6], sizes = [24, 16], strides = [1, 1]} : vector<24x30xf32> to vector<24x16xf32>
    %22 = vector.extract_strided_slice %14 {offsets = [0, 7], sizes = [24, 16], strides = [1, 1]} : vector<24x30xf32> to vector<24x16xf32>
    %23 = vector.extract_strided_slice %14 {offsets = [0, 8], sizes = [24, 16], strides = [1, 1]} : vector<24x30xf32> to vector<24x16xf32>
    %24 = vector.extract_strided_slice %14 {offsets = [0, 9], sizes = [24, 16], strides = [1, 1]} : vector<24x30xf32> to vector<24x16xf32>
    %25 = vector.extract_strided_slice %14 {offsets = [0, 10], sizes = [24, 16], strides = [1, 1]} : vector<24x30xf32> to vector<24x16xf32>
    %26 = vector.extract_strided_slice %14 {offsets = [0, 11], sizes = [24, 16], strides = [1, 1]} : vector<24x30xf32> to vector<24x16xf32>
    %27 = vector.extract_strided_slice %14 {offsets = [0, 12], sizes = [24, 16], strides = [1, 1]} : vector<24x30xf32> to vector<24x16xf32>
    %28 = vector.extract_strided_slice %14 {offsets = [0, 13], sizes = [24, 16], strides = [1, 1]} : vector<24x30xf32> to vector<24x16xf32>
    %29 = vector.extract_strided_slice %14 {offsets = [0, 14], sizes = [24, 16], strides = [1, 1]} : vector<24x30xf32> to vector<24x16xf32>
    %30 = tpu.concatenate %15, %16, %17, %18, %19, %20, %21, %22, %23, %24, %25, %26, %27, %28, %29 in 0 : vector<24x16xf32>, vector<24x16xf32>, vector<24x16xf32>, vector<24x16xf32>, vector<24x16xf32>, vector<24x16xf32>, vector<24x16xf32>, vector<24x16xf32>, vector<24x16xf32>, vector<24x16xf32>, vector<24x16xf32>, vector<24x16xf32>, vector<24x16xf32>, vector<24x16xf32>, vector<24x16xf32> -> vector<360x16xf32>
    %31 = arith.truncf %30 : vector<360x16xf32> to vector<360x16xbf16>
    %c0_8 = arith.constant 0 : index
    %c0_9 = arith.constant 0 : index
    %32 = vector.load %arg4[%c0_8, %c0_9] : memref<32x360xbf16, #tpu.memory_space<vmem>>, vector<32x360xbf16>
    %cst_10 = arith.constant dense<0.000000e+00> : vector<32x16xf32>
    %33 = tpu.matmul %32, %31, %cst_10 {dimension_numbers = #tpu.dot_dimension_numbers<[1], [0], [0], [1], [0, 0, 1, 1], [], []>} : vector<32x360xbf16>, vector<360x16xbf16>, vector<32x16xf32> -> vector<32x16xf32>
    %c0_11 = arith.constant 0 : index
    %c0_12 = arith.constant 0 : index
    %c0_13 = arith.constant 0 : index
    %34 = vector.load %arg5[%c0_11, %c0_12, %c0_13] : memref<1x32x16xf32, #tpu.memory_space<vmem>>, vector<1x32x16xf32>
    %35 = vector.shape_cast %34 : vector<1x32x16xf32> to vector<32x16xf32>
    %36 = vector.shape_cast %33 : vector<32x16xf32> to vector<1x32x16xf32>
    tpu.vector_store %arg5[%c0_11, %c0_12, %c0_13], %36 {strides = array<i32>} : memref<1x32x16xf32, #tpu.memory_space<vmem>>, vector<1x32x16xf32>,
    %cst_14 = arith.constant dense<0.000000e+00> : vector<32xf32>
    %37 = vector.multi_reduction <add>, %33, %cst_14 [1] : vector<32x16xf32> to vector<32xf32>
    %38 = vector.shape_cast %37 : vector<32xf32> to vector<32x1xf32>
    %39 = arith.mulf %33, %33 : vector<32x16xf32>
    %cst_15 = arith.constant dense<0.000000e+00> : vector<32xf32>
    %40 = vector.multi_reduction <add>, %39, %cst_15 [1] : vector<32x16xf32> to vector<32xf32>
    %41 = vector.shape_cast %40 : vector<32xf32> to vector<32x1xf32>
    %42 = tpu.concatenate %38, %41 in 1 : vector<32x1xf32>, vector<32x1xf32> -> vector<32x2xf32>
    %c0_16 = arith.constant 0 : index
    %c0_17 = arith.constant 0 : index
    %c0_18 = arith.constant 0 : index
    %43 = vector.load %arg6[%c0_16, %c0_17, %c0_18] : memref<1x32x2xf32, #tpu.memory_space<vmem>>, vector<1x32x2xf32>
    %44 = vector.shape_cast %43 : vector<1x32x2xf32> to vector<32x2xf32>
    %45 = vector.shape_cast %42 : vector<32x2xf32> to vector<1x32x2xf32>
    tpu.vector_store %arg6[%c0_16, %c0_17, %c0_18], %45 {strides = array<i32>} : memref<1x32x2xf32, #tpu.memory_space<vmem>>, vector<1x32x2xf32>,
    return
  }
  func.func @transform_0(%arg0: i32) -> (i32, i32, i32) {
    %c0_i32 = arith.constant 0 : i32
    %c0_i32_0 = arith.constant 0 : i32
    %c0_i32_1 = arith.constant 0 : i32
    return %arg0, %c0_i32, %c0_i32_0 : i32, i32, i32
  }
  func.func @transform_1(%arg0: i32) -> (i32, i32) {
    %c0_i32 = arith.constant 0 : i32
    %c0_i32_0 = arith.constant 0 : i32
    %c0_i32_1 = arith.constant 0 : i32
    return %c0_i32, %c0_i32_0 : i32, i32
  }
  func.func @transform_2(%arg0: i32) -> (i32, i32) {
    %c0_i32 = arith.constant 0 : i32
    %c0_i32_0 = arith.constant 0 : i32
    %c0_i32_1 = arith.constant 0 : i32
    return %c0_i32, %c0_i32_0 : i32, i32
  }
  func.func @transform_3(%arg0: i32) -> (i32, i32) {
    %c0_i32 = arith.constant 0 : i32
    %c0_i32_0 = arith.constant 0 : i32
    %c0_i32_1 = arith.constant 0 : i32
    return %c0_i32, %c0_i32_0 : i32, i32
  }
  func.func @transform_4(%arg0: i32) -> (i32, i32, i32) {
    %c0_i32 = arith.constant 0 : i32
    %c0_i32_0 = arith.constant 0 : i32
    %c0_i32_1 = arith.constant 0 : i32
    return %arg0, %c0_i32, %c0_i32_0 : i32, i32, i32
  }
  func.func @transform_5(%arg0: i32) -> (i32, i32, i32) {
    %c0_i32 = arith.constant 0 : i32
    %c0_i32_0 = arith.constant 0 : i32
    %c0_i32_1 = arith.constant 0 : i32
    return %arg0, %c0_i32, %c0_i32_0 : i32, i32, i32
  }
}

module attributes {stable_mosaic.version = 11 : i64} {
  func.func @_conv_layer_kernel(%arg0: i32, %arg1: memref<1x32x16xf32, #tpu.memory_space<vmem>>, %arg2: memref<1x32x16xf32, #tpu.memory_space<vmem>>, %arg3: memref<32x1xf32, #tpu.memory_space<vmem>>, %arg4: memref<32x1xf32, #tpu.memory_space<vmem>>, %arg5: memref<32x320xbf16, #tpu.memory_space<vmem>>, %arg6: memref<1x32x16xf32, #tpu.memory_space<vmem>>, %arg7: memref<1x32x2xf32, #tpu.memory_space<vmem>>) attributes {dimension_semantics = [#tpu.dimension_semantics<parallel>], iteration_bounds = array<i64: 2>, scalar_prefetch = 0 : i64, scratch_operands = 0 : i64, tpu.core_type = #tpu.core_type<tc>, window_params = [{transform_indices = @transform_0, window_bounds = array<i64: 1, 32, 16>}, {transform_indices = @transform_1, window_bounds = array<i64: 1, 32, 16>}, {pipeline_mode = #tpu.pipeline_mode<synchronous>, transform_indices = @transform_2, window_bounds = array<i64: 32, 1>}, {pipeline_mode = #tpu.pipeline_mode<synchronous>, transform_indices = @transform_3, window_bounds = array<i64: 32, 1>}, {pipeline_mode = #tpu.pipeline_mode<synchronous>, transform_indices = @transform_4, window_bounds = array<i64: 32, 320>}, {transform_indices = @transform_5, window_bounds = array<i64: 1, 32, 16>}, {transform_indices = @transform_6, window_bounds = array<i64: 1, 32, 2>}]} {
    %c0 = arith.constant 0 : index
    %c0_0 = arith.constant 0 : index
    %c0_1 = arith.constant 0 : index
    %0 = vector.load %arg1[%c0, %c0_0, %c0_1] : memref<1x32x16xf32, #tpu.memory_space<vmem>>, vector<1x32x16xf32>
    %1 = vector.shape_cast %0 : vector<1x32x16xf32> to vector<32x16xf32>
    %cst = arith.constant 0.000000e+00 : f32
    %2 = vector.broadcast %cst : f32 to vector<32x2xf32>
    %3 = tpu.concatenate %2, %1, %2 in 1 : vector<32x2xf32>, vector<32x16xf32>, vector<32x2xf32> -> vector<32x20xf32>
    %c0_2 = arith.constant 0 : index
    %c0_3 = arith.constant 0 : index
    %c0_4 = arith.constant 0 : index
    %4 = vector.load %arg2[%c0_2, %c0_3, %c0_4] : memref<1x32x16xf32, #tpu.memory_space<vmem>>, vector<1x32x16xf32>
    %5 = vector.shape_cast %4 : vector<1x32x16xf32> to vector<32x16xf32>
    %c0_5 = arith.constant 0 : index
    %c0_6 = arith.constant 0 : index
    %6 = vector.load %arg3[%c0_5, %c0_6] : memref<32x1xf32, #tpu.memory_space<vmem>>, vector<32x1xf32>
    %c0_7 = arith.constant 0 : index
    %c0_8 = arith.constant 0 : index
    %7 = vector.load %arg4[%c0_7, %c0_8] : memref<32x1xf32, #tpu.memory_space<vmem>>, vector<32x1xf32>
    %8 = vector.broadcast %6 : vector<32x1xf32> to vector<32x16xf32>
    %9 = arith.mulf %5, %8 : vector<32x16xf32>
    %10 = vector.broadcast %7 : vector<32x1xf32> to vector<32x16xf32>
    %11 = arith.addf %9, %10 : vector<32x16xf32>
    %cst_9 = arith.constant 0.000000e+00 : f32
    %12 = vector.broadcast %cst_9 : f32 to vector<32x16xf32>
    %13 = arith.cmpf oge, %11, %12 : vector<32x16xf32>
    %cst_10 = arith.constant 1.000000e-01 : f32
    %14 = vector.broadcast %cst_10 : f32 to vector<32x16xf32>
    %15 = arith.mulf %14, %11 : vector<32x16xf32>
    %16 = arith.select %13, %11, %15 : vector<32x16xi1>, vector<32x16xf32>
    %cst_11 = arith.constant 0.000000e+00 : f32
    %17 = vector.broadcast %cst_11 : f32 to vector<32x2xf32>
    %18 = tpu.concatenate %17, %16, %17 in 1 : vector<32x2xf32>, vector<32x16xf32>, vector<32x2xf32> -> vector<32x20xf32>
    %19 = vector.extract_strided_slice %3 {offsets = [0, 0], sizes = [32, 16], strides = [1, 1]} : vector<32x20xf32> to vector<32x16xf32>
    %20 = vector.extract_strided_slice %18 {offsets = [0, 0], sizes = [32, 16], strides = [1, 1]} : vector<32x20xf32> to vector<32x16xf32>
    %21 = vector.extract_strided_slice %3 {offsets = [0, 1], sizes = [32, 16], strides = [1, 1]} : vector<32x20xf32> to vector<32x16xf32>
    %22 = vector.extract_strided_slice %18 {offsets = [0, 1], sizes = [32, 16], strides = [1, 1]} : vector<32x20xf32> to vector<32x16xf32>
    %23 = vector.extract_strided_slice %3 {offsets = [0, 2], sizes = [32, 16], strides = [1, 1]} : vector<32x20xf32> to vector<32x16xf32>
    %24 = vector.extract_strided_slice %18 {offsets = [0, 2], sizes = [32, 16], strides = [1, 1]} : vector<32x20xf32> to vector<32x16xf32>
    %25 = vector.extract_strided_slice %3 {offsets = [0, 3], sizes = [32, 16], strides = [1, 1]} : vector<32x20xf32> to vector<32x16xf32>
    %26 = vector.extract_strided_slice %18 {offsets = [0, 3], sizes = [32, 16], strides = [1, 1]} : vector<32x20xf32> to vector<32x16xf32>
    %27 = vector.extract_strided_slice %3 {offsets = [0, 4], sizes = [32, 16], strides = [1, 1]} : vector<32x20xf32> to vector<32x16xf32>
    %28 = vector.extract_strided_slice %18 {offsets = [0, 4], sizes = [32, 16], strides = [1, 1]} : vector<32x20xf32> to vector<32x16xf32>
    %29 = tpu.concatenate %19, %20, %21, %22, %23, %24, %25, %26, %27, %28 in 0 : vector<32x16xf32>, vector<32x16xf32>, vector<32x16xf32>, vector<32x16xf32>, vector<32x16xf32>, vector<32x16xf32>, vector<32x16xf32>, vector<32x16xf32>, vector<32x16xf32>, vector<32x16xf32> -> vector<320x16xf32>
    %30 = arith.truncf %29 : vector<320x16xf32> to vector<320x16xbf16>
    %c0_12 = arith.constant 0 : index
    %c0_13 = arith.constant 0 : index
    %31 = vector.load %arg5[%c0_12, %c0_13] : memref<32x320xbf16, #tpu.memory_space<vmem>>, vector<32x320xbf16>
    %cst_14 = arith.constant dense<0.000000e+00> : vector<32x16xf32>
    %32 = tpu.matmul %31, %30, %cst_14 {dimension_numbers = #tpu.dot_dimension_numbers<[1], [0], [0], [1], [0, 0, 1, 1], [], []>} : vector<32x320xbf16>, vector<320x16xbf16>, vector<32x16xf32> -> vector<32x16xf32>
    %c0_15 = arith.constant 0 : index
    %c0_16 = arith.constant 0 : index
    %c0_17 = arith.constant 0 : index
    %33 = vector.load %arg6[%c0_15, %c0_16, %c0_17] : memref<1x32x16xf32, #tpu.memory_space<vmem>>, vector<1x32x16xf32>
    %34 = vector.shape_cast %33 : vector<1x32x16xf32> to vector<32x16xf32>
    %35 = vector.shape_cast %32 : vector<32x16xf32> to vector<1x32x16xf32>
    tpu.vector_store %arg6[%c0_15, %c0_16, %c0_17], %35 {strides = array<i32>} : memref<1x32x16xf32, #tpu.memory_space<vmem>>, vector<1x32x16xf32>,
    %cst_18 = arith.constant dense<0.000000e+00> : vector<32xf32>
    %36 = vector.multi_reduction <add>, %32, %cst_18 [1] : vector<32x16xf32> to vector<32xf32>
    %37 = vector.shape_cast %36 : vector<32xf32> to vector<32x1xf32>
    %38 = arith.mulf %32, %32 : vector<32x16xf32>
    %cst_19 = arith.constant dense<0.000000e+00> : vector<32xf32>
    %39 = vector.multi_reduction <add>, %38, %cst_19 [1] : vector<32x16xf32> to vector<32xf32>
    %40 = vector.shape_cast %39 : vector<32xf32> to vector<32x1xf32>
    %41 = tpu.concatenate %37, %40 in 1 : vector<32x1xf32>, vector<32x1xf32> -> vector<32x2xf32>
    %c0_20 = arith.constant 0 : index
    %c0_21 = arith.constant 0 : index
    %c0_22 = arith.constant 0 : index
    %42 = vector.load %arg7[%c0_20, %c0_21, %c0_22] : memref<1x32x2xf32, #tpu.memory_space<vmem>>, vector<1x32x2xf32>
    %43 = vector.shape_cast %42 : vector<1x32x2xf32> to vector<32x2xf32>
    %44 = vector.shape_cast %41 : vector<32x2xf32> to vector<1x32x2xf32>
    tpu.vector_store %arg7[%c0_20, %c0_21, %c0_22], %44 {strides = array<i32>} : memref<1x32x2xf32, #tpu.memory_space<vmem>>, vector<1x32x2xf32>,
    return
  }
  func.func @transform_0(%arg0: i32) -> (i32, i32, i32) {
    %c0_i32 = arith.constant 0 : i32
    %c0_i32_0 = arith.constant 0 : i32
    %c0_i32_1 = arith.constant 0 : i32
    return %arg0, %c0_i32, %c0_i32_0 : i32, i32, i32
  }
  func.func @transform_1(%arg0: i32) -> (i32, i32, i32) {
    %c0_i32 = arith.constant 0 : i32
    %c0_i32_0 = arith.constant 0 : i32
    %c0_i32_1 = arith.constant 0 : i32
    return %arg0, %c0_i32, %c0_i32_0 : i32, i32, i32
  }
  func.func @transform_2(%arg0: i32) -> (i32, i32) {
    %c0_i32 = arith.constant 0 : i32
    %c0_i32_0 = arith.constant 0 : i32
    %c0_i32_1 = arith.constant 0 : i32
    return %c0_i32, %c0_i32_0 : i32, i32
  }
  func.func @transform_3(%arg0: i32) -> (i32, i32) {
    %c0_i32 = arith.constant 0 : i32
    %c0_i32_0 = arith.constant 0 : i32
    %c0_i32_1 = arith.constant 0 : i32
    return %c0_i32, %c0_i32_0 : i32, i32
  }
  func.func @transform_4(%arg0: i32) -> (i32, i32) {
    %c0_i32 = arith.constant 0 : i32
    %c0_i32_0 = arith.constant 0 : i32
    %c0_i32_1 = arith.constant 0 : i32
    return %c0_i32, %c0_i32_0 : i32, i32
  }
  func.func @transform_5(%arg0: i32) -> (i32, i32, i32) {
    %c0_i32 = arith.constant 0 : i32
    %c0_i32_0 = arith.constant 0 : i32
    %c0_i32_1 = arith.constant 0 : i32
    return %arg0, %c0_i32, %c0_i32_0 : i32, i32, i32
  }
  func.func @transform_6(%arg0: i32) -> (i32, i32, i32) {
    %c0_i32 = arith.constant 0 : i32
    %c0_i32_0 = arith.constant 0 : i32
    %c0_i32_1 = arith.constant 0 : i32
    return %arg0, %c0_i32, %c0_i32_0 : i32, i32, i32
  }
}

module attributes {stable_mosaic.version = 11 : i64} {
  func.func @_conv_layer_kernel(%arg0: i32, %arg1: memref<1x32x32xf32, #tpu.memory_space<vmem>>, %arg2: memref<1x24x32xf32, #tpu.memory_space<vmem>>, %arg3: memref<24x1xf32, #tpu.memory_space<vmem>>, %arg4: memref<24x1xf32, #tpu.memory_space<vmem>>, %arg5: memref<24x280xbf16, #tpu.memory_space<vmem>>, %arg6: memref<1x24x32xf32, #tpu.memory_space<vmem>>, %arg7: memref<1x24x2xf32, #tpu.memory_space<vmem>>) attributes {dimension_semantics = [#tpu.dimension_semantics<parallel>], iteration_bounds = array<i64: 2>, scalar_prefetch = 0 : i64, scratch_operands = 0 : i64, tpu.core_type = #tpu.core_type<tc>, window_params = [{transform_indices = @transform_0, window_bounds = array<i64: 1, 32, 32>}, {transform_indices = @transform_1, window_bounds = array<i64: 1, 24, 32>}, {pipeline_mode = #tpu.pipeline_mode<synchronous>, transform_indices = @transform_2, window_bounds = array<i64: 24, 1>}, {pipeline_mode = #tpu.pipeline_mode<synchronous>, transform_indices = @transform_3, window_bounds = array<i64: 24, 1>}, {pipeline_mode = #tpu.pipeline_mode<synchronous>, transform_indices = @transform_4, window_bounds = array<i64: 24, 280>}, {transform_indices = @transform_5, window_bounds = array<i64: 1, 24, 32>}, {transform_indices = @transform_6, window_bounds = array<i64: 1, 24, 2>}]} {
    %c0 = arith.constant 0 : index
    %c0_0 = arith.constant 0 : index
    %c0_1 = arith.constant 0 : index
    %0 = vector.load %arg1[%c0, %c0_0, %c0_1] : memref<1x32x32xf32, #tpu.memory_space<vmem>>, vector<1x32x32xf32>
    %1 = vector.shape_cast %0 : vector<1x32x32xf32> to vector<32x32xf32>
    %cst = arith.constant 0.000000e+00 : f32
    %2 = vector.broadcast %cst : f32 to vector<32x2xf32>
    %3 = tpu.concatenate %2, %1, %2 in 1 : vector<32x2xf32>, vector<32x32xf32>, vector<32x2xf32> -> vector<32x36xf32>
    %c0_2 = arith.constant 0 : index
    %c0_3 = arith.constant 0 : index
    %c0_4 = arith.constant 0 : index
    %4 = vector.load %arg2[%c0_2, %c0_3, %c0_4] : memref<1x24x32xf32, #tpu.memory_space<vmem>>, vector<1x24x32xf32>
    %5 = vector.shape_cast %4 : vector<1x24x32xf32> to vector<24x32xf32>
    %c0_5 = arith.constant 0 : index
    %c0_6 = arith.constant 0 : index
    %6 = vector.load %arg3[%c0_5, %c0_6] : memref<24x1xf32, #tpu.memory_space<vmem>>, vector<24x1xf32>
    %c0_7 = arith.constant 0 : index
    %c0_8 = arith.constant 0 : index
    %7 = vector.load %arg4[%c0_7, %c0_8] : memref<24x1xf32, #tpu.memory_space<vmem>>, vector<24x1xf32>
    %8 = vector.broadcast %6 : vector<24x1xf32> to vector<24x32xf32>
    %9 = arith.mulf %5, %8 : vector<24x32xf32>
    %10 = vector.broadcast %7 : vector<24x1xf32> to vector<24x32xf32>
    %11 = arith.addf %9, %10 : vector<24x32xf32>
    %cst_9 = arith.constant 0.000000e+00 : f32
    %12 = vector.broadcast %cst_9 : f32 to vector<24x32xf32>
    %13 = arith.cmpf oge, %11, %12 : vector<24x32xf32>
    %cst_10 = arith.constant 1.000000e-01 : f32
    %14 = vector.broadcast %cst_10 : f32 to vector<24x32xf32>
    %15 = arith.mulf %14, %11 : vector<24x32xf32>
    %16 = arith.select %13, %11, %15 : vector<24x32xi1>, vector<24x32xf32>
    %cst_11 = arith.constant 0.000000e+00 : f32
    %17 = vector.broadcast %cst_11 : f32 to vector<24x2xf32>
    %18 = tpu.concatenate %17, %16, %17 in 1 : vector<24x2xf32>, vector<24x32xf32>, vector<24x2xf32> -> vector<24x36xf32>
    %19 = vector.extract_strided_slice %3 {offsets = [0, 0], sizes = [32, 32], strides = [1, 1]} : vector<32x36xf32> to vector<32x32xf32>
    %20 = vector.extract_strided_slice %18 {offsets = [0, 0], sizes = [24, 32], strides = [1, 1]} : vector<24x36xf32> to vector<24x32xf32>
    %21 = vector.extract_strided_slice %3 {offsets = [0, 1], sizes = [32, 32], strides = [1, 1]} : vector<32x36xf32> to vector<32x32xf32>
    %22 = vector.extract_strided_slice %18 {offsets = [0, 1], sizes = [24, 32], strides = [1, 1]} : vector<24x36xf32> to vector<24x32xf32>
    %23 = vector.extract_strided_slice %3 {offsets = [0, 2], sizes = [32, 32], strides = [1, 1]} : vector<32x36xf32> to vector<32x32xf32>
    %24 = vector.extract_strided_slice %18 {offsets = [0, 2], sizes = [24, 32], strides = [1, 1]} : vector<24x36xf32> to vector<24x32xf32>
    %25 = vector.extract_strided_slice %3 {offsets = [0, 3], sizes = [32, 32], strides = [1, 1]} : vector<32x36xf32> to vector<32x32xf32>
    %26 = vector.extract_strided_slice %18 {offsets = [0, 3], sizes = [24, 32], strides = [1, 1]} : vector<24x36xf32> to vector<24x32xf32>
    %27 = vector.extract_strided_slice %3 {offsets = [0, 4], sizes = [32, 32], strides = [1, 1]} : vector<32x36xf32> to vector<32x32xf32>
    %28 = vector.extract_strided_slice %18 {offsets = [0, 4], sizes = [24, 32], strides = [1, 1]} : vector<24x36xf32> to vector<24x32xf32>
    %29 = tpu.concatenate %19, %20, %21, %22, %23, %24, %25, %26, %27, %28 in 0 : vector<32x32xf32>, vector<24x32xf32>, vector<32x32xf32>, vector<24x32xf32>, vector<32x32xf32>, vector<24x32xf32>, vector<32x32xf32>, vector<24x32xf32>, vector<32x32xf32>, vector<24x32xf32> -> vector<280x32xf32>
    %30 = arith.truncf %29 : vector<280x32xf32> to vector<280x32xbf16>
    %c0_12 = arith.constant 0 : index
    %c0_13 = arith.constant 0 : index
    %31 = vector.load %arg5[%c0_12, %c0_13] : memref<24x280xbf16, #tpu.memory_space<vmem>>, vector<24x280xbf16>
    %cst_14 = arith.constant dense<0.000000e+00> : vector<24x32xf32>
    %32 = tpu.matmul %31, %30, %cst_14 {dimension_numbers = #tpu.dot_dimension_numbers<[1], [0], [0], [1], [0, 0, 1, 1], [], []>} : vector<24x280xbf16>, vector<280x32xbf16>, vector<24x32xf32> -> vector<24x32xf32>
    %c0_15 = arith.constant 0 : index
    %c0_16 = arith.constant 0 : index
    %c0_17 = arith.constant 0 : index
    %33 = vector.load %arg6[%c0_15, %c0_16, %c0_17] : memref<1x24x32xf32, #tpu.memory_space<vmem>>, vector<1x24x32xf32>
    %34 = vector.shape_cast %33 : vector<1x24x32xf32> to vector<24x32xf32>
    %35 = vector.shape_cast %32 : vector<24x32xf32> to vector<1x24x32xf32>
    tpu.vector_store %arg6[%c0_15, %c0_16, %c0_17], %35 {strides = array<i32>} : memref<1x24x32xf32, #tpu.memory_space<vmem>>, vector<1x24x32xf32>,
    %cst_18 = arith.constant dense<0.000000e+00> : vector<24xf32>
    %36 = vector.multi_reduction <add>, %32, %cst_18 [1] : vector<24x32xf32> to vector<24xf32>
    %37 = vector.shape_cast %36 : vector<24xf32> to vector<24x1xf32>
    %38 = arith.mulf %32, %32 : vector<24x32xf32>
    %cst_19 = arith.constant dense<0.000000e+00> : vector<24xf32>
    %39 = vector.multi_reduction <add>, %38, %cst_19 [1] : vector<24x32xf32> to vector<24xf32>
    %40 = vector.shape_cast %39 : vector<24xf32> to vector<24x1xf32>
    %41 = tpu.concatenate %37, %40 in 1 : vector<24x1xf32>, vector<24x1xf32> -> vector<24x2xf32>
    %c0_20 = arith.constant 0 : index
    %c0_21 = arith.constant 0 : index
    %c0_22 = arith.constant 0 : index
    %42 = vector.load %arg7[%c0_20, %c0_21, %c0_22] : memref<1x24x2xf32, #tpu.memory_space<vmem>>, vector<1x24x2xf32>
    %43 = vector.shape_cast %42 : vector<1x24x2xf32> to vector<24x2xf32>
    %44 = vector.shape_cast %41 : vector<24x2xf32> to vector<1x24x2xf32>
    tpu.vector_store %arg7[%c0_20, %c0_21, %c0_22], %44 {strides = array<i32>} : memref<1x24x2xf32, #tpu.memory_space<vmem>>, vector<1x24x2xf32>,
    return
  }
  func.func @transform_0(%arg0: i32) -> (i32, i32, i32) {
    %c0_i32 = arith.constant 0 : i32
    %c0_i32_0 = arith.constant 0 : i32
    %c0_i32_1 = arith.constant 0 : i32
    return %arg0, %c0_i32, %c0_i32_0 : i32, i32, i32
  }
  func.func @transform_1(%arg0: i32) -> (i32, i32, i32) {
    %c0_i32 = arith.constant 0 : i32
    %c0_i32_0 = arith.constant 0 : i32
    %c0_i32_1 = arith.constant 0 : i32
    return %arg0, %c0_i32, %c0_i32_0 : i32, i32, i32
  }
  func.func @transform_2(%arg0: i32) -> (i32, i32) {
    %c0_i32 = arith.constant 0 : i32
    %c0_i32_0 = arith.constant 0 : i32
    %c0_i32_1 = arith.constant 0 : i32
    return %c0_i32, %c0_i32_0 : i32, i32
  }
  func.func @transform_3(%arg0: i32) -> (i32, i32) {
    %c0_i32 = arith.constant 0 : i32
    %c0_i32_0 = arith.constant 0 : i32
    %c0_i32_1 = arith.constant 0 : i32
    return %c0_i32, %c0_i32_0 : i32, i32
  }
  func.func @transform_4(%arg0: i32) -> (i32, i32) {
    %c0_i32 = arith.constant 0 : i32
    %c0_i32_0 = arith.constant 0 : i32
    %c0_i32_1 = arith.constant 0 : i32
    return %c0_i32, %c0_i32_0 : i32, i32
  }
  func.func @transform_5(%arg0: i32) -> (i32, i32, i32) {
    %c0_i32 = arith.constant 0 : i32
    %c0_i32_0 = arith.constant 0 : i32
    %c0_i32_1 = arith.constant 0 : i32
    return %arg0, %c0_i32, %c0_i32_0 : i32, i32, i32
  }
  func.func @transform_6(%arg0: i32) -> (i32, i32, i32) {
    %c0_i32 = arith.constant 0 : i32
    %c0_i32_0 = arith.constant 0 : i32
    %c0_i32_1 = arith.constant 0 : i32
    return %arg0, %c0_i32, %c0_i32_0 : i32, i32, i32
  }
}

module attributes {stable_mosaic.version = 11 : i64} {
  func.func @_conv_layer_kernel(%arg0: i32, %arg1: memref<1x24x64xf32, #tpu.memory_space<vmem>>, %arg2: memref<1x16x64xf32, #tpu.memory_space<vmem>>, %arg3: memref<16x1xf32, #tpu.memory_space<vmem>>, %arg4: memref<16x1xf32, #tpu.memory_space<vmem>>, %arg5: memref<16x200xbf16, #tpu.memory_space<vmem>>, %arg6: memref<1x16x64xf32, #tpu.memory_space<vmem>>, %arg7: memref<1x16x2xf32, #tpu.memory_space<vmem>>) attributes {dimension_semantics = [#tpu.dimension_semantics<parallel>], iteration_bounds = array<i64: 2>, scalar_prefetch = 0 : i64, scratch_operands = 0 : i64, tpu.core_type = #tpu.core_type<tc>, window_params = [{transform_indices = @transform_0, window_bounds = array<i64: 1, 24, 64>}, {transform_indices = @transform_1, window_bounds = array<i64: 1, 16, 64>}, {pipeline_mode = #tpu.pipeline_mode<synchronous>, transform_indices = @transform_2, window_bounds = array<i64: 16, 1>}, {pipeline_mode = #tpu.pipeline_mode<synchronous>, transform_indices = @transform_3, window_bounds = array<i64: 16, 1>}, {pipeline_mode = #tpu.pipeline_mode<synchronous>, transform_indices = @transform_4, window_bounds = array<i64: 16, 200>}, {transform_indices = @transform_5, window_bounds = array<i64: 1, 16, 64>}, {transform_indices = @transform_6, window_bounds = array<i64: 1, 16, 2>}]} {
    %c0 = arith.constant 0 : index
    %c0_0 = arith.constant 0 : index
    %c0_1 = arith.constant 0 : index
    %0 = vector.load %arg1[%c0, %c0_0, %c0_1] : memref<1x24x64xf32, #tpu.memory_space<vmem>>, vector<1x24x64xf32>
    %1 = vector.shape_cast %0 : vector<1x24x64xf32> to vector<24x64xf32>
    %cst = arith.constant 0.000000e+00 : f32
    %2 = vector.broadcast %cst : f32 to vector<24x2xf32>
    %3 = tpu.concatenate %2, %1, %2 in 1 : vector<24x2xf32>, vector<24x64xf32>, vector<24x2xf32> -> vector<24x68xf32>
    %c0_2 = arith.constant 0 : index
    %c0_3 = arith.constant 0 : index
    %c0_4 = arith.constant 0 : index
    %4 = vector.load %arg2[%c0_2, %c0_3, %c0_4] : memref<1x16x64xf32, #tpu.memory_space<vmem>>, vector<1x16x64xf32>
    %5 = vector.shape_cast %4 : vector<1x16x64xf32> to vector<16x64xf32>
    %c0_5 = arith.constant 0 : index
    %c0_6 = arith.constant 0 : index
    %6 = vector.load %arg3[%c0_5, %c0_6] : memref<16x1xf32, #tpu.memory_space<vmem>>, vector<16x1xf32>
    %c0_7 = arith.constant 0 : index
    %c0_8 = arith.constant 0 : index
    %7 = vector.load %arg4[%c0_7, %c0_8] : memref<16x1xf32, #tpu.memory_space<vmem>>, vector<16x1xf32>
    %8 = vector.broadcast %6 : vector<16x1xf32> to vector<16x64xf32>
    %9 = arith.mulf %5, %8 : vector<16x64xf32>
    %10 = vector.broadcast %7 : vector<16x1xf32> to vector<16x64xf32>
    %11 = arith.addf %9, %10 : vector<16x64xf32>
    %cst_9 = arith.constant 0.000000e+00 : f32
    %12 = vector.broadcast %cst_9 : f32 to vector<16x64xf32>
    %13 = arith.cmpf oge, %11, %12 : vector<16x64xf32>
    %cst_10 = arith.constant 1.000000e-01 : f32
    %14 = vector.broadcast %cst_10 : f32 to vector<16x64xf32>
    %15 = arith.mulf %14, %11 : vector<16x64xf32>
    %16 = arith.select %13, %11, %15 : vector<16x64xi1>, vector<16x64xf32>
    %cst_11 = arith.constant 0.000000e+00 : f32
    %17 = vector.broadcast %cst_11 : f32 to vector<16x2xf32>
    %18 = tpu.concatenate %17, %16, %17 in 1 : vector<16x2xf32>, vector<16x64xf32>, vector<16x2xf32> -> vector<16x68xf32>
    %19 = vector.extract_strided_slice %3 {offsets = [0, 0], sizes = [24, 64], strides = [1, 1]} : vector<24x68xf32> to vector<24x64xf32>
    %20 = vector.extract_strided_slice %18 {offsets = [0, 0], sizes = [16, 64], strides = [1, 1]} : vector<16x68xf32> to vector<16x64xf32>
    %21 = vector.extract_strided_slice %3 {offsets = [0, 1], sizes = [24, 64], strides = [1, 1]} : vector<24x68xf32> to vector<24x64xf32>
    %22 = vector.extract_strided_slice %18 {offsets = [0, 1], sizes = [16, 64], strides = [1, 1]} : vector<16x68xf32> to vector<16x64xf32>
    %23 = vector.extract_strided_slice %3 {offsets = [0, 2], sizes = [24, 64], strides = [1, 1]} : vector<24x68xf32> to vector<24x64xf32>
    %24 = vector.extract_strided_slice %18 {offsets = [0, 2], sizes = [16, 64], strides = [1, 1]} : vector<16x68xf32> to vector<16x64xf32>
    %25 = vector.extract_strided_slice %3 {offsets = [0, 3], sizes = [24, 64], strides = [1, 1]} : vector<24x68xf32> to vector<24x64xf32>
    %26 = vector.extract_strided_slice %18 {offsets = [0, 3], sizes = [16, 64], strides = [1, 1]} : vector<16x68xf32> to vector<16x64xf32>
    %27 = vector.extract_strided_slice %3 {offsets = [0, 4], sizes = [24, 64], strides = [1, 1]} : vector<24x68xf32> to vector<24x64xf32>
    %28 = vector.extract_strided_slice %18 {offsets = [0, 4], sizes = [16, 64], strides = [1, 1]} : vector<16x68xf32> to vector<16x64xf32>
    %29 = tpu.concatenate %19, %20, %21, %22, %23, %24, %25, %26, %27, %28 in 0 : vector<24x64xf32>, vector<16x64xf32>, vector<24x64xf32>, vector<16x64xf32>, vector<24x64xf32>, vector<16x64xf32>, vector<24x64xf32>, vector<16x64xf32>, vector<24x64xf32>, vector<16x64xf32> -> vector<200x64xf32>
    %30 = arith.truncf %29 : vector<200x64xf32> to vector<200x64xbf16>
    %c0_12 = arith.constant 0 : index
    %c0_13 = arith.constant 0 : index
    %31 = vector.load %arg5[%c0_12, %c0_13] : memref<16x200xbf16, #tpu.memory_space<vmem>>, vector<16x200xbf16>
    %cst_14 = arith.constant dense<0.000000e+00> : vector<16x64xf32>
    %32 = tpu.matmul %31, %30, %cst_14 {dimension_numbers = #tpu.dot_dimension_numbers<[1], [0], [0], [1], [0, 0, 1, 1], [], []>} : vector<16x200xbf16>, vector<200x64xbf16>, vector<16x64xf32> -> vector<16x64xf32>
    %c0_15 = arith.constant 0 : index
    %c0_16 = arith.constant 0 : index
    %c0_17 = arith.constant 0 : index
    %33 = vector.load %arg6[%c0_15, %c0_16, %c0_17] : memref<1x16x64xf32, #tpu.memory_space<vmem>>, vector<1x16x64xf32>
    %34 = vector.shape_cast %33 : vector<1x16x64xf32> to vector<16x64xf32>
    %35 = vector.shape_cast %32 : vector<16x64xf32> to vector<1x16x64xf32>
    tpu.vector_store %arg6[%c0_15, %c0_16, %c0_17], %35 {strides = array<i32>} : memref<1x16x64xf32, #tpu.memory_space<vmem>>, vector<1x16x64xf32>,
    %cst_18 = arith.constant dense<0.000000e+00> : vector<16xf32>
    %36 = vector.multi_reduction <add>, %32, %cst_18 [1] : vector<16x64xf32> to vector<16xf32>
    %37 = vector.shape_cast %36 : vector<16xf32> to vector<16x1xf32>
    %38 = arith.mulf %32, %32 : vector<16x64xf32>
    %cst_19 = arith.constant dense<0.000000e+00> : vector<16xf32>
    %39 = vector.multi_reduction <add>, %38, %cst_19 [1] : vector<16x64xf32> to vector<16xf32>
    %40 = vector.shape_cast %39 : vector<16xf32> to vector<16x1xf32>
    %41 = tpu.concatenate %37, %40 in 1 : vector<16x1xf32>, vector<16x1xf32> -> vector<16x2xf32>
    %c0_20 = arith.constant 0 : index
    %c0_21 = arith.constant 0 : index
    %c0_22 = arith.constant 0 : index
    %42 = vector.load %arg7[%c0_20, %c0_21, %c0_22] : memref<1x16x2xf32, #tpu.memory_space<vmem>>, vector<1x16x2xf32>
    %43 = vector.shape_cast %42 : vector<1x16x2xf32> to vector<16x2xf32>
    %44 = vector.shape_cast %41 : vector<16x2xf32> to vector<1x16x2xf32>
    tpu.vector_store %arg7[%c0_20, %c0_21, %c0_22], %44 {strides = array<i32>} : memref<1x16x2xf32, #tpu.memory_space<vmem>>, vector<1x16x2xf32>,
    return
  }
  func.func @transform_0(%arg0: i32) -> (i32, i32, i32) {
    %c0_i32 = arith.constant 0 : i32
    %c0_i32_0 = arith.constant 0 : i32
    %c0_i32_1 = arith.constant 0 : i32
    return %arg0, %c0_i32, %c0_i32_0 : i32, i32, i32
  }
  func.func @transform_1(%arg0: i32) -> (i32, i32, i32) {
    %c0_i32 = arith.constant 0 : i32
    %c0_i32_0 = arith.constant 0 : i32
    %c0_i32_1 = arith.constant 0 : i32
    return %arg0, %c0_i32, %c0_i32_0 : i32, i32, i32
  }
  func.func @transform_2(%arg0: i32) -> (i32, i32) {
    %c0_i32 = arith.constant 0 : i32
    %c0_i32_0 = arith.constant 0 : i32
    %c0_i32_1 = arith.constant 0 : i32
    return %c0_i32, %c0_i32_0 : i32, i32
  }
  func.func @transform_3(%arg0: i32) -> (i32, i32) {
    %c0_i32 = arith.constant 0 : i32
    %c0_i32_0 = arith.constant 0 : i32
    %c0_i32_1 = arith.constant 0 : i32
    return %c0_i32, %c0_i32_0 : i32, i32
  }
  func.func @transform_4(%arg0: i32) -> (i32, i32) {
    %c0_i32 = arith.constant 0 : i32
    %c0_i32_0 = arith.constant 0 : i32
    %c0_i32_1 = arith.constant 0 : i32
    return %c0_i32, %c0_i32_0 : i32, i32
  }
  func.func @transform_5(%arg0: i32) -> (i32, i32, i32) {
    %c0_i32 = arith.constant 0 : i32
    %c0_i32_0 = arith.constant 0 : i32
    %c0_i32_1 = arith.constant 0 : i32
    return %arg0, %c0_i32, %c0_i32_0 : i32, i32, i32
  }
  func.func @transform_6(%arg0: i32) -> (i32, i32, i32) {
    %c0_i32 = arith.constant 0 : i32
    %c0_i32_0 = arith.constant 0 : i32
    %c0_i32_1 = arith.constant 0 : i32
    return %arg0, %c0_i32, %c0_i32_0 : i32, i32, i32
  }
}

module attributes {stable_mosaic.version = 11 : i64} {
  func.func @_conv_layer_kernel(%arg0: i32, %arg1: memref<1x16x128xf32, #tpu.memory_space<vmem>>, %arg2: memref<1x8x128xf32, #tpu.memory_space<vmem>>, %arg3: memref<8x1xf32, #tpu.memory_space<vmem>>, %arg4: memref<8x1xf32, #tpu.memory_space<vmem>>, %arg5: memref<8x120xbf16, #tpu.memory_space<vmem>>, %arg6: memref<1x8x128xf32, #tpu.memory_space<vmem>>, %arg7: memref<1x8x2xf32, #tpu.memory_space<vmem>>) attributes {dimension_semantics = [#tpu.dimension_semantics<parallel>], iteration_bounds = array<i64: 2>, scalar_prefetch = 0 : i64, scratch_operands = 0 : i64, tpu.core_type = #tpu.core_type<tc>, window_params = [{transform_indices = @transform_0, window_bounds = array<i64: 1, 16, 128>}, {transform_indices = @transform_1, window_bounds = array<i64: 1, 8, 128>}, {pipeline_mode = #tpu.pipeline_mode<synchronous>, transform_indices = @transform_2, window_bounds = array<i64: 8, 1>}, {pipeline_mode = #tpu.pipeline_mode<synchronous>, transform_indices = @transform_3, window_bounds = array<i64: 8, 1>}, {pipeline_mode = #tpu.pipeline_mode<synchronous>, transform_indices = @transform_4, window_bounds = array<i64: 8, 120>}, {transform_indices = @transform_5, window_bounds = array<i64: 1, 8, 128>}, {transform_indices = @transform_6, window_bounds = array<i64: 1, 8, 2>}]} {
    %c0 = arith.constant 0 : index
    %c0_0 = arith.constant 0 : index
    %c0_1 = arith.constant 0 : index
    %0 = vector.load %arg1[%c0, %c0_0, %c0_1] : memref<1x16x128xf32, #tpu.memory_space<vmem>>, vector<1x16x128xf32>
    %1 = vector.shape_cast %0 : vector<1x16x128xf32> to vector<16x128xf32>
    %cst = arith.constant 0.000000e+00 : f32
    %2 = vector.broadcast %cst : f32 to vector<16x2xf32>
    %3 = tpu.concatenate %2, %1, %2 in 1 : vector<16x2xf32>, vector<16x128xf32>, vector<16x2xf32> -> vector<16x132xf32>
    %c0_2 = arith.constant 0 : index
    %c0_3 = arith.constant 0 : index
    %c0_4 = arith.constant 0 : index
    %4 = vector.load %arg2[%c0_2, %c0_3, %c0_4] : memref<1x8x128xf32, #tpu.memory_space<vmem>>, vector<1x8x128xf32>
    %5 = vector.shape_cast %4 : vector<1x8x128xf32> to vector<8x128xf32>
    %c0_5 = arith.constant 0 : index
    %c0_6 = arith.constant 0 : index
    %6 = vector.load %arg3[%c0_5, %c0_6] : memref<8x1xf32, #tpu.memory_space<vmem>>, vector<8x1xf32>
    %c0_7 = arith.constant 0 : index
    %c0_8 = arith.constant 0 : index
    %7 = vector.load %arg4[%c0_7, %c0_8] : memref<8x1xf32, #tpu.memory_space<vmem>>, vector<8x1xf32>
    %8 = vector.broadcast %6 : vector<8x1xf32> to vector<8x128xf32>
    %9 = arith.mulf %5, %8 : vector<8x128xf32>
    %10 = vector.broadcast %7 : vector<8x1xf32> to vector<8x128xf32>
    %11 = arith.addf %9, %10 : vector<8x128xf32>
    %cst_9 = arith.constant 0.000000e+00 : f32
    %12 = vector.broadcast %cst_9 : f32 to vector<8x128xf32>
    %13 = arith.cmpf oge, %11, %12 : vector<8x128xf32>
    %cst_10 = arith.constant 1.000000e-01 : f32
    %14 = vector.broadcast %cst_10 : f32 to vector<8x128xf32>
    %15 = arith.mulf %14, %11 : vector<8x128xf32>
    %16 = arith.select %13, %11, %15 : vector<8x128xi1>, vector<8x128xf32>
    %cst_11 = arith.constant 0.000000e+00 : f32
    %17 = vector.broadcast %cst_11 : f32 to vector<8x2xf32>
    %18 = tpu.concatenate %17, %16, %17 in 1 : vector<8x2xf32>, vector<8x128xf32>, vector<8x2xf32> -> vector<8x132xf32>
    %19 = vector.extract_strided_slice %3 {offsets = [0, 0], sizes = [16, 128], strides = [1, 1]} : vector<16x132xf32> to vector<16x128xf32>
    %20 = vector.extract_strided_slice %18 {offsets = [0, 0], sizes = [8, 128], strides = [1, 1]} : vector<8x132xf32> to vector<8x128xf32>
    %21 = vector.extract_strided_slice %3 {offsets = [0, 1], sizes = [16, 128], strides = [1, 1]} : vector<16x132xf32> to vector<16x128xf32>
    %22 = vector.extract_strided_slice %18 {offsets = [0, 1], sizes = [8, 128], strides = [1, 1]} : vector<8x132xf32> to vector<8x128xf32>
    %23 = vector.extract_strided_slice %3 {offsets = [0, 2], sizes = [16, 128], strides = [1, 1]} : vector<16x132xf32> to vector<16x128xf32>
    %24 = vector.extract_strided_slice %18 {offsets = [0, 2], sizes = [8, 128], strides = [1, 1]} : vector<8x132xf32> to vector<8x128xf32>
    %25 = vector.extract_strided_slice %3 {offsets = [0, 3], sizes = [16, 128], strides = [1, 1]} : vector<16x132xf32> to vector<16x128xf32>
    %26 = vector.extract_strided_slice %18 {offsets = [0, 3], sizes = [8, 128], strides = [1, 1]} : vector<8x132xf32> to vector<8x128xf32>
    %27 = vector.extract_strided_slice %3 {offsets = [0, 4], sizes = [16, 128], strides = [1, 1]} : vector<16x132xf32> to vector<16x128xf32>
    %28 = vector.extract_strided_slice %18 {offsets = [0, 4], sizes = [8, 128], strides = [1, 1]} : vector<8x132xf32> to vector<8x128xf32>
    %29 = tpu.concatenate %19, %20, %21, %22, %23, %24, %25, %26, %27, %28 in 0 : vector<16x128xf32>, vector<8x128xf32>, vector<16x128xf32>, vector<8x128xf32>, vector<16x128xf32>, vector<8x128xf32>, vector<16x128xf32>, vector<8x128xf32>, vector<16x128xf32>, vector<8x128xf32> -> vector<120x128xf32>
    %30 = arith.truncf %29 : vector<120x128xf32> to vector<120x128xbf16>
    %c0_12 = arith.constant 0 : index
    %c0_13 = arith.constant 0 : index
    %31 = vector.load %arg5[%c0_12, %c0_13] : memref<8x120xbf16, #tpu.memory_space<vmem>>, vector<8x120xbf16>
    %cst_14 = arith.constant dense<0.000000e+00> : vector<8x128xf32>
    %32 = tpu.matmul %31, %30, %cst_14 {dimension_numbers = #tpu.dot_dimension_numbers<[1], [0], [0], [1], [0, 0, 1, 1], [], []>} : vector<8x120xbf16>, vector<120x128xbf16>, vector<8x128xf32> -> vector<8x128xf32>
    %c0_15 = arith.constant 0 : index
    %c0_16 = arith.constant 0 : index
    %c0_17 = arith.constant 0 : index
    %33 = vector.load %arg6[%c0_15, %c0_16, %c0_17] : memref<1x8x128xf32, #tpu.memory_space<vmem>>, vector<1x8x128xf32>
    %34 = vector.shape_cast %33 : vector<1x8x128xf32> to vector<8x128xf32>
    %35 = vector.shape_cast %32 : vector<8x128xf32> to vector<1x8x128xf32>
    tpu.vector_store %arg6[%c0_15, %c0_16, %c0_17], %35 {strides = array<i32>} : memref<1x8x128xf32, #tpu.memory_space<vmem>>, vector<1x8x128xf32>,
    %cst_18 = arith.constant dense<0.000000e+00> : vector<8xf32>
    %36 = vector.multi_reduction <add>, %32, %cst_18 [1] : vector<8x128xf32> to vector<8xf32>
    %37 = vector.shape_cast %36 : vector<8xf32> to vector<8x1xf32>
    %38 = arith.mulf %32, %32 : vector<8x128xf32>
    %cst_19 = arith.constant dense<0.000000e+00> : vector<8xf32>
    %39 = vector.multi_reduction <add>, %38, %cst_19 [1] : vector<8x128xf32> to vector<8xf32>
    %40 = vector.shape_cast %39 : vector<8xf32> to vector<8x1xf32>
    %41 = tpu.concatenate %37, %40 in 1 : vector<8x1xf32>, vector<8x1xf32> -> vector<8x2xf32>
    %c0_20 = arith.constant 0 : index
    %c0_21 = arith.constant 0 : index
    %c0_22 = arith.constant 0 : index
    %42 = vector.load %arg7[%c0_20, %c0_21, %c0_22] : memref<1x8x2xf32, #tpu.memory_space<vmem>>, vector<1x8x2xf32>
    %43 = vector.shape_cast %42 : vector<1x8x2xf32> to vector<8x2xf32>
    %44 = vector.shape_cast %41 : vector<8x2xf32> to vector<1x8x2xf32>
    tpu.vector_store %arg7[%c0_20, %c0_21, %c0_22], %44 {strides = array<i32>} : memref<1x8x2xf32, #tpu.memory_space<vmem>>, vector<1x8x2xf32>,
    return
  }
  func.func @transform_0(%arg0: i32) -> (i32, i32, i32) {
    %c0_i32 = arith.constant 0 : i32
    %c0_i32_0 = arith.constant 0 : i32
    %c0_i32_1 = arith.constant 0 : i32
    return %arg0, %c0_i32, %c0_i32_0 : i32, i32, i32
  }
  func.func @transform_1(%arg0: i32) -> (i32, i32, i32) {
    %c0_i32 = arith.constant 0 : i32
    %c0_i32_0 = arith.constant 0 : i32
    %c0_i32_1 = arith.constant 0 : i32
    return %arg0, %c0_i32, %c0_i32_0 : i32, i32, i32
  }
  func.func @transform_2(%arg0: i32) -> (i32, i32) {
    %c0_i32 = arith.constant 0 : i32
    %c0_i32_0 = arith.constant 0 : i32
    %c0_i32_1 = arith.constant 0 : i32
    return %c0_i32, %c0_i32_0 : i32, i32
  }
  func.func @transform_3(%arg0: i32) -> (i32, i32) {
    %c0_i32 = arith.constant 0 : i32
    %c0_i32_0 = arith.constant 0 : i32
    %c0_i32_1 = arith.constant 0 : i32
    return %c0_i32, %c0_i32_0 : i32, i32
  }
  func.func @transform_4(%arg0: i32) -> (i32, i32) {
    %c0_i32 = arith.constant 0 : i32
    %c0_i32_0 = arith.constant 0 : i32
    %c0_i32_1 = arith.constant 0 : i32
    return %c0_i32, %c0_i32_0 : i32, i32
  }
  func.func @transform_5(%arg0: i32) -> (i32, i32, i32) {
    %c0_i32 = arith.constant 0 : i32
    %c0_i32_0 = arith.constant 0 : i32
    %c0_i32_1 = arith.constant 0 : i32
    return %arg0, %c0_i32, %c0_i32_0 : i32, i32, i32
  }
  func.func @transform_6(%arg0: i32) -> (i32, i32, i32) {
    %c0_i32 = arith.constant 0 : i32
    %c0_i32_0 = arith.constant 0 : i32
    %c0_i32_1 = arith.constant 0 : i32
    return %arg0, %c0_i32, %c0_i32_0 : i32, i32, i32
  }
}

module attributes {stable_mosaic.version = 11 : i64} {
  func.func @_conv_layer_kernel(%arg0: i32, %arg1: memref<1x8x128xf32, #tpu.memory_space<vmem>>, %arg2: memref<1x1x128xf32, #tpu.memory_space<vmem>>, %arg3: memref<8x1xf32, #tpu.memory_space<vmem>>, %arg4: memref<8x1xf32, #tpu.memory_space<vmem>>, %arg5: memref<1x9xbf16, #tpu.memory_space<vmem>>, %arg6: memref<1x1xf32, #tpu.memory_space<vmem>>, %arg7: memref<1x1x128xf32, #tpu.memory_space<vmem>>) attributes {dimension_semantics = [#tpu.dimension_semantics<parallel>], iteration_bounds = array<i64: 2>, scalar_prefetch = 0 : i64, scratch_operands = 0 : i64, tpu.core_type = #tpu.core_type<tc>, window_params = [{transform_indices = @transform_0, window_bounds = array<i64: 1, 8, 128>}, {transform_indices = @transform_1, window_bounds = array<i64: 1, 1, 128>}, {pipeline_mode = #tpu.pipeline_mode<synchronous>, transform_indices = @transform_2, window_bounds = array<i64: 8, 1>}, {pipeline_mode = #tpu.pipeline_mode<synchronous>, transform_indices = @transform_3, window_bounds = array<i64: 8, 1>}, {pipeline_mode = #tpu.pipeline_mode<synchronous>, transform_indices = @transform_4, window_bounds = array<i64: 1, 9>}, {pipeline_mode = #tpu.pipeline_mode<synchronous>, transform_indices = @transform_5, window_bounds = array<i64: 1, 1>}, {transform_indices = @transform_6, window_bounds = array<i64: 1, 1, 128>}]} {
    %c0 = arith.constant 0 : index
    %c0_0 = arith.constant 0 : index
    %c0_1 = arith.constant 0 : index
    %0 = vector.load %arg1[%c0, %c0_0, %c0_1] : memref<1x8x128xf32, #tpu.memory_space<vmem>>, vector<1x8x128xf32>
    %1 = vector.shape_cast %0 : vector<1x8x128xf32> to vector<8x128xf32>
    %c0_2 = arith.constant 0 : index
    %c0_3 = arith.constant 0 : index
    %2 = vector.load %arg3[%c0_2, %c0_3] : memref<8x1xf32, #tpu.memory_space<vmem>>, vector<8x1xf32>
    %c0_4 = arith.constant 0 : index
    %c0_5 = arith.constant 0 : index
    %3 = vector.load %arg4[%c0_4, %c0_5] : memref<8x1xf32, #tpu.memory_space<vmem>>, vector<8x1xf32>
    %4 = vector.broadcast %2 : vector<8x1xf32> to vector<8x128xf32>
    %5 = arith.mulf %1, %4 : vector<8x128xf32>
    %6 = vector.broadcast %3 : vector<8x1xf32> to vector<8x128xf32>
    %7 = arith.addf %5, %6 : vector<8x128xf32>
    %cst = arith.constant 0.000000e+00 : f32
    %8 = vector.broadcast %cst : f32 to vector<8x128xf32>
    %9 = arith.cmpf oge, %7, %8 : vector<8x128xf32>
    %cst_6 = arith.constant 1.000000e-01 : f32
    %10 = vector.broadcast %cst_6 : f32 to vector<8x128xf32>
    %11 = arith.mulf %10, %7 : vector<8x128xf32>
    %12 = arith.select %9, %7, %11 : vector<8x128xi1>, vector<8x128xf32>
    %c0_7 = arith.constant 0 : index
    %c0_8 = arith.constant 0 : index
    %c0_9 = arith.constant 0 : index
    %13 = vector.load %arg2[%c0_7, %c0_8, %c0_9] : memref<1x1x128xf32, #tpu.memory_space<vmem>>, vector<1x1x128xf32>
    %14 = vector.shape_cast %13 : vector<1x1x128xf32> to vector<1x128xf32>
    %15 = tpu.concatenate %12, %14 in 0 : vector<8x128xf32>, vector<1x128xf32> -> vector<9x128xf32>
    %16 = arith.truncf %15 : vector<9x128xf32> to vector<9x128xbf16>
    %c0_10 = arith.constant 0 : index
    %c0_11 = arith.constant 0 : index
    %17 = vector.load %arg5[%c0_10, %c0_11] : memref<1x9xbf16, #tpu.memory_space<vmem>>, vector<1x9xbf16>
    %cst_12 = arith.constant dense<0.000000e+00> : vector<1x128xf32>
    %18 = tpu.matmul %17, %16, %cst_12 {dimension_numbers = #tpu.dot_dimension_numbers<[1], [0], [0], [1], [0, 0, 1, 1], [], []>} : vector<1x9xbf16>, vector<9x128xbf16>, vector<1x128xf32> -> vector<1x128xf32>
    %c0_13 = arith.constant 0 : index
    %c0_14 = arith.constant 0 : index
    %19 = vector.load %arg6[%c0_13, %c0_14] : memref<1x1xf32, #tpu.memory_space<vmem>>, vector<1x1xf32>
    %20 = vector.broadcast %19 : vector<1x1xf32> to vector<1x128xf32>
    %21 = arith.addf %18, %20 : vector<1x128xf32>
    %22 = math.tanh %21 : vector<1x128xf32>
    %c0_15 = arith.constant 0 : index
    %c0_16 = arith.constant 0 : index
    %c0_17 = arith.constant 0 : index
    %23 = vector.load %arg7[%c0_15, %c0_16, %c0_17] : memref<1x1x128xf32, #tpu.memory_space<vmem>>, vector<1x1x128xf32>
    %24 = vector.shape_cast %23 : vector<1x1x128xf32> to vector<1x128xf32>
    %25 = vector.shape_cast %22 : vector<1x128xf32> to vector<1x1x128xf32>
    tpu.vector_store %arg7[%c0_15, %c0_16, %c0_17], %25 {strides = array<i32>} : memref<1x1x128xf32, #tpu.memory_space<vmem>>, vector<1x1x128xf32>,
    return
  }
  func.func @transform_0(%arg0: i32) -> (i32, i32, i32) {
    %c0_i32 = arith.constant 0 : i32
    %c0_i32_0 = arith.constant 0 : i32
    %c0_i32_1 = arith.constant 0 : i32
    return %arg0, %c0_i32, %c0_i32_0 : i32, i32, i32
  }
  func.func @transform_1(%arg0: i32) -> (i32, i32, i32) {
    %c0_i32 = arith.constant 0 : i32
    %c0_i32_0 = arith.constant 0 : i32
    %c0_i32_1 = arith.constant 0 : i32
    return %arg0, %c0_i32, %c0_i32_0 : i32, i32, i32
  }
  func.func @transform_2(%arg0: i32) -> (i32, i32) {
    %c0_i32 = arith.constant 0 : i32
    %c0_i32_0 = arith.constant 0 : i32
    %c0_i32_1 = arith.constant 0 : i32
    return %c0_i32, %c0_i32_0 : i32, i32
  }
  func.func @transform_3(%arg0: i32) -> (i32, i32) {
    %c0_i32 = arith.constant 0 : i32
    %c0_i32_0 = arith.constant 0 : i32
    %c0_i32_1 = arith.constant 0 : i32
    return %c0_i32, %c0_i32_0 : i32, i32
  }
  func.func @transform_4(%arg0: i32) -> (i32, i32) {
    %c0_i32 = arith.constant 0 : i32
    %c0_i32_0 = arith.constant 0 : i32
    %c0_i32_1 = arith.constant 0 : i32
    return %c0_i32, %c0_i32_0 : i32, i32
  }
  func.func @transform_5(%arg0: i32) -> (i32, i32) {
    %c0_i32 = arith.constant 0 : i32
    %c0_i32_0 = arith.constant 0 : i32
    %c0_i32_1 = arith.constant 0 : i32
    return %c0_i32, %c0_i32_0 : i32, i32
  }
  func.func @transform_6(%arg0: i32) -> (i32, i32, i32) {
    %c0_i32 = arith.constant 0 : i32
    %c0_i32_0 = arith.constant 0 : i32
    %c0_i32_1 = arith.constant 0 : i32
    return %arg0, %c0_i32, %c0_i32_0 : i32, i32, i32
  }
}

</mosaic_0001>

<llo_original>
// kernel: model_forward.11
$region0: #{model_forward.11}
  #allocation0 [shape = 'u32[]', space=smem, size = 0x4, offset = 0x4, fixed_abs, tag = 'smem constant byte address 0x4 - core index']
  #allocation1 [shape = 'u32[72,128]{1,0:T(1,128)}', space=vmem, size = 0x9000, scoped, tag = 'internal scratch']
  %s0 = inlined_call_operand.vmem [shape: f32[2,8,64], index: 0, kind: input, shape index: {}]
  %s1 = inlined_call_operand.vmem [shape: f32[8,1], index: 1, kind: input, shape index: {}]
  %s2 = inlined_call_operand.vmem [shape: f32[8,1], index: 2, kind: input, shape index: {}]
  %s3 = inlined_call_operand.vmem [shape: bf16[16,120], index: 3, kind: input, shape index: {}]
  %s4 = inlined_call_operand.vmem [shape: f32[2,16,64], index: 4, kind: output, shape index: {0}]
  %s5 = inlined_call_operand.vmem [shape: f32[2,16,2], index: 5, kind: output, shape index: {1}]
  %6 = xla_tuple %s4, %s5
  %s7 = sld [smem:[#allocation0]]
  $region57: #{model_forward.11} parent=0
    _
  %s9 = ssub.s32 1, %s7
  %s10 = scalar_select 0, %s9, %s7
  loop: start=0, step=1, limit=4
  $region2: #{model_forward.11} parent=0 // loop_pre_header
    _
  $region3: #{model_forward.11} parent=0 // loop_header
    %s12 = sphi 0, %s16
    %p13 = scmp.ge.s32.totalorder %s12, 4
    %s22 = sphi 0, %s24
    %s25 = sphi 0, %s22
    %s26 = sphi 0, %s25
    %s42 = sphi 0, %s26
    %s46 = sphi 0, %s46
    %s48 = sphi 0, %s46
    %s49 = sphi 0, %s48
    %s63 = sphi 0, %s49
    %s67 = sphi 0, %s67
    %s69 = sphi 0, %s67
    %s70 = sphi 0, %s69
    %s84 = sphi 0, %s70
    %s88 = sphi 0, %s88
    %s90 = sphi 0, %s88
    %s91 = sphi 0, %s90
    %s105 = sphi 0, %s91
    %s111 = sphi 0, %s113
    %s114 = sphi 0, %s111
    %s115 = sphi 0, %s114
    %s131 = sphi 0, %s115
    %s137 = sphi 0, %s139
    %s140 = sphi 0, %s137
    %s141 = sphi 0, %s140
    %s157 = sphi 0, %s141
  $region4: #{model_forward.11} parent=0 // loop_header_branch
    %15 = sbr.rel (%p13) target = $region8
  $region5: #{model_forward.11} parent=0 // loop_body
    %s17 = ssub.s32 %s12, 1
    %s18 = ssub.s32 %s12, 2
    %s19 = sadd.s32 %s12, 1
    %s20 = ssub.s32 %s12, %s19
    %p21 = scmp.eq.s32.totalorder %s20, 0
    %s23 = sadd.s32 %s22, 1
    %s24 = scalar_select %p21, %s22, %s23
    %p27 = pneg %p21
    %p28 = scmp.eq.s32.totalorder %s12, 1
    %p29 = por %p27, %p28
    %p30 = scmp.ne.s32.totalorder %s22, %s25
    %p31 = scmp.eq.s32.totalorder %s12, 0
    %p32 = por %p30, %p31
    %p33 = scmp.ne.s32.totalorder %s22, %s25
    %p34 = scmp.eq.s32.totalorder %s17, 1
    %p35 = por %p33, %p34
    %p36 = scmp.ne.s32.totalorder %s25, %s26
    %p37 = scmp.eq.s32.totalorder %s17, 0
    %p38 = por %p36, %p37
    %p39 = scmp.ne.s32.totalorder %s25, %s26
    %p40 = scmp.eq.s32.totalorder %s18, 1
    %p41 = por %p39, %p40
    %p43 = scmp.ne.s32.totalorder %s26, %s42
    %p44 = scmp.eq.s32.totalorder %s18, 0
    %p45 = por %p43, %p44
    %s47 = sadd.s32 %s46, 1
    %p50 = scmp.eq.s32.totalorder %s12, 1
    %p51 = scmp.ne.s32.totalorder %s46, %s48
    %p52 = scmp.eq.s32.totalorder %s12, 0
    %p53 = por %p51, %p52
    %p54 = scmp.ne.s32.totalorder %s46, %s48
    %p55 = scmp.eq.s32.totalorder %s17, 1
    %p56 = por %p54, %p55
    %p57 = scmp.ne.s32.totalorder %s48, %s49
    %p58 = scmp.eq.s32.totalorder %s17, 0
    %p59 = por %p57, %p58
    %p60 = scmp.ne.s32.totalorder %s48, %s49
    %p61 = scmp.eq.s32.totalorder %s18, 1
    %p62 = por %p60, %p61
    %p64 = scmp.ne.s32.totalorder %s49, %s63
    %p65 = scmp.eq.s32.totalorder %s18, 0
    %p66 = por %p64, %p65
    %s68 = sadd.s32 %s67, 1
    %p71 = scmp.eq.s32.totalorder %s12, 1
    %p72 = scmp.ne.s32.totalorder %s67, %s69
    %p73 = scmp.eq.s32.totalorder %s12, 0
    %p74 = por %p72, %p73
    %p75 = scmp.ne.s32.totalorder %s67, %s69
    %p76 = scmp.eq.s32.totalorder %s17, 1
    %p77 = por %p75, %p76
    %p78 = scmp.ne.s32.totalorder %s69, %s70
    %p79 = scmp.eq.s32.totalorder %s17, 0
    %p80 = por %p78, %p79
    %p81 = scmp.ne.s32.totalorder %s69, %s70
    %p82 = scmp.eq.s32.totalorder %s18, 1
    %p83 = por %p81, %p82
    %p85 = scmp.ne.s32.totalorder %s70, %s84
    %p86 = scmp.eq.s32.totalorder %s18, 0
    %p87 = por %p85, %p86
    %s89 = sadd.s32 %s88, 1
    %p92 = scmp.eq.s32.totalorder %s12, 1
    %p93 = scmp.ne.s32.totalorder %s88, %s90
    %p94 = scmp.eq.s32.totalorder %s12, 0
    %p95 = por %p93, %p94
    %p96 = scmp.ne.s32.totalorder %s88, %s90
    %p97 = scmp.eq.s32.totalorder %s17, 1
    %p98 = por %p96, %p97
    %p99 = scmp.ne.s32.totalorder %s90, %s91
    %p100 = scmp.eq.s32.totalorder %s17, 0
    %p101 = por %p99, %p100
    %p102 = scmp.ne.s32.totalorder %s90, %s91
    %p103 = scmp.eq.s32.totalorder %s18, 1
    %p104 = por %p102, %p103
    %p106 = scmp.ne.s32.totalorder %s91, %s105
    %p107 = scmp.eq.s32.totalorder %s18, 0
    %p108 = por %p106, %p107
    %s109 = ssub.s32 %s12, %s19
    %p110 = scmp.eq.s32.totalorder %s109, 0
    %s112 = sadd.s32 %s111, 1
    %s113 = scalar_select %p110, %s111, %s112
    %p116 = pneg %p110
    %p117 = scmp.eq.s32.totalorder %s12, 1
    %p118 = por %p116, %p117
    %p119 = scmp.ne.s32.totalorder %s111, %s114
    %p120 = scmp.eq.s32.totalorder %s12, 0
    %p121 = por %p119, %p120
    %p122 = scmp.ne.s32.totalorder %s111, %s114
    %p123 = scmp.eq.s32.totalorder %s17, 1
    %p124 = por %p122, %p123
    %p125 = scmp.ne.s32.totalorder %s114, %s115
    %p126 = scmp.eq.s32.totalorder %s17, 0
    %p127 = por %p125, %p126
    %p128 = scmp.ne.s32.totalorder %s114, %s115
    %p129 = scmp.eq.s32.totalorder %s18, 1
    %p130 = por %p128, %p129
    %p132 = scmp.ne.s32.totalorder %s115, %s131
    %p133 = scmp.eq.s32.totalorder %s18, 0
    %p134 = por %p132, %p133
    %s135 = ssub.s32 %s12, %s19
    %p136 = scmp.eq.s32.totalorder %s135, 0
    %s138 = sadd.s32 %s137, 1
    %s139 = scalar_select %p136, %s137, %s138
    %p142 = pneg %p136
    %p143 = scmp.eq.s32.totalorder %s12, 1
    %p144 = por %p142, %p143
    %p145 = scmp.ne.s32.totalorder %s137, %s140
    %p146 = scmp.eq.s32.totalorder %s12, 0
    %p147 = por %p145, %p146
    %p148 = scmp.ne.s32.totalorder %s137, %s140
    %p149 = scmp.eq.s32.totalorder %s17, 1
    %p150 = por %p148, %p149
    %p151 = scmp.ne.s32.totalorder %s140, %s141
    %p152 = scmp.eq.s32.totalorder %s17, 0
    %p153 = por %p151, %p152
    %p154 = scmp.ne.s32.totalorder %s140, %s141
    %p155 = scmp.eq.s32.totalorder %s18, 1
    %p156 = por %p154, %p155
    %p158 = scmp.ne.s32.totalorder %s141, %s157
    %p159 = scmp.eq.s32.totalorder %s18, 0
    %p160 = por %p158, %p159
    %p161 = scmp.le.s32.totalorder 1, %s12
    %p162 = scmp.lt.s32.totalorder %s12, 3
    %p163 = pnand %p161, %p162
    %p164 = pneg %p163
    // Predicated region
    $region9: #{model_forward.11} parent=5 // pred_check
      _
    $region10: #{model_forward.11} parent=5 // pred_check_branch
      %166 = sbr.rel (%p163) target = $region12
    $region11: #{model_forward.11} parent=5 // pred_region
      %s167 = ssub.s32 %s12, 1
      // Predicated region
      $region13: #{model_forward.11} parent=11 // pred_check
        %p168 = pneg %p59
      $region14: #{model_forward.11} parent=11 // pred_check_branch
        %170 = sbr.rel (%p168) target = $region16
      $region15: #{model_forward.11} parent=11 // pred_region
        _
      $region16: #{model_forward.11} parent=11 // pred_fallthru
        _
      // Predicated region
      $region17: #{model_forward.11} parent=11 // pred_check
        %p171 = pneg %p80
      $region18: #{model_forward.11} parent=11 // pred_check_branch
        %173 = sbr.rel (%p171) target = $region20
      $region19: #{model_forward.11} parent=11 // pred_region
        _
      $region20: #{model_forward.11} parent=11 // pred_fallthru
        _
      // Predicated region
      $region21: #{model_forward.11} parent=11 // pred_check
        %p174 = pneg %p101
      $region22: #{model_forward.11} parent=11 // pred_check_branch
        %176 = sbr.rel (%p174) target = $region24
      $region23: #{model_forward.11} parent=11 // pred_region
        _
      $region24: #{model_forward.11} parent=11 // pred_fallthru
        _
    $region12: #{model_forward.11} parent=5 // pred_fallthru
      _
    %p177 = scmp.lt.s32.totalorder %s12, 2
    // Predicated region
    $region25: #{model_forward.11} parent=5 // pred_check
      %p178 = pneg %p177
    $region26: #{model_forward.11} parent=5 // pred_check_branch
      %180 = sbr.rel (%p178) target = $region28
    $region27: #{model_forward.11} parent=5 // pred_region
      // Predicated region
      $region29: #{model_forward.11} parent=27 // pred_check
        %p181 = pneg %p32
      $region30: #{model_forward.11} parent=27 // pred_check_branch
        %183 = sbr.rel (%p181) target = $region32
      $region31: #{model_forward.11} parent=27 // pred_region
        %p184 = scmp.lt.s32.totalorder %s12, 1
        %s185 = scalar_select %p184, %s12, 1
        %s186 = smul.addr %s185, 8
        %s187 = scalar_lea.vmem %s0, %s186
      $region32: #{model_forward.11} parent=27 // pred_fallthru
        _
    $region28: #{model_forward.11} parent=5 // pred_fallthru
      _
    %p188 = scmp.le.s32.totalorder 1, %s12
    %p189 = scmp.lt.s32.totalorder %s12, 3
    %p190 = pnand %p188, %p189
    %p191 = pneg %p190
    // Predicated region
    $region33: #{model_forward.11} parent=5 // pred_check
      _
    $region34: #{model_forward.11} parent=5 // pred_check_branch
      %193 = sbr.rel (%p190) target = $region36
    $region35: #{model_forward.11} parent=5 // pred_region
      %s194 = ssub.s32 %s12, 1
      %p195 = scmp.lt.s32.totalorder %s17, 1
      %s196 = scalar_select %p195, %s17, 1
      %s197 = smul.addr %s196, 8
      %s198 = scalar_lea.vmem %s0, %s197
      %p199 = pneg %p38
      %p200 = pneg %p35
      %p201 = pneg %p59
      %p202 = pneg %p56
      %p203 = pneg %p80
      %p204 = pneg %p77
      %p205 = pneg %p101
      %p206 = pneg %p98
      %p207 = pneg %p127
      %p208 = pneg %p124
      %p209 = scmp.lt.s32.totalorder %s17, 1
      %s210 = scalar_select %p209, %s17, 1
      %s211 = smul.addr %s210, 2
      %s212 = smul.addr %s211, 8
      %s213 = scalar_lea.vmem %s4, %s212
      %p214 = pneg %p153
      %p215 = pneg %p150
      %p216 = scmp.lt.s32.totalorder %s17, 1
      %s217 = scalar_select %p216, %s17, 1
      %s218 = smul.addr %s217, 2
      %s219 = smul.addr %s218, 8
      %s220 = scalar_lea.vmem %s5, %s219
      %p221 = scmp.lt.s32.totalorder %s17, 1
      %s222 = scalar_select %p221, %s17, 1
      %s223 = smul.addr %s222, 8
      %s224 = scalar_lea.vmem %s0, %s223
      %p225 = scmp.lt.s32.totalorder %s17, 1
      %s226 = scalar_select %p225, %s17, 1
      %s227 = smul.addr %s226, 2
      %s228 = smul.addr %s227, 8
      %s229 = scalar_lea.vmem %s4, %s228
      %p230 = scmp.lt.s32.totalorder %s17, 1
      %s231 = scalar_select %p230, %s17, 1
      %s232 = smul.addr %s231, 2
      %s233 = smul.addr %s232, 8
      %s234 = scalar_lea.vmem %s5, %s233
      %v235 = vld [vmem:[%s224] sm:$0xff]
      %v236 = vld [vmem:[%s1] sm:$0xff]
      %v237 = vld [vmem:[%s2] sm:$0xff]
      %239 = vset.pattern.permute.xlu0 0
      %240 = vperm.xlu0 %239, %v236
      %v241 = vpop.permute.xlu0 %240
      %v243 = vmul.f32 %v235, %v241
      %245 = vset.pattern.permute.xlu0 0
      %246 = vperm.xlu0 %245, %v237
      %v247 = vpop.permute.xlu0 %246
      %v249 = vadd.f32 %v243, %v247
      %vm250 = vcmp.ge.f32.partialorder %v249, 0.0
      %v251 = vmul.f32 %v249, 0.1
      %v252 = vsel %vm250, %v249, %v251
      %254 = vrot.lane.b32.xlu0 %v252, 7
      %v255 = vpop.permute.xlu0 %254
      %vm257 = vcmask 56320
      %v258 = vsel %vm257, 0.0, %v255
      %vm259 = vcmask 580608
      %v260 = vsel %vm259, %v258, 0.0
      %262 = vrot.lane.b32.xlu0 %v260, 127
      %v263 = vpop.permute.xlu0 %262
      %265 = vrot.lane.b32.xlu0 %v260, 126
      %v266 = vpop.permute.xlu0 %265
      %268 = vrot.lane.b32.xlu0 %v260, 125
      %v269 = vpop.permute.xlu0 %268
      %271 = vrot.lane.b32.xlu0 %v260, 124
      %v272 = vpop.permute.xlu0 %271
      %274 = vrot.lane.b32.xlu0 %v260, 123
      %v275 = vpop.permute.xlu0 %274
      %277 = vrot.lane.b32.xlu0 %v260, 122
      %v278 = vpop.permute.xlu0 %277
      %280 = vrot.lane.b32.xlu0 %v260, 121
      %v281 = vpop.permute.xlu0 %280
      %283 = vrot.lane.b32.xlu0 %v260, 120
      %v284 = vpop.permute.xlu0 %283
      %286 = vrot.lane.b32.xlu0 %v260, 119
      %v287 = vpop.permute.xlu0 %286
      %289 = vrot.lane.b32.xlu0 %v260, 118
      %v290 = vpop.permute.xlu0 %289
      %292 = vrot.lane.b32.xlu0 %v260, 117
      %v293 = vpop.permute.xlu0 %292
      %295 = vrot.lane.b32.xlu0 %v260, 116
      %v296 = vpop.permute.xlu0 %295
      %298 = vrot.lane.b32.xlu0 %v260, 115
      %v299 = vpop.permute.xlu0 %298
      %301 = vrot.lane.b32.xlu0 %v260, 114
      %v302 = vpop.permute.xlu0 %301
      %v304 = vpack.c.bf16 %v263, %v260
      %v305 = vpack.c.bf16 %v269, %v266
      %v306 = vpack.c.bf16 %v275, %v272
      %v307 = vpack.c.bf16 %v281, %v278
      %v308 = vpack.c.bf16 %v287, %v284
      %v309 = vpack.c.bf16 %v293, %v290
      %v310 = vpack.c.bf16 %v299, %v296
      %v311 = vpack.c.bf16 %v302, %v302
      %v312 = vld [vmem:[%s3] sm:$0xf]
      %v313 = vld [vmem:[%s3 + $0x4] sm:$0xf]
      %v316 = vunpack.c.l.b16 %v312
      %v317 = vunpack.c.l.b16 %v313
      %v318 = vpack.c.b16 %v317, %v316
      %vm319 = vcmask 982016
      %v321 = vsel %vm319, %v318, 0
      %vm323 = vcmask 1043456
      %v325 = vsel %vm323, %v311, 0
      %327 = vmatpush.bf16.msra.mxu0 %v325
      %328 = vmatpush.bf16.msra.mxu0 %v310
      %329 = vmatpush.bf16.msra.mxu0 %v309
      %330 = vmatpush.bf16.msra.mxu0 %v308
      %331 = vmatpush.bf16.msra.mxu0 %v307
      %332 = vmatpush.bf16.msra.mxu0 %v306
      %333 = vmatpush.bf16.msra.mxu0 %v305
      %334 = vmatpush.bf16.msra.mxu0 %v304
      %335 = vmatmul.bf16.gmra.mxu0 %v321
      %v336 = vpop.f32.mrf.mxu0
      %v337 = vadd.f32 0.0, %v336
      %v338 = vpop.f32.mrf.mxu0
      %v339 = vadd.f32 0.0, %v338
      %340 = vdwg.mxu0
      %vm341 = vcmask 523264
      %342 = vst.msk [vmem:[%s229] sm:$0xff] %vm341, %v337
      %343 = vst.msk [vmem:[%s229 + $0x8] sm:$0xff] %vm341, %v339
      %v344 = vsel %vm341, %v337, 0.0
      %345 = vadd.xlane.f32.xlu0 %v344
      %v346 = vpop.xlane.xlu0 %345
      %v347 = vsel %vm341, %v339, 0.0
      %348 = vadd.xlane.f32.xlu0 %v347
      %v349 = vpop.xlane.xlu0 %348
      %v350 = vmul.f32 %v337, %v337
      %v351 = vmul.f32 %v339, %v339
      %v352 = vsel %vm341, %v350, 0.0
      %353 = vadd.xlane.f32.xlu0 %v352
      %v354 = vpop.xlane.xlu0 %353
      %v355 = vsel %vm341, %v351, 0.0
      %356 = vadd.xlane.f32.xlu0 %v355
      %v357 = vpop.xlane.xlu0 %356
      %vm358 = vcmask 7168
      %v359 = vsel %vm358, %v346, %v354
      %v360 = vsel %vm358, %v349, %v357
      %vm361 = vcmask 15360
      %362 = vst.msk [vmem:[%s234] sm:$0xff] %vm361, %v359
      %363 = vst.msk [vmem:[%s234 + $0x8] sm:$0xff] %vm361, %v360
      %p364 = scmp.lt.s32.totalorder %s17, 1
      %s365 = scalar_select %p364, %s17, 1
      %s366 = smul.addr %s365, 2
      %s367 = smul.addr %s366, 8
      %s368 = scalar_lea.vmem %s4, %s367
      %p369 = scmp.lt.s32.totalorder %s17, 1
      %s370 = scalar_select %p369, %s17, 1
      %s371 = smul.addr %s370, 2
      %s372 = smul.addr %s371, 8
      %s373 = scalar_lea.vmem %s5, %s372
      // Predicated region
      $region37: #{model_forward.11} parent=35 // pred_check
        %p374 = pneg %p124
      $region38: #{model_forward.11} parent=35 // pred_check_branch
        %376 = sbr.rel (%p374) target = $region40
      $region39: #{model_forward.11} parent=35 // pred_region
        _
      $region40: #{model_forward.11} parent=35 // pred_fallthru
        _
      // Predicated region
      $region41: #{model_forward.11} parent=35 // pred_check
        %p377 = pneg %p150
      $region42: #{model_forward.11} parent=35 // pred_check_branch
        %379 = sbr.rel (%p377) target = $region44
      $region43: #{model_forward.11} parent=35 // pred_region
        _
      $region44: #{model_forward.11} parent=35 // pred_fallthru
        _
    $region36: #{model_forward.11} parent=5 // pred_fallthru
      _
    %p380 = scmp.le.s32.totalorder 2, %s12
    // Predicated region
    $region45: #{model_forward.11} parent=5 // pred_check
      %p381 = pneg %p380
    $region46: #{model_forward.11} parent=5 // pred_check_branch
      %383 = sbr.rel (%p381) target = $region48
    $region47: #{model_forward.11} parent=5 // pred_region
      %s384 = ssub.s32 %s12, 2
      // Predicated region
      $region49: #{model_forward.11} parent=47 // pred_check
        %p385 = pneg %p130
      $region50: #{model_forward.11} parent=47 // pred_check_branch
        %387 = sbr.rel (%p385) target = $region52
      $region51: #{model_forward.11} parent=47 // pred_region
        %p388 = scmp.lt.s32.totalorder %s18, 1
        %s389 = scalar_select %p388, %s18, 1
        %s390 = smul.addr %s389, 2
        %s391 = smul.addr %s390, 8
        %s392 = scalar_lea.vmem %s4, %s391
      $region52: #{model_forward.11} parent=47 // pred_fallthru
        _
      // Predicated region
      $region53: #{model_forward.11} parent=47 // pred_check
        %p393 = pneg %p156
      $region54: #{model_forward.11} parent=47 // pred_check_branch
        %395 = sbr.rel (%p393) target = $region56
      $region55: #{model_forward.11} parent=47 // pred_region
        %p396 = scmp.lt.s32.totalorder %s18, 1
        %s397 = scalar_select %p396, %s18, 1
        %s398 = smul.addr %s397, 2
        %s399 = smul.addr %s398, 8
        %s400 = scalar_lea.vmem %s5, %s399
      $region56: #{model_forward.11} parent=47 // pred_fallthru
        _
    $region48: #{model_forward.11} parent=5 // pred_fallthru
      _
  $region6: #{model_forward.11} parent=0 // loop_footer
    %s16 = sadd.s32 1, %s12
  $region7: #{model_forward.11} parent=0 // loop_footer_branch
    %11 = sbr.rel target = $region3
  $region8: #{model_forward.11} parent=0 // loop_exit
    _

// kernel: model_forward.10
$region0: #{model_forward.10}
  #allocation0 [shape = 'u32[]', space=smem, size = 0x4, offset = 0x4, fixed_abs, tag = 'smem constant byte address 0x4 - core index']
  #allocation1 [shape = 'u32[72,128]{1,0:T(1,128)}', space=vmem, size = 0x9000, scoped, tag = 'internal scratch']
  %s0 = inlined_call_operand.vmem [shape: f32[2,1,128], index: 0, kind: input, shape index: {}]
  %s1 = inlined_call_operand.vmem [shape: bf16[8,15], index: 1, kind: input, shape index: {}]
  %s2 = inlined_call_operand.vmem [shape: f32[2,8,128], index: 2, kind: output, shape index: {0}]
  %s3 = inlined_call_operand.vmem [shape: f32[2,8,2], index: 3, kind: output, shape index: {1}]
  %4 = xla_tuple %s2, %s3
  %s5 = sld [smem:[#allocation0]]
  $region49: #{model_forward.10} parent=0
    _
  %s7 = ssub.s32 1, %s5
  %s8 = scalar_select 0, %s7, %s5
  loop: start=0, step=1, limit=4
  $region2: #{model_forward.10} parent=0 // loop_pre_header
    _
  $region3: #{model_forward.10} parent=0 // loop_header
    %s10 = sphi 0, %s14
    %p11 = scmp.ge.s32.totalorder %s10, 4
    %s20 = sphi 0, %s22
    %s23 = sphi 0, %s20
    %s24 = sphi 0, %s23
    %s40 = sphi 0, %s24
    %s44 = sphi 0, %s44
    %s46 = sphi 0, %s44
    %s47 = sphi 0, %s46
    %s61 = sphi 0, %s47
    %s67 = sphi 0, %s69
    %s70 = sphi 0, %s67
    %s71 = sphi 0, %s70
    %s87 = sphi 0, %s71
    %s93 = sphi 0, %s95
    %s96 = sphi 0, %s93
    %s97 = sphi 0, %s96
    %s113 = sphi 0, %s97
  $region4: #{model_forward.10} parent=0 // loop_header_branch
    %13 = sbr.rel (%p11) target = $region8
  $region5: #{model_forward.10} parent=0 // loop_body
    %s15 = ssub.s32 %s10, 1
    %s16 = ssub.s32 %s10, 2
    %s17 = sadd.s32 %s10, 1
    %s18 = ssub.s32 %s10, %s17
    %p19 = scmp.eq.s32.totalorder %s18, 0
    %s21 = sadd.s32 %s20, 1
    %s22 = scalar_select %p19, %s20, %s21
    %p25 = pneg %p19
    %p26 = scmp.eq.s32.totalorder %s10, 1
    %p27 = por %p25, %p26
    %p28 = scmp.ne.s32.totalorder %s20, %s23
    %p29 = scmp.eq.s32.totalorder %s10, 0
    %p30 = por %p28, %p29
    %p31 = scmp.ne.s32.totalorder %s20, %s23
    %p32 = scmp.eq.s32.totalorder %s15, 1
    %p33 = por %p31, %p32
    %p34 = scmp.ne.s32.totalorder %s23, %s24
    %p35 = scmp.eq.s32.totalorder %s15, 0
    %p36 = por %p34, %p35
    %p37 = scmp.ne.s32.totalorder %s23, %s24
    %p38 = scmp.eq.s32.totalorder %s16, 1
    %p39 = por %p37, %p38
    %p41 = scmp.ne.s32.totalorder %s24, %s40
    %p42 = scmp.eq.s32.totalorder %s16, 0
    %p43 = por %p41, %p42
    %s45 = sadd.s32 %s44, 1
    %p48 = scmp.eq.s32.totalorder %s10, 1
    %p49 = scmp.ne.s32.totalorder %s44, %s46
    %p50 = scmp.eq.s32.totalorder %s10, 0
    %p51 = por %p49, %p50
    %p52 = scmp.ne.s32.totalorder %s44, %s46
    %p53 = scmp.eq.s32.totalorder %s15, 1
    %p54 = por %p52, %p53
    %p55 = scmp.ne.s32.totalorder %s46, %s47
    %p56 = scmp.eq.s32.totalorder %s15, 0
    %p57 = por %p55, %p56
    %p58 = scmp.ne.s32.totalorder %s46, %s47
    %p59 = scmp.eq.s32.totalorder %s16, 1
    %p60 = por %p58, %p59
    %p62 = scmp.ne.s32.totalorder %s47, %s61
    %p63 = scmp.eq.s32.totalorder %s16, 0
    %p64 = por %p62, %p63
    %s65 = ssub.s32 %s10, %s17
    %p66 = scmp.eq.s32.totalorder %s65, 0
    %s68 = sadd.s32 %s67, 1
    %s69 = scalar_select %p66, %s67, %s68
    %p72 = pneg %p66
    %p73 = scmp.eq.s32.totalorder %s10, 1
    %p74 = por %p72, %p73
    %p75 = scmp.ne.s32.totalorder %s67, %s70
    %p76 = scmp.eq.s32.totalorder %s10, 0
    %p77 = por %p75, %p76
    %p78 = scmp.ne.s32.totalorder %s67, %s70
    %p79 = scmp.eq.s32.totalorder %s15, 1
    %p80 = por %p78, %p79
    %p81 = scmp.ne.s32.totalorder %s70, %s71
    %p82 = scmp.eq.s32.totalorder %s15, 0
    %p83 = por %p81, %p82
    %p84 = scmp.ne.s32.totalorder %s70, %s71
    %p85 = scmp.eq.s32.totalorder %s16, 1
    %p86 = por %p84, %p85
    %p88 = scmp.ne.s32.totalorder %s71, %s87
    %p89 = scmp.eq.s32.totalorder %s16, 0
    %p90 = por %p88, %p89
    %s91 = ssub.s32 %s10, %s17
    %p92 = scmp.eq.s32.totalorder %s91, 0
    %s94 = sadd.s32 %s93, 1
    %s95 = scalar_select %p92, %s93, %s94
    %p98 = pneg %p92
    %p99 = scmp.eq.s32.totalorder %s10, 1
    %p100 = por %p98, %p99
    %p101 = scmp.ne.s32.totalorder %s93, %s96
    %p102 = scmp.eq.s32.totalorder %s10, 0
    %p103 = por %p101, %p102
    %p104 = scmp.ne.s32.totalorder %s93, %s96
    %p105 = scmp.eq.s32.totalorder %s15, 1
    %p106 = por %p104, %p105
    %p107 = scmp.ne.s32.totalorder %s96, %s97
    %p108 = scmp.eq.s32.totalorder %s15, 0
    %p109 = por %p107, %p108
    %p110 = scmp.ne.s32.totalorder %s96, %s97
    %p111 = scmp.eq.s32.totalorder %s16, 1
    %p112 = por %p110, %p111
    %p114 = scmp.ne.s32.totalorder %s97, %s113
    %p115 = scmp.eq.s32.totalorder %s16, 0
    %p116 = por %p114, %p115
    %p117 = scmp.le.s32.totalorder 1, %s10
    %p118 = scmp.lt.s32.totalorder %s10, 3
    %p119 = pnand %p117, %p118
    %p120 = pneg %p119
    // Predicated region
    $region9: #{model_forward.10} parent=5 // pred_check
      _
    $region10: #{model_forward.10} parent=5 // pred_check_branch
      %122 = sbr.rel (%p119) target = $region12
    $region11: #{model_forward.10} parent=5 // pred_region
      %s123 = ssub.s32 %s10, 1
      // Predicated region
      $region13: #{model_forward.10} parent=11 // pred_check
        %p124 = pneg %p57
      $region14: #{model_forward.10} parent=11 // pred_check_branch
        %126 = sbr.rel (%p124) target = $region16
      $region15: #{model_forward.10} parent=11 // pred_region
        _
      $region16: #{model_forward.10} parent=11 // pred_fallthru
        _
    $region12: #{model_forward.10} parent=5 // pred_fallthru
      _
    %p127 = scmp.lt.s32.totalorder %s10, 2
    // Predicated region
    $region17: #{model_forward.10} parent=5 // pred_check
      %p128 = pneg %p127
    $region18: #{model_forward.10} parent=5 // pred_check_branch
      %130 = sbr.rel (%p128) target = $region20
    $region19: #{model_forward.10} parent=5 // pred_region
      // Predicated region
      $region21: #{model_forward.10} parent=19 // pred_check
        %p131 = pneg %p30
      $region22: #{model_forward.10} parent=19 // pred_check_branch
        %133 = sbr.rel (%p131) target = $region24
      $region23: #{model_forward.10} parent=19 // pred_region
        %p134 = scmp.lt.s32.totalorder %s10, 1
        %s135 = scalar_select %p134, %s10, 1
        %s136 = scalar_lea.vmem %s0, %s135
      $region24: #{model_forward.10} parent=19 // pred_fallthru
        _
    $region20: #{model_forward.10} parent=5 // pred_fallthru
      _
    %p137 = scmp.le.s32.totalorder 1, %s10
    %p138 = scmp.lt.s32.totalorder %s10, 3
    %p139 = pnand %p137, %p138
    %p140 = pneg %p139
    // Predicated region
    $region25: #{model_forward.10} parent=5 // pred_check
      _
    $region26: #{model_forward.10} parent=5 // pred_check_branch
      %142 = sbr.rel (%p139) target = $region28
    $region27: #{model_forward.10} parent=5 // pred_region
      %s143 = ssub.s32 %s10, 1
      %p144 = scmp.lt.s32.totalorder %s15, 1
      %s145 = scalar_select %p144, %s15, 1
      %s146 = scalar_lea.vmem %s0, %s145
      %p147 = pneg %p36
      %p148 = pneg %p33
      %p149 = pneg %p57
      %p150 = pneg %p54
      %p151 = pneg %p83
      %p152 = pneg %p80
      %p153 = scmp.lt.s32.totalorder %s15, 1
      %s154 = scalar_select %p153, %s15, 1
      %s155 = smul.addr %s154, 8
      %s156 = scalar_lea.vmem %s2, %s155
      %p157 = pneg %p109
      %p158 = pneg %p106
      %p159 = scmp.lt.s32.totalorder %s15, 1
      %s160 = scalar_select %p159, %s15, 1
      %s161 = smul.addr %s160, 8
      %s162 = scalar_lea.vmem %s3, %s161
      %p163 = scmp.lt.s32.totalorder %s15, 1
      %s164 = scalar_select %p163, %s15, 1
      %s165 = scalar_lea.vmem %s0, %s164
      %p166 = scmp.lt.s32.totalorder %s15, 1
      %s167 = scalar_select %p166, %s15, 1
      %s168 = smul.addr %s167, 8
      %s169 = scalar_lea.vmem %s2, %s168
      %p170 = scmp.lt.s32.totalorder %s15, 1
      %s171 = scalar_select %p170, %s15, 1
      %s172 = smul.addr %s171, 8
      %s173 = scalar_lea.vmem %s3, %s172
      %v175 = vld [vmem:[%s165] sm:$0x1]
      %v177 = vperm.slane %v175, 0
      %178 = vrot.lane.b32.xlu0 %v177, 7
      %v179 = vpop.permute.xlu0 %178
      %vm181 = vcmask 56320
      %v182 = vsel %vm181, 0.0, %v179
      %v183 = vsel %vm181, %v179, 0.0
      %v186 = vrot.slane %v182, 7
      %v187 = vrot.slane %v183, 7
      %188 = vrot.lane.b32.xlu0 %v186, 127
      %v189 = vpop.permute.xlu0 %188
      %190 = vrot.lane.b32.xlu0 %v187, 127
      %v191 = vpop.permute.xlu0 %190
      %vm192 = vcmask 1039360
      %v193 = vsel %vm192, %v189, %v191
      %v195 = vrot.slane %v182, 6
      %v196 = vrot.slane %v183, 6
      %197 = vrot.lane.b32.xlu0 %v195, 126
      %v198 = vpop.permute.xlu0 %197
      %199 = vrot.lane.b32.xlu0 %v196, 126
      %v200 = vpop.permute.xlu0 %199
      %vm201 = vcmask 1031168
      %v202 = vsel %vm201, %v198, %v200
      %v204 = vrot.slane %v182, 5
      %v205 = vrot.slane %v183, 5
      %206 = vrot.lane.b32.xlu0 %v204, 125
      %v207 = vpop.permute.xlu0 %206
      %208 = vrot.lane.b32.xlu0 %v205, 125
      %v209 = vpop.permute.xlu0 %208
      %vm210 = vcmask 1022976
      %v211 = vsel %vm210, %v207, %v209
      %v213 = vrot.slane %v182, 4
      %v214 = vrot.slane %v183, 4
      %215 = vrot.lane.b32.xlu0 %v213, 124
      %v216 = vpop.permute.xlu0 %215
      %217 = vrot.lane.b32.xlu0 %v214, 124
      %v218 = vpop.permute.xlu0 %217
      %vm219 = vcmask 1014784
      %v220 = vsel %vm219, %v216, %v218
      %v222 = vrot.slane %v182, 3
      %v223 = vrot.slane %v183, 3
      %224 = vrot.lane.b32.xlu0 %v222, 123
      %v225 = vpop.permute.xlu0 %224
      %226 = vrot.lane.b32.xlu0 %v223, 123
      %v227 = vpop.permute.xlu0 %226
      %vm228 = vcmask 1006592
      %v229 = vsel %vm228, %v225, %v227
      %v231 = vrot.slane %v182, 2
      %v232 = vrot.slane %v183, 2
      %233 = vrot.lane.b32.xlu0 %v231, 122
      %v234 = vpop.permute.xlu0 %233
      %235 = vrot.lane.b32.xlu0 %v232, 122
      %v236 = vpop.permute.xlu0 %235
      %vm237 = vcmask 998400
      %v238 = vsel %vm237, %v234, %v236
      %v240 = vrot.slane %v182, 1
      %v241 = vrot.slane %v183, 1
      %242 = vrot.lane.b32.xlu0 %v240, 121
      %v243 = vpop.permute.xlu0 %242
      %244 = vrot.lane.b32.xlu0 %v241, 121
      %v245 = vpop.permute.xlu0 %244
      %vm246 = vcmask 990208
      %v247 = vsel %vm246, %v243, %v245
      %249 = vrot.lane.b32.xlu0 %v182, 120
      %v250 = vpop.permute.xlu0 %249
      %251 = vrot.lane.b32.xlu0 %v183, 120
      %v252 = vpop.permute.xlu0 %251
      %vm253 = vcmask 982016
      %v254 = vsel %vm253, %v250, %v252
      %256 = vrot.lane.b32.xlu0 %v186, 119
      %v257 = vpop.permute.xlu0 %256
      %258 = vrot.lane.b32.xlu0 %v187, 119
      %v259 = vpop.permute.xlu0 %258
      %vm260 = vcmask 973824
      %v261 = vsel %vm260, %v257, %v259
      %263 = vrot.lane.b32.xlu0 %v195, 118
      %v264 = vpop.permute.xlu0 %263
      %265 = vrot.lane.b32.xlu0 %v196, 118
      %v266 = vpop.permute.xlu0 %265
      %vm267 = vcmask 965632
      %v268 = vsel %vm267, %v264, %v266
      %270 = vrot.lane.b32.xlu0 %v204, 117
      %v271 = vpop.permute.xlu0 %270
      %272 = vrot.lane.b32.xlu0 %v205, 117
      %v273 = vpop.permute.xlu0 %272
      %vm274 = vcmask 957440
      %v275 = vsel %vm274, %v271, %v273
      %277 = vrot.lane.b32.xlu0 %v213, 116
      %v278 = vpop.permute.xlu0 %277
      %279 = vrot.lane.b32.xlu0 %v214, 116
      %v280 = vpop.permute.xlu0 %279
      %vm281 = vcmask 949248
      %v282 = vsel %vm281, %v278, %v280
      %284 = vrot.lane.b32.xlu0 %v222, 115
      %v285 = vpop.permute.xlu0 %284
      %286 = vrot.lane.b32.xlu0 %v223, 115
      %v287 = vpop.permute.xlu0 %286
      %vm288 = vcmask 941056
      %v289 = vsel %vm288, %v285, %v287
      %291 = vrot.lane.b32.xlu0 %v231, 114
      %v292 = vpop.permute.xlu0 %291
      %293 = vrot.lane.b32.xlu0 %v232, 114
      %v294 = vpop.permute.xlu0 %293
      %vm295 = vcmask 932864
      %v296 = vsel %vm295, %v292, %v294
      %vm298 = vcmask 1040384
      %v299 = vsel %vm298, %v182, %v193
      %vm300 = vcmask 1041408
      %v301 = vsel %vm300, %v299, %v202
      %vm302 = vcmask 1042432
      %v303 = vsel %vm302, %v301, %v211
      %vm304 = vcmask 1043456
      %v305 = vsel %vm304, %v303, %v220
      %vm306 = vcmask 1044480
      %v307 = vsel %vm306, %v305, %v229
      %vm308 = vcmask 1045504
      %v309 = vsel %vm308, %v307, %v238
      %vm310 = vcmask 1046528
      %v311 = vsel %vm310, %v309, %v247
      %v312 = vsel %vm298, %v254, %v261
      %v313 = vsel %vm300, %v312, %v268
      %v314 = vsel %vm302, %v313, %v275
      %v315 = vsel %vm304, %v314, %v282
      %v316 = vsel %vm306, %v315, %v289
      %v317 = vsel %vm308, %v316, %v296
      %v318 = vpack.c.bf16 %v317, %v311
      %v319 = vld [vmem:[%s1] sm:$0xf]
      %vm320 = vcmask 121856
      %v322 = vsel %vm320, %v319, 0
      %vm324 = vcmask 1047552
      %v325 = vsel %vm310, 4294967295, 65535
      %v326 = vsel %vm324, %v325, 0
      %v328 = vand.u32 %v318, %v326
      %330 = vmatpush.bf16.msra.mxu0 0
      %331 = vmatpush.bf16.msra.mxu0 0
      %332 = vmatpush.bf16.msra.mxu0 0
      %333 = vmatpush.bf16.msra.mxu0 0
      %334 = vmatpush.bf16.msra.mxu0 0
      %335 = vmatpush.bf16.msra.mxu0 0
      %336 = vmatpush.bf16.msra.mxu0 0
      %337 = vmatpush.bf16.msra.mxu0 %v328
      %338 = vmatmul.bf16.gmra.mxu0 %v322
      %v339 = vpop.f32.mrf.mxu0
      %v340 = vadd.f32 0.0, %v339
      %v341 = vpop.f32.mrf.mxu0
      %342 = vdwg.mxu0
      %343 = vst [vmem:[%s169] sm:$0xff] %v340
      %344 = vadd.xlane.f32.xlu0 %v340
      %v345 = vpop.xlane.xlu0 %344
      %v346 = vmul.f32 %v340, %v340
      %347 = vadd.xlane.f32.xlu0 %v346
      %v348 = vpop.xlane.xlu0 %347
      %vm349 = vcmask 7168
      %v350 = vsel %vm349, %v345, %v348
      %vm351 = vcmask 15360
      %352 = vst.msk [vmem:[%s173] sm:$0xff] %vm351, %v350
      %p353 = scmp.lt.s32.totalorder %s15, 1
      %s354 = scalar_select %p353, %s15, 1
      %s355 = smul.addr %s354, 8
      %s356 = scalar_lea.vmem %s2, %s355
      %p357 = scmp.lt.s32.totalorder %s15, 1
      %s358 = scalar_select %p357, %s15, 1
      %s359 = smul.addr %s358, 8
      %s360 = scalar_lea.vmem %s3, %s359
      // Predicated region
      $region29: #{model_forward.10} parent=27 // pred_check
        %p361 = pneg %p80
      $region30: #{model_forward.10} parent=27 // pred_check_branch
        %363 = sbr.rel (%p361) target = $region32
      $region31: #{model_forward.10} parent=27 // pred_region
        _
      $region32: #{model_forward.10} parent=27 // pred_fallthru
        _
      // Predicated region
      $region33: #{model_forward.10} parent=27 // pred_check
        %p364 = pneg %p106
      $region34: #{model_forward.10} parent=27 // pred_check_branch
        %366 = sbr.rel (%p364) target = $region36
      $region35: #{model_forward.10} parent=27 // pred_region
        _
      $region36: #{model_forward.10} parent=27 // pred_fallthru
        _
    $region28: #{model_forward.10} parent=5 // pred_fallthru
      _
    %p367 = scmp.le.s32.totalorder 2, %s10
    // Predicated region
    $region37: #{model_forward.10} parent=5 // pred_check
      %p368 = pneg %p367
    $region38: #{model_forward.10} parent=5 // pred_check_branch
      %370 = sbr.rel (%p368) target = $region40
    $region39: #{model_forward.10} parent=5 // pred_region
      %s371 = ssub.s32 %s10, 2
      // Predicated region
      $region41: #{model_forward.10} parent=39 // pred_check
        %p372 = pneg %p86
      $region42: #{model_forward.10} parent=39 // pred_check_branch
        %374 = sbr.rel (%p372) target = $region44
      $region43: #{model_forward.10} parent=39 // pred_region
        %p375 = scmp.lt.s32.totalorder %s16, 1
        %s376 = scalar_select %p375, %s16, 1
        %s377 = smul.addr %s376, 8
        %s378 = scalar_lea.vmem %s2, %s377
      $region44: #{model_forward.10} parent=39 // pred_fallthru
        _
      // Predicated region
      $region45: #{model_forward.10} parent=39 // pred_check
        %p379 = pneg %p112
      $region46: #{model_forward.10} parent=39 // pred_check_branch
        %381 = sbr.rel (%p379) target = $region48
      $region47: #{model_forward.10} parent=39 // pred_region
        %p382 = scmp.lt.s32.totalorder %s16, 1
        %s383 = scalar_select %p382, %s16, 1
        %s384 = smul.addr %s383, 8
        %s385 = scalar_lea.vmem %s3, %s384
      $region48: #{model_forward.10} parent=39 // pred_fallthru
        _
    $region40: #{model_forward.10} parent=5 // pred_fallthru
      _
  $region6: #{model_forward.10} parent=0 // loop_footer
    %s14 = sadd.s32 1, %s10
  $region7: #{model_forward.10} parent=0 // loop_footer_branch
    %9 = sbr.rel target = $region3
  $region8: #{model_forward.10} parent=0 // loop_exit
    _

// kernel: model_forward.12
$region0: #{model_forward.12}
  #allocation0 [shape = 'u32[]', space=smem, size = 0x4, offset = 0x4, fixed_abs, tag = 'smem constant byte address 0x4 - core index']
  #allocation1 [shape = 'u32[72,128]{1,0:T(1,128)}', space=vmem, size = 0x9000, scoped, tag = 'internal scratch']
  %s0 = inlined_call_operand.vmem [shape: f32[2,16,32], index: 0, kind: input, shape index: {}]
  %s1 = inlined_call_operand.vmem [shape: f32[16,1], index: 1, kind: input, shape index: {}]
  %s2 = inlined_call_operand.vmem [shape: f32[16,1], index: 2, kind: input, shape index: {}]
  %s3 = inlined_call_operand.vmem [shape: bf16[24,240], index: 3, kind: input, shape index: {}]
  %s4 = inlined_call_operand.vmem [shape: f32[2,24,32], index: 4, kind: output, shape index: {0}]
  %s5 = inlined_call_operand.vmem [shape: f32[2,24,2], index: 5, kind: output, shape index: {1}]
  %6 = xla_tuple %s4, %s5
  %s7 = sld [smem:[#allocation0]]
  $region57: #{model_forward.12} parent=0
    _
  %s9 = ssub.s32 1, %s7
  %s10 = scalar_select 0, %s9, %s7
  loop: start=0, step=1, limit=4
  $region2: #{model_forward.12} parent=0 // loop_pre_header
    _
  $region3: #{model_forward.12} parent=0 // loop_header
    %s12 = sphi 0, %s16
    %p13 = scmp.ge.s32.totalorder %s12, 4
    %s22 = sphi 0, %s24
    %s25 = sphi 0, %s22
    %s26 = sphi 0, %s25
    %s42 = sphi 0, %s26
    %s46 = sphi 0, %s46
    %s48 = sphi 0, %s46
    %s49 = sphi 0, %s48
    %s63 = sphi 0, %s49
    %s67 = sphi 0, %s67
    %s69 = sphi 0, %s67
    %s70 = sphi 0, %s69
    %s84 = sphi 0, %s70
    %s88 = sphi 0, %s88
    %s90 = sphi 0, %s88
    %s91 = sphi 0, %s90
    %s105 = sphi 0, %s91
    %s111 = sphi 0, %s113
    %s114 = sphi 0, %s111
    %s115 = sphi 0, %s114
    %s131 = sphi 0, %s115
    %s137 = sphi 0, %s139
    %s140 = sphi 0, %s137
    %s141 = sphi 0, %s140
    %s157 = sphi 0, %s141
  $region4: #{model_forward.12} parent=0 // loop_header_branch
    %15 = sbr.rel (%p13) target = $region8
  $region5: #{model_forward.12} parent=0 // loop_body
    %s17 = ssub.s32 %s12, 1
    %s18 = ssub.s32 %s12, 2
    %s19 = sadd.s32 %s12, 1
    %s20 = ssub.s32 %s12, %s19
    %p21 = scmp.eq.s32.totalorder %s20, 0
    %s23 = sadd.s32 %s22, 1
    %s24 = scalar_select %p21, %s22, %s23
    %p27 = pneg %p21
    %p28 = scmp.eq.s32.totalorder %s12, 1
    %p29 = por %p27, %p28
    %p30 = scmp.ne.s32.totalorder %s22, %s25
    %p31 = scmp.eq.s32.totalorder %s12, 0
    %p32 = por %p30, %p31
    %p33 = scmp.ne.s32.totalorder %s22, %s25
    %p34 = scmp.eq.s32.totalorder %s17, 1
    %p35 = por %p33, %p34
    %p36 = scmp.ne.s32.totalorder %s25, %s26
    %p37 = scmp.eq.s32.totalorder %s17, 0
    %p38 = por %p36, %p37
    %p39 = scmp.ne.s32.totalorder %s25, %s26
    %p40 = scmp.eq.s32.totalorder %s18, 1
    %p41 = por %p39, %p40
    %p43 = scmp.ne.s32.totalorder %s26, %s42
    %p44 = scmp.eq.s32.totalorder %s18, 0
    %p45 = por %p43, %p44
    %s47 = sadd.s32 %s46, 1
    %p50 = scmp.eq.s32.totalorder %s12, 1
    %p51 = scmp.ne.s32.totalorder %s46, %s48
    %p52 = scmp.eq.s32.totalorder %s12, 0
    %p53 = por %p51, %p52
    %p54 = scmp.ne.s32.totalorder %s46, %s48
    %p55 = scmp.eq.s32.totalorder %s17, 1
    %p56 = por %p54, %p55
    %p57 = scmp.ne.s32.totalorder %s48, %s49
    %p58 = scmp.eq.s32.totalorder %s17, 0
    %p59 = por %p57, %p58
    %p60 = scmp.ne.s32.totalorder %s48, %s49
    %p61 = scmp.eq.s32.totalorder %s18, 1
    %p62 = por %p60, %p61
    %p64 = scmp.ne.s32.totalorder %s49, %s63
    %p65 = scmp.eq.s32.totalorder %s18, 0
    %p66 = por %p64, %p65
    %s68 = sadd.s32 %s67, 1
    %p71 = scmp.eq.s32.totalorder %s12, 1
    %p72 = scmp.ne.s32.totalorder %s67, %s69
    %p73 = scmp.eq.s32.totalorder %s12, 0
    %p74 = por %p72, %p73
    %p75 = scmp.ne.s32.totalorder %s67, %s69
    %p76 = scmp.eq.s32.totalorder %s17, 1
    %p77 = por %p75, %p76
    %p78 = scmp.ne.s32.totalorder %s69, %s70
    %p79 = scmp.eq.s32.totalorder %s17, 0
    %p80 = por %p78, %p79
    %p81 = scmp.ne.s32.totalorder %s69, %s70
    %p82 = scmp.eq.s32.totalorder %s18, 1
    %p83 = por %p81, %p82
    %p85 = scmp.ne.s32.totalorder %s70, %s84
    %p86 = scmp.eq.s32.totalorder %s18, 0
    %p87 = por %p85, %p86
    %s89 = sadd.s32 %s88, 1
    %p92 = scmp.eq.s32.totalorder %s12, 1
    %p93 = scmp.ne.s32.totalorder %s88, %s90
    %p94 = scmp.eq.s32.totalorder %s12, 0
    %p95 = por %p93, %p94
    %p96 = scmp.ne.s32.totalorder %s88, %s90
    %p97 = scmp.eq.s32.totalorder %s17, 1
    %p98 = por %p96, %p97
    %p99 = scmp.ne.s32.totalorder %s90, %s91
    %p100 = scmp.eq.s32.totalorder %s17, 0
    %p101 = por %p99, %p100
    %p102 = scmp.ne.s32.totalorder %s90, %s91
    %p103 = scmp.eq.s32.totalorder %s18, 1
    %p104 = por %p102, %p103
    %p106 = scmp.ne.s32.totalorder %s91, %s105
    %p107 = scmp.eq.s32.totalorder %s18, 0
    %p108 = por %p106, %p107
    %s109 = ssub.s32 %s12, %s19
    %p110 = scmp.eq.s32.totalorder %s109, 0
    %s112 = sadd.s32 %s111, 1
    %s113 = scalar_select %p110, %s111, %s112
    %p116 = pneg %p110
    %p117 = scmp.eq.s32.totalorder %s12, 1
    %p118 = por %p116, %p117
    %p119 = scmp.ne.s32.totalorder %s111, %s114
    %p120 = scmp.eq.s32.totalorder %s12, 0
    %p121 = por %p119, %p120
    %p122 = scmp.ne.s32.totalorder %s111, %s114
    %p123 = scmp.eq.s32.totalorder %s17, 1
    %p124 = por %p122, %p123
    %p125 = scmp.ne.s32.totalorder %s114, %s115
    %p126 = scmp.eq.s32.totalorder %s17, 0
    %p127 = por %p125, %p126
    %p128 = scmp.ne.s32.totalorder %s114, %s115
    %p129 = scmp.eq.s32.totalorder %s18, 1
    %p130 = por %p128, %p129
    %p132 = scmp.ne.s32.totalorder %s115, %s131
    %p133 = scmp.eq.s32.totalorder %s18, 0
    %p134 = por %p132, %p133
    %s135 = ssub.s32 %s12, %s19
    %p136 = scmp.eq.s32.totalorder %s135, 0
    %s138 = sadd.s32 %s137, 1
    %s139 = scalar_select %p136, %s137, %s138
    %p142 = pneg %p136
    %p143 = scmp.eq.s32.totalorder %s12, 1
    %p144 = por %p142, %p143
    %p145 = scmp.ne.s32.totalorder %s137, %s140
    %p146 = scmp.eq.s32.totalorder %s12, 0
    %p147 = por %p145, %p146
    %p148 = scmp.ne.s32.totalorder %s137, %s140
    %p149 = scmp.eq.s32.totalorder %s17, 1
    %p150 = por %p148, %p149
    %p151 = scmp.ne.s32.totalorder %s140, %s141
    %p152 = scmp.eq.s32.totalorder %s17, 0
    %p153 = por %p151, %p152
    %p154 = scmp.ne.s32.totalorder %s140, %s141
    %p155 = scmp.eq.s32.totalorder %s18, 1
    %p156 = por %p154, %p155
    %p158 = scmp.ne.s32.totalorder %s141, %s157
    %p159 = scmp.eq.s32.totalorder %s18, 0
    %p160 = por %p158, %p159
    %p161 = scmp.le.s32.totalorder 1, %s12
    %p162 = scmp.lt.s32.totalorder %s12, 3
    %p163 = pnand %p161, %p162
    %p164 = pneg %p163
    // Predicated region
    $region9: #{model_forward.12} parent=5 // pred_check
      _
    $region10: #{model_forward.12} parent=5 // pred_check_branch
      %166 = sbr.rel (%p163) target = $region12
    $region11: #{model_forward.12} parent=5 // pred_region
      %s167 = ssub.s32 %s12, 1
      // Predicated region
      $region13: #{model_forward.12} parent=11 // pred_check
        %p168 = pneg %p59
      $region14: #{model_forward.12} parent=11 // pred_check_branch
        %170 = sbr.rel (%p168) target = $region16
      $region15: #{model_forward.12} parent=11 // pred_region
        _
      $region16: #{model_forward.12} parent=11 // pred_fallthru
        _
      // Predicated region
      $region17: #{model_forward.12} parent=11 // pred_check
        %p171 = pneg %p80
      $region18: #{model_forward.12} parent=11 // pred_check_branch
        %173 = sbr.rel (%p171) target = $region20
      $region19: #{model_forward.12} parent=11 // pred_region
        _
      $region20: #{model_forward.12} parent=11 // pred_fallthru
        _
      // Predicated region
      $region21: #{model_forward.12} parent=11 // pred_check
        %p174 = pneg %p101
      $region22: #{model_forward.12} parent=11 // pred_check_branch
        %176 = sbr.rel (%p174) target = $region24
      $region23: #{model_forward.12} parent=11 // pred_region
        _
      $region24: #{model_forward.12} parent=11 // pred_fallthru
        _
    $region12: #{model_forward.12} parent=5 // pred_fallthru
      _
    %p177 = scmp.lt.s32.totalorder %s12, 2
    // Predicated region
    $region25: #{model_forward.12} parent=5 // pred_check
      %p178 = pneg %p177
    $region26: #{model_forward.12} parent=5 // pred_check_branch
      %180 = sbr.rel (%p178) target = $region28
    $region27: #{model_forward.12} parent=5 // pred_region
      // Predicated region
      $region29: #{model_forward.12} parent=27 // pred_check
        %p181 = pneg %p32
      $region30: #{model_forward.12} parent=27 // pred_check_branch
        %183 = sbr.rel (%p181) target = $region32
      $region31: #{model_forward.12} parent=27 // pred_region
        %p184 = scmp.lt.s32.totalorder %s12, 1
        %s185 = scalar_select %p184, %s12, 1
        %s186 = smul.addr %s185, 2
        %s187 = smul.addr %s186, 8
        %s188 = scalar_lea.vmem %s0, %s187
      $region32: #{model_forward.12} parent=27 // pred_fallthru
        _
    $region28: #{model_forward.12} parent=5 // pred_fallthru
      _
    %p189 = scmp.le.s32.totalorder 1, %s12
    %p190 = scmp.lt.s32.totalorder %s12, 3
    %p191 = pnand %p189, %p190
    %p192 = pneg %p191
    // Predicated region
    $region33: #{model_forward.12} parent=5 // pred_check
      _
    $region34: #{model_forward.12} parent=5 // pred_check_branch
      %194 = sbr.rel (%p191) target = $region36
    $region35: #{model_forward.12} parent=5 // pred_region
      %s195 = ssub.s32 %s12, 1
      %p196 = scmp.lt.s32.totalorder %s17, 1
      %s197 = scalar_select %p196, %s17, 1
      %s198 = smul.addr %s197, 2
      %s199 = smul.addr %s198, 8
      %s200 = scalar_lea.vmem %s0, %s199
      %p201 = pneg %p38
      %p202 = pneg %p35
      %p203 = pneg %p59
      %p204 = pneg %p56
      %p205 = pneg %p80
      %p206 = pneg %p77
      %p207 = pneg %p101
      %p208 = pneg %p98
      %p209 = pneg %p127
      %p210 = pneg %p124
      %p211 = scmp.lt.s32.totalorder %s17, 1
      %s212 = scalar_select %p211, %s17, 1
      %s213 = smul.addr %s212, 3
      %s214 = smul.addr %s213, 8
      %s215 = scalar_lea.vmem %s4, %s214
      %p216 = pneg %p153
      %p217 = pneg %p150
      %p218 = scmp.lt.s32.totalorder %s17, 1
      %s219 = scalar_select %p218, %s17, 1
      %s220 = smul.addr %s219, 3
      %s221 = smul.addr %s220, 8
      %s222 = scalar_lea.vmem %s5, %s221
      %p223 = scmp.lt.s32.totalorder %s17, 1
      %s224 = scalar_select %p223, %s17, 1
      %s225 = smul.addr %s224, 2
      %s226 = smul.addr %s225, 8
      %s227 = scalar_lea.vmem %s0, %s226
      %p228 = scmp.lt.s32.totalorder %s17, 1
      %s229 = scalar_select %p228, %s17, 1
      %s230 = smul.addr %s229, 3
      %s231 = smul.addr %s230, 8
      %s232 = scalar_lea.vmem %s4, %s231
      %p233 = scmp.lt.s32.totalorder %s17, 1
      %s234 = scalar_select %p233, %s17, 1
      %s235 = smul.addr %s234, 3
      %s236 = smul.addr %s235, 8
      %s237 = scalar_lea.vmem %s5, %s236
      %v239 = vld [vmem:[%s227] sm:$0xff]
      %v240 = vld [vmem:[%s227 + $0x8] sm:$0xff]
      %v241 = vld [vmem:[%s1] sm:$0xff]
      %v242 = vld [vmem:[%s1 + $0x8] sm:$0xff]
      %v243 = vld [vmem:[%s2] sm:$0xff]
      %v244 = vld [vmem:[%s2 + $0x8] sm:$0xff]
      %246 = vset.pattern.permute.xlu0 0
      %247 = vperm.xlu0 %246, %v241
      %v248 = vpop.permute.xlu0 %247
      %251 = vset.pattern.permute.xlu0 0
      %252 = vperm.xlu0 %251, %v242
      %v253 = vpop.permute.xlu0 %252
      %v255 = vmul.f32 %v239, %v248
      %v256 = vmul.f32 %v240, %v253
      %258 = vset.pattern.permute.xlu0 0
      %259 = vperm.xlu0 %258, %v243
      %v260 = vpop.permute.xlu0 %259
      %263 = vset.pattern.permute.xlu0 0
      %264 = vperm.xlu0 %263, %v244
      %v265 = vpop.permute.xlu0 %264
      %v267 = vadd.f32 %v255, %v260
      %v268 = vadd.f32 %v256, %v265
      %vm269 = vcmp.ge.f32.partialorder %v267, 0.0
      %vm270 = vcmp.ge.f32.partialorder %v268, 0.0
      %v271 = vmul.f32 %v267, 0.1
      %v272 = vmul.f32 %v268, 0.1
      %v273 = vsel %vm269, %v267, %v271
      %v274 = vsel %vm270, %v268, %v272
      %277 = vrot.lane.b32.xlu0 %v273, 7
      %v278 = vpop.permute.xlu0 %277
      %279 = vrot.lane.b32.xlu0 %v274, 7
      %v280 = vpop.permute.xlu0 %279
      %vm283 = vcmask 56320
      %v284 = vsel %vm283, 0.0, %v278
      %v285 = vsel %vm283, 0.0, %v280
      %vm286 = vcmask 318464
      %v287 = vsel %vm286, %v284, 0.0
      %v288 = vsel %vm286, %v285, 0.0
      %291 = vrot.lane.b32.xlu0 %v287, 127
      %v292 = vpop.permute.xlu0 %291
      %293 = vrot.lane.b32.xlu0 %v288, 127
      %v294 = vpop.permute.xlu0 %293
      %297 = vrot.lane.b32.xlu0 %v287, 126
      %v298 = vpop.permute.xlu0 %297
      %299 = vrot.lane.b32.xlu0 %v288, 126
      %v300 = vpop.permute.xlu0 %299
      %303 = vrot.lane.b32.xlu0 %v287, 125
      %v304 = vpop.permute.xlu0 %303
      %305 = vrot.lane.b32.xlu0 %v288, 125
      %v306 = vpop.permute.xlu0 %305
      %309 = vrot.lane.b32.xlu0 %v287, 124
      %v310 = vpop.permute.xlu0 %309
      %311 = vrot.lane.b32.xlu0 %v288, 124
      %v312 = vpop.permute.xlu0 %311
      %315 = vrot.lane.b32.xlu0 %v287, 123
      %v316 = vpop.permute.xlu0 %315
      %317 = vrot.lane.b32.xlu0 %v288, 123
      %v318 = vpop.permute.xlu0 %317
      %321 = vrot.lane.b32.xlu0 %v287, 122
      %v322 = vpop.permute.xlu0 %321
      %323 = vrot.lane.b32.xlu0 %v288, 122
      %v324 = vpop.permute.xlu0 %323
      %327 = vrot.lane.b32.xlu0 %v287, 121
      %v328 = vpop.permute.xlu0 %327
      %329 = vrot.lane.b32.xlu0 %v288, 121
      %v330 = vpop.permute.xlu0 %329
      %333 = vrot.lane.b32.xlu0 %v287, 120
      %v334 = vpop.permute.xlu0 %333
      %335 = vrot.lane.b32.xlu0 %v288, 120
      %v336 = vpop.permute.xlu0 %335
      %339 = vrot.lane.b32.xlu0 %v287, 119
      %v340 = vpop.permute.xlu0 %339
      %341 = vrot.lane.b32.xlu0 %v288, 119
      %v342 = vpop.permute.xlu0 %341
      %345 = vrot.lane.b32.xlu0 %v287, 118
      %v346 = vpop.permute.xlu0 %345
      %347 = vrot.lane.b32.xlu0 %v288, 118
      %v348 = vpop.permute.xlu0 %347
      %351 = vrot.lane.b32.xlu0 %v287, 117
      %v352 = vpop.permute.xlu0 %351
      %353 = vrot.lane.b32.xlu0 %v288, 117
      %v354 = vpop.permute.xlu0 %353
      %357 = vrot.lane.b32.xlu0 %v287, 116
      %v358 = vpop.permute.xlu0 %357
      %359 = vrot.lane.b32.xlu0 %v288, 116
      %v360 = vpop.permute.xlu0 %359
      %363 = vrot.lane.b32.xlu0 %v287, 115
      %v364 = vpop.permute.xlu0 %363
      %365 = vrot.lane.b32.xlu0 %v288, 115
      %v366 = vpop.permute.xlu0 %365
      %369 = vrot.lane.b32.xlu0 %v287, 114
      %v370 = vpop.permute.xlu0 %369
      %371 = vrot.lane.b32.xlu0 %v288, 114
      %v372 = vpop.permute.xlu0 %371
      %v375 = vpack.c.bf16 %v288, %v287
      %v376 = vpack.c.bf16 %v294, %v292
      %v377 = vpack.c.bf16 %v300, %v298
      %v378 = vpack.c.bf16 %v306, %v304
      %v379 = vpack.c.bf16 %v312, %v310
      %v380 = vpack.c.bf16 %v318, %v316
      %v381 = vpack.c.bf16 %v324, %v322
      %v382 = vpack.c.bf16 %v330, %v328
      %v383 = vpack.c.bf16 %v336, %v334
      %v384 = vpack.c.bf16 %v342, %v340
      %v385 = vpack.c.bf16 %v348, %v346
      %v386 = vpack.c.bf16 %v354, %v352
      %v387 = vpack.c.bf16 %v360, %v358
      %v388 = vpack.c.bf16 %v366, %v364
      %v389 = vpack.c.bf16 %v372, %v370
      %v390 = vld [vmem:[%s3] sm:$0xff]
      %v391 = vld [vmem:[%s3 + $0x8] sm:$0xff]
      %v392 = vld [vmem:[%s3 + $0x10] sm:$0xff]
      %v396 = vunpack.c.l.b16 %v390
      %v397 = vunpack.c.h.b16 %v390
      %v398 = vunpack.c.l.b16 %v391
      %v399 = vunpack.c.h.b16 %v391
      %v400 = vunpack.c.l.b16 %v392
      %v401 = vunpack.c.h.b16 %v392
      %v402 = vpack.c.b16 %v398, %v396
      %v403 = vpack.c.b16 %v399, %v397
      %v404 = vpack.c.b16 %v400, %v400
      %v405 = vpack.c.b16 %v401, %v401
      %vm408 = vcmask 916480
      %v410 = vsel %vm408, %v403, 0
      %v413 = vsel %vm408, %v405, 0
      %415 = vmatpush.bf16.msra.mxu0 %v382
      %416 = vmatpush.bf16.msra.mxu0 %v381
      %417 = vmatpush.bf16.msra.mxu0 %v380
      %418 = vmatpush.bf16.msra.mxu0 %v379
      %419 = vmatpush.bf16.msra.mxu0 %v378
      %420 = vmatpush.bf16.msra.mxu0 %v377
      %421 = vmatpush.bf16.msra.mxu0 %v376
      %422 = vmatpush.bf16.msra.mxu0 %v375
      %423 = vmatmul.bf16.gmra.mxu0 %v402
      %v424 = vpop.f32.mrf.mxu0
      %v425 = vadd.f32 0.0, %v424
      %v426 = vpop.f32.mrf.mxu0
      %v427 = vadd.f32 0.0, %v426
      %428 = vmatmul.bf16.gmra.mxu0 %v404
      %v429 = vpop.f32.mrf.mxu0
      %v430 = vadd.f32 0.0, %v429
      %v431 = vpop.f32.mrf.mxu0
      %432 = vdwg.mxu0
      %433 = vmatpush.bf16.msra.mxu0 0
      %434 = vmatpush.bf16.msra.mxu0 %v389
      %435 = vmatpush.bf16.msra.mxu0 %v388
      %436 = vmatpush.bf16.msra.mxu0 %v387
      %437 = vmatpush.bf16.msra.mxu0 %v386
      %438 = vmatpush.bf16.msra.mxu0 %v385
      %439 = vmatpush.bf16.msra.mxu0 %v384
      %440 = vmatpush.bf16.msra.mxu0 %v383
      %441 = vmatmul.bf16.gmra.mxu0 %v410
      %v442 = vpop.f32.mrf.mxu0
      %v443 = vadd.f32 %v425, %v442
      %v444 = vpop.f32.mrf.mxu0
      %v445 = vadd.f32 %v427, %v444
      %446 = vmatmul.bf16.gmra.mxu0 %v413
      %v447 = vpop.f32.mrf.mxu0
      %v448 = vadd.f32 %v430, %v447
      %v449 = vpop.f32.mrf.mxu0
      %450 = vdwg.mxu0
      %vm451 = vcmask 261120
      %452 = vst.msk [vmem:[%s232] sm:$0xff] %vm451, %v443
      %453 = vst.msk [vmem:[%s232 + $0x8] sm:$0xff] %vm451, %v445
      %454 = vst.msk [vmem:[%s232 + $0x10] sm:$0xff] %vm451, %v448
      %v455 = vsel %vm451, %v443, 0.0
      %456 = vadd.xlane.f32.xlu0 %v455
      %v457 = vpop.xlane.xlu0 %456
      %v458 = vsel %vm451, %v445, 0.0
      %459 = vadd.xlane.f32.xlu0 %v458
      %v460 = vpop.xlane.xlu0 %459
      %v461 = vsel %vm451, %v448, 0.0
      %462 = vadd.xlane.f32.xlu0 %v461
      %v463 = vpop.xlane.xlu0 %462
      %v464 = vmul.f32 %v443, %v443
      %v465 = vmul.f32 %v445, %v445
      %v466 = vmul.f32 %v448, %v448
      %v467 = vsel %vm451, %v464, 0.0
      %468 = vadd.xlane.f32.xlu0 %v467
      %v469 = vpop.xlane.xlu0 %468
      %v470 = vsel %vm451, %v465, 0.0
      %471 = vadd.xlane.f32.xlu0 %v470
      %v472 = vpop.xlane.xlu0 %471
      %v473 = vsel %vm451, %v466, 0.0
      %474 = vadd.xlane.f32.xlu0 %v473
      %v475 = vpop.xlane.xlu0 %474
      %vm476 = vcmask 7168
      %v477 = vsel %vm476, %v457, %v469
      %v478 = vsel %vm476, %v460, %v472
      %v479 = vsel %vm476, %v463, %v475
      %vm480 = vcmask 15360
      %481 = vst.msk [vmem:[%s237] sm:$0xff] %vm480, %v477
      %482 = vst.msk [vmem:[%s237 + $0x8] sm:$0xff] %vm480, %v478
      %483 = vst.msk [vmem:[%s237 + $0x10] sm:$0xff] %vm480, %v479
      %p484 = scmp.lt.s32.totalorder %s17, 1
      %s485 = scalar_select %p484, %s17, 1
      %s486 = smul.addr %s485, 3
      %s487 = smul.addr %s486, 8
      %s488 = scalar_lea.vmem %s4, %s487
      %p489 = scmp.lt.s32.totalorder %s17, 1
      %s490 = scalar_select %p489, %s17, 1
      %s491 = smul.addr %s490, 3
      %s492 = smul.addr %s491, 8
      %s493 = scalar_lea.vmem %s5, %s492
      // Predicated region
      $region37: #{model_forward.12} parent=35 // pred_check
        %p494 = pneg %p124
      $region38: #{model_forward.12} parent=35 // pred_check_branch
        %496 = sbr.rel (%p494) target = $region40
      $region39: #{model_forward.12} parent=35 // pred_region
        _
      $region40: #{model_forward.12} parent=35 // pred_fallthru
        _
      // Predicated region
      $region41: #{model_forward.12} parent=35 // pred_check
        %p497 = pneg %p150
      $region42: #{model_forward.12} parent=35 // pred_check_branch
        %499 = sbr.rel (%p497) target = $region44
      $region43: #{model_forward.12} parent=35 // pred_region
        _
      $region44: #{model_forward.12} parent=35 // pred_fallthru
        _
    $region36: #{model_forward.12} parent=5 // pred_fallthru
      _
    %p500 = scmp.le.s32.totalorder 2, %s12
    // Predicated region
    $region45: #{model_forward.12} parent=5 // pred_check
      %p501 = pneg %p500
    $region46: #{model_forward.12} parent=5 // pred_check_branch
      %503 = sbr.rel (%p501) target = $region48
    $region47: #{model_forward.12} parent=5 // pred_region
      %s504 = ssub.s32 %s12, 2
      // Predicated region
      $region49: #{model_forward.12} parent=47 // pred_check
        %p505 = pneg %p130
      $region50: #{model_forward.12} parent=47 // pred_check_branch
        %507 = sbr.rel (%p505) target = $region52
      $region51: #{model_forward.12} parent=47 // pred_region
        %p508 = scmp.lt.s32.totalorder %s18, 1
        %s509 = scalar_select %p508, %s18, 1
        %s510 = smul.addr %s509, 3
        %s511 = smul.addr %s510, 8
        %s512 = scalar_lea.vmem %s4, %s511
      $region52: #{model_forward.12} parent=47 // pred_fallthru
        _
      // Predicated region
      $region53: #{model_forward.12} parent=47 // pred_check
        %p513 = pneg %p156
      $region54: #{model_forward.12} parent=47 // pred_check_branch
        %515 = sbr.rel (%p513) target = $region56
      $region55: #{model_forward.12} parent=47 // pred_region
        %p516 = scmp.lt.s32.totalorder %s18, 1
        %s517 = scalar_select %p516, %s18, 1
        %s518 = smul.addr %s517, 3
        %s519 = smul.addr %s518, 8
        %s520 = scalar_lea.vmem %s5, %s519
      $region56: #{model_forward.12} parent=47 // pred_fallthru
        _
    $region48: #{model_forward.12} parent=5 // pred_fallthru
      _
  $region6: #{model_forward.12} parent=0 // loop_footer
    %s16 = sadd.s32 1, %s12
  $region7: #{model_forward.12} parent=0 // loop_footer_branch
    %11 = sbr.rel target = $region3
  $region8: #{model_forward.12} parent=0 // loop_exit
    _

// kernel: model_forward.14
$region0: #{model_forward.14}
  #allocation0 [shape = 'u32[]', space=smem, size = 0x4, offset = 0x4, fixed_abs, tag = 'smem constant byte address 0x4 - core index']
  #allocation1 [shape = 'u32[72,128]{1,0:T(1,128)}', space=vmem, size = 0x9000, scoped, tag = 'internal scratch']
  %s0 = inlined_call_operand.vmem [shape: f32[2,32,8], index: 0, kind: input, shape index: {}]
  %s1 = inlined_call_operand.vmem [shape: f32[32,1], index: 1, kind: input, shape index: {}]
  %s2 = inlined_call_operand.vmem [shape: f32[32,1], index: 2, kind: input, shape index: {}]
  %s3 = inlined_call_operand.vmem [shape: bf16[32,480], index: 3, kind: input, shape index: {}]
  %s4 = inlined_call_operand.vmem [shape: f32[2,32,8], index: 4, kind: output, shape index: {0}]
  %s5 = inlined_call_operand.vmem [shape: f32[2,32,2], index: 5, kind: output, shape index: {1}]
  %6 = xla_tuple %s4, %s5
  %s7 = sld [smem:[#allocation0]]
  $region57: #{model_forward.14} parent=0
    _
  %s9 = ssub.s32 1, %s7
  %s10 = scalar_select 0, %s9, %s7
  loop: start=0, step=1, limit=4
  $region2: #{model_forward.14} parent=0 // loop_pre_header
    _
  $region3: #{model_forward.14} parent=0 // loop_header
    %s12 = sphi 0, %s16
    %p13 = scmp.ge.s32.totalorder %s12, 4
    %s22 = sphi 0, %s24
    %s25 = sphi 0, %s22
    %s26 = sphi 0, %s25
    %s42 = sphi 0, %s26
    %s46 = sphi 0, %s46
    %s48 = sphi 0, %s46
    %s49 = sphi 0, %s48
    %s63 = sphi 0, %s49
    %s67 = sphi 0, %s67
    %s69 = sphi 0, %s67
    %s70 = sphi 0, %s69
    %s84 = sphi 0, %s70
    %s88 = sphi 0, %s88
    %s90 = sphi 0, %s88
    %s91 = sphi 0, %s90
    %s105 = sphi 0, %s91
    %s111 = sphi 0, %s113
    %s114 = sphi 0, %s111
    %s115 = sphi 0, %s114
    %s131 = sphi 0, %s115
    %s137 = sphi 0, %s139
    %s140 = sphi 0, %s137
    %s141 = sphi 0, %s140
    %s157 = sphi 0, %s141
  $region4: #{model_forward.14} parent=0 // loop_header_branch
    %15 = sbr.rel (%p13) target = $region8
  $region5: #{model_forward.14} parent=0 // loop_body
    %s17 = ssub.s32 %s12, 1
    %s18 = ssub.s32 %s12, 2
    %s19 = sadd.s32 %s12, 1
    %s20 = ssub.s32 %s12, %s19
    %p21 = scmp.eq.s32.totalorder %s20, 0
    %s23 = sadd.s32 %s22, 1
    %s24 = scalar_select %p21, %s22, %s23
    %p27 = pneg %p21
    %p28 = scmp.eq.s32.totalorder %s12, 1
    %p29 = por %p27, %p28
    %p30 = scmp.ne.s32.totalorder %s22, %s25
    %p31 = scmp.eq.s32.totalorder %s12, 0
    %p32 = por %p30, %p31
    %p33 = scmp.ne.s32.totalorder %s22, %s25
    %p34 = scmp.eq.s32.totalorder %s17, 1
    %p35 = por %p33, %p34
    %p36 = scmp.ne.s32.totalorder %s25, %s26
    %p37 = scmp.eq.s32.totalorder %s17, 0
    %p38 = por %p36, %p37
    %p39 = scmp.ne.s32.totalorder %s25, %s26
    %p40 = scmp.eq.s32.totalorder %s18, 1
    %p41 = por %p39, %p40
    %p43 = scmp.ne.s32.totalorder %s26, %s42
    %p44 = scmp.eq.s32.totalorder %s18, 0
    %p45 = por %p43, %p44
    %s47 = sadd.s32 %s46, 1
    %p50 = scmp.eq.s32.totalorder %s12, 1
    %p51 = scmp.ne.s32.totalorder %s46, %s48
    %p52 = scmp.eq.s32.totalorder %s12, 0
    %p53 = por %p51, %p52
    %p54 = scmp.ne.s32.totalorder %s46, %s48
    %p55 = scmp.eq.s32.totalorder %s17, 1
    %p56 = por %p54, %p55
    %p57 = scmp.ne.s32.totalorder %s48, %s49
    %p58 = scmp.eq.s32.totalorder %s17, 0
    %p59 = por %p57, %p58
    %p60 = scmp.ne.s32.totalorder %s48, %s49
    %p61 = scmp.eq.s32.totalorder %s18, 1
    %p62 = por %p60, %p61
    %p64 = scmp.ne.s32.totalorder %s49, %s63
    %p65 = scmp.eq.s32.totalorder %s18, 0
    %p66 = por %p64, %p65
    %s68 = sadd.s32 %s67, 1
    %p71 = scmp.eq.s32.totalorder %s12, 1
    %p72 = scmp.ne.s32.totalorder %s67, %s69
    %p73 = scmp.eq.s32.totalorder %s12, 0
    %p74 = por %p72, %p73
    %p75 = scmp.ne.s32.totalorder %s67, %s69
    %p76 = scmp.eq.s32.totalorder %s17, 1
    %p77 = por %p75, %p76
    %p78 = scmp.ne.s32.totalorder %s69, %s70
    %p79 = scmp.eq.s32.totalorder %s17, 0
    %p80 = por %p78, %p79
    %p81 = scmp.ne.s32.totalorder %s69, %s70
    %p82 = scmp.eq.s32.totalorder %s18, 1
    %p83 = por %p81, %p82
    %p85 = scmp.ne.s32.totalorder %s70, %s84
    %p86 = scmp.eq.s32.totalorder %s18, 0
    %p87 = por %p85, %p86
    %s89 = sadd.s32 %s88, 1
    %p92 = scmp.eq.s32.totalorder %s12, 1
    %p93 = scmp.ne.s32.totalorder %s88, %s90
    %p94 = scmp.eq.s32.totalorder %s12, 0
    %p95 = por %p93, %p94
    %p96 = scmp.ne.s32.totalorder %s88, %s90
    %p97 = scmp.eq.s32.totalorder %s17, 1
    %p98 = por %p96, %p97
    %p99 = scmp.ne.s32.totalorder %s90, %s91
    %p100 = scmp.eq.s32.totalorder %s17, 0
    %p101 = por %p99, %p100
    %p102 = scmp.ne.s32.totalorder %s90, %s91
    %p103 = scmp.eq.s32.totalorder %s18, 1
    %p104 = por %p102, %p103
    %p106 = scmp.ne.s32.totalorder %s91, %s105
    %p107 = scmp.eq.s32.totalorder %s18, 0
    %p108 = por %p106, %p107
    %s109 = ssub.s32 %s12, %s19
    %p110 = scmp.eq.s32.totalorder %s109, 0
    %s112 = sadd.s32 %s111, 1
    %s113 = scalar_select %p110, %s111, %s112
    %p116 = pneg %p110
    %p117 = scmp.eq.s32.totalorder %s12, 1
    %p118 = por %p116, %p117
    %p119 = scmp.ne.s32.totalorder %s111, %s114
    %p120 = scmp.eq.s32.totalorder %s12, 0
    %p121 = por %p119, %p120
    %p122 = scmp.ne.s32.totalorder %s111, %s114
    %p123 = scmp.eq.s32.totalorder %s17, 1
    %p124 = por %p122, %p123
    %p125 = scmp.ne.s32.totalorder %s114, %s115
    %p126 = scmp.eq.s32.totalorder %s17, 0
    %p127 = por %p125, %p126
    %p128 = scmp.ne.s32.totalorder %s114, %s115
    %p129 = scmp.eq.s32.totalorder %s18, 1
    %p130 = por %p128, %p129
    %p132 = scmp.ne.s32.totalorder %s115, %s131
    %p133 = scmp.eq.s32.totalorder %s18, 0
    %p134 = por %p132, %p133
    %s135 = ssub.s32 %s12, %s19
    %p136 = scmp.eq.s32.totalorder %s135, 0
    %s138 = sadd.s32 %s137, 1
    %s139 = scalar_select %p136, %s137, %s138
    %p142 = pneg %p136
    %p143 = scmp.eq.s32.totalorder %s12, 1
    %p144 = por %p142, %p143
    %p145 = scmp.ne.s32.totalorder %s137, %s140
    %p146 = scmp.eq.s32.totalorder %s12, 0
    %p147 = por %p145, %p146
    %p148 = scmp.ne.s32.totalorder %s137, %s140
    %p149 = scmp.eq.s32.totalorder %s17, 1
    %p150 = por %p148, %p149
    %p151 = scmp.ne.s32.totalorder %s140, %s141
    %p152 = scmp.eq.s32.totalorder %s17, 0
    %p153 = por %p151, %p152
    %p154 = scmp.ne.s32.totalorder %s140, %s141
    %p155 = scmp.eq.s32.totalorder %s18, 1
    %p156 = por %p154, %p155
    %p158 = scmp.ne.s32.totalorder %s141, %s157
    %p159 = scmp.eq.s32.totalorder %s18, 0
    %p160 = por %p158, %p159
    %p161 = scmp.le.s32.totalorder 1, %s12
    %p162 = scmp.lt.s32.totalorder %s12, 3
    %p163 = pnand %p161, %p162
    %p164 = pneg %p163
    // Predicated region
    $region9: #{model_forward.14} parent=5 // pred_check
      _
    $region10: #{model_forward.14} parent=5 // pred_check_branch
      %166 = sbr.rel (%p163) target = $region12
    $region11: #{model_forward.14} parent=5 // pred_region
      %s167 = ssub.s32 %s12, 1
      // Predicated region
      $region13: #{model_forward.14} parent=11 // pred_check
        %p168 = pneg %p59
      $region14: #{model_forward.14} parent=11 // pred_check_branch
        %170 = sbr.rel (%p168) target = $region16
      $region15: #{model_forward.14} parent=11 // pred_region
        _
      $region16: #{model_forward.14} parent=11 // pred_fallthru
        _
      // Predicated region
      $region17: #{model_forward.14} parent=11 // pred_check
        %p171 = pneg %p80
      $region18: #{model_forward.14} parent=11 // pred_check_branch
        %173 = sbr.rel (%p171) target = $region20
      $region19: #{model_forward.14} parent=11 // pred_region
        _
      $region20: #{model_forward.14} parent=11 // pred_fallthru
        _
      // Predicated region
      $region21: #{model_forward.14} parent=11 // pred_check
        %p174 = pneg %p101
      $region22: #{model_forward.14} parent=11 // pred_check_branch
        %176 = sbr.rel (%p174) target = $region24
      $region23: #{model_forward.14} parent=11 // pred_region
        _
      $region24: #{model_forward.14} parent=11 // pred_fallthru
        _
    $region12: #{model_forward.14} parent=5 // pred_fallthru
      _
    %p177 = scmp.lt.s32.totalorder %s12, 2
    // Predicated region
    $region25: #{model_forward.14} parent=5 // pred_check
      %p178 = pneg %p177
    $region26: #{model_forward.14} parent=5 // pred_check_branch
      %180 = sbr.rel (%p178) target = $region28
    $region27: #{model_forward.14} parent=5 // pred_region
      // Predicated region
      $region29: #{model_forward.14} parent=27 // pred_check
        %p181 = pneg %p32
      $region30: #{model_forward.14} parent=27 // pred_check_branch
        %183 = sbr.rel (%p181) target = $region32
      $region31: #{model_forward.14} parent=27 // pred_region
        %p184 = scmp.lt.s32.totalorder %s12, 1
        %s185 = scalar_select %p184, %s12, 1
        %s186 = smul.addr %s185, 4
        %s187 = smul.addr %s186, 8
        %s188 = scalar_lea.vmem %s0, %s187
      $region32: #{model_forward.14} parent=27 // pred_fallthru
        _
    $region28: #{model_forward.14} parent=5 // pred_fallthru
      _
    %p189 = scmp.le.s32.totalorder 1, %s12
    %p190 = scmp.lt.s32.totalorder %s12, 3
    %p191 = pnand %p189, %p190
    %p192 = pneg %p191
    // Predicated region
    $region33: #{model_forward.14} parent=5 // pred_check
      _
    $region34: #{model_forward.14} parent=5 // pred_check_branch
      %194 = sbr.rel (%p191) target = $region36
    $region35: #{model_forward.14} parent=5 // pred_region
      %s195 = ssub.s32 %s12, 1
      %p196 = scmp.lt.s32.totalorder %s17, 1
      %s197 = scalar_select %p196, %s17, 1
      %s198 = smul.addr %s197, 4
      %s199 = smul.addr %s198, 8
      %s200 = scalar_lea.vmem %s0, %s199
      %p201 = pneg %p38
      %p202 = pneg %p35
      %p203 = pneg %p59
      %p204 = pneg %p56
      %p205 = pneg %p80
      %p206 = pneg %p77
      %p207 = pneg %p101
      %p208 = pneg %p98
      %p209 = pneg %p127
      %p210 = pneg %p124
      %p211 = scmp.lt.s32.totalorder %s17, 1
      %s212 = scalar_select %p211, %s17, 1
      %s213 = smul.addr %s212, 4
      %s214 = smul.addr %s213, 8
      %s215 = scalar_lea.vmem %s4, %s214
      %p216 = pneg %p153
      %p217 = pneg %p150
      %p218 = scmp.lt.s32.totalorder %s17, 1
      %s219 = scalar_select %p218, %s17, 1
      %s220 = smul.addr %s219, 4
      %s221 = smul.addr %s220, 8
      %s222 = scalar_lea.vmem %s5, %s221
      %p223 = scmp.lt.s32.totalorder %s17, 1
      %s224 = scalar_select %p223, %s17, 1
      %s225 = smul.addr %s224, 4
      %s226 = smul.addr %s225, 8
      %s227 = scalar_lea.vmem %s0, %s226
      %p228 = scmp.lt.s32.totalorder %s17, 1
      %s229 = scalar_select %p228, %s17, 1
      %s230 = smul.addr %s229, 4
      %s231 = smul.addr %s230, 8
      %s232 = scalar_lea.vmem %s4, %s231
      %p233 = scmp.lt.s32.totalorder %s17, 1
      %s234 = scalar_select %p233, %s17, 1
      %s235 = smul.addr %s234, 4
      %s236 = smul.addr %s235, 8
      %s237 = scalar_lea.vmem %s5, %s236
      %v239 = vld [vmem:[%s227] sm:$0xff]
      %v240 = vld [vmem:[%s227 + $0x8] sm:$0xff]
      %v241 = vld [vmem:[%s227 + $0x10] sm:$0xff]
      %v242 = vld [vmem:[%s227 + $0x18] sm:$0xff]
      %v243 = vld [vmem:[%s1] sm:$0xff]
      %v244 = vld [vmem:[%s1 + $0x8] sm:$0xff]
      %v245 = vld [vmem:[%s1 + $0x10] sm:$0xff]
      %v246 = vld [vmem:[%s1 + $0x18] sm:$0xff]
      %v247 = vld [vmem:[%s2] sm:$0xff]
      %v248 = vld [vmem:[%s2 + $0x8] sm:$0xff]
      %v249 = vld [vmem:[%s2 + $0x10] sm:$0xff]
      %v250 = vld [vmem:[%s2 + $0x18] sm:$0xff]
      %252 = vset.pattern.permute.xlu0 0
      %253 = vperm.xlu0 %252, %v243
      %v254 = vpop.permute.xlu0 %253
      %257 = vset.pattern.permute.xlu0 0
      %258 = vperm.xlu0 %257, %v244
      %v259 = vpop.permute.xlu0 %258
      %262 = vset.pattern.permute.xlu0 0
      %263 = vperm.xlu0 %262, %v245
      %v264 = vpop.permute.xlu0 %263
      %267 = vset.pattern.permute.xlu0 0
      %268 = vperm.xlu0 %267, %v246
      %v269 = vpop.permute.xlu0 %268
      %v271 = vmul.f32 %v239, %v254
      %v272 = vmul.f32 %v240, %v259
      %v273 = vmul.f32 %v241, %v264
      %v274 = vmul.f32 %v242, %v269
      %276 = vset.pattern.permute.xlu0 0
      %277 = vperm.xlu0 %276, %v247
      %v278 = vpop.permute.xlu0 %277
      %281 = vset.pattern.permute.xlu0 0
      %282 = vperm.xlu0 %281, %v248
      %v283 = vpop.permute.xlu0 %282
      %286 = vset.pattern.permute.xlu0 0
      %287 = vperm.xlu0 %286, %v249
      %v288 = vpop.permute.xlu0 %287
      %291 = vset.pattern.permute.xlu0 0
      %292 = vperm.xlu0 %291, %v250
      %v293 = vpop.permute.xlu0 %292
      %v295 = vadd.f32 %v271, %v278
      %v296 = vadd.f32 %v272, %v283
      %v297 = vadd.f32 %v273, %v288
      %v298 = vadd.f32 %v274, %v293
      %vm299 = vcmp.ge.f32.partialorder %v295, 0.0
      %vm300 = vcmp.ge.f32.partialorder %v296, 0.0
      %vm301 = vcmp.ge.f32.partialorder %v297, 0.0
      %vm302 = vcmp.ge.f32.partialorder %v298, 0.0
      %v303 = vmul.f32 %v295, 0.1
      %v304 = vmul.f32 %v296, 0.1
      %v305 = vmul.f32 %v297, 0.1
      %v306 = vmul.f32 %v298, 0.1
      %v307 = vsel %vm299, %v295, %v303
      %v308 = vsel %vm300, %v296, %v304
      %v309 = vsel %vm301, %v297, %v305
      %v310 = vsel %vm302, %v298, %v306
      %315 = vrot.lane.b32.xlu0 %v307, 7
      %v316 = vpop.permute.xlu0 %315
      %317 = vrot.lane.b32.xlu0 %v308, 7
      %v318 = vpop.permute.xlu0 %317
      %319 = vrot.lane.b32.xlu0 %v309, 7
      %v320 = vpop.permute.xlu0 %319
      %321 = vrot.lane.b32.xlu0 %v310, 7
      %v322 = vpop.permute.xlu0 %321
      %vm327 = vcmask 56320
      %v328 = vsel %vm327, 0.0, %v316
      %v329 = vsel %vm327, 0.0, %v318
      %v330 = vsel %vm327, 0.0, %v320
      %v331 = vsel %vm327, 0.0, %v322
      %vm332 = vcmask 121856
      %v333 = vsel %vm332, %v328, 0.0
      %v334 = vsel %vm332, %v329, 0.0
      %v335 = vsel %vm332, %v330, 0.0
      %v336 = vsel %vm332, %v331, 0.0
      %341 = vrot.lane.b32.xlu0 %v333, 127
      %v342 = vpop.permute.xlu0 %341
      %343 = vrot.lane.b32.xlu0 %v334, 127
      %v344 = vpop.permute.xlu0 %343
      %345 = vrot.lane.b32.xlu0 %v335, 127
      %v346 = vpop.permute.xlu0 %345
      %347 = vrot.lane.b32.xlu0 %v336, 127
      %v348 = vpop.permute.xlu0 %347
      %353 = vrot.lane.b32.xlu0 %v333, 126
      %v354 = vpop.permute.xlu0 %353
      %355 = vrot.lane.b32.xlu0 %v334, 126
      %v356 = vpop.permute.xlu0 %355
      %357 = vrot.lane.b32.xlu0 %v335, 126
      %v358 = vpop.permute.xlu0 %357
      %359 = vrot.lane.b32.xlu0 %v336, 126
      %v360 = vpop.permute.xlu0 %359
      %365 = vrot.lane.b32.xlu0 %v333, 125
      %v366 = vpop.permute.xlu0 %365
      %367 = vrot.lane.b32.xlu0 %v334, 125
      %v368 = vpop.permute.xlu0 %367
      %369 = vrot.lane.b32.xlu0 %v335, 125
      %v370 = vpop.permute.xlu0 %369
      %371 = vrot.lane.b32.xlu0 %v336, 125
      %v372 = vpop.permute.xlu0 %371
      %377 = vrot.lane.b32.xlu0 %v333, 124
      %v378 = vpop.permute.xlu0 %377
      %379 = vrot.lane.b32.xlu0 %v334, 124
      %v380 = vpop.permute.xlu0 %379
      %381 = vrot.lane.b32.xlu0 %v335, 124
      %v382 = vpop.permute.xlu0 %381
      %383 = vrot.lane.b32.xlu0 %v336, 124
      %v384 = vpop.permute.xlu0 %383
      %389 = vrot.lane.b32.xlu0 %v333, 123
      %v390 = vpop.permute.xlu0 %389
      %391 = vrot.lane.b32.xlu0 %v334, 123
      %v392 = vpop.permute.xlu0 %391
      %393 = vrot.lane.b32.xlu0 %v335, 123
      %v394 = vpop.permute.xlu0 %393
      %395 = vrot.lane.b32.xlu0 %v336, 123
      %v396 = vpop.permute.xlu0 %395
      %401 = vrot.lane.b32.xlu0 %v333, 122
      %v402 = vpop.permute.xlu0 %401
      %403 = vrot.lane.b32.xlu0 %v334, 122
      %v404 = vpop.permute.xlu0 %403
      %405 = vrot.lane.b32.xlu0 %v335, 122
      %v406 = vpop.permute.xlu0 %405
      %407 = vrot.lane.b32.xlu0 %v336, 122
      %v408 = vpop.permute.xlu0 %407
      %413 = vrot.lane.b32.xlu0 %v333, 121
      %v414 = vpop.permute.xlu0 %413
      %415 = vrot.lane.b32.xlu0 %v334, 121
      %v416 = vpop.permute.xlu0 %415
      %417 = vrot.lane.b32.xlu0 %v335, 121
      %v418 = vpop.permute.xlu0 %417
      %419 = vrot.lane.b32.xlu0 %v336, 121
      %v420 = vpop.permute.xlu0 %419
      %425 = vrot.lane.b32.xlu0 %v333, 120
      %v426 = vpop.permute.xlu0 %425
      %427 = vrot.lane.b32.xlu0 %v334, 120
      %v428 = vpop.permute.xlu0 %427
      %429 = vrot.lane.b32.xlu0 %v335, 120
      %v430 = vpop.permute.xlu0 %429
      %431 = vrot.lane.b32.xlu0 %v336, 120
      %v432 = vpop.permute.xlu0 %431
      %437 = vrot.lane.b32.xlu0 %v333, 119
      %v438 = vpop.permute.xlu0 %437
      %439 = vrot.lane.b32.xlu0 %v334, 119
      %v440 = vpop.permute.xlu0 %439
      %441 = vrot.lane.b32.xlu0 %v335, 119
      %v442 = vpop.permute.xlu0 %441
      %443 = vrot.lane.b32.xlu0 %v336, 119
      %v444 = vpop.permute.xlu0 %443
      %449 = vrot.lane.b32.xlu0 %v333, 118
      %v450 = vpop.permute.xlu0 %449
      %451 = vrot.lane.b32.xlu0 %v334, 118
      %v452 = vpop.permute.xlu0 %451
      %453 = vrot.lane.b32.xlu0 %v335, 118
      %v454 = vpop.permute.xlu0 %453
      %455 = vrot.lane.b32.xlu0 %v336, 118
      %v456 = vpop.permute.xlu0 %455
      %461 = vrot.lane.b32.xlu0 %v333, 117
      %v462 = vpop.permute.xlu0 %461
      %463 = vrot.lane.b32.xlu0 %v334, 117
      %v464 = vpop.permute.xlu0 %463
      %465 = vrot.lane.b32.xlu0 %v335, 117
      %v466 = vpop.permute.xlu0 %465
      %467 = vrot.lane.b32.xlu0 %v336, 117
      %v468 = vpop.permute.xlu0 %467
      %473 = vrot.lane.b32.xlu0 %v333, 116
      %v474 = vpop.permute.xlu0 %473
      %475 = vrot.lane.b32.xlu0 %v334, 116
      %v476 = vpop.permute.xlu0 %475
      %477 = vrot.lane.b32.xlu0 %v335, 116
      %v478 = vpop.permute.xlu0 %477
      %479 = vrot.lane.b32.xlu0 %v336, 116
      %v480 = vpop.permute.xlu0 %479
      %485 = vrot.lane.b32.xlu0 %v333, 115
      %v486 = vpop.permute.xlu0 %485
      %487 = vrot.lane.b32.xlu0 %v334, 115
      %v488 = vpop.permute.xlu0 %487
      %489 = vrot.lane.b32.xlu0 %v335, 115
      %v490 = vpop.permute.xlu0 %489
      %491 = vrot.lane.b32.xlu0 %v336, 115
      %v492 = vpop.permute.xlu0 %491
      %497 = vrot.lane.b32.xlu0 %v333, 114
      %v498 = vpop.permute.xlu0 %497
      %499 = vrot.lane.b32.xlu0 %v334, 114
      %v500 = vpop.permute.xlu0 %499
      %501 = vrot.lane.b32.xlu0 %v335, 114
      %v502 = vpop.permute.xlu0 %501
      %503 = vrot.lane.b32.xlu0 %v336, 114
      %v504 = vpop.permute.xlu0 %503
      %v509 = vpack.c.bf16 %v334, %v333
      %v510 = vpack.c.bf16 %v336, %v335
      %v511 = vpack.c.bf16 %v344, %v342
      %v512 = vpack.c.bf16 %v348, %v346
      %v513 = vpack.c.bf16 %v356, %v354
      %v514 = vpack.c.bf16 %v360, %v358
      %v515 = vpack.c.bf16 %v368, %v366
      %v516 = vpack.c.bf16 %v372, %v370
      %v517 = vpack.c.bf16 %v380, %v378
      %v518 = vpack.c.bf16 %v384, %v382
      %v519 = vpack.c.bf16 %v392, %v390
      %v520 = vpack.c.bf16 %v396, %v394
      %v521 = vpack.c.bf16 %v404, %v402
      %v522 = vpack.c.bf16 %v408, %v406
      %v523 = vpack.c.bf16 %v416, %v414
      %v524 = vpack.c.bf16 %v420, %v418
      %v525 = vpack.c.bf16 %v428, %v426
      %v526 = vpack.c.bf16 %v432, %v430
      %v527 = vpack.c.bf16 %v440, %v438
      %v528 = vpack.c.bf16 %v444, %v442
      %v529 = vpack.c.bf16 %v452, %v450
      %v530 = vpack.c.bf16 %v456, %v454
      %v531 = vpack.c.bf16 %v464, %v462
      %v532 = vpack.c.bf16 %v468, %v466
      %v533 = vpack.c.bf16 %v476, %v474
      %v534 = vpack.c.bf16 %v480, %v478
      %v535 = vpack.c.bf16 %v488, %v486
      %v536 = vpack.c.bf16 %v492, %v490
      %v537 = vpack.c.bf16 %v500, %v498
      %v538 = vpack.c.bf16 %v504, %v502
      %v539 = vld [vmem:[%s3] sm:$0xff]
      %v540 = vld [vmem:[%s3 + $0x8] sm:$0xff]
      %v541 = vld [vmem:[%s3 + $0x10] sm:$0xff]
      %v542 = vld [vmem:[%s3 + $0x18] sm:$0xff]
      %v543 = vld [vmem:[%s3 + $0x20] sm:$0xff]
      %v544 = vld [vmem:[%s3 + $0x28] sm:$0xff]
      %v545 = vld [vmem:[%s3 + $0x30] sm:$0xff]
      %v546 = vld [vmem:[%s3 + $0x38] sm:$0xff]
      %v555 = vunpack.c.l.b16 %v539
      %v556 = vunpack.c.h.b16 %v539
      %v557 = vunpack.c.l.b16 %v540
      %v558 = vunpack.c.h.b16 %v540
      %v559 = vunpack.c.l.b16 %v541
      %v560 = vunpack.c.h.b16 %v541
      %v561 = vunpack.c.l.b16 %v542
      %v562 = vunpack.c.h.b16 %v542
      %v563 = vunpack.c.l.b16 %v543
      %v564 = vunpack.c.h.b16 %v543
      %v565 = vunpack.c.l.b16 %v544
      %v566 = vunpack.c.h.b16 %v544
      %v567 = vunpack.c.l.b16 %v545
      %v568 = vunpack.c.h.b16 %v545
      %v569 = vunpack.c.l.b16 %v546
      %v570 = vunpack.c.h.b16 %v546
      %v571 = vpack.c.b16 %v559, %v555
      %v572 = vpack.c.b16 %v560, %v556
      %v573 = vpack.c.b16 %v561, %v557
      %v574 = vpack.c.b16 %v562, %v558
      %v575 = vpack.c.b16 %v567, %v563
      %v576 = vpack.c.b16 %v568, %v564
      %v577 = vpack.c.b16 %v569, %v565
      %v578 = vpack.c.b16 %v570, %v566
      %vm585 = vcmask 785408
      %v587 = vsel %vm585, %v574, 0
      %v590 = vsel %vm585, %v578, 0
      %592 = vmatpush.bf16.msra.mxu0 %v516
      %593 = vmatpush.bf16.msra.mxu0 %v515
      %594 = vmatpush.bf16.msra.mxu0 %v514
      %595 = vmatpush.bf16.msra.mxu0 %v513
      %596 = vmatpush.bf16.msra.mxu0 %v512
      %597 = vmatpush.bf16.msra.mxu0 %v511
      %598 = vmatpush.bf16.msra.mxu0 %v510
      %599 = vmatpush.bf16.msra.mxu0 %v509
      %600 = vmatmul.bf16.gmra.mxu0 %v571
      %v601 = vpop.f32.mrf.mxu0
      %v602 = vadd.f32 0.0, %v601
      %v603 = vpop.f32.mrf.mxu0
      %v604 = vadd.f32 0.0, %v603
      %605 = vmatmul.bf16.gmra.mxu0 %v575
      %v606 = vpop.f32.mrf.mxu0
      %v607 = vadd.f32 0.0, %v606
      %v608 = vpop.f32.mrf.mxu0
      %v609 = vadd.f32 0.0, %v608
      %610 = vdwg.mxu0
      %611 = vmatpush.bf16.msra.mxu0 %v524
      %612 = vmatpush.bf16.msra.mxu0 %v523
      %613 = vmatpush.bf16.msra.mxu0 %v522
      %614 = vmatpush.bf16.msra.mxu0 %v521
      %615 = vmatpush.bf16.msra.mxu0 %v520
      %616 = vmatpush.bf16.msra.mxu0 %v519
      %617 = vmatpush.bf16.msra.mxu0 %v518
      %618 = vmatpush.bf16.msra.mxu0 %v517
      %619 = vmatmul.bf16.gmra.mxu0 %v572
      %v620 = vpop.f32.mrf.mxu0
      %v621 = vadd.f32 %v602, %v620
      %v622 = vpop.f32.mrf.mxu0
      %v623 = vadd.f32 %v604, %v622
      %624 = vmatmul.bf16.gmra.mxu0 %v576
      %v625 = vpop.f32.mrf.mxu0
      %v626 = vadd.f32 %v607, %v625
      %v627 = vpop.f32.mrf.mxu0
      %v628 = vadd.f32 %v609, %v627
      %629 = vdwg.mxu0
      %630 = vmatpush.bf16.msra.mxu0 %v532
      %631 = vmatpush.bf16.msra.mxu0 %v531
      %632 = vmatpush.bf16.msra.mxu0 %v530
      %633 = vmatpush.bf16.msra.mxu0 %v529
      %634 = vmatpush.bf16.msra.mxu0 %v528
      %635 = vmatpush.bf16.msra.mxu0 %v527
      %636 = vmatpush.bf16.msra.mxu0 %v526
      %637 = vmatpush.bf16.msra.mxu0 %v525
      %638 = vmatmul.bf16.gmra.mxu0 %v573
      %v639 = vpop.f32.mrf.mxu0
      %v640 = vadd.f32 %v621, %v639
      %v641 = vpop.f32.mrf.mxu0
      %v642 = vadd.f32 %v623, %v641
      %643 = vmatmul.bf16.gmra.mxu0 %v577
      %v644 = vpop.f32.mrf.mxu0
      %v645 = vadd.f32 %v626, %v644
      %v646 = vpop.f32.mrf.mxu0
      %v647 = vadd.f32 %v628, %v646
      %648 = vdwg.mxu0
      %649 = vmatpush.bf16.msra.mxu0 0
      %650 = vmatpush.bf16.msra.mxu0 0
      %651 = vmatpush.bf16.msra.mxu0 %v538
      %652 = vmatpush.bf16.msra.mxu0 %v537
      %653 = vmatpush.bf16.msra.mxu0 %v536
      %654 = vmatpush.bf16.msra.mxu0 %v535
      %655 = vmatpush.bf16.msra.mxu0 %v534
      %656 = vmatpush.bf16.msra.mxu0 %v533
      %657 = vmatmul.bf16.gmra.mxu0 %v587
      %v658 = vpop.f32.mrf.mxu0
      %v659 = vadd.f32 %v640, %v658
      %v660 = vpop.f32.mrf.mxu0
      %v661 = vadd.f32 %v642, %v660
      %662 = vmatmul.bf16.gmra.mxu0 %v590
      %v663 = vpop.f32.mrf.mxu0
      %v664 = vadd.f32 %v645, %v663
      %v665 = vpop.f32.mrf.mxu0
      %v666 = vadd.f32 %v647, %v665
      %667 = vdwg.mxu0
      %vm668 = vcmask 64512
      %669 = vst.msk [vmem:[%s232] sm:$0xff] %vm668, %v659
      %670 = vst.msk [vmem:[%s232 + $0x8] sm:$0xff] %vm668, %v661
      %671 = vst.msk [vmem:[%s232 + $0x10] sm:$0xff] %vm668, %v664
      %672 = vst.msk [vmem:[%s232 + $0x18] sm:$0xff] %vm668, %v666
      %v673 = vsel %vm668, %v659, 0.0
      %674 = vadd.xlane.f32.xlu0 %v673
      %v675 = vpop.xlane.xlu0 %674
      %v676 = vsel %vm668, %v661, 0.0
      %677 = vadd.xlane.f32.xlu0 %v676
      %v678 = vpop.xlane.xlu0 %677
      %v679 = vsel %vm668, %v664, 0.0
      %680 = vadd.xlane.f32.xlu0 %v679
      %v681 = vpop.xlane.xlu0 %680
      %v682 = vsel %vm668, %v666, 0.0
      %683 = vadd.xlane.f32.xlu0 %v682
      %v684 = vpop.xlane.xlu0 %683
      %v685 = vmul.f32 %v659, %v659
      %v686 = vmul.f32 %v661, %v661
      %v687 = vmul.f32 %v664, %v664
      %v688 = vmul.f32 %v666, %v666
      %v689 = vsel %vm668, %v685, 0.0
      %690 = vadd.xlane.f32.xlu0 %v689
      %v691 = vpop.xlane.xlu0 %690
      %v692 = vsel %vm668, %v686, 0.0
      %693 = vadd.xlane.f32.xlu0 %v692
      %v694 = vpop.xlane.xlu0 %693
      %v695 = vsel %vm668, %v687, 0.0
      %696 = vadd.xlane.f32.xlu0 %v695
      %v697 = vpop.xlane.xlu0 %696
      %v698 = vsel %vm668, %v688, 0.0
      %699 = vadd.xlane.f32.xlu0 %v698
      %v700 = vpop.xlane.xlu0 %699
      %vm701 = vcmask 7168
      %v702 = vsel %vm701, %v675, %v691
      %v703 = vsel %vm701, %v678, %v694
      %v704 = vsel %vm701, %v681, %v697
      %v705 = vsel %vm701, %v684, %v700
      %vm706 = vcmask 15360
      %707 = vst.msk [vmem:[%s237] sm:$0xff] %vm706, %v702
      %708 = vst.msk [vmem:[%s237 + $0x8] sm:$0xff] %vm706, %v703
      %709 = vst.msk [vmem:[%s237 + $0x10] sm:$0xff] %vm706, %v704
      %710 = vst.msk [vmem:[%s237 + $0x18] sm:$0xff] %vm706, %v705
      %p711 = scmp.lt.s32.totalorder %s17, 1
      %s712 = scalar_select %p711, %s17, 1
      %s713 = smul.addr %s712, 4
      %s714 = smul.addr %s713, 8
      %s715 = scalar_lea.vmem %s4, %s714
      %p716 = scmp.lt.s32.totalorder %s17, 1
      %s717 = scalar_select %p716, %s17, 1
      %s718 = smul.addr %s717, 4
      %s719 = smul.addr %s718, 8
      %s720 = scalar_lea.vmem %s5, %s719
      // Predicated region
      $region37: #{model_forward.14} parent=35 // pred_check
        %p721 = pneg %p124
      $region38: #{model_forward.14} parent=35 // pred_check_branch
        %723 = sbr.rel (%p721) target = $region40
      $region39: #{model_forward.14} parent=35 // pred_region
        _
      $region40: #{model_forward.14} parent=35 // pred_fallthru
        _
      // Predicated region
      $region41: #{model_forward.14} parent=35 // pred_check
        %p724 = pneg %p150
      $region42: #{model_forward.14} parent=35 // pred_check_branch
        %726 = sbr.rel (%p724) target = $region44
      $region43: #{model_forward.14} parent=35 // pred_region
        _
      $region44: #{model_forward.14} parent=35 // pred_fallthru
        _
    $region36: #{model_forward.14} parent=5 // pred_fallthru
      _
    %p727 = scmp.le.s32.totalorder 2, %s12
    // Predicated region
    $region45: #{model_forward.14} parent=5 // pred_check
      %p728 = pneg %p727
    $region46: #{model_forward.14} parent=5 // pred_check_branch
      %730 = sbr.rel (%p728) target = $region48
    $region47: #{model_forward.14} parent=5 // pred_region
      %s731 = ssub.s32 %s12, 2
      // Predicated region
      $region49: #{model_forward.14} parent=47 // pred_check
        %p732 = pneg %p130
      $region50: #{model_forward.14} parent=47 // pred_check_branch
        %734 = sbr.rel (%p732) target = $region52
      $region51: #{model_forward.14} parent=47 // pred_region
        %p735 = scmp.lt.s32.totalorder %s18, 1
        %s736 = scalar_select %p735, %s18, 1
        %s737 = smul.addr %s736, 4
        %s738 = smul.addr %s737, 8
        %s739 = scalar_lea.vmem %s4, %s738
      $region52: #{model_forward.14} parent=47 // pred_fallthru
        _
      // Predicated region
      $region53: #{model_forward.14} parent=47 // pred_check
        %p740 = pneg %p156
      $region54: #{model_forward.14} parent=47 // pred_check_branch
        %742 = sbr.rel (%p740) target = $region56
      $region55: #{model_forward.14} parent=47 // pred_region
        %p743 = scmp.lt.s32.totalorder %s18, 1
        %s744 = scalar_select %p743, %s18, 1
        %s745 = smul.addr %s744, 4
        %s746 = smul.addr %s745, 8
        %s747 = scalar_lea.vmem %s5, %s746
      $region56: #{model_forward.14} parent=47 // pred_fallthru
        _
    $region48: #{model_forward.14} parent=5 // pred_fallthru
      _
  $region6: #{model_forward.14} parent=0 // loop_footer
    %s16 = sadd.s32 1, %s12
  $region7: #{model_forward.14} parent=0 // loop_footer_branch
    %11 = sbr.rel target = $region3
  $region8: #{model_forward.14} parent=0 // loop_exit
    _

// kernel: model_forward.13
$region0: #{model_forward.13}
  #allocation0 [shape = 'u32[]', space=smem, size = 0x4, offset = 0x4, fixed_abs, tag = 'smem constant byte address 0x4 - core index']
  #allocation1 [shape = 'u32[72,128]{1,0:T(1,128)}', space=vmem, size = 0x9000, scoped, tag = 'internal scratch']
  %s0 = inlined_call_operand.vmem [shape: f32[2,24,16], index: 0, kind: input, shape index: {}]
  %s1 = inlined_call_operand.vmem [shape: f32[24,1], index: 1, kind: input, shape index: {}]
  %s2 = inlined_call_operand.vmem [shape: f32[24,1], index: 2, kind: input, shape index: {}]
  %s3 = inlined_call_operand.vmem [shape: bf16[32,360], index: 3, kind: input, shape index: {}]
  %s4 = inlined_call_operand.vmem [shape: f32[2,32,16], index: 4, kind: output, shape index: {0}]
  %s5 = inlined_call_operand.vmem [shape: f32[2,32,2], index: 5, kind: output, shape index: {1}]
  %6 = xla_tuple %s4, %s5
  %s7 = sld [smem:[#allocation0]]
  $region57: #{model_forward.13} parent=0
    _
  %s9 = ssub.s32 1, %s7
  %s10 = scalar_select 0, %s9, %s7
  loop: start=0, step=1, limit=4
  $region2: #{model_forward.13} parent=0 // loop_pre_header
    _
  $region3: #{model_forward.13} parent=0 // loop_header
    %s12 = sphi 0, %s16
    %p13 = scmp.ge.s32.totalorder %s12, 4
    %s22 = sphi 0, %s24
    %s25 = sphi 0, %s22
    %s26 = sphi 0, %s25
    %s42 = sphi 0, %s26
    %s46 = sphi 0, %s46
    %s48 = sphi 0, %s46
    %s49 = sphi 0, %s48
    %s63 = sphi 0, %s49
    %s67 = sphi 0, %s67
    %s69 = sphi 0, %s67
    %s70 = sphi 0, %s69
    %s84 = sphi 0, %s70
    %s88 = sphi 0, %s88
    %s90 = sphi 0, %s88
    %s91 = sphi 0, %s90
    %s105 = sphi 0, %s91
    %s111 = sphi 0, %s113
    %s114 = sphi 0, %s111
    %s115 = sphi 0, %s114
    %s131 = sphi 0, %s115
    %s137 = sphi 0, %s139
    %s140 = sphi 0, %s137
    %s141 = sphi 0, %s140
    %s157 = sphi 0, %s141
  $region4: #{model_forward.13} parent=0 // loop_header_branch
    %15 = sbr.rel (%p13) target = $region8
  $region5: #{model_forward.13} parent=0 // loop_body
    %s17 = ssub.s32 %s12, 1
    %s18 = ssub.s32 %s12, 2
    %s19 = sadd.s32 %s12, 1
    %s20 = ssub.s32 %s12, %s19
    %p21 = scmp.eq.s32.totalorder %s20, 0
    %s23 = sadd.s32 %s22, 1
    %s24 = scalar_select %p21, %s22, %s23
    %p27 = pneg %p21
    %p28 = scmp.eq.s32.totalorder %s12, 1
    %p29 = por %p27, %p28
    %p30 = scmp.ne.s32.totalorder %s22, %s25
    %p31 = scmp.eq.s32.totalorder %s12, 0
    %p32 = por %p30, %p31
    %p33 = scmp.ne.s32.totalorder %s22, %s25
    %p34 = scmp.eq.s32.totalorder %s17, 1
    %p35 = por %p33, %p34
    %p36 = scmp.ne.s32.totalorder %s25, %s26
    %p37 = scmp.eq.s32.totalorder %s17, 0
    %p38 = por %p36, %p37
    %p39 = scmp.ne.s32.totalorder %s25, %s26
    %p40 = scmp.eq.s32.totalorder %s18, 1
    %p41 = por %p39, %p40
    %p43 = scmp.ne.s32.totalorder %s26, %s42
    %p44 = scmp.eq.s32.totalorder %s18, 0
    %p45 = por %p43, %p44
    %s47 = sadd.s32 %s46, 1
    %p50 = scmp.eq.s32.totalorder %s12, 1
    %p51 = scmp.ne.s32.totalorder %s46, %s48
    %p52 = scmp.eq.s32.totalorder %s12, 0
    %p53 = por %p51, %p52
    %p54 = scmp.ne.s32.totalorder %s46, %s48
    %p55 = scmp.eq.s32.totalorder %s17, 1
    %p56 = por %p54, %p55
    %p57 = scmp.ne.s32.totalorder %s48, %s49
    %p58 = scmp.eq.s32.totalorder %s17, 0
    %p59 = por %p57, %p58
    %p60 = scmp.ne.s32.totalorder %s48, %s49
    %p61 = scmp.eq.s32.totalorder %s18, 1
    %p62 = por %p60, %p61
    %p64 = scmp.ne.s32.totalorder %s49, %s63
    %p65 = scmp.eq.s32.totalorder %s18, 0
    %p66 = por %p64, %p65
    %s68 = sadd.s32 %s67, 1
    %p71 = scmp.eq.s32.totalorder %s12, 1
    %p72 = scmp.ne.s32.totalorder %s67, %s69
    %p73 = scmp.eq.s32.totalorder %s12, 0
    %p74 = por %p72, %p73
    %p75 = scmp.ne.s32.totalorder %s67, %s69
    %p76 = scmp.eq.s32.totalorder %s17, 1
    %p77 = por %p75, %p76
    %p78 = scmp.ne.s32.totalorder %s69, %s70
    %p79 = scmp.eq.s32.totalorder %s17, 0
    %p80 = por %p78, %p79
    %p81 = scmp.ne.s32.totalorder %s69, %s70
    %p82 = scmp.eq.s32.totalorder %s18, 1
    %p83 = por %p81, %p82
    %p85 = scmp.ne.s32.totalorder %s70, %s84
    %p86 = scmp.eq.s32.totalorder %s18, 0
    %p87 = por %p85, %p86
    %s89 = sadd.s32 %s88, 1
    %p92 = scmp.eq.s32.totalorder %s12, 1
    %p93 = scmp.ne.s32.totalorder %s88, %s90
    %p94 = scmp.eq.s32.totalorder %s12, 0
    %p95 = por %p93, %p94
    %p96 = scmp.ne.s32.totalorder %s88, %s90
    %p97 = scmp.eq.s32.totalorder %s17, 1
    %p98 = por %p96, %p97
    %p99 = scmp.ne.s32.totalorder %s90, %s91
    %p100 = scmp.eq.s32.totalorder %s17, 0
    %p101 = por %p99, %p100
    %p102 = scmp.ne.s32.totalorder %s90, %s91
    %p103 = scmp.eq.s32.totalorder %s18, 1
    %p104 = por %p102, %p103
    %p106 = scmp.ne.s32.totalorder %s91, %s105
    %p107 = scmp.eq.s32.totalorder %s18, 0
    %p108 = por %p106, %p107
    %s109 = ssub.s32 %s12, %s19
    %p110 = scmp.eq.s32.totalorder %s109, 0
    %s112 = sadd.s32 %s111, 1
    %s113 = scalar_select %p110, %s111, %s112
    %p116 = pneg %p110
    %p117 = scmp.eq.s32.totalorder %s12, 1
    %p118 = por %p116, %p117
    %p119 = scmp.ne.s32.totalorder %s111, %s114
    %p120 = scmp.eq.s32.totalorder %s12, 0
    %p121 = por %p119, %p120
    %p122 = scmp.ne.s32.totalorder %s111, %s114
    %p123 = scmp.eq.s32.totalorder %s17, 1
    %p124 = por %p122, %p123
    %p125 = scmp.ne.s32.totalorder %s114, %s115
    %p126 = scmp.eq.s32.totalorder %s17, 0
    %p127 = por %p125, %p126
    %p128 = scmp.ne.s32.totalorder %s114, %s115
    %p129 = scmp.eq.s32.totalorder %s18, 1
    %p130 = por %p128, %p129
    %p132 = scmp.ne.s32.totalorder %s115, %s131
    %p133 = scmp.eq.s32.totalorder %s18, 0
    %p134 = por %p132, %p133
    %s135 = ssub.s32 %s12, %s19
    %p136 = scmp.eq.s32.totalorder %s135, 0
    %s138 = sadd.s32 %s137, 1
    %s139 = scalar_select %p136, %s137, %s138
    %p142 = pneg %p136
    %p143 = scmp.eq.s32.totalorder %s12, 1
    %p144 = por %p142, %p143
    %p145 = scmp.ne.s32.totalorder %s137, %s140
    %p146 = scmp.eq.s32.totalorder %s12, 0
    %p147 = por %p145, %p146
    %p148 = scmp.ne.s32.totalorder %s137, %s140
    %p149 = scmp.eq.s32.totalorder %s17, 1
    %p150 = por %p148, %p149
    %p151 = scmp.ne.s32.totalorder %s140, %s141
    %p152 = scmp.eq.s32.totalorder %s17, 0
    %p153 = por %p151, %p152
    %p154 = scmp.ne.s32.totalorder %s140, %s141
    %p155 = scmp.eq.s32.totalorder %s18, 1
    %p156 = por %p154, %p155
    %p158 = scmp.ne.s32.totalorder %s141, %s157
    %p159 = scmp.eq.s32.totalorder %s18, 0
    %p160 = por %p158, %p159
    %p161 = scmp.le.s32.totalorder 1, %s12
    %p162 = scmp.lt.s32.totalorder %s12, 3
    %p163 = pnand %p161, %p162
    %p164 = pneg %p163
    // Predicated region
    $region9: #{model_forward.13} parent=5 // pred_check
      _
    $region10: #{model_forward.13} parent=5 // pred_check_branch
      %166 = sbr.rel (%p163) target = $region12
    $region11: #{model_forward.13} parent=5 // pred_region
      %s167 = ssub.s32 %s12, 1
      // Predicated region
      $region13: #{model_forward.13} parent=11 // pred_check
        %p168 = pneg %p59
      $region14: #{model_forward.13} parent=11 // pred_check_branch
        %170 = sbr.rel (%p168) target = $region16
      $region15: #{model_forward.13} parent=11 // pred_region
        _
      $region16: #{model_forward.13} parent=11 // pred_fallthru
        _
      // Predicated region
      $region17: #{model_forward.13} parent=11 // pred_check
        %p171 = pneg %p80
      $region18: #{model_forward.13} parent=11 // pred_check_branch
        %173 = sbr.rel (%p171) target = $region20
      $region19: #{model_forward.13} parent=11 // pred_region
        _
      $region20: #{model_forward.13} parent=11 // pred_fallthru
        _
      // Predicated region
      $region21: #{model_forward.13} parent=11 // pred_check
        %p174 = pneg %p101
      $region22: #{model_forward.13} parent=11 // pred_check_branch
        %176 = sbr.rel (%p174) target = $region24
      $region23: #{model_forward.13} parent=11 // pred_region
        _
      $region24: #{model_forward.13} parent=11 // pred_fallthru
        _
    $region12: #{model_forward.13} parent=5 // pred_fallthru
      _
    %p177 = scmp.lt.s32.totalorder %s12, 2
    // Predicated region
    $region25: #{model_forward.13} parent=5 // pred_check
      %p178 = pneg %p177
    $region26: #{model_forward.13} parent=5 // pred_check_branch
      %180 = sbr.rel (%p178) target = $region28
    $region27: #{model_forward.13} parent=5 // pred_region
      // Predicated region
      $region29: #{model_forward.13} parent=27 // pred_check
        %p181 = pneg %p32
      $region30: #{model_forward.13} parent=27 // pred_check_branch
        %183 = sbr.rel (%p181) target = $region32
      $region31: #{model_forward.13} parent=27 // pred_region
        %p184 = scmp.lt.s32.totalorder %s12, 1
        %s185 = scalar_select %p184, %s12, 1
        %s186 = smul.addr %s185, 3
        %s187 = smul.addr %s186, 8
        %s188 = scalar_lea.vmem %s0, %s187
      $region32: #{model_forward.13} parent=27 // pred_fallthru
        _
    $region28: #{model_forward.13} parent=5 // pred_fallthru
      _
    %p189 = scmp.le.s32.totalorder 1, %s12
    %p190 = scmp.lt.s32.totalorder %s12, 3
    %p191 = pnand %p189, %p190
    %p192 = pneg %p191
    // Predicated region
    $region33: #{model_forward.13} parent=5 // pred_check
      _
    $region34: #{model_forward.13} parent=5 // pred_check_branch
      %194 = sbr.rel (%p191) target = $region36
    $region35: #{model_forward.13} parent=5 // pred_region
      %s195 = ssub.s32 %s12, 1
      %p196 = scmp.lt.s32.totalorder %s17, 1
      %s197 = scalar_select %p196, %s17, 1
      %s198 = smul.addr %s197, 3
      %s199 = smul.addr %s198, 8
      %s200 = scalar_lea.vmem %s0, %s199
      %p201 = pneg %p38
      %p202 = pneg %p35
      %p203 = pneg %p59
      %p204 = pneg %p56
      %p205 = pneg %p80
      %p206 = pneg %p77
      %p207 = pneg %p101
      %p208 = pneg %p98
      %p209 = pneg %p127
      %p210 = pneg %p124
      %p211 = scmp.lt.s32.totalorder %s17, 1
      %s212 = scalar_select %p211, %s17, 1
      %s213 = smul.addr %s212, 4
      %s214 = smul.addr %s213, 8
      %s215 = scalar_lea.vmem %s4, %s214
      %p216 = pneg %p153
      %p217 = pneg %p150
      %p218 = scmp.lt.s32.totalorder %s17, 1
      %s219 = scalar_select %p218, %s17, 1
      %s220 = smul.addr %s219, 4
      %s221 = smul.addr %s220, 8
      %s222 = scalar_lea.vmem %s5, %s221
      %p223 = scmp.lt.s32.totalorder %s17, 1
      %s224 = scalar_select %p223, %s17, 1
      %s225 = smul.addr %s224, 3
      %s226 = smul.addr %s225, 8
      %s227 = scalar_lea.vmem %s0, %s226
      %p228 = scmp.lt.s32.totalorder %s17, 1
      %s229 = scalar_select %p228, %s17, 1
      %s230 = smul.addr %s229, 4
      %s231 = smul.addr %s230, 8
      %s232 = scalar_lea.vmem %s4, %s231
      %p233 = scmp.lt.s32.totalorder %s17, 1
      %s234 = scalar_select %p233, %s17, 1
      %s235 = smul.addr %s234, 4
      %s236 = smul.addr %s235, 8
      %s237 = scalar_lea.vmem %s5, %s236
      %v239 = vld [vmem:[%s227] sm:$0xff]
      %v240 = vld [vmem:[%s227 + $0x8] sm:$0xff]
      %v241 = vld [vmem:[%s227 + $0x10] sm:$0xff]
      %v242 = vld [vmem:[%s1] sm:$0xff]
      %v243 = vld [vmem:[%s1 + $0x8] sm:$0xff]
      %v244 = vld [vmem:[%s1 + $0x10] sm:$0xff]
      %v245 = vld [vmem:[%s2] sm:$0xff]
      %v246 = vld [vmem:[%s2 + $0x8] sm:$0xff]
      %v247 = vld [vmem:[%s2 + $0x10] sm:$0xff]
      %249 = vset.pattern.permute.xlu0 0
      %250 = vperm.xlu0 %249, %v242
      %v251 = vpop.permute.xlu0 %250
      %254 = vset.pattern.permute.xlu0 0
      %255 = vperm.xlu0 %254, %v243
      %v256 = vpop.permute.xlu0 %255
      %259 = vset.pattern.permute.xlu0 0
      %260 = vperm.xlu0 %259, %v244
      %v261 = vpop.permute.xlu0 %260
      %v263 = vmul.f32 %v239, %v251
      %v264 = vmul.f32 %v240, %v256
      %v265 = vmul.f32 %v241, %v261
      %267 = vset.pattern.permute.xlu0 0
      %268 = vperm.xlu0 %267, %v245
      %v269 = vpop.permute.xlu0 %268
      %272 = vset.pattern.permute.xlu0 0
      %273 = vperm.xlu0 %272, %v246
      %v274 = vpop.permute.xlu0 %273
      %277 = vset.pattern.permute.xlu0 0
      %278 = vperm.xlu0 %277, %v247
      %v279 = vpop.permute.xlu0 %278
      %v281 = vadd.f32 %v263, %v269
      %v282 = vadd.f32 %v264, %v274
      %v283 = vadd.f32 %v265, %v279
      %vm284 = vcmp.ge.f32.partialorder %v281, 0.0
      %vm285 = vcmp.ge.f32.partialorder %v282, 0.0
      %vm286 = vcmp.ge.f32.partialorder %v283, 0.0
      %v287 = vmul.f32 %v281, 0.1
      %v288 = vmul.f32 %v282, 0.1
      %v289 = vmul.f32 %v283, 0.1
      %v290 = vsel %vm284, %v281, %v287
      %v291 = vsel %vm285, %v282, %v288
      %v292 = vsel %vm286, %v283, %v289
      %296 = vrot.lane.b32.xlu0 %v290, 7
      %v297 = vpop.permute.xlu0 %296
      %298 = vrot.lane.b32.xlu0 %v291, 7
      %v299 = vpop.permute.xlu0 %298
      %300 = vrot.lane.b32.xlu0 %v292, 7
      %v301 = vpop.permute.xlu0 %300
      %vm305 = vcmask 56320
      %v306 = vsel %vm305, 0.0, %v297
      %v307 = vsel %vm305, 0.0, %v299
      %v308 = vsel %vm305, 0.0, %v301
      %vm309 = vcmask 187392
      %v310 = vsel %vm309, %v306, 0.0
      %v311 = vsel %vm309, %v307, 0.0
      %v312 = vsel %vm309, %v308, 0.0
      %316 = vrot.lane.b32.xlu0 %v310, 127
      %v317 = vpop.permute.xlu0 %316
      %318 = vrot.lane.b32.xlu0 %v311, 127
      %v319 = vpop.permute.xlu0 %318
      %320 = vrot.lane.b32.xlu0 %v312, 127
      %v321 = vpop.permute.xlu0 %320
      %325 = vrot.lane.b32.xlu0 %v310, 126
      %v326 = vpop.permute.xlu0 %325
      %327 = vrot.lane.b32.xlu0 %v311, 126
      %v328 = vpop.permute.xlu0 %327
      %329 = vrot.lane.b32.xlu0 %v312, 126
      %v330 = vpop.permute.xlu0 %329
      %334 = vrot.lane.b32.xlu0 %v310, 125
      %v335 = vpop.permute.xlu0 %334
      %336 = vrot.lane.b32.xlu0 %v311, 125
      %v337 = vpop.permute.xlu0 %336
      %338 = vrot.lane.b32.xlu0 %v312, 125
      %v339 = vpop.permute.xlu0 %338
      %343 = vrot.lane.b32.xlu0 %v310, 124
      %v344 = vpop.permute.xlu0 %343
      %345 = vrot.lane.b32.xlu0 %v311, 124
      %v346 = vpop.permute.xlu0 %345
      %347 = vrot.lane.b32.xlu0 %v312, 124
      %v348 = vpop.permute.xlu0 %347
      %352 = vrot.lane.b32.xlu0 %v310, 123
      %v353 = vpop.permute.xlu0 %352
      %354 = vrot.lane.b32.xlu0 %v311, 123
      %v355 = vpop.permute.xlu0 %354
      %356 = vrot.lane.b32.xlu0 %v312, 123
      %v357 = vpop.permute.xlu0 %356
      %361 = vrot.lane.b32.xlu0 %v310, 122
      %v362 = vpop.permute.xlu0 %361
      %363 = vrot.lane.b32.xlu0 %v311, 122
      %v364 = vpop.permute.xlu0 %363
      %365 = vrot.lane.b32.xlu0 %v312, 122
      %v366 = vpop.permute.xlu0 %365
      %370 = vrot.lane.b32.xlu0 %v310, 121
      %v371 = vpop.permute.xlu0 %370
      %372 = vrot.lane.b32.xlu0 %v311, 121
      %v373 = vpop.permute.xlu0 %372
      %374 = vrot.lane.b32.xlu0 %v312, 121
      %v375 = vpop.permute.xlu0 %374
      %379 = vrot.lane.b32.xlu0 %v310, 120
      %v380 = vpop.permute.xlu0 %379
      %381 = vrot.lane.b32.xlu0 %v311, 120
      %v382 = vpop.permute.xlu0 %381
      %383 = vrot.lane.b32.xlu0 %v312, 120
      %v384 = vpop.permute.xlu0 %383
      %388 = vrot.lane.b32.xlu0 %v310, 119
      %v389 = vpop.permute.xlu0 %388
      %390 = vrot.lane.b32.xlu0 %v311, 119
      %v391 = vpop.permute.xlu0 %390
      %392 = vrot.lane.b32.xlu0 %v312, 119
      %v393 = vpop.permute.xlu0 %392
      %397 = vrot.lane.b32.xlu0 %v310, 118
      %v398 = vpop.permute.xlu0 %397
      %399 = vrot.lane.b32.xlu0 %v311, 118
      %v400 = vpop.permute.xlu0 %399
      %401 = vrot.lane.b32.xlu0 %v312, 118
      %v402 = vpop.permute.xlu0 %401
      %406 = vrot.lane.b32.xlu0 %v310, 117
      %v407 = vpop.permute.xlu0 %406
      %408 = vrot.lane.b32.xlu0 %v311, 117
      %v409 = vpop.permute.xlu0 %408
      %410 = vrot.lane.b32.xlu0 %v312, 117
      %v411 = vpop.permute.xlu0 %410
      %415 = vrot.lane.b32.xlu0 %v310, 116
      %v416 = vpop.permute.xlu0 %415
      %417 = vrot.lane.b32.xlu0 %v311, 116
      %v418 = vpop.permute.xlu0 %417
      %419 = vrot.lane.b32.xlu0 %v312, 116
      %v420 = vpop.permute.xlu0 %419
      %424 = vrot.lane.b32.xlu0 %v310, 115
      %v425 = vpop.permute.xlu0 %424
      %426 = vrot.lane.b32.xlu0 %v311, 115
      %v427 = vpop.permute.xlu0 %426
      %428 = vrot.lane.b32.xlu0 %v312, 115
      %v429 = vpop.permute.xlu0 %428
      %433 = vrot.lane.b32.xlu0 %v310, 114
      %v434 = vpop.permute.xlu0 %433
      %435 = vrot.lane.b32.xlu0 %v311, 114
      %v436 = vpop.permute.xlu0 %435
      %437 = vrot.lane.b32.xlu0 %v312, 114
      %v438 = vpop.permute.xlu0 %437
      %v442 = vpack.c.bf16 %v311, %v310
      %v443 = vpack.c.bf16 %v317, %v312
      %v444 = vpack.c.bf16 %v321, %v319
      %v445 = vpack.c.bf16 %v328, %v326
      %v446 = vpack.c.bf16 %v335, %v330
      %v447 = vpack.c.bf16 %v339, %v337
      %v448 = vpack.c.bf16 %v346, %v344
      %v449 = vpack.c.bf16 %v353, %v348
      %v450 = vpack.c.bf16 %v357, %v355
      %v451 = vpack.c.bf16 %v364, %v362
      %v452 = vpack.c.bf16 %v371, %v366
      %v453 = vpack.c.bf16 %v375, %v373
      %v454 = vpack.c.bf16 %v382, %v380
      %v455 = vpack.c.bf16 %v389, %v384
      %v456 = vpack.c.bf16 %v393, %v391
      %v457 = vpack.c.bf16 %v400, %v398
      %v458 = vpack.c.bf16 %v407, %v402
      %v459 = vpack.c.bf16 %v411, %v409
      %v460 = vpack.c.bf16 %v418, %v416
      %v461 = vpack.c.bf16 %v425, %v420
      %v462 = vpack.c.bf16 %v429, %v427
      %v463 = vpack.c.bf16 %v436, %v434
      %v464 = vpack.c.bf16 %v438, %v438
      %v465 = vld [vmem:[%s3] sm:$0xff]
      %v466 = vld [vmem:[%s3 + $0x8] sm:$0xf]
      %v467 = vld [vmem:[%s3 + $0xc] sm:$0xff]
      %v468 = vld [vmem:[%s3 + $0x14] sm:$0xf]
      %v469 = vld [vmem:[%s3 + $0x18] sm:$0xff]
      %v470 = vld [vmem:[%s3 + $0x20] sm:$0xf]
      %v471 = vld [vmem:[%s3 + $0x24] sm:$0xff]
      %v472 = vld [vmem:[%s3 + $0x2c] sm:$0xf]
      %v481 = vunpack.c.l.b16 %v465
      %v482 = vunpack.c.h.b16 %v465
      %v483 = vunpack.c.l.b16 %v466
      %v484 = vunpack.c.l.b16 %v467
      %v485 = vunpack.c.h.b16 %v467
      %v486 = vunpack.c.l.b16 %v468
      %v487 = vunpack.c.l.b16 %v469
      %v488 = vunpack.c.h.b16 %v469
      %v489 = vunpack.c.l.b16 %v470
      %v490 = vunpack.c.l.b16 %v471
      %v491 = vunpack.c.h.b16 %v471
      %v492 = vunpack.c.l.b16 %v472
      %v493 = vpack.c.b16 %v484, %v481
      %v494 = vpack.c.b16 %v485, %v482
      %v495 = vpack.c.b16 %v486, %v483
      %v496 = vpack.c.b16 %v490, %v487
      %v497 = vpack.c.b16 %v491, %v488
      %v498 = vpack.c.b16 %v492, %v489
      %vm503 = vcmask 850944
      %v505 = vsel %vm503, %v495, 0
      %v508 = vsel %vm503, %v498, 0
      %vm510 = vcmask 1043456
      %v512 = vsel %vm510, %v464, 0
      %514 = vmatpush.bf16.msra.mxu0 %v449
      %515 = vmatpush.bf16.msra.mxu0 %v448
      %516 = vmatpush.bf16.msra.mxu0 %v447
      %517 = vmatpush.bf16.msra.mxu0 %v446
      %518 = vmatpush.bf16.msra.mxu0 %v445
      %519 = vmatpush.bf16.msra.mxu0 %v444
      %520 = vmatpush.bf16.msra.mxu0 %v443
      %521 = vmatpush.bf16.msra.mxu0 %v442
      %522 = vmatmul.bf16.gmra.mxu0 %v493
      %v523 = vpop.f32.mrf.mxu0
      %v524 = vadd.f32 0.0, %v523
      %v525 = vpop.f32.mrf.mxu0
      %v526 = vadd.f32 0.0, %v525
      %527 = vmatmul.bf16.gmra.mxu0 %v496
      %v528 = vpop.f32.mrf.mxu0
      %v529 = vadd.f32 0.0, %v528
      %v530 = vpop.f32.mrf.mxu0
      %v531 = vadd.f32 0.0, %v530
      %532 = vdwg.mxu0
      %533 = vmatpush.bf16.msra.mxu0 %v457
      %534 = vmatpush.bf16.msra.mxu0 %v456
      %535 = vmatpush.bf16.msra.mxu0 %v455
      %536 = vmatpush.bf16.msra.mxu0 %v454
      %537 = vmatpush.bf16.msra.mxu0 %v453
      %538 = vmatpush.bf16.msra.mxu0 %v452
      %539 = vmatpush.bf16.msra.mxu0 %v451
      %540 = vmatpush.bf16.msra.mxu0 %v450
      %541 = vmatmul.bf16.gmra.mxu0 %v494
      %v542 = vpop.f32.mrf.mxu0
      %v543 = vadd.f32 %v524, %v542
      %v544 = vpop.f32.mrf.mxu0
      %v545 = vadd.f32 %v526, %v544
      %546 = vmatmul.bf16.gmra.mxu0 %v497
      %v547 = vpop.f32.mrf.mxu0
      %v548 = vadd.f32 %v529, %v547
      %v549 = vpop.f32.mrf.mxu0
      %v550 = vadd.f32 %v531, %v549
      %551 = vdwg.mxu0
      %552 = vmatpush.bf16.msra.mxu0 0
      %553 = vmatpush.bf16.msra.mxu0 %v512
      %554 = vmatpush.bf16.msra.mxu0 %v463
      %555 = vmatpush.bf16.msra.mxu0 %v462
      %556 = vmatpush.bf16.msra.mxu0 %v461
      %557 = vmatpush.bf16.msra.mxu0 %v460
      %558 = vmatpush.bf16.msra.mxu0 %v459
      %559 = vmatpush.bf16.msra.mxu0 %v458
      %560 = vmatmul.bf16.gmra.mxu0 %v505
      %v561 = vpop.f32.mrf.mxu0
      %v562 = vadd.f32 %v543, %v561
      %v563 = vpop.f32.mrf.mxu0
      %v564 = vadd.f32 %v545, %v563
      %565 = vmatmul.bf16.gmra.mxu0 %v508
      %v566 = vpop.f32.mrf.mxu0
      %v567 = vadd.f32 %v548, %v566
      %v568 = vpop.f32.mrf.mxu0
      %v569 = vadd.f32 %v550, %v568
      %570 = vdwg.mxu0
      %vm571 = vcmask 130048
      %572 = vst.msk [vmem:[%s232] sm:$0xff] %vm571, %v562
      %573 = vst.msk [vmem:[%s232 + $0x8] sm:$0xff] %vm571, %v564
      %574 = vst.msk [vmem:[%s232 + $0x10] sm:$0xff] %vm571, %v567
      %575 = vst.msk [vmem:[%s232 + $0x18] sm:$0xff] %vm571, %v569
      %v576 = vsel %vm571, %v562, 0.0
      %577 = vadd.xlane.f32.xlu0 %v576
      %v578 = vpop.xlane.xlu0 %577
      %v579 = vsel %vm571, %v564, 0.0
      %580 = vadd.xlane.f32.xlu0 %v579
      %v581 = vpop.xlane.xlu0 %580
      %v582 = vsel %vm571, %v567, 0.0
      %583 = vadd.xlane.f32.xlu0 %v582
      %v584 = vpop.xlane.xlu0 %583
      %v585 = vsel %vm571, %v569, 0.0
      %586 = vadd.xlane.f32.xlu0 %v585
      %v587 = vpop.xlane.xlu0 %586
      %v588 = vmul.f32 %v562, %v562
      %v589 = vmul.f32 %v564, %v564
      %v590 = vmul.f32 %v567, %v567
      %v591 = vmul.f32 %v569, %v569
      %v592 = vsel %vm571, %v588, 0.0
      %593 = vadd.xlane.f32.xlu0 %v592
      %v594 = vpop.xlane.xlu0 %593
      %v595 = vsel %vm571, %v589, 0.0
      %596 = vadd.xlane.f32.xlu0 %v595
      %v597 = vpop.xlane.xlu0 %596
      %v598 = vsel %vm571, %v590, 0.0
      %599 = vadd.xlane.f32.xlu0 %v598
      %v600 = vpop.xlane.xlu0 %599
      %v601 = vsel %vm571, %v591, 0.0
      %602 = vadd.xlane.f32.xlu0 %v601
      %v603 = vpop.xlane.xlu0 %602
      %vm604 = vcmask 7168
      %v605 = vsel %vm604, %v578, %v594
      %v606 = vsel %vm604, %v581, %v597
      %v607 = vsel %vm604, %v584, %v600
      %v608 = vsel %vm604, %v587, %v603
      %vm609 = vcmask 15360
      %610 = vst.msk [vmem:[%s237] sm:$0xff] %vm609, %v605
      %611 = vst.msk [vmem:[%s237 + $0x8] sm:$0xff] %vm609, %v606
      %612 = vst.msk [vmem:[%s237 + $0x10] sm:$0xff] %vm609, %v607
      %613 = vst.msk [vmem:[%s237 + $0x18] sm:$0xff] %vm609, %v608
      %p614 = scmp.lt.s32.totalorder %s17, 1
      %s615 = scalar_select %p614, %s17, 1
      %s616 = smul.addr %s615, 4
      %s617 = smul.addr %s616, 8
      %s618 = scalar_lea.vmem %s4, %s617
      %p619 = scmp.lt.s32.totalorder %s17, 1
      %s620 = scalar_select %p619, %s17, 1
      %s621 = smul.addr %s620, 4
      %s622 = smul.addr %s621, 8
      %s623 = scalar_lea.vmem %s5, %s622
      // Predicated region
      $region37: #{model_forward.13} parent=35 // pred_check
        %p624 = pneg %p124
      $region38: #{model_forward.13} parent=35 // pred_check_branch
        %626 = sbr.rel (%p624) target = $region40
      $region39: #{model_forward.13} parent=35 // pred_region
        _
      $region40: #{model_forward.13} parent=35 // pred_fallthru
        _
      // Predicated region
      $region41: #{model_forward.13} parent=35 // pred_check
        %p627 = pneg %p150
      $region42: #{model_forward.13} parent=35 // pred_check_branch
        %629 = sbr.rel (%p627) target = $region44
      $region43: #{model_forward.13} parent=35 // pred_region
        _
      $region44: #{model_forward.13} parent=35 // pred_fallthru
        _
    $region36: #{model_forward.13} parent=5 // pred_fallthru
      _
    %p630 = scmp.le.s32.totalorder 2, %s12
    // Predicated region
    $region45: #{model_forward.13} parent=5 // pred_check
      %p631 = pneg %p630
    $region46: #{model_forward.13} parent=5 // pred_check_branch
      %633 = sbr.rel (%p631) target = $region48
    $region47: #{model_forward.13} parent=5 // pred_region
      %s634 = ssub.s32 %s12, 2
      // Predicated region
      $region49: #{model_forward.13} parent=47 // pred_check
        %p635 = pneg %p130
      $region50: #{model_forward.13} parent=47 // pred_check_branch
        %637 = sbr.rel (%p635) target = $region52
      $region51: #{model_forward.13} parent=47 // pred_region
        %p638 = scmp.lt.s32.totalorder %s18, 1
        %s639 = scalar_select %p638, %s18, 1
        %s640 = smul.addr %s639, 4
        %s641 = smul.addr %s640, 8
        %s642 = scalar_lea.vmem %s4, %s641
      $region52: #{model_forward.13} parent=47 // pred_fallthru
        _
      // Predicated region
      $region53: #{model_forward.13} parent=47 // pred_check
        %p643 = pneg %p156
      $region54: #{model_forward.13} parent=47 // pred_check_branch
        %645 = sbr.rel (%p643) target = $region56
      $region55: #{model_forward.13} parent=47 // pred_region
        %p646 = scmp.lt.s32.totalorder %s18, 1
        %s647 = scalar_select %p646, %s18, 1
        %s648 = smul.addr %s647, 4
        %s649 = smul.addr %s648, 8
        %s650 = scalar_lea.vmem %s5, %s649
      $region56: #{model_forward.13} parent=47 // pred_fallthru
        _
    $region48: #{model_forward.13} parent=5 // pred_fallthru
      _
  $region6: #{model_forward.13} parent=0 // loop_footer
    %s16 = sadd.s32 1, %s12
  $region7: #{model_forward.13} parent=0 // loop_footer_branch
    %11 = sbr.rel target = $region3
  $region8: #{model_forward.13} parent=0 // loop_exit
    _

// kernel: model_forward.15
$region0: #{model_forward.15}
  #allocation0 [shape = 'u32[]', space=smem, size = 0x4, offset = 0x4, fixed_abs, tag = 'smem constant byte address 0x4 - core index']
  #allocation1 [shape = 'u32[72,128]{1,0:T(1,128)}', space=vmem, size = 0x9000, scoped, tag = 'internal scratch']
  %s0 = inlined_call_operand.vmem [shape: f32[2,32,16], index: 0, kind: input, shape index: {}]
  %s1 = inlined_call_operand.vmem [shape: f32[2,32,16], index: 1, kind: input, shape index: {}]
  %s2 = inlined_call_operand.vmem [shape: f32[32,1], index: 2, kind: input, shape index: {}]
  %s3 = inlined_call_operand.vmem [shape: f32[32,1], index: 3, kind: input, shape index: {}]
  %s4 = inlined_call_operand.vmem [shape: bf16[32,320], index: 4, kind: input, shape index: {}]
  %s5 = inlined_call_operand.vmem [shape: f32[2,32,16], index: 5, kind: output, shape index: {0}]
  %s6 = inlined_call_operand.vmem [shape: f32[2,32,2], index: 6, kind: output, shape index: {1}]
  %7 = xla_tuple %s5, %s6
  %s8 = sld [smem:[#allocation0]]
  $region61: #{model_forward.15} parent=0
    _
  %s10 = ssub.s32 1, %s8
  %s11 = scalar_select 0, %s10, %s8
  loop: start=0, step=1, limit=4
  $region2: #{model_forward.15} parent=0 // loop_pre_header
    _
  $region3: #{model_forward.15} parent=0 // loop_header
    %s13 = sphi 0, %s17
    %p14 = scmp.ge.s32.totalorder %s13, 4
    %s23 = sphi 0, %s25
    %s26 = sphi 0, %s23
    %s27 = sphi 0, %s26
    %s43 = sphi 0, %s27
    %s49 = sphi 0, %s51
    %s52 = sphi 0, %s49
    %s53 = sphi 0, %s52
    %s69 = sphi 0, %s53
    %s73 = sphi 0, %s73
    %s75 = sphi 0, %s73
    %s76 = sphi 0, %s75
    %s90 = sphi 0, %s76
    %s94 = sphi 0, %s94
    %s96 = sphi 0, %s94
    %s97 = sphi 0, %s96
    %s111 = sphi 0, %s97
    %s115 = sphi 0, %s115
    %s117 = sphi 0, %s115
    %s118 = sphi 0, %s117
    %s132 = sphi 0, %s118
    %s138 = sphi 0, %s140
    %s141 = sphi 0, %s138
    %s142 = sphi 0, %s141
    %s158 = sphi 0, %s142
    %s164 = sphi 0, %s166
    %s167 = sphi 0, %s164
    %s168 = sphi 0, %s167
    %s184 = sphi 0, %s168
  $region4: #{model_forward.15} parent=0 // loop_header_branch
    %16 = sbr.rel (%p14) target = $region8
  $region5: #{model_forward.15} parent=0 // loop_body
    %s18 = ssub.s32 %s13, 1
    %s19 = ssub.s32 %s13, 2
    %s20 = sadd.s32 %s13, 1
    %s21 = ssub.s32 %s13, %s20
    %p22 = scmp.eq.s32.totalorder %s21, 0
    %s24 = sadd.s32 %s23, 1
    %s25 = scalar_select %p22, %s23, %s24
    %p28 = pneg %p22
    %p29 = scmp.eq.s32.totalorder %s13, 1
    %p30 = por %p28, %p29
    %p31 = scmp.ne.s32.totalorder %s23, %s26
    %p32 = scmp.eq.s32.totalorder %s13, 0
    %p33 = por %p31, %p32
    %p34 = scmp.ne.s32.totalorder %s23, %s26
    %p35 = scmp.eq.s32.totalorder %s18, 1
    %p36 = por %p34, %p35
    %p37 = scmp.ne.s32.totalorder %s26, %s27
    %p38 = scmp.eq.s32.totalorder %s18, 0
    %p39 = por %p37, %p38
    %p40 = scmp.ne.s32.totalorder %s26, %s27
    %p41 = scmp.eq.s32.totalorder %s19, 1
    %p42 = por %p40, %p41
    %p44 = scmp.ne.s32.totalorder %s27, %s43
    %p45 = scmp.eq.s32.totalorder %s19, 0
    %p46 = por %p44, %p45
    %s47 = ssub.s32 %s13, %s20
    %p48 = scmp.eq.s32.totalorder %s47, 0
    %s50 = sadd.s32 %s49, 1
    %s51 = scalar_select %p48, %s49, %s50
    %p54 = pneg %p48
    %p55 = scmp.eq.s32.totalorder %s13, 1
    %p56 = por %p54, %p55
    %p57 = scmp.ne.s32.totalorder %s49, %s52
    %p58 = scmp.eq.s32.totalorder %s13, 0
    %p59 = por %p57, %p58
    %p60 = scmp.ne.s32.totalorder %s49, %s52
    %p61 = scmp.eq.s32.totalorder %s18, 1
    %p62 = por %p60, %p61
    %p63 = scmp.ne.s32.totalorder %s52, %s53
    %p64 = scmp.eq.s32.totalorder %s18, 0
    %p65 = por %p63, %p64
    %p66 = scmp.ne.s32.totalorder %s52, %s53
    %p67 = scmp.eq.s32.totalorder %s19, 1
    %p68 = por %p66, %p67
    %p70 = scmp.ne.s32.totalorder %s53, %s69
    %p71 = scmp.eq.s32.totalorder %s19, 0
    %p72 = por %p70, %p71
    %s74 = sadd.s32 %s73, 1
    %p77 = scmp.eq.s32.totalorder %s13, 1
    %p78 = scmp.ne.s32.totalorder %s73, %s75
    %p79 = scmp.eq.s32.totalorder %s13, 0
    %p80 = por %p78, %p79
    %p81 = scmp.ne.s32.totalorder %s73, %s75
    %p82 = scmp.eq.s32.totalorder %s18, 1
    %p83 = por %p81, %p82
    %p84 = scmp.ne.s32.totalorder %s75, %s76
    %p85 = scmp.eq.s32.totalorder %s18, 0
    %p86 = por %p84, %p85
    %p87 = scmp.ne.s32.totalorder %s75, %s76
    %p88 = scmp.eq.s32.totalorder %s19, 1
    %p89 = por %p87, %p88
    %p91 = scmp.ne.s32.totalorder %s76, %s90
    %p92 = scmp.eq.s32.totalorder %s19, 0
    %p93 = por %p91, %p92
    %s95 = sadd.s32 %s94, 1
    %p98 = scmp.eq.s32.totalorder %s13, 1
    %p99 = scmp.ne.s32.totalorder %s94, %s96
    %p100 = scmp.eq.s32.totalorder %s13, 0
    %p101 = por %p99, %p100
    %p102 = scmp.ne.s32.totalorder %s94, %s96
    %p103 = scmp.eq.s32.totalorder %s18, 1
    %p104 = por %p102, %p103
    %p105 = scmp.ne.s32.totalorder %s96, %s97
    %p106 = scmp.eq.s32.totalorder %s18, 0
    %p107 = por %p105, %p106
    %p108 = scmp.ne.s32.totalorder %s96, %s97
    %p109 = scmp.eq.s32.totalorder %s19, 1
    %p110 = por %p108, %p109
    %p112 = scmp.ne.s32.totalorder %s97, %s111
    %p113 = scmp.eq.s32.totalorder %s19, 0
    %p114 = por %p112, %p113
    %s116 = sadd.s32 %s115, 1
    %p119 = scmp.eq.s32.totalorder %s13, 1
    %p120 = scmp.ne.s32.totalorder %s115, %s117
    %p121 = scmp.eq.s32.totalorder %s13, 0
    %p122 = por %p120, %p121
    %p123 = scmp.ne.s32.totalorder %s115, %s117
    %p124 = scmp.eq.s32.totalorder %s18, 1
    %p125 = por %p123, %p124
    %p126 = scmp.ne.s32.totalorder %s117, %s118
    %p127 = scmp.eq.s32.totalorder %s18, 0
    %p128 = por %p126, %p127
    %p129 = scmp.ne.s32.totalorder %s117, %s118
    %p130 = scmp.eq.s32.totalorder %s19, 1
    %p131 = por %p129, %p130
    %p133 = scmp.ne.s32.totalorder %s118, %s132
    %p134 = scmp.eq.s32.totalorder %s19, 0
    %p135 = por %p133, %p134
    %s136 = ssub.s32 %s13, %s20
    %p137 = scmp.eq.s32.totalorder %s136, 0
    %s139 = sadd.s32 %s138, 1
    %s140 = scalar_select %p137, %s138, %s139
    %p143 = pneg %p137
    %p144 = scmp.eq.s32.totalorder %s13, 1
    %p145 = por %p143, %p144
    %p146 = scmp.ne.s32.totalorder %s138, %s141
    %p147 = scmp.eq.s32.totalorder %s13, 0
    %p148 = por %p146, %p147
    %p149 = scmp.ne.s32.totalorder %s138, %s141
    %p150 = scmp.eq.s32.totalorder %s18, 1
    %p151 = por %p149, %p150
    %p152 = scmp.ne.s32.totalorder %s141, %s142
    %p153 = scmp.eq.s32.totalorder %s18, 0
    %p154 = por %p152, %p153
    %p155 = scmp.ne.s32.totalorder %s141, %s142
    %p156 = scmp.eq.s32.totalorder %s19, 1
    %p157 = por %p155, %p156
    %p159 = scmp.ne.s32.totalorder %s142, %s158
    %p160 = scmp.eq.s32.totalorder %s19, 0
    %p161 = por %p159, %p160
    %s162 = ssub.s32 %s13, %s20
    %p163 = scmp.eq.s32.totalorder %s162, 0
    %s165 = sadd.s32 %s164, 1
    %s166 = scalar_select %p163, %s164, %s165
    %p169 = pneg %p163
    %p170 = scmp.eq.s32.totalorder %s13, 1
    %p171 = por %p169, %p170
    %p172 = scmp.ne.s32.totalorder %s164, %s167
    %p173 = scmp.eq.s32.totalorder %s13, 0
    %p174 = por %p172, %p173
    %p175 = scmp.ne.s32.totalorder %s164, %s167
    %p176 = scmp.eq.s32.totalorder %s18, 1
    %p177 = por %p175, %p176
    %p178 = scmp.ne.s32.totalorder %s167, %s168
    %p179 = scmp.eq.s32.totalorder %s18, 0
    %p180 = por %p178, %p179
    %p181 = scmp.ne.s32.totalorder %s167, %s168
    %p182 = scmp.eq.s32.totalorder %s19, 1
    %p183 = por %p181, %p182
    %p185 = scmp.ne.s32.totalorder %s168, %s184
    %p186 = scmp.eq.s32.totalorder %s19, 0
    %p187 = por %p185, %p186
    %p188 = scmp.le.s32.totalorder 1, %s13
    %p189 = scmp.lt.s32.totalorder %s13, 3
    %p190 = pnand %p188, %p189
    %p191 = pneg %p190
    // Predicated region
    $region9: #{model_forward.15} parent=5 // pred_check
      _
    $region10: #{model_forward.15} parent=5 // pred_check_branch
      %193 = sbr.rel (%p190) target = $region12
    $region11: #{model_forward.15} parent=5 // pred_region
      %s194 = ssub.s32 %s13, 1
      // Predicated region
      $region13: #{model_forward.15} parent=11 // pred_check
        %p195 = pneg %p86
      $region14: #{model_forward.15} parent=11 // pred_check_branch
        %197 = sbr.rel (%p195) target = $region16
      $region15: #{model_forward.15} parent=11 // pred_region
        _
      $region16: #{model_forward.15} parent=11 // pred_fallthru
        _
      // Predicated region
      $region17: #{model_forward.15} parent=11 // pred_check
        %p198 = pneg %p107
      $region18: #{model_forward.15} parent=11 // pred_check_branch
        %200 = sbr.rel (%p198) target = $region20
      $region19: #{model_forward.15} parent=11 // pred_region
        _
      $region20: #{model_forward.15} parent=11 // pred_fallthru
        _
      // Predicated region
      $region21: #{model_forward.15} parent=11 // pred_check
        %p201 = pneg %p128
      $region22: #{model_forward.15} parent=11 // pred_check_branch
        %203 = sbr.rel (%p201) target = $region24
      $region23: #{model_forward.15} parent=11 // pred_region
        _
      $region24: #{model_forward.15} parent=11 // pred_fallthru
        _
    $region12: #{model_forward.15} parent=5 // pred_fallthru
      _
    %p204 = scmp.lt.s32.totalorder %s13, 2
    // Predicated region
    $region25: #{model_forward.15} parent=5 // pred_check
      %p205 = pneg %p204
    $region26: #{model_forward.15} parent=5 // pred_check_branch
      %207 = sbr.rel (%p205) target = $region28
    $region27: #{model_forward.15} parent=5 // pred_region
      // Predicated region
      $region29: #{model_forward.15} parent=27 // pred_check
        %p208 = pneg %p33
      $region30: #{model_forward.15} parent=27 // pred_check_branch
        %210 = sbr.rel (%p208) target = $region32
      $region31: #{model_forward.15} parent=27 // pred_region
        %p211 = scmp.lt.s32.totalorder %s13, 1
        %s212 = scalar_select %p211, %s13, 1
        %s213 = smul.addr %s212, 4
        %s214 = smul.addr %s213, 8
        %s215 = scalar_lea.vmem %s0, %s214
      $region32: #{model_forward.15} parent=27 // pred_fallthru
        _
      // Predicated region
      $region33: #{model_forward.15} parent=27 // pred_check
        %p216 = pneg %p59
      $region34: #{model_forward.15} parent=27 // pred_check_branch
        %218 = sbr.rel (%p216) target = $region36
      $region35: #{model_forward.15} parent=27 // pred_region
        %p219 = scmp.lt.s32.totalorder %s13, 1
        %s220 = scalar_select %p219, %s13, 1
        %s221 = smul.addr %s220, 4
        %s222 = smul.addr %s221, 8
        %s223 = scalar_lea.vmem %s1, %s222
      $region36: #{model_forward.15} parent=27 // pred_fallthru
        _
    $region28: #{model_forward.15} parent=5 // pred_fallthru
      _
    %p224 = scmp.le.s32.totalorder 1, %s13
    %p225 = scmp.lt.s32.totalorder %s13, 3
    %p226 = pnand %p224, %p225
    %p227 = pneg %p226
    // Predicated region
    $region37: #{model_forward.15} parent=5 // pred_check
      _
    $region38: #{model_forward.15} parent=5 // pred_check_branch
      %229 = sbr.rel (%p226) target = $region40
    $region39: #{model_forward.15} parent=5 // pred_region
      %s230 = ssub.s32 %s13, 1
      %p231 = scmp.lt.s32.totalorder %s18, 1
      %s232 = scalar_select %p231, %s18, 1
      %s233 = smul.addr %s232, 4
      %s234 = smul.addr %s233, 8
      %s235 = scalar_lea.vmem %s0, %s234
      %p236 = pneg %p39
      %p237 = pneg %p36
      %p238 = scmp.lt.s32.totalorder %s18, 1
      %s239 = scalar_select %p238, %s18, 1
      %s240 = smul.addr %s239, 4
      %s241 = smul.addr %s240, 8
      %s242 = scalar_lea.vmem %s1, %s241
      %p243 = pneg %p65
      %p244 = pneg %p62
      %p245 = pneg %p86
      %p246 = pneg %p83
      %p247 = pneg %p107
      %p248 = pneg %p104
      %p249 = pneg %p128
      %p250 = pneg %p125
      %p251 = pneg %p154
      %p252 = pneg %p151
      %p253 = scmp.lt.s32.totalorder %s18, 1
      %s254 = scalar_select %p253, %s18, 1
      %s255 = smul.addr %s254, 4
      %s256 = smul.addr %s255, 8
      %s257 = scalar_lea.vmem %s5, %s256
      %p258 = pneg %p180
      %p259 = pneg %p177
      %p260 = scmp.lt.s32.totalorder %s18, 1
      %s261 = scalar_select %p260, %s18, 1
      %s262 = smul.addr %s261, 4
      %s263 = smul.addr %s262, 8
      %s264 = scalar_lea.vmem %s6, %s263
      %p265 = scmp.lt.s32.totalorder %s18, 1
      %s266 = scalar_select %p265, %s18, 1
      %s267 = smul.addr %s266, 4
      %s268 = smul.addr %s267, 8
      %s269 = scalar_lea.vmem %s0, %s268
      %p270 = scmp.lt.s32.totalorder %s18, 1
      %s271 = scalar_select %p270, %s18, 1
      %s272 = smul.addr %s271, 4
      %s273 = smul.addr %s272, 8
      %s274 = scalar_lea.vmem %s1, %s273
      %p275 = scmp.lt.s32.totalorder %s18, 1
      %s276 = scalar_select %p275, %s18, 1
      %s277 = smul.addr %s276, 4
      %s278 = smul.addr %s277, 8
      %s279 = scalar_lea.vmem %s5, %s278
      %p280 = scmp.lt.s32.totalorder %s18, 1
      %s281 = scalar_select %p280, %s18, 1
      %s282 = smul.addr %s281, 4
      %s283 = smul.addr %s282, 8
      %s284 = scalar_lea.vmem %s6, %s283
      %v286 = vld [vmem:[%s269] sm:$0xff]
      %v287 = vld [vmem:[%s269 + $0x8] sm:$0xff]
      %v288 = vld [vmem:[%s269 + $0x10] sm:$0xff]
      %v289 = vld [vmem:[%s269 + $0x18] sm:$0xff]
      %294 = vrot.lane.b32.xlu0 %v286, 2
      %v295 = vpop.permute.xlu0 %294
      %296 = vrot.lane.b32.xlu0 %v287, 2
      %v297 = vpop.permute.xlu0 %296
      %298 = vrot.lane.b32.xlu0 %v288, 2
      %v299 = vpop.permute.xlu0 %298
      %300 = vrot.lane.b32.xlu0 %v289, 2
      %v301 = vpop.permute.xlu0 %300
      %vm306 = vcmask 15360
      %v307 = vsel %vm306, 0.0, %v295
      %v308 = vsel %vm306, 0.0, %v297
      %v309 = vsel %vm306, 0.0, %v299
      %v310 = vsel %vm306, 0.0, %v301
      %vm311 = vcmask 146432
      %v312 = vsel %vm311, %v307, 0.0
      %v313 = vsel %vm311, %v308, 0.0
      %v314 = vsel %vm311, %v309, 0.0
      %v315 = vsel %vm311, %v310, 0.0
      %v316 = vld [vmem:[%s274] sm:$0xff]
      %v317 = vld [vmem:[%s274 + $0x8] sm:$0xff]
      %v318 = vld [vmem:[%s274 + $0x10] sm:$0xff]
      %v319 = vld [vmem:[%s274 + $0x18] sm:$0xff]
      %v320 = vld [vmem:[%s2] sm:$0xff]
      %v321 = vld [vmem:[%s2 + $0x8] sm:$0xff]
      %v322 = vld [vmem:[%s2 + $0x10] sm:$0xff]
      %v323 = vld [vmem:[%s2 + $0x18] sm:$0xff]
      %v324 = vld [vmem:[%s3] sm:$0xff]
      %v325 = vld [vmem:[%s3 + $0x8] sm:$0xff]
      %v326 = vld [vmem:[%s3 + $0x10] sm:$0xff]
      %v327 = vld [vmem:[%s3 + $0x18] sm:$0xff]
      %329 = vset.pattern.permute.xlu0 0
      %330 = vperm.xlu0 %329, %v320
      %v331 = vpop.permute.xlu0 %330
      %334 = vset.pattern.permute.xlu0 0
      %335 = vperm.xlu0 %334, %v321
      %v336 = vpop.permute.xlu0 %335
      %339 = vset.pattern.permute.xlu0 0
      %340 = vperm.xlu0 %339, %v322
      %v341 = vpop.permute.xlu0 %340
      %344 = vset.pattern.permute.xlu0 0
      %345 = vperm.xlu0 %344, %v323
      %v346 = vpop.permute.xlu0 %345
      %v348 = vmul.f32 %v316, %v331
      %v349 = vmul.f32 %v317, %v336
      %v350 = vmul.f32 %v318, %v341
      %v351 = vmul.f32 %v319, %v346
      %353 = vset.pattern.permute.xlu0 0
      %354 = vperm.xlu0 %353, %v324
      %v355 = vpop.permute.xlu0 %354
      %358 = vset.pattern.permute.xlu0 0
      %359 = vperm.xlu0 %358, %v325
      %v360 = vpop.permute.xlu0 %359
      %363 = vset.pattern.permute.xlu0 0
      %364 = vperm.xlu0 %363, %v326
      %v365 = vpop.permute.xlu0 %364
      %368 = vset.pattern.permute.xlu0 0
      %369 = vperm.xlu0 %368, %v327
      %v370 = vpop.permute.xlu0 %369
      %v372 = vadd.f32 %v348, %v355
      %v373 = vadd.f32 %v349, %v360
      %v374 = vadd.f32 %v350, %v365
      %v375 = vadd.f32 %v351, %v370
      %vm376 = vcmp.ge.f32.partialorder %v372, 0.0
      %vm377 = vcmp.ge.f32.partialorder %v373, 0.0
      %vm378 = vcmp.ge.f32.partialorder %v374, 0.0
      %vm379 = vcmp.ge.f32.partialorder %v375, 0.0
      %v380 = vmul.f32 %v372, 0.1
      %v381 = vmul.f32 %v373, 0.1
      %v382 = vmul.f32 %v374, 0.1
      %v383 = vmul.f32 %v375, 0.1
      %v384 = vsel %vm376, %v372, %v380
      %v385 = vsel %vm377, %v373, %v381
      %v386 = vsel %vm378, %v374, %v382
      %v387 = vsel %vm379, %v375, %v383
      %392 = vrot.lane.b32.xlu0 %v384, 2
      %v393 = vpop.permute.xlu0 %392
      %394 = vrot.lane.b32.xlu0 %v385, 2
      %v395 = vpop.permute.xlu0 %394
      %396 = vrot.lane.b32.xlu0 %v386, 2
      %v397 = vpop.permute.xlu0 %396
      %398 = vrot.lane.b32.xlu0 %v387, 2
      %v399 = vpop.permute.xlu0 %398
      %v404 = vsel %vm306, 0.0, %v393
      %v405 = vsel %vm306, 0.0, %v395
      %v406 = vsel %vm306, 0.0, %v397
      %v407 = vsel %vm306, 0.0, %v399
      %v408 = vsel %vm311, %v404, 0.0
      %v409 = vsel %vm311, %v405, 0.0
      %v410 = vsel %vm311, %v406, 0.0
      %v411 = vsel %vm311, %v407, 0.0
      %416 = vrot.lane.b32.xlu0 %v312, 127
      %v417 = vpop.permute.xlu0 %416
      %418 = vrot.lane.b32.xlu0 %v313, 127
      %v419 = vpop.permute.xlu0 %418
      %420 = vrot.lane.b32.xlu0 %v314, 127
      %v421 = vpop.permute.xlu0 %420
      %422 = vrot.lane.b32.xlu0 %v315, 127
      %v423 = vpop.permute.xlu0 %422
      %432 = vrot.lane.b32.xlu0 %v408, 127
      %v433 = vpop.permute.xlu0 %432
      %434 = vrot.lane.b32.xlu0 %v409, 127
      %v435 = vpop.permute.xlu0 %434
      %436 = vrot.lane.b32.xlu0 %v410, 127
      %v437 = vpop.permute.xlu0 %436
      %438 = vrot.lane.b32.xlu0 %v411, 127
      %v439 = vpop.permute.xlu0 %438
      %444 = vrot.lane.b32.xlu0 %v312, 126
      %v445 = vpop.permute.xlu0 %444
      %446 = vrot.lane.b32.xlu0 %v313, 126
      %v447 = vpop.permute.xlu0 %446
      %448 = vrot.lane.b32.xlu0 %v314, 126
      %v449 = vpop.permute.xlu0 %448
      %450 = vrot.lane.b32.xlu0 %v315, 126
      %v451 = vpop.permute.xlu0 %450
      %456 = vrot.lane.b32.xlu0 %v408, 126
      %v457 = vpop.permute.xlu0 %456
      %458 = vrot.lane.b32.xlu0 %v409, 126
      %v459 = vpop.permute.xlu0 %458
      %460 = vrot.lane.b32.xlu0 %v410, 126
      %v461 = vpop.permute.xlu0 %460
      %462 = vrot.lane.b32.xlu0 %v411, 126
      %v463 = vpop.permute.xlu0 %462
      %468 = vrot.lane.b32.xlu0 %v312, 125
      %v469 = vpop.permute.xlu0 %468
      %470 = vrot.lane.b32.xlu0 %v313, 125
      %v471 = vpop.permute.xlu0 %470
      %472 = vrot.lane.b32.xlu0 %v314, 125
      %v473 = vpop.permute.xlu0 %472
      %474 = vrot.lane.b32.xlu0 %v315, 125
      %v475 = vpop.permute.xlu0 %474
      %480 = vrot.lane.b32.xlu0 %v408, 125
      %v481 = vpop.permute.xlu0 %480
      %482 = vrot.lane.b32.xlu0 %v409, 125
      %v483 = vpop.permute.xlu0 %482
      %484 = vrot.lane.b32.xlu0 %v410, 125
      %v485 = vpop.permute.xlu0 %484
      %486 = vrot.lane.b32.xlu0 %v411, 125
      %v487 = vpop.permute.xlu0 %486
      %492 = vrot.lane.b32.xlu0 %v312, 124
      %v493 = vpop.permute.xlu0 %492
      %494 = vrot.lane.b32.xlu0 %v313, 124
      %v495 = vpop.permute.xlu0 %494
      %496 = vrot.lane.b32.xlu0 %v314, 124
      %v497 = vpop.permute.xlu0 %496
      %498 = vrot.lane.b32.xlu0 %v315, 124
      %v499 = vpop.permute.xlu0 %498
      %504 = vrot.lane.b32.xlu0 %v408, 124
      %v505 = vpop.permute.xlu0 %504
      %506 = vrot.lane.b32.xlu0 %v409, 124
      %v507 = vpop.permute.xlu0 %506
      %508 = vrot.lane.b32.xlu0 %v410, 124
      %v509 = vpop.permute.xlu0 %508
      %510 = vrot.lane.b32.xlu0 %v411, 124
      %v511 = vpop.permute.xlu0 %510
      %v516 = vpack.c.bf16 %v313, %v312
      %v517 = vpack.c.bf16 %v315, %v314
      %v518 = vpack.c.bf16 %v409, %v408
      %v519 = vpack.c.bf16 %v411, %v410
      %v520 = vpack.c.bf16 %v419, %v417
      %v521 = vpack.c.bf16 %v423, %v421
      %v522 = vpack.c.bf16 %v435, %v433
      %v523 = vpack.c.bf16 %v439, %v437
      %v524 = vpack.c.bf16 %v447, %v445
      %v525 = vpack.c.bf16 %v451, %v449
      %v526 = vpack.c.bf16 %v459, %v457
      %v527 = vpack.c.bf16 %v463, %v461
      %v528 = vpack.c.bf16 %v471, %v469
      %v529 = vpack.c.bf16 %v475, %v473
      %v530 = vpack.c.bf16 %v483, %v481
      %v531 = vpack.c.bf16 %v487, %v485
      %v532 = vpack.c.bf16 %v495, %v493
      %v533 = vpack.c.bf16 %v499, %v497
      %v534 = vpack.c.bf16 %v507, %v505
      %v535 = vpack.c.bf16 %v511, %v509
      %v536 = vld [vmem:[%s4] sm:$0xff]
      %v537 = vld [vmem:[%s4 + $0x8] sm:$0xf]
      %v538 = vld [vmem:[%s4 + $0xc] sm:$0xff]
      %v539 = vld [vmem:[%s4 + $0x14] sm:$0xf]
      %v540 = vld [vmem:[%s4 + $0x18] sm:$0xff]
      %v541 = vld [vmem:[%s4 + $0x20] sm:$0xf]
      %v542 = vld [vmem:[%s4 + $0x24] sm:$0xff]
      %v543 = vld [vmem:[%s4 + $0x2c] sm:$0xf]
      %v552 = vunpack.c.l.b16 %v536
      %v553 = vunpack.c.h.b16 %v536
      %v554 = vunpack.c.l.b16 %v537
      %v555 = vunpack.c.l.b16 %v538
      %v556 = vunpack.c.h.b16 %v538
      %v557 = vunpack.c.l.b16 %v539
      %v558 = vunpack.c.l.b16 %v540
      %v559 = vunpack.c.h.b16 %v540
      %v560 = vunpack.c.l.b16 %v541
      %v561 = vunpack.c.l.b16 %v542
      %v562 = vunpack.c.h.b16 %v542
      %v563 = vunpack.c.l.b16 %v543
      %v564 = vpack.c.b16 %v555, %v552
      %v565 = vpack.c.b16 %v556, %v553
      %v566 = vpack.c.b16 %v557, %v554
      %v567 = vpack.c.b16 %v561, %v558
      %v568 = vpack.c.b16 %v562, %v559
      %v569 = vpack.c.b16 %v563, %v560
      %vm574 = vcmask 523264
      %v576 = vsel %vm574, %v566, 0
      %v579 = vsel %vm574, %v569, 0
      %581 = vmatpush.bf16.msra.mxu0 %v523
      %582 = vmatpush.bf16.msra.mxu0 %v522
      %583 = vmatpush.bf16.msra.mxu0 %v521
      %584 = vmatpush.bf16.msra.mxu0 %v520
      %585 = vmatpush.bf16.msra.mxu0 %v519
      %586 = vmatpush.bf16.msra.mxu0 %v518
      %587 = vmatpush.bf16.msra.mxu0 %v517
      %588 = vmatpush.bf16.msra.mxu0 %v516
      %589 = vmatmul.bf16.gmra.mxu0 %v564
      %v590 = vpop.f32.mrf.mxu0
      %v591 = vadd.f32 0.0, %v590
      %v592 = vpop.f32.mrf.mxu0
      %v593 = vadd.f32 0.0, %v592
      %594 = vmatmul.bf16.gmra.mxu0 %v567
      %v595 = vpop.f32.mrf.mxu0
      %v596 = vadd.f32 0.0, %v595
      %v597 = vpop.f32.mrf.mxu0
      %v598 = vadd.f32 0.0, %v597
      %599 = vdwg.mxu0
      %600 = vmatpush.bf16.msra.mxu0 %v531
      %601 = vmatpush.bf16.msra.mxu0 %v530
      %602 = vmatpush.bf16.msra.mxu0 %v529
      %603 = vmatpush.bf16.msra.mxu0 %v528
      %604 = vmatpush.bf16.msra.mxu0 %v527
      %605 = vmatpush.bf16.msra.mxu0 %v526
      %606 = vmatpush.bf16.msra.mxu0 %v525
      %607 = vmatpush.bf16.msra.mxu0 %v524
      %608 = vmatmul.bf16.gmra.mxu0 %v565
      %v609 = vpop.f32.mrf.mxu0
      %v610 = vadd.f32 %v591, %v609
      %v611 = vpop.f32.mrf.mxu0
      %v612 = vadd.f32 %v593, %v611
      %613 = vmatmul.bf16.gmra.mxu0 %v568
      %v614 = vpop.f32.mrf.mxu0
      %v615 = vadd.f32 %v596, %v614
      %v616 = vpop.f32.mrf.mxu0
      %v617 = vadd.f32 %v598, %v616
      %618 = vdwg.mxu0
      %619 = vmatpush.bf16.msra.mxu0 0
      %620 = vmatpush.bf16.msra.mxu0 0
      %621 = vmatpush.bf16.msra.mxu0 0
      %622 = vmatpush.bf16.msra.mxu0 0
      %623 = vmatpush.bf16.msra.mxu0 %v535
      %624 = vmatpush.bf16.msra.mxu0 %v534
      %625 = vmatpush.bf16.msra.mxu0 %v533
      %626 = vmatpush.bf16.msra.mxu0 %v532
      %627 = vmatmul.bf16.gmra.mxu0 %v576
      %v628 = vpop.f32.mrf.mxu0
      %v629 = vadd.f32 %v610, %v628
      %v630 = vpop.f32.mrf.mxu0
      %v631 = vadd.f32 %v612, %v630
      %632 = vmatmul.bf16.gmra.mxu0 %v579
      %v633 = vpop.f32.mrf.mxu0
      %v634 = vadd.f32 %v615, %v633
      %v635 = vpop.f32.mrf.mxu0
      %v636 = vadd.f32 %v617, %v635
      %637 = vdwg.mxu0
      %vm638 = vcmask 130048
      %639 = vst.msk [vmem:[%s279] sm:$0xff] %vm638, %v629
      %640 = vst.msk [vmem:[%s279 + $0x8] sm:$0xff] %vm638, %v631
      %641 = vst.msk [vmem:[%s279 + $0x10] sm:$0xff] %vm638, %v634
      %642 = vst.msk [vmem:[%s279 + $0x18] sm:$0xff] %vm638, %v636
      %v643 = vsel %vm638, %v629, 0.0
      %644 = vadd.xlane.f32.xlu0 %v643
      %v645 = vpop.xlane.xlu0 %644
      %v646 = vsel %vm638, %v631, 0.0
      %647 = vadd.xlane.f32.xlu0 %v646
      %v648 = vpop.xlane.xlu0 %647
      %v649 = vsel %vm638, %v634, 0.0
      %650 = vadd.xlane.f32.xlu0 %v649
      %v651 = vpop.xlane.xlu0 %650
      %v652 = vsel %vm638, %v636, 0.0
      %653 = vadd.xlane.f32.xlu0 %v652
      %v654 = vpop.xlane.xlu0 %653
      %v655 = vmul.f32 %v629, %v629
      %v656 = vmul.f32 %v631, %v631
      %v657 = vmul.f32 %v634, %v634
      %v658 = vmul.f32 %v636, %v636
      %v659 = vsel %vm638, %v655, 0.0
      %660 = vadd.xlane.f32.xlu0 %v659
      %v661 = vpop.xlane.xlu0 %660
      %v662 = vsel %vm638, %v656, 0.0
      %663 = vadd.xlane.f32.xlu0 %v662
      %v664 = vpop.xlane.xlu0 %663
      %v665 = vsel %vm638, %v657, 0.0
      %666 = vadd.xlane.f32.xlu0 %v665
      %v667 = vpop.xlane.xlu0 %666
      %v668 = vsel %vm638, %v658, 0.0
      %669 = vadd.xlane.f32.xlu0 %v668
      %v670 = vpop.xlane.xlu0 %669
      %vm671 = vcmask 7168
      %v672 = vsel %vm671, %v645, %v661
      %v673 = vsel %vm671, %v648, %v664
      %v674 = vsel %vm671, %v651, %v667
      %v675 = vsel %vm671, %v654, %v670
      %676 = vst.msk [vmem:[%s284] sm:$0xff] %vm306, %v672
      %677 = vst.msk [vmem:[%s284 + $0x8] sm:$0xff] %vm306, %v673
      %678 = vst.msk [vmem:[%s284 + $0x10] sm:$0xff] %vm306, %v674
      %679 = vst.msk [vmem:[%s284 + $0x18] sm:$0xff] %vm306, %v675
      %p680 = scmp.lt.s32.totalorder %s18, 1
      %s681 = scalar_select %p680, %s18, 1
      %s682 = smul.addr %s681, 4
      %s683 = smul.addr %s682, 8
      %s684 = scalar_lea.vmem %s5, %s683
      %p685 = scmp.lt.s32.totalorder %s18, 1
      %s686 = scalar_select %p685, %s18, 1
      %s687 = smul.addr %s686, 4
      %s688 = smul.addr %s687, 8
      %s689 = scalar_lea.vmem %s6, %s688
      // Predicated region
      $region41: #{model_forward.15} parent=39 // pred_check
        %p690 = pneg %p151
      $region42: #{model_forward.15} parent=39 // pred_check_branch
        %692 = sbr.rel (%p690) target = $region44
      $region43: #{model_forward.15} parent=39 // pred_region
        _
      $region44: #{model_forward.15} parent=39 // pred_fallthru
        _
      // Predicated region
      $region45: #{model_forward.15} parent=39 // pred_check
        %p693 = pneg %p177
      $region46: #{model_forward.15} parent=39 // pred_check_branch
        %695 = sbr.rel (%p693) target = $region48
      $region47: #{model_forward.15} parent=39 // pred_region
        _
      $region48: #{model_forward.15} parent=39 // pred_fallthru
        _
    $region40: #{model_forward.15} parent=5 // pred_fallthru
      _
    %p696 = scmp.le.s32.totalorder 2, %s13
    // Predicated region
    $region49: #{model_forward.15} parent=5 // pred_check
      %p697 = pneg %p696
    $region50: #{model_forward.15} parent=5 // pred_check_branch
      %699 = sbr.rel (%p697) target = $region52
    $region51: #{model_forward.15} parent=5 // pred_region
      %s700 = ssub.s32 %s13, 2
      // Predicated region
      $region53: #{model_forward.15} parent=51 // pred_check
        %p701 = pneg %p157
      $region54: #{model_forward.15} parent=51 // pred_check_branch
        %703 = sbr.rel (%p701) target = $region56
      $region55: #{model_forward.15} parent=51 // pred_region
        %p704 = scmp.lt.s32.totalorder %s19, 1
        %s705 = scalar_select %p704, %s19, 1
        %s706 = smul.addr %s705, 4
        %s707 = smul.addr %s706, 8
        %s708 = scalar_lea.vmem %s5, %s707
      $region56: #{model_forward.15} parent=51 // pred_fallthru
        _
      // Predicated region
      $region57: #{model_forward.15} parent=51 // pred_check
        %p709 = pneg %p183
      $region58: #{model_forward.15} parent=51 // pred_check_branch
        %711 = sbr.rel (%p709) target = $region60
      $region59: #{model_forward.15} parent=51 // pred_region
        %p712 = scmp.lt.s32.totalorder %s19, 1
        %s713 = scalar_select %p712, %s19, 1
        %s714 = smul.addr %s713, 4
        %s715 = smul.addr %s714, 8
        %s716 = scalar_lea.vmem %s6, %s715
      $region60: #{model_forward.15} parent=51 // pred_fallthru
        _
    $region52: #{model_forward.15} parent=5 // pred_fallthru
      _
  $region6: #{model_forward.15} parent=0 // loop_footer
    %s17 = sadd.s32 1, %s13
  $region7: #{model_forward.15} parent=0 // loop_footer_branch
    %12 = sbr.rel target = $region3
  $region8: #{model_forward.15} parent=0 // loop_exit
    _

// kernel: model_forward.16
$region0: #{model_forward.16}
  #allocation0 [shape = 'u32[]', space=smem, size = 0x4, offset = 0x4, fixed_abs, tag = 'smem constant byte address 0x4 - core index']
  #allocation1 [shape = 'u32[72,128]{1,0:T(1,128)}', space=vmem, size = 0x9000, scoped, tag = 'internal scratch']
  %s0 = inlined_call_operand.vmem [shape: f32[2,32,32], index: 0, kind: input, shape index: {}]
  %s1 = inlined_call_operand.vmem [shape: f32[2,24,32], index: 1, kind: input, shape index: {}]
  %s2 = inlined_call_operand.vmem [shape: f32[24,1], index: 2, kind: input, shape index: {}]
  %s3 = inlined_call_operand.vmem [shape: f32[24,1], index: 3, kind: input, shape index: {}]
  %s4 = inlined_call_operand.vmem [shape: bf16[24,280], index: 4, kind: input, shape index: {}]
  %s5 = inlined_call_operand.vmem [shape: f32[2,24,32], index: 5, kind: output, shape index: {0}]
  %s6 = inlined_call_operand.vmem [shape: f32[2,24,2], index: 6, kind: output, shape index: {1}]
  %7 = xla_tuple %s5, %s6
  %s8 = sld [smem:[#allocation0]]
  $region61: #{model_forward.16} parent=0
    _
  %s10 = ssub.s32 1, %s8
  %s11 = scalar_select 0, %s10, %s8
  loop: start=0, step=1, limit=4
  $region2: #{model_forward.16} parent=0 // loop_pre_header
    _
  $region3: #{model_forward.16} parent=0 // loop_header
    %s13 = sphi 0, %s17
    %p14 = scmp.ge.s32.totalorder %s13, 4
    %s23 = sphi 0, %s25
    %s26 = sphi 0, %s23
    %s27 = sphi 0, %s26
    %s43 = sphi 0, %s27
    %s49 = sphi 0, %s51
    %s52 = sphi 0, %s49
    %s53 = sphi 0, %s52
    %s69 = sphi 0, %s53
    %s73 = sphi 0, %s73
    %s75 = sphi 0, %s73
    %s76 = sphi 0, %s75
    %s90 = sphi 0, %s76
    %s94 = sphi 0, %s94
    %s96 = sphi 0, %s94
    %s97 = sphi 0, %s96
    %s111 = sphi 0, %s97
    %s115 = sphi 0, %s115
    %s117 = sphi 0, %s115
    %s118 = sphi 0, %s117
    %s132 = sphi 0, %s118
    %s138 = sphi 0, %s140
    %s141 = sphi 0, %s138
    %s142 = sphi 0, %s141
    %s158 = sphi 0, %s142
    %s164 = sphi 0, %s166
    %s167 = sphi 0, %s164
    %s168 = sphi 0, %s167
    %s184 = sphi 0, %s168
  $region4: #{model_forward.16} parent=0 // loop_header_branch
    %16 = sbr.rel (%p14) target = $region8
  $region5: #{model_forward.16} parent=0 // loop_body
    %s18 = ssub.s32 %s13, 1
    %s19 = ssub.s32 %s13, 2
    %s20 = sadd.s32 %s13, 1
    %s21 = ssub.s32 %s13, %s20
    %p22 = scmp.eq.s32.totalorder %s21, 0
    %s24 = sadd.s32 %s23, 1
    %s25 = scalar_select %p22, %s23, %s24
    %p28 = pneg %p22
    %p29 = scmp.eq.s32.totalorder %s13, 1
    %p30 = por %p28, %p29
    %p31 = scmp.ne.s32.totalorder %s23, %s26
    %p32 = scmp.eq.s32.totalorder %s13, 0
    %p33 = por %p31, %p32
    %p34 = scmp.ne.s32.totalorder %s23, %s26
    %p35 = scmp.eq.s32.totalorder %s18, 1
    %p36 = por %p34, %p35
    %p37 = scmp.ne.s32.totalorder %s26, %s27
    %p38 = scmp.eq.s32.totalorder %s18, 0
    %p39 = por %p37, %p38
    %p40 = scmp.ne.s32.totalorder %s26, %s27
    %p41 = scmp.eq.s32.totalorder %s19, 1
    %p42 = por %p40, %p41
    %p44 = scmp.ne.s32.totalorder %s27, %s43
    %p45 = scmp.eq.s32.totalorder %s19, 0
    %p46 = por %p44, %p45
    %s47 = ssub.s32 %s13, %s20
    %p48 = scmp.eq.s32.totalorder %s47, 0
    %s50 = sadd.s32 %s49, 1
    %s51 = scalar_select %p48, %s49, %s50
    %p54 = pneg %p48
    %p55 = scmp.eq.s32.totalorder %s13, 1
    %p56 = por %p54, %p55
    %p57 = scmp.ne.s32.totalorder %s49, %s52
    %p58 = scmp.eq.s32.totalorder %s13, 0
    %p59 = por %p57, %p58
    %p60 = scmp.ne.s32.totalorder %s49, %s52
    %p61 = scmp.eq.s32.totalorder %s18, 1
    %p62 = por %p60, %p61
    %p63 = scmp.ne.s32.totalorder %s52, %s53
    %p64 = scmp.eq.s32.totalorder %s18, 0
    %p65 = por %p63, %p64
    %p66 = scmp.ne.s32.totalorder %s52, %s53
    %p67 = scmp.eq.s32.totalorder %s19, 1
    %p68 = por %p66, %p67
    %p70 = scmp.ne.s32.totalorder %s53, %s69
    %p71 = scmp.eq.s32.totalorder %s19, 0
    %p72 = por %p70, %p71
    %s74 = sadd.s32 %s73, 1
    %p77 = scmp.eq.s32.totalorder %s13, 1
    %p78 = scmp.ne.s32.totalorder %s73, %s75
    %p79 = scmp.eq.s32.totalorder %s13, 0
    %p80 = por %p78, %p79
    %p81 = scmp.ne.s32.totalorder %s73, %s75
    %p82 = scmp.eq.s32.totalorder %s18, 1
    %p83 = por %p81, %p82
    %p84 = scmp.ne.s32.totalorder %s75, %s76
    %p85 = scmp.eq.s32.totalorder %s18, 0
    %p86 = por %p84, %p85
    %p87 = scmp.ne.s32.totalorder %s75, %s76
    %p88 = scmp.eq.s32.totalorder %s19, 1
    %p89 = por %p87, %p88
    %p91 = scmp.ne.s32.totalorder %s76, %s90
    %p92 = scmp.eq.s32.totalorder %s19, 0
    %p93 = por %p91, %p92
    %s95 = sadd.s32 %s94, 1
    %p98 = scmp.eq.s32.totalorder %s13, 1
    %p99 = scmp.ne.s32.totalorder %s94, %s96
    %p100 = scmp.eq.s32.totalorder %s13, 0
    %p101 = por %p99, %p100
    %p102 = scmp.ne.s32.totalorder %s94, %s96
    %p103 = scmp.eq.s32.totalorder %s18, 1
    %p104 = por %p102, %p103
    %p105 = scmp.ne.s32.totalorder %s96, %s97
    %p106 = scmp.eq.s32.totalorder %s18, 0
    %p107 = por %p105, %p106
    %p108 = scmp.ne.s32.totalorder %s96, %s97
    %p109 = scmp.eq.s32.totalorder %s19, 1
    %p110 = por %p108, %p109
    %p112 = scmp.ne.s32.totalorder %s97, %s111
    %p113 = scmp.eq.s32.totalorder %s19, 0
    %p114 = por %p112, %p113
    %s116 = sadd.s32 %s115, 1
    %p119 = scmp.eq.s32.totalorder %s13, 1
    %p120 = scmp.ne.s32.totalorder %s115, %s117
    %p121 = scmp.eq.s32.totalorder %s13, 0
    %p122 = por %p120, %p121
    %p123 = scmp.ne.s32.totalorder %s115, %s117
    %p124 = scmp.eq.s32.totalorder %s18, 1
    %p125 = por %p123, %p124
    %p126 = scmp.ne.s32.totalorder %s117, %s118
    %p127 = scmp.eq.s32.totalorder %s18, 0
    %p128 = por %p126, %p127
    %p129 = scmp.ne.s32.totalorder %s117, %s118
    %p130 = scmp.eq.s32.totalorder %s19, 1
    %p131 = por %p129, %p130
    %p133 = scmp.ne.s32.totalorder %s118, %s132
    %p134 = scmp.eq.s32.totalorder %s19, 0
    %p135 = por %p133, %p134
    %s136 = ssub.s32 %s13, %s20
    %p137 = scmp.eq.s32.totalorder %s136, 0
    %s139 = sadd.s32 %s138, 1
    %s140 = scalar_select %p137, %s138, %s139
    %p143 = pneg %p137
    %p144 = scmp.eq.s32.totalorder %s13, 1
    %p145 = por %p143, %p144
    %p146 = scmp.ne.s32.totalorder %s138, %s141
    %p147 = scmp.eq.s32.totalorder %s13, 0
    %p148 = por %p146, %p147
    %p149 = scmp.ne.s32.totalorder %s138, %s141
    %p150 = scmp.eq.s32.totalorder %s18, 1
    %p151 = por %p149, %p150
    %p152 = scmp.ne.s32.totalorder %s141, %s142
    %p153 = scmp.eq.s32.totalorder %s18, 0
    %p154 = por %p152, %p153
    %p155 = scmp.ne.s32.totalorder %s141, %s142
    %p156 = scmp.eq.s32.totalorder %s19, 1
    %p157 = por %p155, %p156
    %p159 = scmp.ne.s32.totalorder %s142, %s158
    %p160 = scmp.eq.s32.totalorder %s19, 0
    %p161 = por %p159, %p160
    %s162 = ssub.s32 %s13, %s20
    %p163 = scmp.eq.s32.totalorder %s162, 0
    %s165 = sadd.s32 %s164, 1
    %s166 = scalar_select %p163, %s164, %s165
    %p169 = pneg %p163
    %p170 = scmp.eq.s32.totalorder %s13, 1
    %p171 = por %p169, %p170
    %p172 = scmp.ne.s32.totalorder %s164, %s167
    %p173 = scmp.eq.s32.totalorder %s13, 0
    %p174 = por %p172, %p173
    %p175 = scmp.ne.s32.totalorder %s164, %s167
    %p176 = scmp.eq.s32.totalorder %s18, 1
    %p177 = por %p175, %p176
    %p178 = scmp.ne.s32.totalorder %s167, %s168
    %p179 = scmp.eq.s32.totalorder %s18, 0
    %p180 = por %p178, %p179
    %p181 = scmp.ne.s32.totalorder %s167, %s168
    %p182 = scmp.eq.s32.totalorder %s19, 1
    %p183 = por %p181, %p182
    %p185 = scmp.ne.s32.totalorder %s168, %s184
    %p186 = scmp.eq.s32.totalorder %s19, 0
    %p187 = por %p185, %p186
    %p188 = scmp.le.s32.totalorder 1, %s13
    %p189 = scmp.lt.s32.totalorder %s13, 3
    %p190 = pnand %p188, %p189
    %p191 = pneg %p190
    // Predicated region
    $region9: #{model_forward.16} parent=5 // pred_check
      _
    $region10: #{model_forward.16} parent=5 // pred_check_branch
      %193 = sbr.rel (%p190) target = $region12
    $region11: #{model_forward.16} parent=5 // pred_region
      %s194 = ssub.s32 %s13, 1
      // Predicated region
      $region13: #{model_forward.16} parent=11 // pred_check
        %p195 = pneg %p86
      $region14: #{model_forward.16} parent=11 // pred_check_branch
        %197 = sbr.rel (%p195) target = $region16
      $region15: #{model_forward.16} parent=11 // pred_region
        _
      $region16: #{model_forward.16} parent=11 // pred_fallthru
        _
      // Predicated region
      $region17: #{model_forward.16} parent=11 // pred_check
        %p198 = pneg %p107
      $region18: #{model_forward.16} parent=11 // pred_check_branch
        %200 = sbr.rel (%p198) target = $region20
      $region19: #{model_forward.16} parent=11 // pred_region
        _
      $region20: #{model_forward.16} parent=11 // pred_fallthru
        _
      // Predicated region
      $region21: #{model_forward.16} parent=11 // pred_check
        %p201 = pneg %p128
      $region22: #{model_forward.16} parent=11 // pred_check_branch
        %203 = sbr.rel (%p201) target = $region24
      $region23: #{model_forward.16} parent=11 // pred_region
        _
      $region24: #{model_forward.16} parent=11 // pred_fallthru
        _
    $region12: #{model_forward.16} parent=5 // pred_fallthru
      _
    %p204 = scmp.lt.s32.totalorder %s13, 2
    // Predicated region
    $region25: #{model_forward.16} parent=5 // pred_check
      %p205 = pneg %p204
    $region26: #{model_forward.16} parent=5 // pred_check_branch
      %207 = sbr.rel (%p205) target = $region28
    $region27: #{model_forward.16} parent=5 // pred_region
      // Predicated region
      $region29: #{model_forward.16} parent=27 // pred_check
        %p208 = pneg %p33
      $region30: #{model_forward.16} parent=27 // pred_check_branch
        %210 = sbr.rel (%p208) target = $region32
      $region31: #{model_forward.16} parent=27 // pred_region
        %p211 = scmp.lt.s32.totalorder %s13, 1
        %s212 = scalar_select %p211, %s13, 1
        %s213 = smul.addr %s212, 4
        %s214 = smul.addr %s213, 8
        %s215 = scalar_lea.vmem %s0, %s214
      $region32: #{model_forward.16} parent=27 // pred_fallthru
        _
      // Predicated region
      $region33: #{model_forward.16} parent=27 // pred_check
        %p216 = pneg %p59
      $region34: #{model_forward.16} parent=27 // pred_check_branch
        %218 = sbr.rel (%p216) target = $region36
      $region35: #{model_forward.16} parent=27 // pred_region
        %p219 = scmp.lt.s32.totalorder %s13, 1
        %s220 = scalar_select %p219, %s13, 1
        %s221 = smul.addr %s220, 3
        %s222 = smul.addr %s221, 8
        %s223 = scalar_lea.vmem %s1, %s222
      $region36: #{model_forward.16} parent=27 // pred_fallthru
        _
    $region28: #{model_forward.16} parent=5 // pred_fallthru
      _
    %p224 = scmp.le.s32.totalorder 1, %s13
    %p225 = scmp.lt.s32.totalorder %s13, 3
    %p226 = pnand %p224, %p225
    %p227 = pneg %p226
    // Predicated region
    $region37: #{model_forward.16} parent=5 // pred_check
      _
    $region38: #{model_forward.16} parent=5 // pred_check_branch
      %229 = sbr.rel (%p226) target = $region40
    $region39: #{model_forward.16} parent=5 // pred_region
      %s230 = ssub.s32 %s13, 1
      %p231 = scmp.lt.s32.totalorder %s18, 1
      %s232 = scalar_select %p231, %s18, 1
      %s233 = smul.addr %s232, 4
      %s234 = smul.addr %s233, 8
      %s235 = scalar_lea.vmem %s0, %s234
      %p236 = pneg %p39
      %p237 = pneg %p36
      %p238 = scmp.lt.s32.totalorder %s18, 1
      %s239 = scalar_select %p238, %s18, 1
      %s240 = smul.addr %s239, 3
      %s241 = smul.addr %s240, 8
      %s242 = scalar_lea.vmem %s1, %s241
      %p243 = pneg %p65
      %p244 = pneg %p62
      %p245 = pneg %p86
      %p246 = pneg %p83
      %p247 = pneg %p107
      %p248 = pneg %p104
      %p249 = pneg %p128
      %p250 = pneg %p125
      %p251 = pneg %p154
      %p252 = pneg %p151
      %p253 = scmp.lt.s32.totalorder %s18, 1
      %s254 = scalar_select %p253, %s18, 1
      %s255 = smul.addr %s254, 3
      %s256 = smul.addr %s255, 8
      %s257 = scalar_lea.vmem %s5, %s256
      %p258 = pneg %p180
      %p259 = pneg %p177
      %p260 = scmp.lt.s32.totalorder %s18, 1
      %s261 = scalar_select %p260, %s18, 1
      %s262 = smul.addr %s261, 3
      %s263 = smul.addr %s262, 8
      %s264 = scalar_lea.vmem %s6, %s263
      %p265 = scmp.lt.s32.totalorder %s18, 1
      %s266 = scalar_select %p265, %s18, 1
      %s267 = smul.addr %s266, 4
      %s268 = smul.addr %s267, 8
      %s269 = scalar_lea.vmem %s0, %s268
      %p270 = scmp.lt.s32.totalorder %s18, 1
      %s271 = scalar_select %p270, %s18, 1
      %s272 = smul.addr %s271, 3
      %s273 = smul.addr %s272, 8
      %s274 = scalar_lea.vmem %s1, %s273
      %p275 = scmp.lt.s32.totalorder %s18, 1
      %s276 = scalar_select %p275, %s18, 1
      %s277 = smul.addr %s276, 3
      %s278 = smul.addr %s277, 8
      %s279 = scalar_lea.vmem %s5, %s278
      %p280 = scmp.lt.s32.totalorder %s18, 1
      %s281 = scalar_select %p280, %s18, 1
      %s282 = smul.addr %s281, 3
      %s283 = smul.addr %s282, 8
      %s284 = scalar_lea.vmem %s6, %s283
      %v286 = vld [vmem:[%s269] sm:$0xff]
      %v287 = vld [vmem:[%s269 + $0x8] sm:$0xff]
      %v288 = vld [vmem:[%s269 + $0x10] sm:$0xff]
      %v289 = vld [vmem:[%s269 + $0x18] sm:$0xff]
      %294 = vrot.lane.b32.xlu0 %v286, 2
      %v295 = vpop.permute.xlu0 %294
      %296 = vrot.lane.b32.xlu0 %v287, 2
      %v297 = vpop.permute.xlu0 %296
      %298 = vrot.lane.b32.xlu0 %v288, 2
      %v299 = vpop.permute.xlu0 %298
      %300 = vrot.lane.b32.xlu0 %v289, 2
      %v301 = vpop.permute.xlu0 %300
      %vm306 = vcmask 15360
      %v307 = vsel %vm306, 0.0, %v295
      %v308 = vsel %vm306, 0.0, %v297
      %v309 = vsel %vm306, 0.0, %v299
      %v310 = vsel %vm306, 0.0, %v301
      %vm311 = vcmask 277504
      %v312 = vsel %vm311, %v307, 0.0
      %v313 = vsel %vm311, %v308, 0.0
      %v314 = vsel %vm311, %v309, 0.0
      %v315 = vsel %vm311, %v310, 0.0
      %v316 = vld [vmem:[%s274] sm:$0xff]
      %v317 = vld [vmem:[%s274 + $0x8] sm:$0xff]
      %v318 = vld [vmem:[%s274 + $0x10] sm:$0xff]
      %v319 = vld [vmem:[%s2] sm:$0xff]
      %v320 = vld [vmem:[%s2 + $0x8] sm:$0xff]
      %v321 = vld [vmem:[%s2 + $0x10] sm:$0xff]
      %v322 = vld [vmem:[%s3] sm:$0xff]
      %v323 = vld [vmem:[%s3 + $0x8] sm:$0xff]
      %v324 = vld [vmem:[%s3 + $0x10] sm:$0xff]
      %326 = vset.pattern.permute.xlu0 0
      %327 = vperm.xlu0 %326, %v319
      %v328 = vpop.permute.xlu0 %327
      %331 = vset.pattern.permute.xlu0 0
      %332 = vperm.xlu0 %331, %v320
      %v333 = vpop.permute.xlu0 %332
      %336 = vset.pattern.permute.xlu0 0
      %337 = vperm.xlu0 %336, %v321
      %v338 = vpop.permute.xlu0 %337
      %v340 = vmul.f32 %v316, %v328
      %v341 = vmul.f32 %v317, %v333
      %v342 = vmul.f32 %v318, %v338
      %344 = vset.pattern.permute.xlu0 0
      %345 = vperm.xlu0 %344, %v322
      %v346 = vpop.permute.xlu0 %345
      %349 = vset.pattern.permute.xlu0 0
      %350 = vperm.xlu0 %349, %v323
      %v351 = vpop.permute.xlu0 %350
      %354 = vset.pattern.permute.xlu0 0
      %355 = vperm.xlu0 %354, %v324
      %v356 = vpop.permute.xlu0 %355
      %v358 = vadd.f32 %v340, %v346
      %v359 = vadd.f32 %v341, %v351
      %v360 = vadd.f32 %v342, %v356
      %vm361 = vcmp.ge.f32.partialorder %v358, 0.0
      %vm362 = vcmp.ge.f32.partialorder %v359, 0.0
      %vm363 = vcmp.ge.f32.partialorder %v360, 0.0
      %v364 = vmul.f32 %v358, 0.1
      %v365 = vmul.f32 %v359, 0.1
      %v366 = vmul.f32 %v360, 0.1
      %v367 = vsel %vm361, %v358, %v364
      %v368 = vsel %vm362, %v359, %v365
      %v369 = vsel %vm363, %v360, %v366
      %373 = vrot.lane.b32.xlu0 %v367, 2
      %v374 = vpop.permute.xlu0 %373
      %375 = vrot.lane.b32.xlu0 %v368, 2
      %v376 = vpop.permute.xlu0 %375
      %377 = vrot.lane.b32.xlu0 %v369, 2
      %v378 = vpop.permute.xlu0 %377
      %v382 = vsel %vm306, 0.0, %v374
      %v383 = vsel %vm306, 0.0, %v376
      %v384 = vsel %vm306, 0.0, %v378
      %v385 = vsel %vm311, %v382, 0.0
      %v386 = vsel %vm311, %v383, 0.0
      %v387 = vsel %vm311, %v384, 0.0
      %392 = vrot.lane.b32.xlu0 %v312, 127
      %v393 = vpop.permute.xlu0 %392
      %394 = vrot.lane.b32.xlu0 %v313, 127
      %v395 = vpop.permute.xlu0 %394
      %396 = vrot.lane.b32.xlu0 %v314, 127
      %v397 = vpop.permute.xlu0 %396
      %398 = vrot.lane.b32.xlu0 %v315, 127
      %v399 = vpop.permute.xlu0 %398
      %407 = vrot.lane.b32.xlu0 %v385, 127
      %v408 = vpop.permute.xlu0 %407
      %409 = vrot.lane.b32.xlu0 %v386, 127
      %v410 = vpop.permute.xlu0 %409
      %411 = vrot.lane.b32.xlu0 %v387, 127
      %v412 = vpop.permute.xlu0 %411
      %416 = vrot.lane.b32.xlu0 %v312, 126
      %v417 = vpop.permute.xlu0 %416
      %418 = vrot.lane.b32.xlu0 %v313, 126
      %v419 = vpop.permute.xlu0 %418
      %420 = vrot.lane.b32.xlu0 %v314, 126
      %v421 = vpop.permute.xlu0 %420
      %422 = vrot.lane.b32.xlu0 %v315, 126
      %v423 = vpop.permute.xlu0 %422
      %428 = vrot.lane.b32.xlu0 %v385, 126
      %v429 = vpop.permute.xlu0 %428
      %430 = vrot.lane.b32.xlu0 %v386, 126
      %v431 = vpop.permute.xlu0 %430
      %432 = vrot.lane.b32.xlu0 %v387, 126
      %v433 = vpop.permute.xlu0 %432
      %437 = vrot.lane.b32.xlu0 %v312, 125
      %v438 = vpop.permute.xlu0 %437
      %439 = vrot.lane.b32.xlu0 %v313, 125
      %v440 = vpop.permute.xlu0 %439
      %441 = vrot.lane.b32.xlu0 %v314, 125
      %v442 = vpop.permute.xlu0 %441
      %443 = vrot.lane.b32.xlu0 %v315, 125
      %v444 = vpop.permute.xlu0 %443
      %449 = vrot.lane.b32.xlu0 %v385, 125
      %v450 = vpop.permute.xlu0 %449
      %451 = vrot.lane.b32.xlu0 %v386, 125
      %v452 = vpop.permute.xlu0 %451
      %453 = vrot.lane.b32.xlu0 %v387, 125
      %v454 = vpop.permute.xlu0 %453
      %458 = vrot.lane.b32.xlu0 %v312, 124
      %v459 = vpop.permute.xlu0 %458
      %460 = vrot.lane.b32.xlu0 %v313, 124
      %v461 = vpop.permute.xlu0 %460
      %462 = vrot.lane.b32.xlu0 %v314, 124
      %v463 = vpop.permute.xlu0 %462
      %464 = vrot.lane.b32.xlu0 %v315, 124
      %v465 = vpop.permute.xlu0 %464
      %470 = vrot.lane.b32.xlu0 %v385, 124
      %v471 = vpop.permute.xlu0 %470
      %472 = vrot.lane.b32.xlu0 %v386, 124
      %v473 = vpop.permute.xlu0 %472
      %474 = vrot.lane.b32.xlu0 %v387, 124
      %v475 = vpop.permute.xlu0 %474
      %v479 = vpack.c.bf16 %v313, %v312
      %v480 = vpack.c.bf16 %v315, %v314
      %v481 = vpack.c.bf16 %v386, %v385
      %v482 = vpack.c.bf16 %v393, %v387
      %v483 = vpack.c.bf16 %v397, %v395
      %v484 = vpack.c.bf16 %v408, %v399
      %v485 = vpack.c.bf16 %v412, %v410
      %v486 = vpack.c.bf16 %v419, %v417
      %v487 = vpack.c.bf16 %v423, %v421
      %v488 = vpack.c.bf16 %v431, %v429
      %v489 = vpack.c.bf16 %v438, %v433
      %v490 = vpack.c.bf16 %v442, %v440
      %v491 = vpack.c.bf16 %v450, %v444
      %v492 = vpack.c.bf16 %v454, %v452
      %v493 = vpack.c.bf16 %v461, %v459
      %v494 = vpack.c.bf16 %v465, %v463
      %v495 = vpack.c.bf16 %v473, %v471
      %v496 = vpack.c.bf16 %v475, %v475
      %v497 = vld [vmem:[%s4] sm:$0xff]
      %v498 = vld [vmem:[%s4 + $0x8] sm:$0xf]
      %v499 = vld [vmem:[%s4 + $0xc] sm:$0xff]
      %v500 = vld [vmem:[%s4 + $0x14] sm:$0xf]
      %v501 = vld [vmem:[%s4 + $0x18] sm:$0xff]
      %v502 = vld [vmem:[%s4 + $0x20] sm:$0xf]
      %v509 = vunpack.c.l.b16 %v497
      %v510 = vunpack.c.h.b16 %v497
      %v511 = vunpack.c.l.b16 %v498
      %v512 = vunpack.c.l.b16 %v499
      %v513 = vunpack.c.h.b16 %v499
      %v514 = vunpack.c.l.b16 %v500
      %v515 = vunpack.c.l.b16 %v501
      %v516 = vunpack.c.h.b16 %v501
      %v517 = vunpack.c.l.b16 %v502
      %v518 = vpack.c.b16 %v512, %v509
      %v519 = vpack.c.b16 %v513, %v510
      %v520 = vpack.c.b16 %v514, %v511
      %v521 = vpack.c.b16 %v515, %v515
      %v522 = vpack.c.b16 %v516, %v516
      %v523 = vpack.c.b16 %v517, %v517
      %vm528 = vcmask 195584
      %v530 = vsel %vm528, %v520, 0
      %v533 = vsel %vm528, %v523, 0
      %vm535 = vcmask 1043456
      %v537 = vsel %vm535, %v496, 0
      %539 = vmatpush.bf16.msra.mxu0 %v486
      %540 = vmatpush.bf16.msra.mxu0 %v485
      %541 = vmatpush.bf16.msra.mxu0 %v484
      %542 = vmatpush.bf16.msra.mxu0 %v483
      %543 = vmatpush.bf16.msra.mxu0 %v482
      %544 = vmatpush.bf16.msra.mxu0 %v481
      %545 = vmatpush.bf16.msra.mxu0 %v480
      %546 = vmatpush.bf16.msra.mxu0 %v479
      %547 = vmatmul.bf16.gmra.mxu0 %v518
      %v548 = vpop.f32.mrf.mxu0
      %v549 = vadd.f32 0.0, %v548
      %v550 = vpop.f32.mrf.mxu0
      %v551 = vadd.f32 0.0, %v550
      %552 = vmatmul.bf16.gmra.mxu0 %v521
      %v553 = vpop.f32.mrf.mxu0
      %v554 = vadd.f32 0.0, %v553
      %v555 = vpop.f32.mrf.mxu0
      %556 = vdwg.mxu0
      %557 = vmatpush.bf16.msra.mxu0 %v494
      %558 = vmatpush.bf16.msra.mxu0 %v493
      %559 = vmatpush.bf16.msra.mxu0 %v492
      %560 = vmatpush.bf16.msra.mxu0 %v491
      %561 = vmatpush.bf16.msra.mxu0 %v490
      %562 = vmatpush.bf16.msra.mxu0 %v489
      %563 = vmatpush.bf16.msra.mxu0 %v488
      %564 = vmatpush.bf16.msra.mxu0 %v487
      %565 = vmatmul.bf16.gmra.mxu0 %v519
      %v566 = vpop.f32.mrf.mxu0
      %v567 = vadd.f32 %v549, %v566
      %v568 = vpop.f32.mrf.mxu0
      %v569 = vadd.f32 %v551, %v568
      %570 = vmatmul.bf16.gmra.mxu0 %v522
      %v571 = vpop.f32.mrf.mxu0
      %v572 = vadd.f32 %v554, %v571
      %v573 = vpop.f32.mrf.mxu0
      %574 = vdwg.mxu0
      %575 = vmatpush.bf16.msra.mxu0 0
      %576 = vmatpush.bf16.msra.mxu0 0
      %577 = vmatpush.bf16.msra.mxu0 0
      %578 = vmatpush.bf16.msra.mxu0 0
      %579 = vmatpush.bf16.msra.mxu0 0
      %580 = vmatpush.bf16.msra.mxu0 0
      %581 = vmatpush.bf16.msra.mxu0 %v537
      %582 = vmatpush.bf16.msra.mxu0 %v495
      %583 = vmatmul.bf16.gmra.mxu0 %v530
      %v584 = vpop.f32.mrf.mxu0
      %v585 = vadd.f32 %v567, %v584
      %v586 = vpop.f32.mrf.mxu0
      %v587 = vadd.f32 %v569, %v586
      %588 = vmatmul.bf16.gmra.mxu0 %v533
      %v589 = vpop.f32.mrf.mxu0
      %v590 = vadd.f32 %v572, %v589
      %v591 = vpop.f32.mrf.mxu0
      %592 = vdwg.mxu0
      %vm593 = vcmask 261120
      %594 = vst.msk [vmem:[%s279] sm:$0xff] %vm593, %v585
      %595 = vst.msk [vmem:[%s279 + $0x8] sm:$0xff] %vm593, %v587
      %596 = vst.msk [vmem:[%s279 + $0x10] sm:$0xff] %vm593, %v590
      %v597 = vsel %vm593, %v585, 0.0
      %598 = vadd.xlane.f32.xlu0 %v597
      %v599 = vpop.xlane.xlu0 %598
      %v600 = vsel %vm593, %v587, 0.0
      %601 = vadd.xlane.f32.xlu0 %v600
      %v602 = vpop.xlane.xlu0 %601
      %v603 = vsel %vm593, %v590, 0.0
      %604 = vadd.xlane.f32.xlu0 %v603
      %v605 = vpop.xlane.xlu0 %604
      %v606 = vmul.f32 %v585, %v585
      %v607 = vmul.f32 %v587, %v587
      %v608 = vmul.f32 %v590, %v590
      %v609 = vsel %vm593, %v606, 0.0
      %610 = vadd.xlane.f32.xlu0 %v609
      %v611 = vpop.xlane.xlu0 %610
      %v612 = vsel %vm593, %v607, 0.0
      %613 = vadd.xlane.f32.xlu0 %v612
      %v614 = vpop.xlane.xlu0 %613
      %v615 = vsel %vm593, %v608, 0.0
      %616 = vadd.xlane.f32.xlu0 %v615
      %v617 = vpop.xlane.xlu0 %616
      %vm618 = vcmask 7168
      %v619 = vsel %vm618, %v599, %v611
      %v620 = vsel %vm618, %v602, %v614
      %v621 = vsel %vm618, %v605, %v617
      %622 = vst.msk [vmem:[%s284] sm:$0xff] %vm306, %v619
      %623 = vst.msk [vmem:[%s284 + $0x8] sm:$0xff] %vm306, %v620
      %624 = vst.msk [vmem:[%s284 + $0x10] sm:$0xff] %vm306, %v621
      %p625 = scmp.lt.s32.totalorder %s18, 1
      %s626 = scalar_select %p625, %s18, 1
      %s627 = smul.addr %s626, 3
      %s628 = smul.addr %s627, 8
      %s629 = scalar_lea.vmem %s5, %s628
      %p630 = scmp.lt.s32.totalorder %s18, 1
      %s631 = scalar_select %p630, %s18, 1
      %s632 = smul.addr %s631, 3
      %s633 = smul.addr %s632, 8
      %s634 = scalar_lea.vmem %s6, %s633
      // Predicated region
      $region41: #{model_forward.16} parent=39 // pred_check
        %p635 = pneg %p151
      $region42: #{model_forward.16} parent=39 // pred_check_branch
        %637 = sbr.rel (%p635) target = $region44
      $region43: #{model_forward.16} parent=39 // pred_region
        _
      $region44: #{model_forward.16} parent=39 // pred_fallthru
        _
      // Predicated region
      $region45: #{model_forward.16} parent=39 // pred_check
        %p638 = pneg %p177
      $region46: #{model_forward.16} parent=39 // pred_check_branch
        %640 = sbr.rel (%p638) target = $region48
      $region47: #{model_forward.16} parent=39 // pred_region
        _
      $region48: #{model_forward.16} parent=39 // pred_fallthru
        _
    $region40: #{model_forward.16} parent=5 // pred_fallthru
      _
    %p641 = scmp.le.s32.totalorder 2, %s13
    // Predicated region
    $region49: #{model_forward.16} parent=5 // pred_check
      %p642 = pneg %p641
    $region50: #{model_forward.16} parent=5 // pred_check_branch
      %644 = sbr.rel (%p642) target = $region52
    $region51: #{model_forward.16} parent=5 // pred_region
      %s645 = ssub.s32 %s13, 2
      // Predicated region
      $region53: #{model_forward.16} parent=51 // pred_check
        %p646 = pneg %p157
      $region54: #{model_forward.16} parent=51 // pred_check_branch
        %648 = sbr.rel (%p646) target = $region56
      $region55: #{model_forward.16} parent=51 // pred_region
        %p649 = scmp.lt.s32.totalorder %s19, 1
        %s650 = scalar_select %p649, %s19, 1
        %s651 = smul.addr %s650, 3
        %s652 = smul.addr %s651, 8
        %s653 = scalar_lea.vmem %s5, %s652
      $region56: #{model_forward.16} parent=51 // pred_fallthru
        _
      // Predicated region
      $region57: #{model_forward.16} parent=51 // pred_check
        %p654 = pneg %p183
      $region58: #{model_forward.16} parent=51 // pred_check_branch
        %656 = sbr.rel (%p654) target = $region60
      $region59: #{model_forward.16} parent=51 // pred_region
        %p657 = scmp.lt.s32.totalorder %s19, 1
        %s658 = scalar_select %p657, %s19, 1
        %s659 = smul.addr %s658, 3
        %s660 = smul.addr %s659, 8
        %s661 = scalar_lea.vmem %s6, %s660
      $region60: #{model_forward.16} parent=51 // pred_fallthru
        _
    $region52: #{model_forward.16} parent=5 // pred_fallthru
      _
  $region6: #{model_forward.16} parent=0 // loop_footer
    %s17 = sadd.s32 1, %s13
  $region7: #{model_forward.16} parent=0 // loop_footer_branch
    %12 = sbr.rel target = $region3
  $region8: #{model_forward.16} parent=0 // loop_exit
    _

// kernel: model_forward.17
$region0: #{model_forward.17}
  #allocation0 [shape = 'u32[]', space=smem, size = 0x4, offset = 0x4, fixed_abs, tag = 'smem constant byte address 0x4 - core index']
  #allocation1 [shape = 'u32[72,128]{1,0:T(1,128)}', space=vmem, size = 0x9000, scoped, tag = 'internal scratch']
  %s0 = inlined_call_operand.vmem [shape: f32[2,24,64], index: 0, kind: input, shape index: {}]
  %s1 = inlined_call_operand.vmem [shape: f32[2,16,64], index: 1, kind: input, shape index: {}]
  %s2 = inlined_call_operand.vmem [shape: f32[16,1], index: 2, kind: input, shape index: {}]
  %s3 = inlined_call_operand.vmem [shape: f32[16,1], index: 3, kind: input, shape index: {}]
  %s4 = inlined_call_operand.vmem [shape: bf16[16,200], index: 4, kind: input, shape index: {}]
  %s5 = inlined_call_operand.vmem [shape: f32[2,16,64], index: 5, kind: output, shape index: {0}]
  %s6 = inlined_call_operand.vmem [shape: f32[2,16,2], index: 6, kind: output, shape index: {1}]
  %7 = xla_tuple %s5, %s6
  %s8 = sld [smem:[#allocation0]]
  $region61: #{model_forward.17} parent=0
    _
  %s10 = ssub.s32 1, %s8
  %s11 = scalar_select 0, %s10, %s8
  loop: start=0, step=1, limit=4
  $region2: #{model_forward.17} parent=0 // loop_pre_header
    _
  $region3: #{model_forward.17} parent=0 // loop_header
    %s13 = sphi 0, %s17
    %p14 = scmp.ge.s32.totalorder %s13, 4
    %s23 = sphi 0, %s25
    %s26 = sphi 0, %s23
    %s27 = sphi 0, %s26
    %s43 = sphi 0, %s27
    %s49 = sphi 0, %s51
    %s52 = sphi 0, %s49
    %s53 = sphi 0, %s52
    %s69 = sphi 0, %s53
    %s73 = sphi 0, %s73
    %s75 = sphi 0, %s73
    %s76 = sphi 0, %s75
    %s90 = sphi 0, %s76
    %s94 = sphi 0, %s94
    %s96 = sphi 0, %s94
    %s97 = sphi 0, %s96
    %s111 = sphi 0, %s97
    %s115 = sphi 0, %s115
    %s117 = sphi 0, %s115
    %s118 = sphi 0, %s117
    %s132 = sphi 0, %s118
    %s138 = sphi 0, %s140
    %s141 = sphi 0, %s138
    %s142 = sphi 0, %s141
    %s158 = sphi 0, %s142
    %s164 = sphi 0, %s166
    %s167 = sphi 0, %s164
    %s168 = sphi 0, %s167
    %s184 = sphi 0, %s168
  $region4: #{model_forward.17} parent=0 // loop_header_branch
    %16 = sbr.rel (%p14) target = $region8
  $region5: #{model_forward.17} parent=0 // loop_body
    %s18 = ssub.s32 %s13, 1
    %s19 = ssub.s32 %s13, 2
    %s20 = sadd.s32 %s13, 1
    %s21 = ssub.s32 %s13, %s20
    %p22 = scmp.eq.s32.totalorder %s21, 0
    %s24 = sadd.s32 %s23, 1
    %s25 = scalar_select %p22, %s23, %s24
    %p28 = pneg %p22
    %p29 = scmp.eq.s32.totalorder %s13, 1
    %p30 = por %p28, %p29
    %p31 = scmp.ne.s32.totalorder %s23, %s26
    %p32 = scmp.eq.s32.totalorder %s13, 0
    %p33 = por %p31, %p32
    %p34 = scmp.ne.s32.totalorder %s23, %s26
    %p35 = scmp.eq.s32.totalorder %s18, 1
    %p36 = por %p34, %p35
    %p37 = scmp.ne.s32.totalorder %s26, %s27
    %p38 = scmp.eq.s32.totalorder %s18, 0
    %p39 = por %p37, %p38
    %p40 = scmp.ne.s32.totalorder %s26, %s27
    %p41 = scmp.eq.s32.totalorder %s19, 1
    %p42 = por %p40, %p41
    %p44 = scmp.ne.s32.totalorder %s27, %s43
    %p45 = scmp.eq.s32.totalorder %s19, 0
    %p46 = por %p44, %p45
    %s47 = ssub.s32 %s13, %s20
    %p48 = scmp.eq.s32.totalorder %s47, 0
    %s50 = sadd.s32 %s49, 1
    %s51 = scalar_select %p48, %s49, %s50
    %p54 = pneg %p48
    %p55 = scmp.eq.s32.totalorder %s13, 1
    %p56 = por %p54, %p55
    %p57 = scmp.ne.s32.totalorder %s49, %s52
    %p58 = scmp.eq.s32.totalorder %s13, 0
    %p59 = por %p57, %p58
    %p60 = scmp.ne.s32.totalorder %s49, %s52
    %p61 = scmp.eq.s32.totalorder %s18, 1
    %p62 = por %p60, %p61
    %p63 = scmp.ne.s32.totalorder %s52, %s53
    %p64 = scmp.eq.s32.totalorder %s18, 0
    %p65 = por %p63, %p64
    %p66 = scmp.ne.s32.totalorder %s52, %s53
    %p67 = scmp.eq.s32.totalorder %s19, 1
    %p68 = por %p66, %p67
    %p70 = scmp.ne.s32.totalorder %s53, %s69
    %p71 = scmp.eq.s32.totalorder %s19, 0
    %p72 = por %p70, %p71
    %s74 = sadd.s32 %s73, 1
    %p77 = scmp.eq.s32.totalorder %s13, 1
    %p78 = scmp.ne.s32.totalorder %s73, %s75
    %p79 = scmp.eq.s32.totalorder %s13, 0
    %p80 = por %p78, %p79
    %p81 = scmp.ne.s32.totalorder %s73, %s75
    %p82 = scmp.eq.s32.totalorder %s18, 1
    %p83 = por %p81, %p82
    %p84 = scmp.ne.s32.totalorder %s75, %s76
    %p85 = scmp.eq.s32.totalorder %s18, 0
    %p86 = por %p84, %p85
    %p87 = scmp.ne.s32.totalorder %s75, %s76
    %p88 = scmp.eq.s32.totalorder %s19, 1
    %p89 = por %p87, %p88
    %p91 = scmp.ne.s32.totalorder %s76, %s90
    %p92 = scmp.eq.s32.totalorder %s19, 0
    %p93 = por %p91, %p92
    %s95 = sadd.s32 %s94, 1
    %p98 = scmp.eq.s32.totalorder %s13, 1
    %p99 = scmp.ne.s32.totalorder %s94, %s96
    %p100 = scmp.eq.s32.totalorder %s13, 0
    %p101 = por %p99, %p100
    %p102 = scmp.ne.s32.totalorder %s94, %s96
    %p103 = scmp.eq.s32.totalorder %s18, 1
    %p104 = por %p102, %p103
    %p105 = scmp.ne.s32.totalorder %s96, %s97
    %p106 = scmp.eq.s32.totalorder %s18, 0
    %p107 = por %p105, %p106
    %p108 = scmp.ne.s32.totalorder %s96, %s97
    %p109 = scmp.eq.s32.totalorder %s19, 1
    %p110 = por %p108, %p109
    %p112 = scmp.ne.s32.totalorder %s97, %s111
    %p113 = scmp.eq.s32.totalorder %s19, 0
    %p114 = por %p112, %p113
    %s116 = sadd.s32 %s115, 1
    %p119 = scmp.eq.s32.totalorder %s13, 1
    %p120 = scmp.ne.s32.totalorder %s115, %s117
    %p121 = scmp.eq.s32.totalorder %s13, 0
    %p122 = por %p120, %p121
    %p123 = scmp.ne.s32.totalorder %s115, %s117
    %p124 = scmp.eq.s32.totalorder %s18, 1
    %p125 = por %p123, %p124
    %p126 = scmp.ne.s32.totalorder %s117, %s118
    %p127 = scmp.eq.s32.totalorder %s18, 0
    %p128 = por %p126, %p127
    %p129 = scmp.ne.s32.totalorder %s117, %s118
    %p130 = scmp.eq.s32.totalorder %s19, 1
    %p131 = por %p129, %p130
    %p133 = scmp.ne.s32.totalorder %s118, %s132
    %p134 = scmp.eq.s32.totalorder %s19, 0
    %p135 = por %p133, %p134
    %s136 = ssub.s32 %s13, %s20
    %p137 = scmp.eq.s32.totalorder %s136, 0
    %s139 = sadd.s32 %s138, 1
    %s140 = scalar_select %p137, %s138, %s139
    %p143 = pneg %p137
    %p144 = scmp.eq.s32.totalorder %s13, 1
    %p145 = por %p143, %p144
    %p146 = scmp.ne.s32.totalorder %s138, %s141
    %p147 = scmp.eq.s32.totalorder %s13, 0
    %p148 = por %p146, %p147
    %p149 = scmp.ne.s32.totalorder %s138, %s141
    %p150 = scmp.eq.s32.totalorder %s18, 1
    %p151 = por %p149, %p150
    %p152 = scmp.ne.s32.totalorder %s141, %s142
    %p153 = scmp.eq.s32.totalorder %s18, 0
    %p154 = por %p152, %p153
    %p155 = scmp.ne.s32.totalorder %s141, %s142
    %p156 = scmp.eq.s32.totalorder %s19, 1
    %p157 = por %p155, %p156
    %p159 = scmp.ne.s32.totalorder %s142, %s158
    %p160 = scmp.eq.s32.totalorder %s19, 0
    %p161 = por %p159, %p160
    %s162 = ssub.s32 %s13, %s20
    %p163 = scmp.eq.s32.totalorder %s162, 0
    %s165 = sadd.s32 %s164, 1
    %s166 = scalar_select %p163, %s164, %s165
    %p169 = pneg %p163
    %p170 = scmp.eq.s32.totalorder %s13, 1
    %p171 = por %p169, %p170
    %p172 = scmp.ne.s32.totalorder %s164, %s167
    %p173 = scmp.eq.s32.totalorder %s13, 0
    %p174 = por %p172, %p173
    %p175 = scmp.ne.s32.totalorder %s164, %s167
    %p176 = scmp.eq.s32.totalorder %s18, 1
    %p177 = por %p175, %p176
    %p178 = scmp.ne.s32.totalorder %s167, %s168
    %p179 = scmp.eq.s32.totalorder %s18, 0
    %p180 = por %p178, %p179
    %p181 = scmp.ne.s32.totalorder %s167, %s168
    %p182 = scmp.eq.s32.totalorder %s19, 1
    %p183 = por %p181, %p182
    %p185 = scmp.ne.s32.totalorder %s168, %s184
    %p186 = scmp.eq.s32.totalorder %s19, 0
    %p187 = por %p185, %p186
    %p188 = scmp.le.s32.totalorder 1, %s13
    %p189 = scmp.lt.s32.totalorder %s13, 3
    %p190 = pnand %p188, %p189
    %p191 = pneg %p190
    // Predicated region
    $region9: #{model_forward.17} parent=5 // pred_check
      _
    $region10: #{model_forward.17} parent=5 // pred_check_branch
      %193 = sbr.rel (%p190) target = $region12
    $region11: #{model_forward.17} parent=5 // pred_region
      %s194 = ssub.s32 %s13, 1
      // Predicated region
      $region13: #{model_forward.17} parent=11 // pred_check
        %p195 = pneg %p86
      $region14: #{model_forward.17} parent=11 // pred_check_branch
        %197 = sbr.rel (%p195) target = $region16
      $region15: #{model_forward.17} parent=11 // pred_region
        _
      $region16: #{model_forward.17} parent=11 // pred_fallthru
        _
      // Predicated region
      $region17: #{model_forward.17} parent=11 // pred_check
        %p198 = pneg %p107
      $region18: #{model_forward.17} parent=11 // pred_check_branch
        %200 = sbr.rel (%p198) target = $region20
      $region19: #{model_forward.17} parent=11 // pred_region
        _
      $region20: #{model_forward.17} parent=11 // pred_fallthru
        _
      // Predicated region
      $region21: #{model_forward.17} parent=11 // pred_check
        %p201 = pneg %p128
      $region22: #{model_forward.17} parent=11 // pred_check_branch
        %203 = sbr.rel (%p201) target = $region24
      $region23: #{model_forward.17} parent=11 // pred_region
        _
      $region24: #{model_forward.17} parent=11 // pred_fallthru
        _
    $region12: #{model_forward.17} parent=5 // pred_fallthru
      _
    %p204 = scmp.lt.s32.totalorder %s13, 2
    // Predicated region
    $region25: #{model_forward.17} parent=5 // pred_check
      %p205 = pneg %p204
    $region26: #{model_forward.17} parent=5 // pred_check_branch
      %207 = sbr.rel (%p205) target = $region28
    $region27: #{model_forward.17} parent=5 // pred_region
      // Predicated region
      $region29: #{model_forward.17} parent=27 // pred_check
        %p208 = pneg %p33
      $region30: #{model_forward.17} parent=27 // pred_check_branch
        %210 = sbr.rel (%p208) target = $region32
      $region31: #{model_forward.17} parent=27 // pred_region
        %p211 = scmp.lt.s32.totalorder %s13, 1
        %s212 = scalar_select %p211, %s13, 1
        %s213 = smul.addr %s212, 3
        %s214 = smul.addr %s213, 8
        %s215 = scalar_lea.vmem %s0, %s214
      $region32: #{model_forward.17} parent=27 // pred_fallthru
        _
      // Predicated region
      $region33: #{model_forward.17} parent=27 // pred_check
        %p216 = pneg %p59
      $region34: #{model_forward.17} parent=27 // pred_check_branch
        %218 = sbr.rel (%p216) target = $region36
      $region35: #{model_forward.17} parent=27 // pred_region
        %p219 = scmp.lt.s32.totalorder %s13, 1
        %s220 = scalar_select %p219, %s13, 1
        %s221 = smul.addr %s220, 2
        %s222 = smul.addr %s221, 8
        %s223 = scalar_lea.vmem %s1, %s222
      $region36: #{model_forward.17} parent=27 // pred_fallthru
        _
    $region28: #{model_forward.17} parent=5 // pred_fallthru
      _
    %p224 = scmp.le.s32.totalorder 1, %s13
    %p225 = scmp.lt.s32.totalorder %s13, 3
    %p226 = pnand %p224, %p225
    %p227 = pneg %p226
    // Predicated region
    $region37: #{model_forward.17} parent=5 // pred_check
      _
    $region38: #{model_forward.17} parent=5 // pred_check_branch
      %229 = sbr.rel (%p226) target = $region40
    $region39: #{model_forward.17} parent=5 // pred_region
      %s230 = ssub.s32 %s13, 1
      %p231 = scmp.lt.s32.totalorder %s18, 1
      %s232 = scalar_select %p231, %s18, 1
      %s233 = smul.addr %s232, 3
      %s234 = smul.addr %s233, 8
      %s235 = scalar_lea.vmem %s0, %s234
      %p236 = pneg %p39
      %p237 = pneg %p36
      %p238 = scmp.lt.s32.totalorder %s18, 1
      %s239 = scalar_select %p238, %s18, 1
      %s240 = smul.addr %s239, 2
      %s241 = smul.addr %s240, 8
      %s242 = scalar_lea.vmem %s1, %s241
      %p243 = pneg %p65
      %p244 = pneg %p62
      %p245 = pneg %p86
      %p246 = pneg %p83
      %p247 = pneg %p107
      %p248 = pneg %p104
      %p249 = pneg %p128
      %p250 = pneg %p125
      %p251 = pneg %p154
      %p252 = pneg %p151
      %p253 = scmp.lt.s32.totalorder %s18, 1
      %s254 = scalar_select %p253, %s18, 1
      %s255 = smul.addr %s254, 2
      %s256 = smul.addr %s255, 8
      %s257 = scalar_lea.vmem %s5, %s256
      %p258 = pneg %p180
      %p259 = pneg %p177
      %p260 = scmp.lt.s32.totalorder %s18, 1
      %s261 = scalar_select %p260, %s18, 1
      %s262 = smul.addr %s261, 2
      %s263 = smul.addr %s262, 8
      %s264 = scalar_lea.vmem %s6, %s263
      %p265 = scmp.lt.s32.totalorder %s18, 1
      %s266 = scalar_select %p265, %s18, 1
      %s267 = smul.addr %s266, 3
      %s268 = smul.addr %s267, 8
      %s269 = scalar_lea.vmem %s0, %s268
      %p270 = scmp.lt.s32.totalorder %s18, 1
      %s271 = scalar_select %p270, %s18, 1
      %s272 = smul.addr %s271, 2
      %s273 = smul.addr %s272, 8
      %s274 = scalar_lea.vmem %s1, %s273
      %p275 = scmp.lt.s32.totalorder %s18, 1
      %s276 = scalar_select %p275, %s18, 1
      %s277 = smul.addr %s276, 2
      %s278 = smul.addr %s277, 8
      %s279 = scalar_lea.vmem %s5, %s278
      %p280 = scmp.lt.s32.totalorder %s18, 1
      %s281 = scalar_select %p280, %s18, 1
      %s282 = smul.addr %s281, 2
      %s283 = smul.addr %s282, 8
      %s284 = scalar_lea.vmem %s6, %s283
      %v286 = vld [vmem:[%s269] sm:$0xff]
      %v287 = vld [vmem:[%s269 + $0x8] sm:$0xff]
      %v288 = vld [vmem:[%s269 + $0x10] sm:$0xff]
      %292 = vrot.lane.b32.xlu0 %v286, 2
      %v293 = vpop.permute.xlu0 %292
      %294 = vrot.lane.b32.xlu0 %v287, 2
      %v295 = vpop.permute.xlu0 %294
      %296 = vrot.lane.b32.xlu0 %v288, 2
      %v297 = vpop.permute.xlu0 %296
      %vm301 = vcmask 15360
      %v302 = vsel %vm301, 0.0, %v293
      %v303 = vsel %vm301, 0.0, %v295
      %v304 = vsel %vm301, 0.0, %v297
      %vm305 = vcmask 539648
      %v306 = vsel %vm305, %v302, 0.0
      %v307 = vsel %vm305, %v303, 0.0
      %v308 = vsel %vm305, %v304, 0.0
      %v309 = vld [vmem:[%s274] sm:$0xff]
      %v310 = vld [vmem:[%s274 + $0x8] sm:$0xff]
      %v311 = vld [vmem:[%s2] sm:$0xff]
      %v312 = vld [vmem:[%s2 + $0x8] sm:$0xff]
      %v313 = vld [vmem:[%s3] sm:$0xff]
      %v314 = vld [vmem:[%s3 + $0x8] sm:$0xff]
      %316 = vset.pattern.permute.xlu0 0
      %317 = vperm.xlu0 %316, %v311
      %v318 = vpop.permute.xlu0 %317
      %321 = vset.pattern.permute.xlu0 0
      %322 = vperm.xlu0 %321, %v312
      %v323 = vpop.permute.xlu0 %322
      %v325 = vmul.f32 %v309, %v318
      %v326 = vmul.f32 %v310, %v323
      %328 = vset.pattern.permute.xlu0 0
      %329 = vperm.xlu0 %328, %v313
      %v330 = vpop.permute.xlu0 %329
      %333 = vset.pattern.permute.xlu0 0
      %334 = vperm.xlu0 %333, %v314
      %v335 = vpop.permute.xlu0 %334
      %v337 = vadd.f32 %v325, %v330
      %v338 = vadd.f32 %v326, %v335
      %vm339 = vcmp.ge.f32.partialorder %v337, 0.0
      %vm340 = vcmp.ge.f32.partialorder %v338, 0.0
      %v341 = vmul.f32 %v337, 0.1
      %v342 = vmul.f32 %v338, 0.1
      %v343 = vsel %vm339, %v337, %v341
      %v344 = vsel %vm340, %v338, %v342
      %347 = vrot.lane.b32.xlu0 %v343, 2
      %v348 = vpop.permute.xlu0 %347
      %349 = vrot.lane.b32.xlu0 %v344, 2
      %v350 = vpop.permute.xlu0 %349
      %v353 = vsel %vm301, 0.0, %v348
      %v354 = vsel %vm301, 0.0, %v350
      %v355 = vsel %vm305, %v353, 0.0
      %v356 = vsel %vm305, %v354, 0.0
      %360 = vrot.lane.b32.xlu0 %v306, 127
      %v361 = vpop.permute.xlu0 %360
      %362 = vrot.lane.b32.xlu0 %v307, 127
      %v363 = vpop.permute.xlu0 %362
      %364 = vrot.lane.b32.xlu0 %v308, 127
      %v365 = vpop.permute.xlu0 %364
      %371 = vrot.lane.b32.xlu0 %v355, 127
      %v372 = vpop.permute.xlu0 %371
      %373 = vrot.lane.b32.xlu0 %v356, 127
      %v374 = vpop.permute.xlu0 %373
      %377 = vrot.lane.b32.xlu0 %v306, 126
      %v378 = vpop.permute.xlu0 %377
      %379 = vrot.lane.b32.xlu0 %v307, 126
      %v380 = vpop.permute.xlu0 %379
      %381 = vrot.lane.b32.xlu0 %v308, 126
      %v382 = vpop.permute.xlu0 %381
      %386 = vrot.lane.b32.xlu0 %v355, 126
      %v387 = vpop.permute.xlu0 %386
      %388 = vrot.lane.b32.xlu0 %v356, 126
      %v389 = vpop.permute.xlu0 %388
      %392 = vrot.lane.b32.xlu0 %v306, 125
      %v393 = vpop.permute.xlu0 %392
      %394 = vrot.lane.b32.xlu0 %v307, 125
      %v395 = vpop.permute.xlu0 %394
      %396 = vrot.lane.b32.xlu0 %v308, 125
      %v397 = vpop.permute.xlu0 %396
      %401 = vrot.lane.b32.xlu0 %v355, 125
      %v402 = vpop.permute.xlu0 %401
      %403 = vrot.lane.b32.xlu0 %v356, 125
      %v404 = vpop.permute.xlu0 %403
      %407 = vrot.lane.b32.xlu0 %v306, 124
      %v408 = vpop.permute.xlu0 %407
      %409 = vrot.lane.b32.xlu0 %v307, 124
      %v410 = vpop.permute.xlu0 %409
      %411 = vrot.lane.b32.xlu0 %v308, 124
      %v412 = vpop.permute.xlu0 %411
      %416 = vrot.lane.b32.xlu0 %v355, 124
      %v417 = vpop.permute.xlu0 %416
      %418 = vrot.lane.b32.xlu0 %v356, 124
      %v419 = vpop.permute.xlu0 %418
      %v422 = vpack.c.bf16 %v307, %v306
      %v423 = vpack.c.bf16 %v355, %v308
      %v424 = vpack.c.bf16 %v361, %v356
      %v425 = vpack.c.bf16 %v365, %v363
      %v426 = vpack.c.bf16 %v374, %v372
      %v427 = vpack.c.bf16 %v380, %v378
      %v428 = vpack.c.bf16 %v387, %v382
      %v429 = vpack.c.bf16 %v393, %v389
      %v430 = vpack.c.bf16 %v397, %v395
      %v431 = vpack.c.bf16 %v404, %v402
      %v432 = vpack.c.bf16 %v410, %v408
      %v433 = vpack.c.bf16 %v417, %v412
      %v434 = vpack.c.bf16 %v419, %v419
      %v435 = vld [vmem:[%s4] sm:$0xff]
      %v436 = vld [vmem:[%s4 + $0x8] sm:$0xff]
      %v439 = vunpack.c.l.b16 %v435
      %v440 = vunpack.c.h.b16 %v435
      %v441 = vunpack.c.l.b16 %v436
      %v442 = vunpack.c.h.b16 %v436
      %v443 = vpack.c.b16 %v441, %v439
      %v444 = vpack.c.b16 %v442, %v440
      %vm446 = vcmask 588800
      %v448 = vsel %vm446, %v444, 0
      %vm450 = vcmask 1043456
      %v452 = vsel %vm450, %v434, 0
      %454 = vmatpush.bf16.msra.mxu0 %v429
      %455 = vmatpush.bf16.msra.mxu0 %v428
      %456 = vmatpush.bf16.msra.mxu0 %v427
      %457 = vmatpush.bf16.msra.mxu0 %v426
      %458 = vmatpush.bf16.msra.mxu0 %v425
      %459 = vmatpush.bf16.msra.mxu0 %v424
      %460 = vmatpush.bf16.msra.mxu0 %v423
      %461 = vmatpush.bf16.msra.mxu0 %v422
      %462 = vmatmul.bf16.gmra.mxu0 %v443
      %v463 = vpop.f32.mrf.mxu0
      %v464 = vadd.f32 0.0, %v463
      %v465 = vpop.f32.mrf.mxu0
      %v466 = vadd.f32 0.0, %v465
      %467 = vdwg.mxu0
      %468 = vmatpush.bf16.msra.mxu0 0
      %469 = vmatpush.bf16.msra.mxu0 0
      %470 = vmatpush.bf16.msra.mxu0 0
      %471 = vmatpush.bf16.msra.mxu0 %v452
      %472 = vmatpush.bf16.msra.mxu0 %v433
      %473 = vmatpush.bf16.msra.mxu0 %v432
      %474 = vmatpush.bf16.msra.mxu0 %v431
      %475 = vmatpush.bf16.msra.mxu0 %v430
      %476 = vmatmul.bf16.gmra.mxu0 %v448
      %v477 = vpop.f32.mrf.mxu0
      %v478 = vadd.f32 %v464, %v477
      %v479 = vpop.f32.mrf.mxu0
      %v480 = vadd.f32 %v466, %v479
      %481 = vdwg.mxu0
      %vm482 = vcmask 523264
      %483 = vst.msk [vmem:[%s279] sm:$0xff] %vm482, %v478
      %484 = vst.msk [vmem:[%s279 + $0x8] sm:$0xff] %vm482, %v480
      %v485 = vsel %vm482, %v478, 0.0
      %486 = vadd.xlane.f32.xlu0 %v485
      %v487 = vpop.xlane.xlu0 %486
      %v488 = vsel %vm482, %v480, 0.0
      %489 = vadd.xlane.f32.xlu0 %v488
      %v490 = vpop.xlane.xlu0 %489
      %v491 = vmul.f32 %v478, %v478
      %v492 = vmul.f32 %v480, %v480
      %v493 = vsel %vm482, %v491, 0.0
      %494 = vadd.xlane.f32.xlu0 %v493
      %v495 = vpop.xlane.xlu0 %494
      %v496 = vsel %vm482, %v492, 0.0
      %497 = vadd.xlane.f32.xlu0 %v496
      %v498 = vpop.xlane.xlu0 %497
      %vm499 = vcmask 7168
      %v500 = vsel %vm499, %v487, %v495
      %v501 = vsel %vm499, %v490, %v498
      %502 = vst.msk [vmem:[%s284] sm:$0xff] %vm301, %v500
      %503 = vst.msk [vmem:[%s284 + $0x8] sm:$0xff] %vm301, %v501
      %p504 = scmp.lt.s32.totalorder %s18, 1
      %s505 = scalar_select %p504, %s18, 1
      %s506 = smul.addr %s505, 2
      %s507 = smul.addr %s506, 8
      %s508 = scalar_lea.vmem %s5, %s507
      %p509 = scmp.lt.s32.totalorder %s18, 1
      %s510 = scalar_select %p509, %s18, 1
      %s511 = smul.addr %s510, 2
      %s512 = smul.addr %s511, 8
      %s513 = scalar_lea.vmem %s6, %s512
      // Predicated region
      $region41: #{model_forward.17} parent=39 // pred_check
        %p514 = pneg %p151
      $region42: #{model_forward.17} parent=39 // pred_check_branch
        %516 = sbr.rel (%p514) target = $region44
      $region43: #{model_forward.17} parent=39 // pred_region
        _
      $region44: #{model_forward.17} parent=39 // pred_fallthru
        _
      // Predicated region
      $region45: #{model_forward.17} parent=39 // pred_check
        %p517 = pneg %p177
      $region46: #{model_forward.17} parent=39 // pred_check_branch
        %519 = sbr.rel (%p517) target = $region48
      $region47: #{model_forward.17} parent=39 // pred_region
        _
      $region48: #{model_forward.17} parent=39 // pred_fallthru
        _
    $region40: #{model_forward.17} parent=5 // pred_fallthru
      _
    %p520 = scmp.le.s32.totalorder 2, %s13
    // Predicated region
    $region49: #{model_forward.17} parent=5 // pred_check
      %p521 = pneg %p520
    $region50: #{model_forward.17} parent=5 // pred_check_branch
      %523 = sbr.rel (%p521) target = $region52
    $region51: #{model_forward.17} parent=5 // pred_region
      %s524 = ssub.s32 %s13, 2
      // Predicated region
      $region53: #{model_forward.17} parent=51 // pred_check
        %p525 = pneg %p157
      $region54: #{model_forward.17} parent=51 // pred_check_branch
        %527 = sbr.rel (%p525) target = $region56
      $region55: #{model_forward.17} parent=51 // pred_region
        %p528 = scmp.lt.s32.totalorder %s19, 1
        %s529 = scalar_select %p528, %s19, 1
        %s530 = smul.addr %s529, 2
        %s531 = smul.addr %s530, 8
        %s532 = scalar_lea.vmem %s5, %s531
      $region56: #{model_forward.17} parent=51 // pred_fallthru
        _
      // Predicated region
      $region57: #{model_forward.17} parent=51 // pred_check
        %p533 = pneg %p183
      $region58: #{model_forward.17} parent=51 // pred_check_branch
        %535 = sbr.rel (%p533) target = $region60
      $region59: #{model_forward.17} parent=51 // pred_region
        %p536 = scmp.lt.s32.totalorder %s19, 1
        %s537 = scalar_select %p536, %s19, 1
        %s538 = smul.addr %s537, 2
        %s539 = smul.addr %s538, 8
        %s540 = scalar_lea.vmem %s6, %s539
      $region60: #{model_forward.17} parent=51 // pred_fallthru
        _
    $region52: #{model_forward.17} parent=5 // pred_fallthru
      _
  $region6: #{model_forward.17} parent=0 // loop_footer
    %s17 = sadd.s32 1, %s13
  $region7: #{model_forward.17} parent=0 // loop_footer_branch
    %12 = sbr.rel target = $region3
  $region8: #{model_forward.17} parent=0 // loop_exit
    _

// kernel: model_forward.18
$region0: #{model_forward.18}
  #allocation0 [shape = 'u32[]', space=smem, size = 0x4, offset = 0x4, fixed_abs, tag = 'smem constant byte address 0x4 - core index']
  #allocation1 [shape = 'u32[72,128]{1,0:T(1,128)}', space=vmem, size = 0x9000, scoped, tag = 'internal scratch']
  %s0 = inlined_call_operand.vmem [shape: f32[2,16,128], index: 0, kind: input, shape index: {}]
  %s1 = inlined_call_operand.vmem [shape: f32[2,8,128], index: 1, kind: input, shape index: {}]
  %s2 = inlined_call_operand.vmem [shape: f32[8,1], index: 2, kind: input, shape index: {}]
  %s3 = inlined_call_operand.vmem [shape: f32[8,1], index: 3, kind: input, shape index: {}]
  %s4 = inlined_call_operand.vmem [shape: bf16[8,120], index: 4, kind: input, shape index: {}]
  %s5 = inlined_call_operand.vmem [shape: f32[2,8,128], index: 5, kind: output, shape index: {0}]
  %s6 = inlined_call_operand.vmem [shape: f32[2,8,2], index: 6, kind: output, shape index: {1}]
  %7 = xla_tuple %s5, %s6
  %s8 = sld [smem:[#allocation0]]
  $region61: #{model_forward.18} parent=0
    _
  %s10 = ssub.s32 1, %s8
  %s11 = scalar_select 0, %s10, %s8
  loop: start=0, step=1, limit=4
  $region2: #{model_forward.18} parent=0 // loop_pre_header
    _
  $region3: #{model_forward.18} parent=0 // loop_header
    %s13 = sphi 0, %s17
    %p14 = scmp.ge.s32.totalorder %s13, 4
    %s23 = sphi 0, %s25
    %s26 = sphi 0, %s23
    %s27 = sphi 0, %s26
    %s43 = sphi 0, %s27
    %s49 = sphi 0, %s51
    %s52 = sphi 0, %s49
    %s53 = sphi 0, %s52
    %s69 = sphi 0, %s53
    %s73 = sphi 0, %s73
    %s75 = sphi 0, %s73
    %s76 = sphi 0, %s75
    %s90 = sphi 0, %s76
    %s94 = sphi 0, %s94
    %s96 = sphi 0, %s94
    %s97 = sphi 0, %s96
    %s111 = sphi 0, %s97
    %s115 = sphi 0, %s115
    %s117 = sphi 0, %s115
    %s118 = sphi 0, %s117
    %s132 = sphi 0, %s118
    %s138 = sphi 0, %s140
    %s141 = sphi 0, %s138
    %s142 = sphi 0, %s141
    %s158 = sphi 0, %s142
    %s164 = sphi 0, %s166
    %s167 = sphi 0, %s164
    %s168 = sphi 0, %s167
    %s184 = sphi 0, %s168
  $region4: #{model_forward.18} parent=0 // loop_header_branch
    %16 = sbr.rel (%p14) target = $region8
  $region5: #{model_forward.18} parent=0 // loop_body
    %s18 = ssub.s32 %s13, 1
    %s19 = ssub.s32 %s13, 2
    %s20 = sadd.s32 %s13, 1
    %s21 = ssub.s32 %s13, %s20
    %p22 = scmp.eq.s32.totalorder %s21, 0
    %s24 = sadd.s32 %s23, 1
    %s25 = scalar_select %p22, %s23, %s24
    %p28 = pneg %p22
    %p29 = scmp.eq.s32.totalorder %s13, 1
    %p30 = por %p28, %p29
    %p31 = scmp.ne.s32.totalorder %s23, %s26
    %p32 = scmp.eq.s32.totalorder %s13, 0
    %p33 = por %p31, %p32
    %p34 = scmp.ne.s32.totalorder %s23, %s26
    %p35 = scmp.eq.s32.totalorder %s18, 1
    %p36 = por %p34, %p35
    %p37 = scmp.ne.s32.totalorder %s26, %s27
    %p38 = scmp.eq.s32.totalorder %s18, 0
    %p39 = por %p37, %p38
    %p40 = scmp.ne.s32.totalorder %s26, %s27
    %p41 = scmp.eq.s32.totalorder %s19, 1
    %p42 = por %p40, %p41
    %p44 = scmp.ne.s32.totalorder %s27, %s43
    %p45 = scmp.eq.s32.totalorder %s19, 0
    %p46 = por %p44, %p45
    %s47 = ssub.s32 %s13, %s20
    %p48 = scmp.eq.s32.totalorder %s47, 0
    %s50 = sadd.s32 %s49, 1
    %s51 = scalar_select %p48, %s49, %s50
    %p54 = pneg %p48
    %p55 = scmp.eq.s32.totalorder %s13, 1
    %p56 = por %p54, %p55
    %p57 = scmp.ne.s32.totalorder %s49, %s52
    %p58 = scmp.eq.s32.totalorder %s13, 0
    %p59 = por %p57, %p58
    %p60 = scmp.ne.s32.totalorder %s49, %s52
    %p61 = scmp.eq.s32.totalorder %s18, 1
    %p62 = por %p60, %p61
    %p63 = scmp.ne.s32.totalorder %s52, %s53
    %p64 = scmp.eq.s32.totalorder %s18, 0
    %p65 = por %p63, %p64
    %p66 = scmp.ne.s32.totalorder %s52, %s53
    %p67 = scmp.eq.s32.totalorder %s19, 1
    %p68 = por %p66, %p67
    %p70 = scmp.ne.s32.totalorder %s53, %s69
    %p71 = scmp.eq.s32.totalorder %s19, 0
    %p72 = por %p70, %p71
    %s74 = sadd.s32 %s73, 1
    %p77 = scmp.eq.s32.totalorder %s13, 1
    %p78 = scmp.ne.s32.totalorder %s73, %s75
    %p79 = scmp.eq.s32.totalorder %s13, 0
    %p80 = por %p78, %p79
    %p81 = scmp.ne.s32.totalorder %s73, %s75
    %p82 = scmp.eq.s32.totalorder %s18, 1
    %p83 = por %p81, %p82
    %p84 = scmp.ne.s32.totalorder %s75, %s76
    %p85 = scmp.eq.s32.totalorder %s18, 0
    %p86 = por %p84, %p85
    %p87 = scmp.ne.s32.totalorder %s75, %s76
    %p88 = scmp.eq.s32.totalorder %s19, 1
    %p89 = por %p87, %p88
    %p91 = scmp.ne.s32.totalorder %s76, %s90
    %p92 = scmp.eq.s32.totalorder %s19, 0
    %p93 = por %p91, %p92
    %s95 = sadd.s32 %s94, 1
    %p98 = scmp.eq.s32.totalorder %s13, 1
    %p99 = scmp.ne.s32.totalorder %s94, %s96
    %p100 = scmp.eq.s32.totalorder %s13, 0
    %p101 = por %p99, %p100
    %p102 = scmp.ne.s32.totalorder %s94, %s96
    %p103 = scmp.eq.s32.totalorder %s18, 1
    %p104 = por %p102, %p103
    %p105 = scmp.ne.s32.totalorder %s96, %s97
    %p106 = scmp.eq.s32.totalorder %s18, 0
    %p107 = por %p105, %p106
    %p108 = scmp.ne.s32.totalorder %s96, %s97
    %p109 = scmp.eq.s32.totalorder %s19, 1
    %p110 = por %p108, %p109
    %p112 = scmp.ne.s32.totalorder %s97, %s111
    %p113 = scmp.eq.s32.totalorder %s19, 0
    %p114 = por %p112, %p113
    %s116 = sadd.s32 %s115, 1
    %p119 = scmp.eq.s32.totalorder %s13, 1
    %p120 = scmp.ne.s32.totalorder %s115, %s117
    %p121 = scmp.eq.s32.totalorder %s13, 0
    %p122 = por %p120, %p121
    %p123 = scmp.ne.s32.totalorder %s115, %s117
    %p124 = scmp.eq.s32.totalorder %s18, 1
    %p125 = por %p123, %p124
    %p126 = scmp.ne.s32.totalorder %s117, %s118
    %p127 = scmp.eq.s32.totalorder %s18, 0
    %p128 = por %p126, %p127
    %p129 = scmp.ne.s32.totalorder %s117, %s118
    %p130 = scmp.eq.s32.totalorder %s19, 1
    %p131 = por %p129, %p130
    %p133 = scmp.ne.s32.totalorder %s118, %s132
    %p134 = scmp.eq.s32.totalorder %s19, 0
    %p135 = por %p133, %p134
    %s136 = ssub.s32 %s13, %s20
    %p137 = scmp.eq.s32.totalorder %s136, 0
    %s139 = sadd.s32 %s138, 1
    %s140 = scalar_select %p137, %s138, %s139
    %p143 = pneg %p137
    %p144 = scmp.eq.s32.totalorder %s13, 1
    %p145 = por %p143, %p144
    %p146 = scmp.ne.s32.totalorder %s138, %s141
    %p147 = scmp.eq.s32.totalorder %s13, 0
    %p148 = por %p146, %p147
    %p149 = scmp.ne.s32.totalorder %s138, %s141
    %p150 = scmp.eq.s32.totalorder %s18, 1
    %p151 = por %p149, %p150
    %p152 = scmp.ne.s32.totalorder %s141, %s142
    %p153 = scmp.eq.s32.totalorder %s18, 0
    %p154 = por %p152, %p153
    %p155 = scmp.ne.s32.totalorder %s141, %s142
    %p156 = scmp.eq.s32.totalorder %s19, 1
    %p157 = por %p155, %p156
    %p159 = scmp.ne.s32.totalorder %s142, %s158
    %p160 = scmp.eq.s32.totalorder %s19, 0
    %p161 = por %p159, %p160
    %s162 = ssub.s32 %s13, %s20
    %p163 = scmp.eq.s32.totalorder %s162, 0
    %s165 = sadd.s32 %s164, 1
    %s166 = scalar_select %p163, %s164, %s165
    %p169 = pneg %p163
    %p170 = scmp.eq.s32.totalorder %s13, 1
    %p171 = por %p169, %p170
    %p172 = scmp.ne.s32.totalorder %s164, %s167
    %p173 = scmp.eq.s32.totalorder %s13, 0
    %p174 = por %p172, %p173
    %p175 = scmp.ne.s32.totalorder %s164, %s167
    %p176 = scmp.eq.s32.totalorder %s18, 1
    %p177 = por %p175, %p176
    %p178 = scmp.ne.s32.totalorder %s167, %s168
    %p179 = scmp.eq.s32.totalorder %s18, 0
    %p180 = por %p178, %p179
    %p181 = scmp.ne.s32.totalorder %s167, %s168
    %p182 = scmp.eq.s32.totalorder %s19, 1
    %p183 = por %p181, %p182
    %p185 = scmp.ne.s32.totalorder %s168, %s184
    %p186 = scmp.eq.s32.totalorder %s19, 0
    %p187 = por %p185, %p186
    %p188 = scmp.le.s32.totalorder 1, %s13
    %p189 = scmp.lt.s32.totalorder %s13, 3
    %p190 = pnand %p188, %p189
    %p191 = pneg %p190
    // Predicated region
    $region9: #{model_forward.18} parent=5 // pred_check
      _
    $region10: #{model_forward.18} parent=5 // pred_check_branch
      %193 = sbr.rel (%p190) target = $region12
    $region11: #{model_forward.18} parent=5 // pred_region
      %s194 = ssub.s32 %s13, 1
      // Predicated region
      $region13: #{model_forward.18} parent=11 // pred_check
        %p195 = pneg %p86
      $region14: #{model_forward.18} parent=11 // pred_check_branch
        %197 = sbr.rel (%p195) target = $region16
      $region15: #{model_forward.18} parent=11 // pred_region
        _
      $region16: #{model_forward.18} parent=11 // pred_fallthru
        _
      // Predicated region
      $region17: #{model_forward.18} parent=11 // pred_check
        %p198 = pneg %p107
      $region18: #{model_forward.18} parent=11 // pred_check_branch
        %200 = sbr.rel (%p198) target = $region20
      $region19: #{model_forward.18} parent=11 // pred_region
        _
      $region20: #{model_forward.18} parent=11 // pred_fallthru
        _
      // Predicated region
      $region21: #{model_forward.18} parent=11 // pred_check
        %p201 = pneg %p128
      $region22: #{model_forward.18} parent=11 // pred_check_branch
        %203 = sbr.rel (%p201) target = $region24
      $region23: #{model_forward.18} parent=11 // pred_region
        _
      $region24: #{model_forward.18} parent=11 // pred_fallthru
        _
    $region12: #{model_forward.18} parent=5 // pred_fallthru
      _
    %p204 = scmp.lt.s32.totalorder %s13, 2
    // Predicated region
    $region25: #{model_forward.18} parent=5 // pred_check
      %p205 = pneg %p204
    $region26: #{model_forward.18} parent=5 // pred_check_branch
      %207 = sbr.rel (%p205) target = $region28
    $region27: #{model_forward.18} parent=5 // pred_region
      // Predicated region
      $region29: #{model_forward.18} parent=27 // pred_check
        %p208 = pneg %p33
      $region30: #{model_forward.18} parent=27 // pred_check_branch
        %210 = sbr.rel (%p208) target = $region32
      $region31: #{model_forward.18} parent=27 // pred_region
        %p211 = scmp.lt.s32.totalorder %s13, 1
        %s212 = scalar_select %p211, %s13, 1
        %s213 = smul.addr %s212, 2
        %s214 = smul.addr %s213, 8
        %s215 = scalar_lea.vmem %s0, %s214
      $region32: #{model_forward.18} parent=27 // pred_fallthru
        _
      // Predicated region
      $region33: #{model_forward.18} parent=27 // pred_check
        %p216 = pneg %p59
      $region34: #{model_forward.18} parent=27 // pred_check_branch
        %218 = sbr.rel (%p216) target = $region36
      $region35: #{model_forward.18} parent=27 // pred_region
        %p219 = scmp.lt.s32.totalorder %s13, 1
        %s220 = scalar_select %p219, %s13, 1
        %s221 = smul.addr %s220, 8
        %s222 = scalar_lea.vmem %s1, %s221
      $region36: #{model_forward.18} parent=27 // pred_fallthru
        _
    $region28: #{model_forward.18} parent=5 // pred_fallthru
      _
    %p223 = scmp.le.s32.totalorder 1, %s13
    %p224 = scmp.lt.s32.totalorder %s13, 3
    %p225 = pnand %p223, %p224
    %p226 = pneg %p225
    // Predicated region
    $region37: #{model_forward.18} parent=5 // pred_check
      _
    $region38: #{model_forward.18} parent=5 // pred_check_branch
      %228 = sbr.rel (%p225) target = $region40
    $region39: #{model_forward.18} parent=5 // pred_region
      %s229 = ssub.s32 %s13, 1
      %p230 = scmp.lt.s32.totalorder %s18, 1
      %s231 = scalar_select %p230, %s18, 1
      %s232 = smul.addr %s231, 2
      %s233 = smul.addr %s232, 8
      %s234 = scalar_lea.vmem %s0, %s233
      %p235 = pneg %p39
      %p236 = pneg %p36
      %p237 = scmp.lt.s32.totalorder %s18, 1
      %s238 = scalar_select %p237, %s18, 1
      %s239 = smul.addr %s238, 8
      %s240 = scalar_lea.vmem %s1, %s239
      %p241 = pneg %p65
      %p242 = pneg %p62
      %p243 = pneg %p86
      %p244 = pneg %p83
      %p245 = pneg %p107
      %p246 = pneg %p104
      %p247 = pneg %p128
      %p248 = pneg %p125
      %p249 = pneg %p154
      %p250 = pneg %p151
      %p251 = scmp.lt.s32.totalorder %s18, 1
      %s252 = scalar_select %p251, %s18, 1
      %s253 = smul.addr %s252, 8
      %s254 = scalar_lea.vmem %s5, %s253
      %p255 = pneg %p180
      %p256 = pneg %p177
      %p257 = scmp.lt.s32.totalorder %s18, 1
      %s258 = scalar_select %p257, %s18, 1
      %s259 = smul.addr %s258, 8
      %s260 = scalar_lea.vmem %s6, %s259
      %p261 = scmp.lt.s32.totalorder %s18, 1
      %s262 = scalar_select %p261, %s18, 1
      %s263 = smul.addr %s262, 2
      %s264 = smul.addr %s263, 8
      %s265 = scalar_lea.vmem %s0, %s264
      %p266 = scmp.lt.s32.totalorder %s18, 1
      %s267 = scalar_select %p266, %s18, 1
      %s268 = smul.addr %s267, 8
      %s269 = scalar_lea.vmem %s1, %s268
      %p270 = scmp.lt.s32.totalorder %s18, 1
      %s271 = scalar_select %p270, %s18, 1
      %s272 = smul.addr %s271, 8
      %s273 = scalar_lea.vmem %s5, %s272
      %p274 = scmp.lt.s32.totalorder %s18, 1
      %s275 = scalar_select %p274, %s18, 1
      %s276 = smul.addr %s275, 8
      %s277 = scalar_lea.vmem %s6, %s276
      %v278 = vld [vmem:[%s265] sm:$0xff]
      %v279 = vld [vmem:[%s265 + $0x8] sm:$0xff]
      %282 = vrot.lane.b32.xlu0 %v278, 2
      %v283 = vpop.permute.xlu0 %282
      %284 = vrot.lane.b32.xlu0 %v279, 2
      %v285 = vpop.permute.xlu0 %284
      %vm288 = vcmask 15360
      %v289 = vsel %vm288, 0.0, %v283
      %v290 = vsel %vm288, 0.0, %v285
      %v291 = vsel %vm288, %v283, 0.0
      %v292 = vsel %vm288, %v285, 0.0
      %v293 = vld [vmem:[%s269] sm:$0xff]
      %v294 = vld [vmem:[%s2] sm:$0xff]
      %v295 = vld [vmem:[%s3] sm:$0xff]
      %297 = vset.pattern.permute.xlu0 0
      %298 = vperm.xlu0 %297, %v294
      %v299 = vpop.permute.xlu0 %298
      %v301 = vmul.f32 %v293, %v299
      %303 = vset.pattern.permute.xlu0 0
      %304 = vperm.xlu0 %303, %v295
      %v305 = vpop.permute.xlu0 %304
      %v307 = vadd.f32 %v301, %v305
      %vm308 = vcmp.ge.f32.partialorder %v307, 0.0
      %v309 = vmul.f32 %v307, 0.1
      %v310 = vsel %vm308, %v307, %v309
      %312 = vrot.lane.b32.xlu0 %v310, 2
      %v313 = vpop.permute.xlu0 %312
      %v315 = vsel %vm288, 0.0, %v313
      %v316 = vsel %vm288, %v313, 0.0
      %321 = vrot.lane.b32.xlu0 %v289, 127
      %v322 = vpop.permute.xlu0 %321
      %323 = vrot.lane.b32.xlu0 %v291, 127
      %v324 = vpop.permute.xlu0 %323
      %325 = vrot.lane.b32.xlu0 %v290, 127
      %v326 = vpop.permute.xlu0 %325
      %327 = vrot.lane.b32.xlu0 %v292, 127
      %v328 = vpop.permute.xlu0 %327
      %vm329 = vcmask 1039360
      %v330 = vsel %vm329, %v322, %v324
      %v331 = vsel %vm329, %v326, %v328
      %336 = vrot.lane.b32.xlu0 %v315, 127
      %v337 = vpop.permute.xlu0 %336
      %338 = vrot.lane.b32.xlu0 %v316, 127
      %v339 = vpop.permute.xlu0 %338
      %v340 = vsel %vm329, %v337, %v339
      %342 = vrot.lane.b32.xlu0 %v289, 126
      %v343 = vpop.permute.xlu0 %342
      %344 = vrot.lane.b32.xlu0 %v291, 126
      %v345 = vpop.permute.xlu0 %344
      %346 = vrot.lane.b32.xlu0 %v290, 126
      %v347 = vpop.permute.xlu0 %346
      %348 = vrot.lane.b32.xlu0 %v292, 126
      %v349 = vpop.permute.xlu0 %348
      %vm350 = vcmask 1031168
      %v351 = vsel %vm350, %v343, %v345
      %v352 = vsel %vm350, %v347, %v349
      %355 = vrot.lane.b32.xlu0 %v315, 126
      %v356 = vpop.permute.xlu0 %355
      %357 = vrot.lane.b32.xlu0 %v316, 126
      %v358 = vpop.permute.xlu0 %357
      %v359 = vsel %vm350, %v356, %v358
      %361 = vrot.lane.b32.xlu0 %v289, 125
      %v362 = vpop.permute.xlu0 %361
      %363 = vrot.lane.b32.xlu0 %v291, 125
      %v364 = vpop.permute.xlu0 %363
      %365 = vrot.lane.b32.xlu0 %v290, 125
      %v366 = vpop.permute.xlu0 %365
      %367 = vrot.lane.b32.xlu0 %v292, 125
      %v368 = vpop.permute.xlu0 %367
      %vm369 = vcmask 1022976
      %v370 = vsel %vm369, %v362, %v364
      %v371 = vsel %vm369, %v366, %v368
      %374 = vrot.lane.b32.xlu0 %v315, 125
      %v375 = vpop.permute.xlu0 %374
      %376 = vrot.lane.b32.xlu0 %v316, 125
      %v377 = vpop.permute.xlu0 %376
      %v378 = vsel %vm369, %v375, %v377
      %380 = vrot.lane.b32.xlu0 %v289, 124
      %v381 = vpop.permute.xlu0 %380
      %382 = vrot.lane.b32.xlu0 %v291, 124
      %v383 = vpop.permute.xlu0 %382
      %384 = vrot.lane.b32.xlu0 %v290, 124
      %v385 = vpop.permute.xlu0 %384
      %386 = vrot.lane.b32.xlu0 %v292, 124
      %v387 = vpop.permute.xlu0 %386
      %vm388 = vcmask 1014784
      %v389 = vsel %vm388, %v381, %v383
      %v390 = vsel %vm388, %v385, %v387
      %393 = vrot.lane.b32.xlu0 %v315, 124
      %v394 = vpop.permute.xlu0 %393
      %395 = vrot.lane.b32.xlu0 %v316, 124
      %v396 = vpop.permute.xlu0 %395
      %v397 = vsel %vm388, %v394, %v396
      %v399 = vpack.c.bf16 %v290, %v289
      %v400 = vpack.c.bf16 %v330, %v315
      %v401 = vpack.c.bf16 %v340, %v331
      %v402 = vpack.c.bf16 %v352, %v351
      %v403 = vpack.c.bf16 %v370, %v359
      %v404 = vpack.c.bf16 %v378, %v371
      %v405 = vpack.c.bf16 %v390, %v389
      %v406 = vpack.c.bf16 %v397, %v397
      %v407 = vld [vmem:[%s4] sm:$0xf]
      %vm408 = vcmask 982016
      %v410 = vsel %vm408, %v407, 0
      %vm412 = vcmask 1043456
      %v414 = vsel %vm412, %v406, 0
      %416 = vmatpush.bf16.msra.mxu0 %v414
      %417 = vmatpush.bf16.msra.mxu0 %v405
      %418 = vmatpush.bf16.msra.mxu0 %v404
      %419 = vmatpush.bf16.msra.mxu0 %v403
      %420 = vmatpush.bf16.msra.mxu0 %v402
      %421 = vmatpush.bf16.msra.mxu0 %v401
      %422 = vmatpush.bf16.msra.mxu0 %v400
      %423 = vmatpush.bf16.msra.mxu0 %v399
      %424 = vmatmul.bf16.gmra.mxu0 %v410
      %v425 = vpop.f32.mrf.mxu0
      %v426 = vadd.f32 0.0, %v425
      %v427 = vpop.f32.mrf.mxu0
      %428 = vdwg.mxu0
      %429 = vst [vmem:[%s273] sm:$0xff] %v426
      %430 = vadd.xlane.f32.xlu0 %v426
      %v431 = vpop.xlane.xlu0 %430
      %v432 = vmul.f32 %v426, %v426
      %433 = vadd.xlane.f32.xlu0 %v432
      %v434 = vpop.xlane.xlu0 %433
      %vm435 = vcmask 7168
      %v436 = vsel %vm435, %v431, %v434
      %437 = vst.msk [vmem:[%s277] sm:$0xff] %vm288, %v436
      %p438 = scmp.lt.s32.totalorder %s18, 1
      %s439 = scalar_select %p438, %s18, 1
      %s440 = smul.addr %s439, 8
      %s441 = scalar_lea.vmem %s5, %s440
      %p442 = scmp.lt.s32.totalorder %s18, 1
      %s443 = scalar_select %p442, %s18, 1
      %s444 = smul.addr %s443, 8
      %s445 = scalar_lea.vmem %s6, %s444
      // Predicated region
      $region41: #{model_forward.18} parent=39 // pred_check
        %p446 = pneg %p151
      $region42: #{model_forward.18} parent=39 // pred_check_branch
        %448 = sbr.rel (%p446) target = $region44
      $region43: #{model_forward.18} parent=39 // pred_region
        _
      $region44: #{model_forward.18} parent=39 // pred_fallthru
        _
      // Predicated region
      $region45: #{model_forward.18} parent=39 // pred_check
        %p449 = pneg %p177
      $region46: #{model_forward.18} parent=39 // pred_check_branch
        %451 = sbr.rel (%p449) target = $region48
      $region47: #{model_forward.18} parent=39 // pred_region
        _
      $region48: #{model_forward.18} parent=39 // pred_fallthru
        _
    $region40: #{model_forward.18} parent=5 // pred_fallthru
      _
    %p452 = scmp.le.s32.totalorder 2, %s13
    // Predicated region
    $region49: #{model_forward.18} parent=5 // pred_check
      %p453 = pneg %p452
    $region50: #{model_forward.18} parent=5 // pred_check_branch
      %455 = sbr.rel (%p453) target = $region52
    $region51: #{model_forward.18} parent=5 // pred_region
      %s456 = ssub.s32 %s13, 2
      // Predicated region
      $region53: #{model_forward.18} parent=51 // pred_check
        %p457 = pneg %p157
      $region54: #{model_forward.18} parent=51 // pred_check_branch
        %459 = sbr.rel (%p457) target = $region56
      $region55: #{model_forward.18} parent=51 // pred_region
        %p460 = scmp.lt.s32.totalorder %s19, 1
        %s461 = scalar_select %p460, %s19, 1
        %s462 = smul.addr %s461, 8
        %s463 = scalar_lea.vmem %s5, %s462
      $region56: #{model_forward.18} parent=51 // pred_fallthru
        _
      // Predicated region
      $region57: #{model_forward.18} parent=51 // pred_check
        %p464 = pneg %p183
      $region58: #{model_forward.18} parent=51 // pred_check_branch
        %466 = sbr.rel (%p464) target = $region60
      $region59: #{model_forward.18} parent=51 // pred_region
        %p467 = scmp.lt.s32.totalorder %s19, 1
        %s468 = scalar_select %p467, %s19, 1
        %s469 = smul.addr %s468, 8
        %s470 = scalar_lea.vmem %s6, %s469
      $region60: #{model_forward.18} parent=51 // pred_fallthru
        _
    $region52: #{model_forward.18} parent=5 // pred_fallthru
      _
  $region6: #{model_forward.18} parent=0 // loop_footer
    %s17 = sadd.s32 1, %s13
  $region7: #{model_forward.18} parent=0 // loop_footer_branch
    %12 = sbr.rel target = $region3
  $region8: #{model_forward.18} parent=0 // loop_exit
    _

// kernel: model_forward.19
$region0: #{model_forward.19}
  #allocation0 [shape = 'u32[]', space=smem, size = 0x4, offset = 0x4, fixed_abs, tag = 'smem constant byte address 0x4 - core index']
  #allocation1 [shape = 'u32[72,128]{1,0:T(1,128)}', space=vmem, size = 0x9000, scoped, tag = 'internal scratch']
  #allocation2 [shape = 'f32[1,1]{1,0:T(1,128)S(1)}', space=vmem, size = 0x200, scoped, tag = 'scoped memory for model_forward.19']
  %s0 = inlined_call_operand.vmem [shape: f32[2,8,128], index: 0, kind: input, shape index: {}]
  %s1 = inlined_call_operand.vmem [shape: f32[2,1,128], index: 1, kind: input, shape index: {}]
  %s2 = inlined_call_operand.vmem [shape: f32[8,1], index: 2, kind: input, shape index: {}]
  %s3 = inlined_call_operand.vmem [shape: f32[8,1], index: 3, kind: input, shape index: {}]
  %s4 = inlined_call_operand.vmem [shape: bf16[1,9], index: 4, kind: input, shape index: {}]
  %s5 = inlined_call_operand.<no memory space> [shape: f32[1,1], index: 5, kind: input, shape index: {}]
  %s6 = inlined_call_operand.hbm [shape: f32[2,1,128], index: 6, kind: output, shape index: {}]
  %s7 = sld [smem:[#allocation0]]
  $region57: #{model_forward.19} parent=0
    _
  %s9 = ssub.s32 1, %s7
  %s10 = scalar_select 0, %s9, %s7
  %v11 = vstv %s5
  %12 = vst [vmem:[#allocation2] sm:$0x1] %v11
  $region1: #{model_forward.19} parent=0
    #allocation3 [shape = 'u8[1024]{0}', space=vmem, size = 0x400, scoped, tag = 'output window, operand 0']
    #allocation4 [shape = 's32[2]{0}', space=sflag, size = 0x8, scoped, tag = 'scoped memory for model_forward.19']
    %13 = vsyncpa [#allocation4], 0
    %s14 = scalar_lea.sflag [#allocation4], 1
    %15 = vsyncpa %s14, 0
    loop: start=0, step=1, limit=4
    $region2: #{model_forward.19} parent=1 // loop_pre_header
      _
    $region3: #{model_forward.19} parent=1 // loop_header
      %s17 = sphi 0, %s21
      %p18 = scmp.ge.s32.totalorder %s17, 4
      %s27 = sphi 0, %s29
      %s30 = sphi 0, %s27
      %s31 = sphi 0, %s30
      %s47 = sphi 0, %s31
      %s53 = sphi 0, %s55
      %s56 = sphi 0, %s53
      %s57 = sphi 0, %s56
      %s73 = sphi 0, %s57
      %s77 = sphi 0, %s77
      %s79 = sphi 0, %s77
      %s80 = sphi 0, %s79
      %s94 = sphi 0, %s80
      %s98 = sphi 0, %s98
      %s100 = sphi 0, %s98
      %s101 = sphi 0, %s100
      %s115 = sphi 0, %s101
      %s119 = sphi 0, %s119
      %s121 = sphi 0, %s119
      %s122 = sphi 0, %s121
      %s136 = sphi 0, %s122
      %s140 = sphi 0, %s140
      %s142 = sphi 0, %s140
      %s143 = sphi 0, %s142
      %s157 = sphi 0, %s143
      %s163 = sphi 0, %s165
      %s166 = sphi 0, %s163
      %s167 = sphi 0, %s166
      %s183 = sphi 0, %s167
    $region4: #{model_forward.19} parent=1 // loop_header_branch
      %20 = sbr.rel (%p18) target = $region8
    $region5: #{model_forward.19} parent=1 // loop_body
      %s22 = ssub.s32 %s17, 1
      %s23 = ssub.s32 %s17, 2
      %s24 = sadd.s32 %s17, 1
      %s25 = ssub.s32 %s17, %s24
      %p26 = scmp.eq.s32.totalorder %s25, 0
      %s28 = sadd.s32 %s27, 1
      %s29 = scalar_select %p26, %s27, %s28
      %p32 = pneg %p26
      %p33 = scmp.eq.s32.totalorder %s17, 1
      %p34 = por %p32, %p33
      %p35 = scmp.ne.s32.totalorder %s27, %s30
      %p36 = scmp.eq.s32.totalorder %s17, 0
      %p37 = por %p35, %p36
      %p38 = scmp.ne.s32.totalorder %s27, %s30
      %p39 = scmp.eq.s32.totalorder %s22, 1
      %p40 = por %p38, %p39
      %p41 = scmp.ne.s32.totalorder %s30, %s31
      %p42 = scmp.eq.s32.totalorder %s22, 0
      %p43 = por %p41, %p42
      %p44 = scmp.ne.s32.totalorder %s30, %s31
      %p45 = scmp.eq.s32.totalorder %s23, 1
      %p46 = por %p44, %p45
      %p48 = scmp.ne.s32.totalorder %s31, %s47
      %p49 = scmp.eq.s32.totalorder %s23, 0
      %p50 = por %p48, %p49
      %s51 = ssub.s32 %s17, %s24
      %p52 = scmp.eq.s32.totalorder %s51, 0
      %s54 = sadd.s32 %s53, 1
      %s55 = scalar_select %p52, %s53, %s54
      %p58 = pneg %p52
      %p59 = scmp.eq.s32.totalorder %s17, 1
      %p60 = por %p58, %p59
      %p61 = scmp.ne.s32.totalorder %s53, %s56
      %p62 = scmp.eq.s32.totalorder %s17, 0
      %p63 = por %p61, %p62
      %p64 = scmp.ne.s32.totalorder %s53, %s56
      %p65 = scmp.eq.s32.totalorder %s22, 1
      %p66 = por %p64, %p65
      %p67 = scmp.ne.s32.totalorder %s56, %s57
      %p68 = scmp.eq.s32.totalorder %s22, 0
      %p69 = por %p67, %p68
      %p70 = scmp.ne.s32.totalorder %s56, %s57
      %p71 = scmp.eq.s32.totalorder %s23, 1
      %p72 = por %p70, %p71
      %p74 = scmp.ne.s32.totalorder %s57, %s73
      %p75 = scmp.eq.s32.totalorder %s23, 0
      %p76 = por %p74, %p75
      %s78 = sadd.s32 %s77, 1
      %p81 = scmp.eq.s32.totalorder %s17, 1
      %p82 = scmp.ne.s32.totalorder %s77, %s79
      %p83 = scmp.eq.s32.totalorder %s17, 0
      %p84 = por %p82, %p83
      %p85 = scmp.ne.s32.totalorder %s77, %s79
      %p86 = scmp.eq.s32.totalorder %s22, 1
      %p87 = por %p85, %p86
      %p88 = scmp.ne.s32.totalorder %s79, %s80
      %p89 = scmp.eq.s32.totalorder %s22, 0
      %p90 = por %p88, %p89
      %p91 = scmp.ne.s32.totalorder %s79, %s80
      %p92 = scmp.eq.s32.totalorder %s23, 1
      %p93 = por %p91, %p92
      %p95 = scmp.ne.s32.totalorder %s80, %s94
      %p96 = scmp.eq.s32.totalorder %s23, 0
      %p97 = por %p95, %p96
      %s99 = sadd.s32 %s98, 1
      %p102 = scmp.eq.s32.totalorder %s17, 1
      %p103 = scmp.ne.s32.totalorder %s98, %s100
      %p104 = scmp.eq.s32.totalorder %s17, 0
      %p105 = por %p103, %p104
      %p106 = scmp.ne.s32.totalorder %s98, %s100
      %p107 = scmp.eq.s32.totalorder %s22, 1
      %p108 = por %p106, %p107
      %p109 = scmp.ne.s32.totalorder %s100, %s101
      %p110 = scmp.eq.s32.totalorder %s22, 0
      %p111 = por %p109, %p110
      %p112 = scmp.ne.s32.totalorder %s100, %s101
      %p113 = scmp.eq.s32.totalorder %s23, 1
      %p114 = por %p112, %p113
      %p116 = scmp.ne.s32.totalorder %s101, %s115
      %p117 = scmp.eq.s32.totalorder %s23, 0
      %p118 = por %p116, %p117
      %s120 = sadd.s32 %s119, 1
      %p123 = scmp.eq.s32.totalorder %s17, 1
      %p124 = scmp.ne.s32.totalorder %s119, %s121
      %p125 = scmp.eq.s32.totalorder %s17, 0
      %p126 = por %p124, %p125
      %p127 = scmp.ne.s32.totalorder %s119, %s121
      %p128 = scmp.eq.s32.totalorder %s22, 1
      %p129 = por %p127, %p128
      %p130 = scmp.ne.s32.totalorder %s121, %s122
      %p131 = scmp.eq.s32.totalorder %s22, 0
      %p132 = por %p130, %p131
      %p133 = scmp.ne.s32.totalorder %s121, %s122
      %p134 = scmp.eq.s32.totalorder %s23, 1
      %p135 = por %p133, %p134
      %p137 = scmp.ne.s32.totalorder %s122, %s136
      %p138 = scmp.eq.s32.totalorder %s23, 0
      %p139 = por %p137, %p138
      %s141 = sadd.s32 %s140, 1
      %p144 = scmp.eq.s32.totalorder %s17, 1
      %p145 = scmp.ne.s32.totalorder %s140, %s142
      %p146 = scmp.eq.s32.totalorder %s17, 0
      %p147 = por %p145, %p146
      %p148 = scmp.ne.s32.totalorder %s140, %s142
      %p149 = scmp.eq.s32.totalorder %s22, 1
      %p150 = por %p148, %p149
      %p151 = scmp.ne.s32.totalorder %s142, %s143
      %p152 = scmp.eq.s32.totalorder %s22, 0
      %p153 = por %p151, %p152
      %p154 = scmp.ne.s32.totalorder %s142, %s143
      %p155 = scmp.eq.s32.totalorder %s23, 1
      %p156 = por %p154, %p155
      %p158 = scmp.ne.s32.totalorder %s143, %s157
      %p159 = scmp.eq.s32.totalorder %s23, 0
      %p160 = por %p158, %p159
      %s161 = ssub.s32 %s17, %s24
      %p162 = scmp.eq.s32.totalorder %s161, 0
      %s164 = sadd.s32 %s163, 1
      %s165 = scalar_select %p162, %s163, %s164
      %p168 = pneg %p162
      %p169 = scmp.eq.s32.totalorder %s17, 1
      %p170 = por %p168, %p169
      %p171 = scmp.ne.s32.totalorder %s163, %s166
      %p172 = scmp.eq.s32.totalorder %s17, 0
      %p173 = por %p171, %p172
      %p174 = scmp.ne.s32.totalorder %s163, %s166
      %p175 = scmp.eq.s32.totalorder %s22, 1
      %p176 = por %p174, %p175
      %p177 = scmp.ne.s32.totalorder %s166, %s167
      %p178 = scmp.eq.s32.totalorder %s22, 0
      %p179 = por %p177, %p178
      %p180 = scmp.ne.s32.totalorder %s166, %s167
      %p181 = scmp.eq.s32.totalorder %s23, 1
      %p182 = por %p180, %p181
      %p184 = scmp.ne.s32.totalorder %s167, %s183
      %p185 = scmp.eq.s32.totalorder %s23, 0
      %p186 = por %p184, %p185
      %p187 = scmp.le.s32.totalorder 1, %s17
      %p188 = scmp.lt.s32.totalorder %s17, 3
      %p189 = pnand %p187, %p188
      %p190 = pneg %p189
      // Predicated region
      $region9: #{model_forward.19} parent=5 // pred_check
        _
      $region10: #{model_forward.19} parent=5 // pred_check_branch
        %192 = sbr.rel (%p189) target = $region12
      $region11: #{model_forward.19} parent=5 // pred_region
        %s193 = ssub.s32 %s17, 1
        // Predicated region
        $region13: #{model_forward.19} parent=11 // pred_check
          %p194 = pneg %p90
        $region14: #{model_forward.19} parent=11 // pred_check_branch
          %196 = sbr.rel (%p194) target = $region16
        $region15: #{model_forward.19} parent=11 // pred_region
          _
        $region16: #{model_forward.19} parent=11 // pred_fallthru
          _
        // Predicated region
        $region17: #{model_forward.19} parent=11 // pred_check
          %p197 = pneg %p111
        $region18: #{model_forward.19} parent=11 // pred_check_branch
          %199 = sbr.rel (%p197) target = $region20
        $region19: #{model_forward.19} parent=11 // pred_region
          _
        $region20: #{model_forward.19} parent=11 // pred_fallthru
          _
        // Predicated region
        $region21: #{model_forward.19} parent=11 // pred_check
          %p200 = pneg %p132
        $region22: #{model_forward.19} parent=11 // pred_check_branch
          %202 = sbr.rel (%p200) target = $region24
        $region23: #{model_forward.19} parent=11 // pred_region
          _
        $region24: #{model_forward.19} parent=11 // pred_fallthru
          _
        // Predicated region
        $region25: #{model_forward.19} parent=11 // pred_check
          %p203 = pneg %p153
        $region26: #{model_forward.19} parent=11 // pred_check_branch
          %205 = sbr.rel (%p203) target = $region28
        $region27: #{model_forward.19} parent=11 // pred_region
          _
        $region28: #{model_forward.19} parent=11 // pred_fallthru
          _
      $region12: #{model_forward.19} parent=5 // pred_fallthru
        _
      %p206 = scmp.lt.s32.totalorder %s17, 2
      // Predicated region
      $region29: #{model_forward.19} parent=5 // pred_check
        %p207 = pneg %p206
      $region30: #{model_forward.19} parent=5 // pred_check_branch
        %209 = sbr.rel (%p207) target = $region32
      $region31: #{model_forward.19} parent=5 // pred_region
        // Predicated region
        $region33: #{model_forward.19} parent=31 // pred_check
          %p210 = pneg %p37
        $region34: #{model_forward.19} parent=31 // pred_check_branch
          %212 = sbr.rel (%p210) target = $region36
        $region35: #{model_forward.19} parent=31 // pred_region
          %p213 = scmp.lt.s32.totalorder %s17, 1
          %s214 = scalar_select %p213, %s17, 1
          %s215 = smul.addr %s214, 8
          %s216 = scalar_lea.vmem %s0, %s215
        $region36: #{model_forward.19} parent=31 // pred_fallthru
          _
        // Predicated region
        $region37: #{model_forward.19} parent=31 // pred_check
          %p217 = pneg %p63
        $region38: #{model_forward.19} parent=31 // pred_check_branch
          %219 = sbr.rel (%p217) target = $region40
        $region39: #{model_forward.19} parent=31 // pred_region
          %p220 = scmp.lt.s32.totalorder %s17, 1
          %s221 = scalar_select %p220, %s17, 1
          %s222 = scalar_lea.vmem %s1, %s221
        $region40: #{model_forward.19} parent=31 // pred_fallthru
          _
      $region32: #{model_forward.19} parent=5 // pred_fallthru
        _
      %p223 = scmp.le.s32.totalorder 1, %s17
      %p224 = scmp.lt.s32.totalorder %s17, 3
      %p225 = pnand %p223, %p224
      %p226 = pneg %p225
      // Predicated region
      $region41: #{model_forward.19} parent=5 // pred_check
        _
      $region42: #{model_forward.19} parent=5 // pred_check_branch
        %228 = sbr.rel (%p225) target = $region44
      $region43: #{model_forward.19} parent=5 // pred_region
        %s229 = ssub.s32 %s17, 1
        %p230 = scmp.lt.s32.totalorder %s22, 1
        %s231 = scalar_select %p230, %s22, 1
        %s232 = smul.addr %s231, 8
        %s233 = scalar_lea.vmem %s0, %s232
        %p234 = pneg %p43
        %p235 = pneg %p40
        %p236 = scmp.lt.s32.totalorder %s22, 1
        %s237 = scalar_select %p236, %s22, 1
        %s238 = scalar_lea.vmem %s1, %s237
        %p239 = pneg %p69
        %p240 = pneg %p66
        %p241 = pneg %p90
        %p242 = pneg %p87
        %p243 = pneg %p111
        %p244 = pneg %p108
        %p245 = pneg %p132
        %p246 = pneg %p129
        %p247 = pneg %p153
        %p248 = pneg %p150
        %p249 = pneg %p179
        %p250 = pneg %p176
        %s251 = sand.u32 %s166, 1
        %s252 = scalar_lea.sflag [#allocation4], %s251
        %s253 = sand.u32 %s166, 1
        %s254 = scalar_lea.vmem [#allocation3], %s253
        %p255 = scmp.lt.s32.totalorder %s22, 1
        %s256 = scalar_select %p255, %s22, 1
        %s257 = smul.addr %s256, 8
        %s258 = scalar_lea.vmem %s0, %s257
        %p259 = scmp.lt.s32.totalorder %s22, 1
        %s260 = scalar_select %p259, %s22, 1
        %s261 = scalar_lea.vmem %s1, %s260
        %v263 = vld [vmem:[%s258] sm:$0xff]
        %v264 = vld [vmem:[%s2] sm:$0xff]
        %v265 = vld [vmem:[%s3] sm:$0xff]
        %267 = vset.pattern.permute.xlu0 0
        %268 = vperm.xlu0 %267, %v264
        %v269 = vpop.permute.xlu0 %268
        %v271 = vmul.f32 %v263, %v269
        %273 = vset.pattern.permute.xlu0 0
        %274 = vperm.xlu0 %273, %v265
        %v275 = vpop.permute.xlu0 %274
        %v277 = vadd.f32 %v271, %v275
        %vm278 = vcmp.ge.f32.partialorder %v277, 0.0
        %v279 = vmul.f32 %v277, 0.1
        %v280 = vsel %vm278, %v277, %v279
        %v281 = vld [vmem:[%s261] sm:$0x1]
        %v282 = vpack.c.bf16 %v281, %v280
        %v283 = vld [vmem:[%s4] sm:$0x1]
        %v284 = vld [vmem:[#allocation2] sm:$0x1]
        %286 = vset.pattern.permute.xlu0 0
        %287 = vperm.xlu0 %286, %v284
        %v288 = vpop.permute.xlu0 %287
        %v290 = vperm.slane %v288, 0
        %vm291 = vcmask 72704
        %v293 = vsel %vm291, %v283, 0
        %vm295 = vcmask 1043456
        %vm296 = vcmask 1044480
        %v297 = vsel %vm295, 4294967295, 65535
        %v298 = vsel %vm296, %v297, 0
        %v300 = vand.u32 %v282, %v298
        %302 = vmatpush.bf16.msra.mxu0 0
        %303 = vmatpush.bf16.msra.mxu0 0
        %304 = vmatpush.bf16.msra.mxu0 0
        %305 = vmatpush.bf16.msra.mxu0 0
        %306 = vmatpush.bf16.msra.mxu0 0
        %307 = vmatpush.bf16.msra.mxu0 0
        %308 = vmatpush.bf16.msra.mxu0 0
        %309 = vmatpush.bf16.msra.mxu0 %v300
        %310 = vmatmul.bf16.gmra.mxu0 %v293
        %v311 = vpop.f32.mrf.mxu0
        %v312 = vadd.f32 %v290, %v311
        %v313 = vpop.f32.mrf.mxu0
        %314 = vdwg.mxu0
        %v315 = vtanh.pop %v312
        %316 = vst [vmem:[%s254] sm:$0x1] %v315
        %s317 = sand.u32 %s166, 1
        %s318 = scalar_lea.sflag [#allocation4], %s317
        %s319 = sand.u32 %s166, 1
        %s320 = scalar_lea.vmem [#allocation3], %s319
        // Predicated region
        $region45: #{model_forward.19} parent=43 // pred_check
          %p321 = pneg %p176
        $region46: #{model_forward.19} parent=43 // pred_check_branch
          %323 = sbr.rel (%p321) target = $region48
        $region47: #{model_forward.19} parent=43 // pred_region
          %325 = vsyncadd %s318, 0
          %s326 = scalar_lea.hbm %s6, %s22
          %s328 = sshll.u32 %s320, 4
          %s329 = int_to_ptr.vmem [resolvable:$true] %s328
          %s330 = sshll.u32 %s326, 4
          %s331 = int_to_ptr.hbm [resolvable:$true] %s330
          %333 = dma.vmem_to_hbm [thread:$0]  %s329, 16, %s331, %s318
        $region48: #{model_forward.19} parent=43 // pred_fallthru
          _
      $region44: #{model_forward.19} parent=5 // pred_fallthru
        _
      %p334 = scmp.le.s32.totalorder 2, %s17
      // Predicated region
      $region49: #{model_forward.19} parent=5 // pred_check
        %p335 = pneg %p334
      $region50: #{model_forward.19} parent=5 // pred_check_branch
        %337 = sbr.rel (%p335) target = $region52
      $region51: #{model_forward.19} parent=5 // pred_region
        %s338 = ssub.s32 %s17, 2
        // Predicated region
        $region53: #{model_forward.19} parent=51 // pred_check
          %p339 = pneg %p182
        $region54: #{model_forward.19} parent=51 // pred_check_branch
          %341 = sbr.rel (%p339) target = $region56
        $region55: #{model_forward.19} parent=51 // pred_region
          %s342 = sand.u32 %s167, 1
          %s343 = scalar_lea.sflag [#allocation4], %s342
          %s344 = sand.u32 %s167, 1
          %s345 = scalar_lea.vmem [#allocation3], %s344
          %347 = dma.done %s343, 16
        $region56: #{model_forward.19} parent=51 // pred_fallthru
          _
      $region52: #{model_forward.19} parent=5 // pred_fallthru
        _
    $region6: #{model_forward.19} parent=1 // loop_footer
      %s21 = sadd.s32 1, %s17
    $region7: #{model_forward.19} parent=1 // loop_footer_branch
      %16 = sbr.rel target = $region3
    $region8: #{model_forward.19} parent=1 // loop_exit
      _
    %348 = vsyncpa [#allocation4], 1
    %s349 = scalar_lea.sflag [#allocation4], 1
    %350 = vsyncpa %s349, 1

</llo_original>
